<compile_context>
chip_gen: v7x
topology: tpu7x:2x2x1
jax: 0.10.0
libtpu: 0.0.40
codegen_flags: <defaults>
</compile_context>

<pallas_src>
import jax
import jax.numpy as jnp
import numpy as np
from jax import lax
from jax.experimental import pallas as pl
from jax.experimental.pallas import tpu as pltpu


_GN_ROWS_SINGLE_MAX = 4096   # above this, use the two-pass row-tiled GroupNorm
_GN_ROW_TILE = 2048          # ~1 MiB f32 per (row_tile, 128) block

_VMEM_LIMIT = []


def _round_up(a, b):
    return (a + b - 1) // b * b


def _vmem_limit():
    """Scoped-VMEM limit: ~75% of this generation's capacity (fallback 48 MiB)."""
    if not _VMEM_LIMIT:
        try:
            cap = int(pltpu.get_tpu_info().vmem_capacity_bytes)
        except Exception:
            cap = 64 << 20
        _VMEM_LIMIT.append(int(min(cap - cap // 4, 100 << 20)))
    return _VMEM_LIMIT[0]


# --------------------------- generic in-kernel-tap conv ---------------------------

def _make_conv_tap_kernel(offsets, lr, n_dtaps):
    def kernel(x_ref, w_ref, o_ref, acc_ref):
        a = pl.program_id(2)

        @pl.when(a == 0)
        def _():
            acc_ref[...] = jnp.zeros_like(acc_ref)

        xb = x_ref[0, 0]                                   # (Cin, Lpad) bf16, one depth slab
        acc = acc_ref[...]
        for t, off in enumerate(offsets):                  # kh*kw in-plane taps: lane shifts
            acc = acc + jnp.dot(w_ref[0, t], xb[:, off:off + lr],
                                preferred_element_type=jnp.float32)
        acc_ref[...] = acc

        @pl.when(a == n_dtaps - 1)
        def _():
            o_ref[0] = acc_ref[...].astype(o_ref.dtype)
    return kernel


def _conv3d_core(x, w, stride, pads, out_dtype):
    """Small-kernel 3-D conv; taps reduced inside the Pallas kernel (no im2col).

    x: (N, Cin, D, H, W) any float dtype (cast to bf16); w: (Cout, Cin, kd, kh, kw);
    pads: ((dlo,dhi),(hlo,hhi),(wlo,whi)).  Outputs are computed over the padded,
    lane-dense H*W grid and the valid/strided positions are extracted by one fused
    XLA slice afterwards.  Returns NCDHW `out_dtype`.
    """
    n, cin = x.shape[:2]
    cout, _, kd, kh, kw = w.shape
    s = stride

    xq = jnp.pad(x.astype(jnp.bfloat16),
                 ((0, 0), (0, 0), pads[0], pads[1], pads[2]))
    dp, hp, wp = xq.shape[2:]
    lhw = hp * wp
    lr = _round_up(lhw, 128)                               # lane-dense working width
    max_off = (kh - 1) * wp + (kw - 1)
    lpad = _round_up(lr + max_off, 128)
    # (N, Dp, Cin, Hp*Wp) layout -> clean full-dim (Cin, lane) blocks per depth slab.
    # pad + cast + transpose + flatten fuse into a single XLA copy pass.
    xq = xq.transpose(0, 2, 1, 3, 4).reshape(n, dp, cin, lhw)
    xq = jnp.pad(xq, ((0, 0), (0, 0), (0, 0), (0, lpad - lhw)))

    do = (dp - kd) // s + 1
    ho = (hp - kh) // s + 1
    wo = (wp - kw) // s + 1

    wt = w.transpose(2, 3, 4, 0, 1).reshape(kd, kh * kw, cout, cin).astype(jnp.bfloat16)
    offsets = [b * wp + c for b in range(kh) for c in range(kw)]

    out = pl.pallas_call(
        _make_conv_tap_kernel(offsets, lr, kd),
        grid=(n, do, kd),
        in_specs=[
            pl.BlockSpec((1, 1, cin, lpad), lambda i, d, a: (i, s * d + a, 0, 0)),
            pl.BlockSpec((1, kh * kw, cout, cin), lambda i, d, a: (a, 0, 0, 0)),
        ],
        out_specs=pl.BlockSpec((1, cout, lr), lambda i, d, a: (i, 0, d)),
        out_shape=jax.ShapeDtypeStruct((n, cout, do * lr), out_dtype),
        scratch_shapes=[pltpu.VMEM((cout, lr), jnp.float32)],
        compiler_params=pltpu.CompilerParams(
            dimension_semantics=("parallel", "parallel", "arbitrary"),
            vmem_limit_bytes=_vmem_limit()),
    )(xq, wt)

    # valid-position extraction (handles stride); one fused XLA copy pass, NCDHW result.
    out = out.reshape(n, cout, do, lr)[:, :, :, :lhw].reshape(n, cout, do, hp, wp)
    out = out[:, :, :, 0:(ho - 1) * s + 1:s, 0:(wo - 1) * s + 1:s]
    return out


def conv3d_pallas(x, w, stride):
    """Conv3d, kernel 3, padding 1."""
    return _conv3d_core(x, w, stride, ((1, 1), (1, 1), (1, 1)), jnp.bfloat16)


# parity -> ((input offset, original kernel index), ...) for k=3, stride=2, pad=1
_PARITY_TAP = {0: ((0, 1),), 1: ((0, 2), (1, 0))}


def _convT_merged_weights(wt):
    """wt: (Cin, Cout, 3, 3, 3) -> (8*Cout, Cin, 2, 2, 2) parity-merged stride-1 weights."""
    cin, cout = wt.shape[:2]
    blocks = []
    for pd in (0, 1):
        for ph in (0, 1):
            for pw in (0, 1):
                sub = jnp.zeros((cout, cin, 2, 2, 2), wt.dtype)
                for od, kdx in _PARITY_TAP[pd]:
                    for oh, khx in _PARITY_TAP[ph]:
                        for ow, kwx in _PARITY_TAP[pw]:
                            sub = sub.at[:, :, od, oh, ow].set(wt[:, :, kdx, khx, kwx].T)
                blocks.append(sub)
    return jnp.concatenate(blocks, axis=0)


def conv_transpose3d_pallas(x, wt, output_padding):
    """ConvTranspose3d (kernel 3, stride 2, padding 1) as one parity-merged conv +
    a single dense depth-to-space interleave (no zero fill, no strided scatters)."""
    n, cin, d, h, w = x.shape
    cout = wt.shape[1]
    wbig = _convT_merged_weights(wt)                               # (8*Cout, Cin, 2,2,2)
    sub = _conv3d_core(x, wbig, 1, ((0, 1), (0, 1), (0, 1)), jnp.bfloat16)
    sub = sub.reshape(n, 2, 2, 2, cout, d, h, w)
    full = sub.transpose(0, 4, 5, 1, 6, 2, 7, 3).reshape(n, cout, 2 * d, 2 * h, 2 * w)
    od, oh, ow = output_padding
    return full[:, :, :2 * d - 1 + od, :2 * h - 1 + oh, :2 * w - 1 + ow]


# ---------------------------------- GroupNorm ----------------------------------

def _make_gn_fused_kernel(has_res, do_relu, eps, count):
    def kernel(x_ref, g_ref, b_ref, *rest):
        if has_res:
            r_ref, o_ref = rest
        else:
            (o_ref,) = rest
        x = x_ref[0, 0].astype(jnp.float32)                # (rows, rowlen)
        s1 = jnp.sum(x, keepdims=True)                     # (1, 1)
        s2 = jnp.sum(x * x, keepdims=True)
        mean = s1 / count
        var = jnp.maximum(s2 / count - mean * mean, 0.0)
        inv = lax.rsqrt(var + eps)
        y = (x - mean) * inv
        y = y * g_ref[0] + b_ref[0]                        # per-row affine (rows, 1)
        if has_res:
            y = y + r_ref[0, 0].astype(jnp.float32)
        if do_relu:
            y = jnp.maximum(y, 0.0)
        o_ref[0, 0] = y.astype(o_ref.dtype)
    return kernel


def _gn_stats_kernel(x_ref, s_ref, acc_ref):
    r = pl.program_id(2)

    @pl.when(r == 0)
    def _():
        acc_ref[...] = jnp.zeros_like(acc_ref)

    x = x_ref[0, 0].astype(jnp.float32)                    # (rt, 128)
    acc_ref[0:1] += jnp.sum(x, axis=0, keepdims=True)      # per-lane partial sums
    acc_ref[1:2] += jnp.sum(x * x, axis=0, keepdims=True)

    @pl.when(r == pl.num_programs(2) - 1)
    def _():
        s_ref[0, 0] = acc_ref[...]


def _make_gn_apply_kernel(has_res, do_relu, eps, count):
    def kernel(x_ref, s_ref, g_ref, b_ref, *rest):
        if has_res:
            r_ref, o_ref = rest
        else:
            (o_ref,) = rest
        st = s_ref[0, 0]                                   # (2, 128) per-lane partials
        tot = jnp.sum(st, axis=1, keepdims=True)           # (2, 1)
        mean = tot[0:1, :] / count
        ex2 = tot[1:2, :] / count
        inv = lax.rsqrt(jnp.maximum(ex2 - mean * mean, 0.0) + eps)
        x = x_ref[0, 0].astype(jnp.float32)                # (rt, 128)
        y = (x - mean) * inv
        y = y * g_ref[0] + b_ref[0]
        if has_res:
            y = y + r_ref[0, 0].astype(jnp.float32)
        if do_relu:
            y = jnp.maximum(y, 0.0)
        o_ref[0, 0] = y.astype(o_ref.dtype)
    return kernel


def groupnorm_pallas(x, gamma, beta, num_groups, *, residual=None, relu=False,
                     eps=1e-5, out_dtype=jnp.float32, row_tile=None):
    """GroupNorm over an NCDHW tensor, fused optional residual add + ReLU.

    Group slabs are laid out sublane/lane dense as (rows, 128) when S % 128 == 0.
    For large `rows`, a two-pass row-tiled path keeps VMEM blocks small (v5e/v7x)."""
    N, C, D, H, W = x.shape
    G = num_groups
    Cg = C // G
    S = D * H * W

    if S % 128 == 0:
        rowlen, rows = 128, Cg * S // 128
    else:
        # TODO(synk): row-tiling is unavailable in this fallback (S not lane-aligned).
        rowlen, rows = S, Cg

    xr = x.reshape(N, G, rows, rowlen)
    rr = residual.reshape(N, G, rows, rowlen) if residual is not None else None
    per_ch_rows = S // rowlen
    gam = jnp.repeat(gamma.astype(jnp.float32).reshape(G, Cg),
                     per_ch_rows, axis=1).reshape(G, rows, 1)
    bet = jnp.repeat(beta.astype(jnp.float32).reshape(G, Cg),
                     per_ch_rows, axis=1).reshape(G, rows, 1)
    count = float(Cg * S)
    has_res = rr is not None

    if row_tile is None:
        row_tile = _GN_ROW_TILE if rows > _GN_ROWS_SINGLE_MAX else rows
    row_tile = min(row_tile, rows)
    tiled = (row_tile < rows and rowlen == 128
             and rows % row_tile == 0 and row_tile % 8 == 0)

    if not tiled:
        args = [xr, gam, bet]
        in_specs = [pl.BlockSpec((1, 1, rows, rowlen), lambda n, g: (n, g, 0, 0)),
                    pl.BlockSpec((1, rows, 1), lambda n, g: (g, 0, 0)),
                    pl.BlockSpec((1, rows, 1), lambda n, g: (g, 0, 0))]
        if has_res:
            args.append(rr)
            in_specs.append(pl.BlockSpec((1, 1, rows, rowlen), lambda n, g: (n, g, 0, 0)))
        out = pl.pallas_call(
            _make_gn_fused_kernel(has_res, relu, eps, count),
            grid=(N, G),
            in_specs=in_specs,
            out_specs=pl.BlockSpec((1, 1, rows, rowlen), lambda n, g: (n, g, 0, 0)),
            out_shape=jax.ShapeDtypeStruct((N, G, rows, rowlen), out_dtype),
            compiler_params=pltpu.CompilerParams(
                dimension_semantics=("parallel", "parallel"),
                vmem_limit_bytes=_vmem_limit()),
        )(*args)
        return out.reshape(N, C, D, H, W)

    # ---- row-tiled two-pass path ----
    nrt = rows // row_tile
    stats = pl.pallas_call(
        _gn_stats_kernel,
        grid=(N, G, nrt),
        in_specs=[pl.BlockSpec((1, 1, row_tile, 128), lambda n, g, r: (n, g, r, 0))],
        out_specs=pl.BlockSpec((1, 1, 2, 128), lambda n, g, r: (n, g, 0, 0)),
        out_shape=jax.ShapeDtypeStruct((N, G, 2, 128), jnp.float32),
        scratch_shapes=[pltpu.VMEM((2, 128), jnp.float32)],
        compiler_params=pltpu.CompilerParams(
            dimension_semantics=("parallel", "parallel", "arbitrary"),
            vmem_limit_bytes=_vmem_limit()),
    )(xr)

    args = [xr, stats, gam, bet]
    in_specs = [pl.BlockSpec((1, 1, row_tile, 128), lambda n, g, r: (n, g, r, 0)),
                pl.BlockSpec((1, 1, 2, 128), lambda n, g, r: (n, g, 0, 0)),
                pl.BlockSpec((1, row_tile, 1), lambda n, g, r: (g, r, 0)),
                pl.BlockSpec((1, row_tile, 1), lambda n, g, r: (g, r, 0))]
    if has_res:
        args.append(rr)
        in_specs.append(pl.BlockSpec((1, 1, row_tile, 128), lambda n, g, r: (n, g, r, 0)))
    out = pl.pallas_call(
        _make_gn_apply_kernel(has_res, relu, eps, count),
        grid=(N, G, nrt),
        in_specs=in_specs,
        out_specs=pl.BlockSpec((1, 1, row_tile, 128), lambda n, g, r: (n, g, r, 0)),
        out_shape=jax.ShapeDtypeStruct((N, G, rows, 128), out_dtype),
        compiler_params=pltpu.CompilerParams(
            dimension_semantics=("parallel", "parallel", "parallel"),
            vmem_limit_bytes=_vmem_limit()),
    )(*args)
    return out.reshape(N, C, D, H, W)


# ----------------------------- hourglass module -----------------------------

def init_params(key, inplanes):
    C = inplanes
    ks = jax.random.split(key, 18)

    def w(k, cout, cin):
        return 0.1 * jax.random.normal(k, (cout, cin, 3, 3, 3), jnp.float32)

    def wt(k, cin, cout):
        return 0.1 * jax.random.normal(k, (cin, cout, 3, 3, 3), jnp.float32)

    def gb(k1, k2, c):
        return (1.0 + 0.1 * jax.random.normal(k1, (c,), jnp.float32),
                0.1 * jax.random.normal(k2, (c,), jnp.float32))

    p = {}
    p['w1'] = w(ks[0], 2 * C, C);       p['g1'], p['b1'] = gb(ks[1], ks[2], 2 * C)
    p['w2'] = w(ks[3], 2 * C, 2 * C);   p['g2'], p['b2'] = gb(ks[4], ks[5], 2 * C)
    p['w3'] = w(ks[6], 2 * C, 2 * C);   p['g3'], p['b3'] = gb(ks[7], ks[8], 2 * C)
    p['w4'] = w(ks[9], 2 * C, 2 * C);   p['g4'], p['b4'] = gb(ks[10], ks[11], 2 * C)
    p['w5'] = wt(ks[12], 2 * C, 2 * C); p['g5'], p['b5'] = gb(ks[13], ks[14], 2 * C)
    p['w6'] = wt(ks[15], 2 * C, C);     p['g6'], p['b6'] = gb(ks[16], ks[17], C)
    return p


def hourglass_forward(params, x, presqu=None, postsqu=None):
    C = params['w6'].shape[1]            # inplanes
    C2 = 2 * C

    # conv1: conv s2 -> GN -> ReLU (bf16 internal activation)
    out = conv3d_pallas(x, params['w1'], 2)
    out = groupnorm_pallas(out, params['g1'], params['b1'], C2 // 4,
                           relu=True, out_dtype=jnp.bfloat16)
    # conv2: conv s1 -> GN, then pre = relu(pre [+ postsqu])  (returned -> f32)
    pre = conv3d_pallas(out, params['w2'], 1)
    pre = groupnorm_pallas(pre, params['g2'], params['b2'], C2 // 4,
                           residual=postsqu, relu=True, out_dtype=jnp.float32)
    # conv3 / conv4
    out = conv3d_pallas(pre, params['w3'], 2)
    out = groupnorm_pallas(out, params['g3'], params['b3'], C2 // 4,
                           relu=True, out_dtype=jnp.bfloat16)
    out = conv3d_pallas(out, params['w4'], 1)
    out = groupnorm_pallas(out, params['g4'], params['b4'], C2 // 4,
                           relu=True, out_dtype=jnp.bfloat16)
    # conv5: convT -> GN; post = relu(gn + (presqu or pre))  (returned -> f32)
    out5 = conv_transpose3d_pallas(out, params['w5'], (1, 1, 1))
    res5 = presqu if presqu is not None else pre
    post = groupnorm_pallas(out5, params['g5'], params['b5'], C // 2,
                            residual=res5, relu=True, out_dtype=jnp.float32)
    # conv6: convT -> GN (no relu, no add)  (returned -> f32)
    out6 = conv_transpose3d_pallas(post, params['w6'], (0, 1, 1))
    out6 = groupnorm_pallas(out6, params['g6'], params['b6'], C // 4,
                            relu=False, out_dtype=jnp.float32)
    return out6, pre, post


# ----------------------------- pure-JAX reference -----------------------------

def _conv3d_ref(x, w, stride, pad):
    return lax.conv_general_dilated(x, w, (stride,) * 3, [(pad, pad)] * 3,
                                    dimension_numbers=('NCDHW', 'OIDHW', 'NCDHW'),
                                    precision=lax.Precision.HIGHEST)


def _convT3d_ref(x, wt, stride, pad, out_pad):
    k = wt.shape[2]
    w_eq = jnp.flip(wt, axis=(2, 3, 4)).transpose(1, 0, 2, 3, 4)
    pads = [(k - 1 - pad, k - 1 - pad + out_pad[i]) for i in range(3)]
    return lax.conv_general_dilated(x, w_eq, (1, 1, 1), pads, lhs_dilation=(stride,) * 3,
                                    dimension_numbers=('NCDHW', 'OIDHW', 'NCDHW'),
                                    precision=lax.Precision.HIGHEST)


def _gn_ref(x, gamma, beta, G, eps=1e-5):
    N, C = x.shape[:2]
    xr = x.reshape(N, G, -1)
    mean = xr.mean(-1, keepdims=True)
    var = ((xr - mean) ** 2).mean(-1, keepdims=True)
    y = ((xr - mean) / jnp.sqrt(var + eps)).reshape(x.shape)
    shp = (1, C) + (1,) * (x.ndim - 2)
    return y * gamma.reshape(shp) + beta.reshape(shp)


def hourglass_reference(params, x, presqu=None, postsqu=None):
    C = params['w6'].shape[1]
    out = jax.nn.relu(_gn_ref(_conv3d_ref(x, params['w1'], 2, 1),
                              params['g1'], params['b1'], (2 * C) // 4))
    pre = _gn_ref(_conv3d_ref(out, params['w2'], 1, 1),
                  params['g2'], params['b2'], (2 * C) // 4)
    pre = jax.nn.relu(pre + postsqu) if postsqu is not None else jax.nn.relu(pre)
    out = jax.nn.relu(_gn_ref(_conv3d_ref(pre, params['w3'], 2, 1),
                              params['g3'], params['b3'], (2 * C) // 4))
    out = jax.nn.relu(_gn_ref(_conv3d_ref(out, params['w4'], 1, 1),
                              params['g4'], params['b4'], (2 * C) // 4))
    g5 = _gn_ref(_convT3d_ref(out, params['w5'], 2, 1, (1, 1, 1)),
                 params['g5'], params['b5'], C // 2)
    post = jax.nn.relu(g5 + (presqu if presqu is not None else pre))
    out6 = _gn_ref(_convT3d_ref(post, params['w6'], 2, 1, (0, 1, 1)),
                   params['g6'], params['b6'], C // 4)
    return out6, pre, post


# ----------------------------------- main -----------------------------------

if __name__ == "__main__":
    key = jax.random.PRNGKey(0)
    inplanes = 4
    N, D, H, W = 2, 8, 16, 16      # x: (N, inplanes, D, H, W), D/H/W divisible by 4

    params = init_params(key, inplanes)
    x = jax.random.normal(jax.random.fold_in(key, 100),
                          (N, inplanes, D, H, W), jnp.float32)

    fwd = jax.jit(hourglass_forward)

    # branch 1: presqu = postsqu = None (like hourglass1 in the parent model)
    out1, pre1, post1 = fwd(params, x, None, None)
    jax.block_until_ready((out1, pre1, post1))

    # branch 2: presqu / postsqu provided (like hourglass2 in the parent model)
    out2, pre2, post2 = fwd(params, x, pre1, post1)
    jax.block_until_ready((out2, pre2, post2))

    # cross-check against pure-JAX/XLA f32 reference.  The Pallas path deliberately uses
    # bf16 MXU inputs and bf16 internal activations, hence the loose tolerance.
    ref1 = hourglass_reference(params, x, None, None)
    ref2 = hourglass_reference(params, x, pre1, post1)
    for got, ref in zip((out1, pre1, post1, out2, pre2, post2), (*ref1, *ref2)):
        np.testing.assert_allclose(np.asarray(got, dtype=np.float32), np.asarray(ref),
                                   rtol=6e-2, atol=6e-2)

    # Explicitly exercise the row-tiled two-pass GroupNorm path (f32, tight tolerance).
    xt = jax.random.normal(jax.random.fold_in(key, 200), (2, 8, 4, 8, 16), jnp.float32)
    res_t = jax.random.normal(jax.random.fold_in(key, 201), xt.shape, jnp.float32)
    g_t = 1.0 + 0.1 * jax.random.normal(jax.random.fold_in(key, 202), (8,), jnp.float32)
    b_t = 0.1 * jax.random.normal(jax.random.fold_in(key, 203), (8,), jnp.float32)
    got_t = groupnorm_pallas(xt, g_t, b_t, 2, residual=res_t, relu=True,
                             out_dtype=jnp.float32, row_tile=8)
    ref_t = jax.nn.relu(_gn_ref(xt, g_t, b_t, 2) + res_t)
    np.testing.assert_allclose(np.asarray(got_t), np.asarray(ref_t), rtol=1e-3, atol=1e-3)

    print("KERNEL_OK")
</pallas_src>

<mosaic_0001>
module attributes {stable_mosaic.version = 11 : i64} {
  func.func @kernel(%arg0: i32, %arg1: i32, %arg2: i32, %arg3: memref<1x1x4x512xbf16, #tpu.memory_space<vmem>>, %arg4: memref<1x9x8x4xbf16, #tpu.memory_space<vmem>>, %arg5: memref<1x8x384xbf16, #tpu.memory_space<vmem>>, %arg6: memref<8x384xf32, #tpu.memory_space<vmem>>) attributes {dimension_semantics = [#tpu.dimension_semantics<parallel>, #tpu.dimension_semantics<parallel>, #tpu.dimension_semantics<arbitrary>], iteration_bounds = array<i64: 2, 4, 3>, scalar_prefetch = 0 : i64, scratch_operands = 1 : i64, tpu.core_type = #tpu.core_type<tc>, window_params = [{transform_indices = @transform_0, window_bounds = array<i64: 1, 1, 4, 512>}, {transform_indices = @transform_1, window_bounds = array<i64: 1, 9, 8, 4>}, {transform_indices = @transform_2, window_bounds = array<i64: 1, 8, 384>}]} {
    %c0_i32 = arith.constant 0 : i32
    %0 = arith.cmpi eq, %arg2, %c0_i32 : i32
    %1 = arith.extui %0 : i1 to i32
    %c0_i32_0 = arith.constant 0 : i32
    %2 = arith.cmpi ne, %1, %c0_i32_0 : i32
    scf.if %2 {
      %cst_45 = arith.constant 0.000000e+00 : f32
      %55 = vector.broadcast %cst_45 : f32 to vector<8x384xf32>
      %c0_46 = arith.constant 0 : index
      %c0_47 = arith.constant 0 : index
      %56 = vector.load %arg6[%c0_46, %c0_47] : memref<8x384xf32, #tpu.memory_space<vmem>>, vector<8x384xf32>
      tpu.vector_store %arg6[%c0_46, %c0_47], %55 {strides = array<i32>} : memref<8x384xf32, #tpu.memory_space<vmem>>, vector<8x384xf32>,
    } else {
    }
    %c0 = arith.constant 0 : index
    %c0_1 = arith.constant 0 : index
    %c0_2 = arith.constant 0 : index
    %c0_3 = arith.constant 0 : index
    %3 = vector.load %arg3[%c0, %c0_1, %c0_2, %c0_3] : memref<1x1x4x512xbf16, #tpu.memory_space<vmem>>, vector<1x1x4x512xbf16>
    %4 = vector.shape_cast %3 : vector<1x1x4x512xbf16> to vector<4x512xbf16>
    %c0_4 = arith.constant 0 : index
    %c0_5 = arith.constant 0 : index
    %5 = vector.load %arg6[%c0_4, %c0_5] : memref<8x384xf32, #tpu.memory_space<vmem>>, vector<8x384xf32>
    %c0_6 = arith.constant 0 : index
    %c0_7 = arith.constant 0 : index
    %c0_8 = arith.constant 0 : index
    %c0_9 = arith.constant 0 : index
    %6 = vector.load %arg4[%c0_6, %c0_7, %c0_8, %c0_9] : memref<1x9x8x4xbf16, #tpu.memory_space<vmem>>, vector<1x1x8x4xbf16>
    %7 = vector.shape_cast %6 : vector<1x1x8x4xbf16> to vector<8x4xbf16>
    %8 = vector.extract_strided_slice %4 {offsets = [0, 0], sizes = [4, 384], strides = [1, 1]} : vector<4x512xbf16> to vector<4x384xbf16>
    %cst = arith.constant dense<0.000000e+00> : vector<8x384xf32>
    %9 = tpu.matmul %7, %8, %cst {dimension_numbers = #tpu.dot_dimension_numbers<[1], [0], [0], [1], [0, 0, 1, 1], [], []>} : vector<8x4xbf16>, vector<4x384xbf16>, vector<8x384xf32> -> vector<8x384xf32>
    %10 = arith.addf %5, %9 : vector<8x384xf32>
    %c0_10 = arith.constant 0 : index
    %c1 = arith.constant 1 : index
    %c0_11 = arith.constant 0 : index
    %c0_12 = arith.constant 0 : index
    %11 = vector.load %arg4[%c0_10, %c1, %c0_11, %c0_12] : memref<1x9x8x4xbf16, #tpu.memory_space<vmem>>, vector<1x1x8x4xbf16>
    %12 = vector.shape_cast %11 : vector<1x1x8x4xbf16> to vector<8x4xbf16>
    %13 = vector.extract_strided_slice %4 {offsets = [0, 1], sizes = [4, 384], strides = [1, 1]} : vector<4x512xbf16> to vector<4x384xbf16>
    %cst_13 = arith.constant dense<0.000000e+00> : vector<8x384xf32>
    %14 = tpu.matmul %12, %13, %cst_13 {dimension_numbers = #tpu.dot_dimension_numbers<[1], [0], [0], [1], [0, 0, 1, 1], [], []>} : vector<8x4xbf16>, vector<4x384xbf16>, vector<8x384xf32> -> vector<8x384xf32>
    %15 = arith.addf %10, %14 : vector<8x384xf32>
    %c0_14 = arith.constant 0 : index
    %c2 = arith.constant 2 : index
    %c0_15 = arith.constant 0 : index
    %c0_16 = arith.constant 0 : index
    %16 = vector.load %arg4[%c0_14, %c2, %c0_15, %c0_16] : memref<1x9x8x4xbf16, #tpu.memory_space<vmem>>, vector<1x1x8x4xbf16>
    %17 = vector.shape_cast %16 : vector<1x1x8x4xbf16> to vector<8x4xbf16>
    %18 = vector.extract_strided_slice %4 {offsets = [0, 2], sizes = [4, 384], strides = [1, 1]} : vector<4x512xbf16> to vector<4x384xbf16>
    %cst_17 = arith.constant dense<0.000000e+00> : vector<8x384xf32>
    %19 = tpu.matmul %17, %18, %cst_17 {dimension_numbers = #tpu.dot_dimension_numbers<[1], [0], [0], [1], [0, 0, 1, 1], [], []>} : vector<8x4xbf16>, vector<4x384xbf16>, vector<8x384xf32> -> vector<8x384xf32>
    %20 = arith.addf %15, %19 : vector<8x384xf32>
    %c0_18 = arith.constant 0 : index
    %c3 = arith.constant 3 : index
    %c0_19 = arith.constant 0 : index
    %c0_20 = arith.constant 0 : index
    %21 = vector.load %arg4[%c0_18, %c3, %c0_19, %c0_20] : memref<1x9x8x4xbf16, #tpu.memory_space<vmem>>, vector<1x1x8x4xbf16>
    %22 = vector.shape_cast %21 : vector<1x1x8x4xbf16> to vector<8x4xbf16>
    %23 = vector.extract_strided_slice %4 {offsets = [0, 18], sizes = [4, 384], strides = [1, 1]} : vector<4x512xbf16> to vector<4x384xbf16>
    %cst_21 = arith.constant dense<0.000000e+00> : vector<8x384xf32>
    %24 = tpu.matmul %22, %23, %cst_21 {dimension_numbers = #tpu.dot_dimension_numbers<[1], [0], [0], [1], [0, 0, 1, 1], [], []>} : vector<8x4xbf16>, vector<4x384xbf16>, vector<8x384xf32> -> vector<8x384xf32>
    %25 = arith.addf %20, %24 : vector<8x384xf32>
    %c0_22 = arith.constant 0 : index
    %c4 = arith.constant 4 : index
    %c0_23 = arith.constant 0 : index
    %c0_24 = arith.constant 0 : index
    %26 = vector.load %arg4[%c0_22, %c4, %c0_23, %c0_24] : memref<1x9x8x4xbf16, #tpu.memory_space<vmem>>, vector<1x1x8x4xbf16>
    %27 = vector.shape_cast %26 : vector<1x1x8x4xbf16> to vector<8x4xbf16>
    %28 = vector.extract_strided_slice %4 {offsets = [0, 19], sizes = [4, 384], strides = [1, 1]} : vector<4x512xbf16> to vector<4x384xbf16>
    %cst_25 = arith.constant dense<0.000000e+00> : vector<8x384xf32>
    %29 = tpu.matmul %27, %28, %cst_25 {dimension_numbers = #tpu.dot_dimension_numbers<[1], [0], [0], [1], [0, 0, 1, 1], [], []>} : vector<8x4xbf16>, vector<4x384xbf16>, vector<8x384xf32> -> vector<8x384xf32>
    %30 = arith.addf %25, %29 : vector<8x384xf32>
    %c0_26 = arith.constant 0 : index
    %c5 = arith.constant 5 : index
    %c0_27 = arith.constant 0 : index
    %c0_28 = arith.constant 0 : index
    %31 = vector.load %arg4[%c0_26, %c5, %c0_27, %c0_28] : memref<1x9x8x4xbf16, #tpu.memory_space<vmem>>, vector<1x1x8x4xbf16>
    %32 = vector.shape_cast %31 : vector<1x1x8x4xbf16> to vector<8x4xbf16>
    %33 = vector.extract_strided_slice %4 {offsets = [0, 20], sizes = [4, 384], strides = [1, 1]} : vector<4x512xbf16> to vector<4x384xbf16>
    %cst_29 = arith.constant dense<0.000000e+00> : vector<8x384xf32>
    %34 = tpu.matmul %32, %33, %cst_29 {dimension_numbers = #tpu.dot_dimension_numbers<[1], [0], [0], [1], [0, 0, 1, 1], [], []>} : vector<8x4xbf16>, vector<4x384xbf16>, vector<8x384xf32> -> vector<8x384xf32>
    %35 = arith.addf %30, %34 : vector<8x384xf32>
    %c0_30 = arith.constant 0 : index
    %c6 = arith.constant 6 : index
    %c0_31 = arith.constant 0 : index
    %c0_32 = arith.constant 0 : index
    %36 = vector.load %arg4[%c0_30, %c6, %c0_31, %c0_32] : memref<1x9x8x4xbf16, #tpu.memory_space<vmem>>, vector<1x1x8x4xbf16>
    %37 = vector.shape_cast %36 : vector<1x1x8x4xbf16> to vector<8x4xbf16>
    %38 = vector.extract_strided_slice %4 {offsets = [0, 36], sizes = [4, 384], strides = [1, 1]} : vector<4x512xbf16> to vector<4x384xbf16>
    %cst_33 = arith.constant dense<0.000000e+00> : vector<8x384xf32>
    %39 = tpu.matmul %37, %38, %cst_33 {dimension_numbers = #tpu.dot_dimension_numbers<[1], [0], [0], [1], [0, 0, 1, 1], [], []>} : vector<8x4xbf16>, vector<4x384xbf16>, vector<8x384xf32> -> vector<8x384xf32>
    %40 = arith.addf %35, %39 : vector<8x384xf32>
    %c0_34 = arith.constant 0 : index
    %c7 = arith.constant 7 : index
    %c0_35 = arith.constant 0 : index
    %c0_36 = arith.constant 0 : index
    %41 = vector.load %arg4[%c0_34, %c7, %c0_35, %c0_36] : memref<1x9x8x4xbf16, #tpu.memory_space<vmem>>, vector<1x1x8x4xbf16>
    %42 = vector.shape_cast %41 : vector<1x1x8x4xbf16> to vector<8x4xbf16>
    %43 = vector.extract_strided_slice %4 {offsets = [0, 37], sizes = [4, 384], strides = [1, 1]} : vector<4x512xbf16> to vector<4x384xbf16>
    %cst_37 = arith.constant dense<0.000000e+00> : vector<8x384xf32>
    %44 = tpu.matmul %42, %43, %cst_37 {dimension_numbers = #tpu.dot_dimension_numbers<[1], [0], [0], [1], [0, 0, 1, 1], [], []>} : vector<8x4xbf16>, vector<4x384xbf16>, vector<8x384xf32> -> vector<8x384xf32>
    %45 = arith.addf %40, %44 : vector<8x384xf32>
    %c0_38 = arith.constant 0 : index
    %c8 = arith.constant 8 : index
    %c0_39 = arith.constant 0 : index
    %c0_40 = arith.constant 0 : index
    %46 = vector.load %arg4[%c0_38, %c8, %c0_39, %c0_40] : memref<1x9x8x4xbf16, #tpu.memory_space<vmem>>, vector<1x1x8x4xbf16>
    %47 = vector.shape_cast %46 : vector<1x1x8x4xbf16> to vector<8x4xbf16>
    %48 = vector.extract_strided_slice %4 {offsets = [0, 38], sizes = [4, 384], strides = [1, 1]} : vector<4x512xbf16> to vector<4x384xbf16>
    %cst_41 = arith.constant dense<0.000000e+00> : vector<8x384xf32>
    %49 = tpu.matmul %47, %48, %cst_41 {dimension_numbers = #tpu.dot_dimension_numbers<[1], [0], [0], [1], [0, 0, 1, 1], [], []>} : vector<8x4xbf16>, vector<4x384xbf16>, vector<8x384xf32> -> vector<8x384xf32>
    %50 = arith.addf %45, %49 : vector<8x384xf32>
    %c0_42 = arith.constant 0 : index
    %c0_43 = arith.constant 0 : index
    %51 = vector.load %arg6[%c0_42, %c0_43] : memref<8x384xf32, #tpu.memory_space<vmem>>, vector<8x384xf32>
    tpu.vector_store %arg6[%c0_42, %c0_43], %50 {strides = array<i32>} : memref<8x384xf32, #tpu.memory_space<vmem>>, vector<8x384xf32>,
    %c2_i32 = arith.constant 2 : i32
    %52 = arith.cmpi eq, %arg2, %c2_i32 : i32
    %53 = arith.extui %52 : i1 to i32
    %c0_i32_44 = arith.constant 0 : i32
    %54 = arith.cmpi ne, %53, %c0_i32_44 : i32
    scf.if %54 {
      %c0_45 = arith.constant 0 : index
      %c0_46 = arith.constant 0 : index
      %55 = vector.load %arg6[%c0_45, %c0_46] : memref<8x384xf32, #tpu.memory_space<vmem>>, vector<8x384xf32>
      %56 = arith.truncf %55 : vector<8x384xf32> to vector<8x384xbf16>
      %c0_47 = arith.constant 0 : index
      %c0_48 = arith.constant 0 : index
      %c0_49 = arith.constant 0 : index
      %57 = vector.load %arg5[%c0_47, %c0_48, %c0_49] : memref<1x8x384xbf16, #tpu.memory_space<vmem>>, vector<1x8x384xbf16>
      %58 = vector.shape_cast %57 : vector<1x8x384xbf16> to vector<8x384xbf16>
      %59 = vector.shape_cast %56 : vector<8x384xbf16> to vector<1x8x384xbf16>
      tpu.vector_store %arg5[%c0_47, %c0_48, %c0_49], %59 {strides = array<i32>} : memref<1x8x384xbf16, #tpu.memory_space<vmem>>, vector<1x8x384xbf16>,
    } else {
    }
    return
  }
  func.func @transform_0(%arg0: i32, %arg1: i32, %arg2: i32) -> (i32, i32, i32, i32) {
    %c2_i32 = arith.constant 2 : i32
    %0 = arith.muli %c2_i32, %arg1 : i32
    %1 = arith.addi %0, %arg2 : i32
    %c0_i32 = arith.constant 0 : i32
    %c0_i32_0 = arith.constant 0 : i32
    %c0_i32_1 = arith.constant 0 : i32
    return %arg0, %1, %c0_i32, %c0_i32_0 : i32, i32, i32, i32
  }
  func.func @transform_1(%arg0: i32, %arg1: i32, %arg2: i32) -> (i32, i32, i32, i32) {
    %c0_i32 = arith.constant 0 : i32
    %c0_i32_0 = arith.constant 0 : i32
    %c0_i32_1 = arith.constant 0 : i32
    %c0_i32_2 = arith.constant 0 : i32
    return %arg2, %c0_i32, %c0_i32_0, %c0_i32_1 : i32, i32, i32, i32
  }
  func.func @transform_2(%arg0: i32, %arg1: i32, %arg2: i32) -> (i32, i32, i32) {
    %c0_i32 = arith.constant 0 : i32
    %c0_i32_0 = arith.constant 0 : i32
    return %arg0, %c0_i32, %arg1 : i32, i32, i32
  }
}

module attributes {stable_mosaic.version = 11 : i64} {
  func.func @kernel(%arg0: i32, %arg1: i32, %arg2: memref<1x1x8x128xbf16, #tpu.memory_space<vmem>>, %arg3: memref<1x8x1xf32, #tpu.memory_space<vmem>>, %arg4: memref<1x8x1xf32, #tpu.memory_space<vmem>>, %arg5: memref<1x1x8x128xbf16, #tpu.memory_space<vmem>>) attributes {dimension_semantics = [#tpu.dimension_semantics<parallel>, #tpu.dimension_semantics<parallel>], iteration_bounds = array<i64: 2, 2>, scalar_prefetch = 0 : i64, scratch_operands = 0 : i64, tpu.core_type = #tpu.core_type<tc>, window_params = [{transform_indices = @transform_0, window_bounds = array<i64: 1, 1, 8, 128>}, {transform_indices = @transform_1, window_bounds = array<i64: 1, 8, 1>}, {transform_indices = @transform_2, window_bounds = array<i64: 1, 8, 1>}, {transform_indices = @transform_3, window_bounds = array<i64: 1, 1, 8, 128>}]} {
    %c0 = arith.constant 0 : index
    %c0_0 = arith.constant 0 : index
    %c0_1 = arith.constant 0 : index
    %c0_2 = arith.constant 0 : index
    %0 = vector.load %arg2[%c0, %c0_0, %c0_1, %c0_2] : memref<1x1x8x128xbf16, #tpu.memory_space<vmem>>, vector<1x1x8x128xbf16>
    %1 = vector.shape_cast %0 : vector<1x1x8x128xbf16> to vector<8x128xbf16>
    %2 = arith.extf %1 : vector<8x128xbf16> to vector<8x128xf32>
    %3 = vector.shape_cast %2 : vector<8x128xf32> to vector<1x8x128xf32>
    %cst = arith.constant dense<0.000000e+00> : vector<1xf32>
    %4 = vector.multi_reduction <add>, %3, %cst [1, 2] : vector<1x8x128xf32> to vector<1xf32>
    %5 = vector.shape_cast %4 : vector<1xf32> to vector<1x1x1xf32>
    %6 = vector.extract %5[0, 0, 0] : f32 from vector<1x1x1xf32>
    %7 = vector.broadcast %6 : f32 to vector<1x1xf32>
    %8 = arith.mulf %2, %2 : vector<8x128xf32>
    %9 = vector.shape_cast %8 : vector<8x128xf32> to vector<1x8x128xf32>
    %cst_3 = arith.constant dense<0.000000e+00> : vector<1xf32>
    %10 = vector.multi_reduction <add>, %9, %cst_3 [1, 2] : vector<1x8x128xf32> to vector<1xf32>
    %11 = vector.shape_cast %10 : vector<1xf32> to vector<1x1x1xf32>
    %12 = vector.extract %11[0, 0, 0] : f32 from vector<1x1x1xf32>
    %13 = vector.broadcast %12 : f32 to vector<1x1xf32>
    %cst_4 = arith.constant 1.024000e+03 : f32
    %14 = vector.broadcast %cst_4 : f32 to vector<1x1xf32>
    %15 = arith.divf %7, %14 : vector<1x1xf32>
    %cst_5 = arith.constant 1.024000e+03 : f32
    %16 = vector.broadcast %cst_5 : f32 to vector<1x1xf32>
    %17 = arith.divf %13, %16 : vector<1x1xf32>
    %18 = arith.mulf %15, %15 : vector<1x1xf32>
    %19 = arith.subf %17, %18 : vector<1x1xf32>
    %cst_6 = arith.constant 0.000000e+00 : f32
    %20 = vector.broadcast %cst_6 : f32 to vector<1x1xf32>
    %21 = arith.maximumf %19, %20 : vector<1x1xf32>
    %cst_7 = arith.constant 9.99999974E-6 : f32
    %22 = vector.broadcast %cst_7 : f32 to vector<1x1xf32>
    %23 = arith.addf %21, %22 : vector<1x1xf32>
    %24 = math.rsqrt %23 : vector<1x1xf32>
    %25 = vector.broadcast %15 : vector<1x1xf32> to vector<8x128xf32>
    %26 = arith.subf %2, %25 : vector<8x128xf32>
    %27 = vector.broadcast %24 : vector<1x1xf32> to vector<8x128xf32>
    %28 = arith.mulf %26, %27 : vector<8x128xf32>
    %c0_8 = arith.constant 0 : index
    %c0_9 = arith.constant 0 : index
    %c0_10 = arith.constant 0 : index
    %29 = vector.load %arg3[%c0_8, %c0_9, %c0_10] : memref<1x8x1xf32, #tpu.memory_space<vmem>>, vector<1x8x1xf32>
    %30 = vector.shape_cast %29 : vector<1x8x1xf32> to vector<8x1xf32>
    %31 = vector.broadcast %30 : vector<8x1xf32> to vector<8x128xf32>
    %32 = arith.mulf %28, %31 : vector<8x128xf32>
    %c0_11 = arith.constant 0 : index
    %c0_12 = arith.constant 0 : index
    %c0_13 = arith.constant 0 : index
    %33 = vector.load %arg4[%c0_11, %c0_12, %c0_13] : memref<1x8x1xf32, #tpu.memory_space<vmem>>, vector<1x8x1xf32>
    %34 = vector.shape_cast %33 : vector<1x8x1xf32> to vector<8x1xf32>
    %35 = vector.broadcast %34 : vector<8x1xf32> to vector<8x128xf32>
    %36 = arith.addf %32, %35 : vector<8x128xf32>
    %cst_14 = arith.constant 0.000000e+00 : f32
    %37 = vector.broadcast %cst_14 : f32 to vector<8x128xf32>
    %38 = arith.maximumf %36, %37 : vector<8x128xf32>
    %39 = arith.truncf %38 : vector<8x128xf32> to vector<8x128xbf16>
    %c0_15 = arith.constant 0 : index
    %c0_16 = arith.constant 0 : index
    %c0_17 = arith.constant 0 : index
    %c0_18 = arith.constant 0 : index
    %40 = vector.load %arg5[%c0_15, %c0_16, %c0_17, %c0_18] : memref<1x1x8x128xbf16, #tpu.memory_space<vmem>>, vector<1x1x8x128xbf16>
    %41 = vector.shape_cast %40 : vector<1x1x8x128xbf16> to vector<8x128xbf16>
    %42 = vector.shape_cast %39 : vector<8x128xbf16> to vector<1x1x8x128xbf16>
    tpu.vector_store %arg5[%c0_15, %c0_16, %c0_17, %c0_18], %42 {strides = array<i32>} : memref<1x1x8x128xbf16, #tpu.memory_space<vmem>>, vector<1x1x8x128xbf16>,
    return
  }
  func.func @transform_0(%arg0: i32, %arg1: i32) -> (i32, i32, i32, i32) {
    %c0_i32 = arith.constant 0 : i32
    %c0_i32_0 = arith.constant 0 : i32
    %c0_i32_1 = arith.constant 0 : i32
    return %arg0, %arg1, %c0_i32, %c0_i32_0 : i32, i32, i32, i32
  }
  func.func @transform_1(%arg0: i32, %arg1: i32) -> (i32, i32, i32) {
    %c0_i32 = arith.constant 0 : i32
    %c0_i32_0 = arith.constant 0 : i32
    %c0_i32_1 = arith.constant 0 : i32
    return %arg1, %c0_i32, %c0_i32_0 : i32, i32, i32
  }
  func.func @transform_2(%arg0: i32, %arg1: i32) -> (i32, i32, i32) {
    %c0_i32 = arith.constant 0 : i32
    %c0_i32_0 = arith.constant 0 : i32
    %c0_i32_1 = arith.constant 0 : i32
    return %arg1, %c0_i32, %c0_i32_0 : i32, i32, i32
  }
  func.func @transform_3(%arg0: i32, %arg1: i32) -> (i32, i32, i32, i32) {
    %c0_i32 = arith.constant 0 : i32
    %c0_i32_0 = arith.constant 0 : i32
    %c0_i32_1 = arith.constant 0 : i32
    return %arg0, %arg1, %c0_i32, %c0_i32_0 : i32, i32, i32, i32
  }
}

module attributes {stable_mosaic.version = 11 : i64} {
  func.func @kernel(%arg0: i32, %arg1: i32, %arg2: i32, %arg3: memref<1x1x8x256xbf16, #tpu.memory_space<vmem>>, %arg4: memref<1x9x8x8xbf16, #tpu.memory_space<vmem>>, %arg5: memref<1x8x128xbf16, #tpu.memory_space<vmem>>, %arg6: memref<8x128xf32, #tpu.memory_space<vmem>>) attributes {dimension_semantics = [#tpu.dimension_semantics<parallel>, #tpu.dimension_semantics<parallel>, #tpu.dimension_semantics<arbitrary>], iteration_bounds = array<i64: 2, 4, 3>, scalar_prefetch = 0 : i64, scratch_operands = 1 : i64, tpu.core_type = #tpu.core_type<tc>, window_params = [{transform_indices = @transform_0, window_bounds = array<i64: 1, 1, 8, 256>}, {transform_indices = @transform_1, window_bounds = array<i64: 1, 9, 8, 8>}, {transform_indices = @transform_2, window_bounds = array<i64: 1, 8, 128>}]} {
    %c0_i32 = arith.constant 0 : i32
    %0 = arith.cmpi eq, %arg2, %c0_i32 : i32
    %1 = arith.extui %0 : i1 to i32
    %c0_i32_0 = arith.constant 0 : i32
    %2 = arith.cmpi ne, %1, %c0_i32_0 : i32
    scf.if %2 {
      %cst_45 = arith.constant 0.000000e+00 : f32
      %55 = vector.broadcast %cst_45 : f32 to vector<8x128xf32>
      %c0_46 = arith.constant 0 : index
      %c0_47 = arith.constant 0 : index
      %56 = vector.load %arg6[%c0_46, %c0_47] : memref<8x128xf32, #tpu.memory_space<vmem>>, vector<8x128xf32>
      tpu.vector_store %arg6[%c0_46, %c0_47], %55 {strides = array<i32>} : memref<8x128xf32, #tpu.memory_space<vmem>>, vector<8x128xf32>,
    } else {
    }
    %c0 = arith.constant 0 : index
    %c0_1 = arith.constant 0 : index
    %c0_2 = arith.constant 0 : index
    %c0_3 = arith.constant 0 : index
    %3 = vector.load %arg3[%c0, %c0_1, %c0_2, %c0_3] : memref<1x1x8x256xbf16, #tpu.memory_space<vmem>>, vector<1x1x8x256xbf16>
    %4 = vector.shape_cast %3 : vector<1x1x8x256xbf16> to vector<8x256xbf16>
    %c0_4 = arith.constant 0 : index
    %c0_5 = arith.constant 0 : index
    %5 = vector.load %arg6[%c0_4, %c0_5] : memref<8x128xf32, #tpu.memory_space<vmem>>, vector<8x128xf32>
    %c0_6 = arith.constant 0 : index
    %c0_7 = arith.constant 0 : index
    %c0_8 = arith.constant 0 : index
    %c0_9 = arith.constant 0 : index
    %6 = vector.load %arg4[%c0_6, %c0_7, %c0_8, %c0_9] : memref<1x9x8x8xbf16, #tpu.memory_space<vmem>>, vector<1x1x8x8xbf16>
    %7 = vector.shape_cast %6 : vector<1x1x8x8xbf16> to vector<8x8xbf16>
    %8 = vector.extract_strided_slice %4 {offsets = [0, 0], sizes = [8, 128], strides = [1, 1]} : vector<8x256xbf16> to vector<8x128xbf16>
    %cst = arith.constant dense<0.000000e+00> : vector<8x128xf32>
    %9 = tpu.matmul %7, %8, %cst {dimension_numbers = #tpu.dot_dimension_numbers<[1], [0], [0], [1], [0, 0, 1, 1], [], []>} : vector<8x8xbf16>, vector<8x128xbf16>, vector<8x128xf32> -> vector<8x128xf32>
    %10 = arith.addf %5, %9 : vector<8x128xf32>
    %c0_10 = arith.constant 0 : index
    %c1 = arith.constant 1 : index
    %c0_11 = arith.constant 0 : index
    %c0_12 = arith.constant 0 : index
    %11 = vector.load %arg4[%c0_10, %c1, %c0_11, %c0_12] : memref<1x9x8x8xbf16, #tpu.memory_space<vmem>>, vector<1x1x8x8xbf16>
    %12 = vector.shape_cast %11 : vector<1x1x8x8xbf16> to vector<8x8xbf16>
    %13 = vector.extract_strided_slice %4 {offsets = [0, 1], sizes = [8, 128], strides = [1, 1]} : vector<8x256xbf16> to vector<8x128xbf16>
    %cst_13 = arith.constant dense<0.000000e+00> : vector<8x128xf32>
    %14 = tpu.matmul %12, %13, %cst_13 {dimension_numbers = #tpu.dot_dimension_numbers<[1], [0], [0], [1], [0, 0, 1, 1], [], []>} : vector<8x8xbf16>, vector<8x128xbf16>, vector<8x128xf32> -> vector<8x128xf32>
    %15 = arith.addf %10, %14 : vector<8x128xf32>
    %c0_14 = arith.constant 0 : index
    %c2 = arith.constant 2 : index
    %c0_15 = arith.constant 0 : index
    %c0_16 = arith.constant 0 : index
    %16 = vector.load %arg4[%c0_14, %c2, %c0_15, %c0_16] : memref<1x9x8x8xbf16, #tpu.memory_space<vmem>>, vector<1x1x8x8xbf16>
    %17 = vector.shape_cast %16 : vector<1x1x8x8xbf16> to vector<8x8xbf16>
    %18 = vector.extract_strided_slice %4 {offsets = [0, 2], sizes = [8, 128], strides = [1, 1]} : vector<8x256xbf16> to vector<8x128xbf16>
    %cst_17 = arith.constant dense<0.000000e+00> : vector<8x128xf32>
    %19 = tpu.matmul %17, %18, %cst_17 {dimension_numbers = #tpu.dot_dimension_numbers<[1], [0], [0], [1], [0, 0, 1, 1], [], []>} : vector<8x8xbf16>, vector<8x128xbf16>, vector<8x128xf32> -> vector<8x128xf32>
    %20 = arith.addf %15, %19 : vector<8x128xf32>
    %c0_18 = arith.constant 0 : index
    %c3 = arith.constant 3 : index
    %c0_19 = arith.constant 0 : index
    %c0_20 = arith.constant 0 : index
    %21 = vector.load %arg4[%c0_18, %c3, %c0_19, %c0_20] : memref<1x9x8x8xbf16, #tpu.memory_space<vmem>>, vector<1x1x8x8xbf16>
    %22 = vector.shape_cast %21 : vector<1x1x8x8xbf16> to vector<8x8xbf16>
    %23 = vector.extract_strided_slice %4 {offsets = [0, 10], sizes = [8, 128], strides = [1, 1]} : vector<8x256xbf16> to vector<8x128xbf16>
    %cst_21 = arith.constant dense<0.000000e+00> : vector<8x128xf32>
    %24 = tpu.matmul %22, %23, %cst_21 {dimension_numbers = #tpu.dot_dimension_numbers<[1], [0], [0], [1], [0, 0, 1, 1], [], []>} : vector<8x8xbf16>, vector<8x128xbf16>, vector<8x128xf32> -> vector<8x128xf32>
    %25 = arith.addf %20, %24 : vector<8x128xf32>
    %c0_22 = arith.constant 0 : index
    %c4 = arith.constant 4 : index
    %c0_23 = arith.constant 0 : index
    %c0_24 = arith.constant 0 : index
    %26 = vector.load %arg4[%c0_22, %c4, %c0_23, %c0_24] : memref<1x9x8x8xbf16, #tpu.memory_space<vmem>>, vector<1x1x8x8xbf16>
    %27 = vector.shape_cast %26 : vector<1x1x8x8xbf16> to vector<8x8xbf16>
    %28 = vector.extract_strided_slice %4 {offsets = [0, 11], sizes = [8, 128], strides = [1, 1]} : vector<8x256xbf16> to vector<8x128xbf16>
    %cst_25 = arith.constant dense<0.000000e+00> : vector<8x128xf32>
    %29 = tpu.matmul %27, %28, %cst_25 {dimension_numbers = #tpu.dot_dimension_numbers<[1], [0], [0], [1], [0, 0, 1, 1], [], []>} : vector<8x8xbf16>, vector<8x128xbf16>, vector<8x128xf32> -> vector<8x128xf32>
    %30 = arith.addf %25, %29 : vector<8x128xf32>
    %c0_26 = arith.constant 0 : index
    %c5 = arith.constant 5 : index
    %c0_27 = arith.constant 0 : index
    %c0_28 = arith.constant 0 : index
    %31 = vector.load %arg4[%c0_26, %c5, %c0_27, %c0_28] : memref<1x9x8x8xbf16, #tpu.memory_space<vmem>>, vector<1x1x8x8xbf16>
    %32 = vector.shape_cast %31 : vector<1x1x8x8xbf16> to vector<8x8xbf16>
    %33 = vector.extract_strided_slice %4 {offsets = [0, 12], sizes = [8, 128], strides = [1, 1]} : vector<8x256xbf16> to vector<8x128xbf16>
    %cst_29 = arith.constant dense<0.000000e+00> : vector<8x128xf32>
    %34 = tpu.matmul %32, %33, %cst_29 {dimension_numbers = #tpu.dot_dimension_numbers<[1], [0], [0], [1], [0, 0, 1, 1], [], []>} : vector<8x8xbf16>, vector<8x128xbf16>, vector<8x128xf32> -> vector<8x128xf32>
    %35 = arith.addf %30, %34 : vector<8x128xf32>
    %c0_30 = arith.constant 0 : index
    %c6 = arith.constant 6 : index
    %c0_31 = arith.constant 0 : index
    %c0_32 = arith.constant 0 : index
    %36 = vector.load %arg4[%c0_30, %c6, %c0_31, %c0_32] : memref<1x9x8x8xbf16, #tpu.memory_space<vmem>>, vector<1x1x8x8xbf16>
    %37 = vector.shape_cast %36 : vector<1x1x8x8xbf16> to vector<8x8xbf16>
    %38 = vector.extract_strided_slice %4 {offsets = [0, 20], sizes = [8, 128], strides = [1, 1]} : vector<8x256xbf16> to vector<8x128xbf16>
    %cst_33 = arith.constant dense<0.000000e+00> : vector<8x128xf32>
    %39 = tpu.matmul %37, %38, %cst_33 {dimension_numbers = #tpu.dot_dimension_numbers<[1], [0], [0], [1], [0, 0, 1, 1], [], []>} : vector<8x8xbf16>, vector<8x128xbf16>, vector<8x128xf32> -> vector<8x128xf32>
    %40 = arith.addf %35, %39 : vector<8x128xf32>
    %c0_34 = arith.constant 0 : index
    %c7 = arith.constant 7 : index
    %c0_35 = arith.constant 0 : index
    %c0_36 = arith.constant 0 : index
    %41 = vector.load %arg4[%c0_34, %c7, %c0_35, %c0_36] : memref<1x9x8x8xbf16, #tpu.memory_space<vmem>>, vector<1x1x8x8xbf16>
    %42 = vector.shape_cast %41 : vector<1x1x8x8xbf16> to vector<8x8xbf16>
    %43 = vector.extract_strided_slice %4 {offsets = [0, 21], sizes = [8, 128], strides = [1, 1]} : vector<8x256xbf16> to vector<8x128xbf16>
    %cst_37 = arith.constant dense<0.000000e+00> : vector<8x128xf32>
    %44 = tpu.matmul %42, %43, %cst_37 {dimension_numbers = #tpu.dot_dimension_numbers<[1], [0], [0], [1], [0, 0, 1, 1], [], []>} : vector<8x8xbf16>, vector<8x128xbf16>, vector<8x128xf32> -> vector<8x128xf32>
    %45 = arith.addf %40, %44 : vector<8x128xf32>
    %c0_38 = arith.constant 0 : index
    %c8 = arith.constant 8 : index
    %c0_39 = arith.constant 0 : index
    %c0_40 = arith.constant 0 : index
    %46 = vector.load %arg4[%c0_38, %c8, %c0_39, %c0_40] : memref<1x9x8x8xbf16, #tpu.memory_space<vmem>>, vector<1x1x8x8xbf16>
    %47 = vector.shape_cast %46 : vector<1x1x8x8xbf16> to vector<8x8xbf16>
    %48 = vector.extract_strided_slice %4 {offsets = [0, 22], sizes = [8, 128], strides = [1, 1]} : vector<8x256xbf16> to vector<8x128xbf16>
    %cst_41 = arith.constant dense<0.000000e+00> : vector<8x128xf32>
    %49 = tpu.matmul %47, %48, %cst_41 {dimension_numbers = #tpu.dot_dimension_numbers<[1], [0], [0], [1], [0, 0, 1, 1], [], []>} : vector<8x8xbf16>, vector<8x128xbf16>, vector<8x128xf32> -> vector<8x128xf32>
    %50 = arith.addf %45, %49 : vector<8x128xf32>
    %c0_42 = arith.constant 0 : index
    %c0_43 = arith.constant 0 : index
    %51 = vector.load %arg6[%c0_42, %c0_43] : memref<8x128xf32, #tpu.memory_space<vmem>>, vector<8x128xf32>
    tpu.vector_store %arg6[%c0_42, %c0_43], %50 {strides = array<i32>} : memref<8x128xf32, #tpu.memory_space<vmem>>, vector<8x128xf32>,
    %c2_i32 = arith.constant 2 : i32
    %52 = arith.cmpi eq, %arg2, %c2_i32 : i32
    %53 = arith.extui %52 : i1 to i32
    %c0_i32_44 = arith.constant 0 : i32
    %54 = arith.cmpi ne, %53, %c0_i32_44 : i32
    scf.if %54 {
      %c0_45 = arith.constant 0 : index
      %c0_46 = arith.constant 0 : index
      %55 = vector.load %arg6[%c0_45, %c0_46] : memref<8x128xf32, #tpu.memory_space<vmem>>, vector<8x128xf32>
      %56 = arith.truncf %55 : vector<8x128xf32> to vector<8x128xbf16>
      %c0_47 = arith.constant 0 : index
      %c0_48 = arith.constant 0 : index
      %c0_49 = arith.constant 0 : index
      %57 = vector.load %arg5[%c0_47, %c0_48, %c0_49] : memref<1x8x128xbf16, #tpu.memory_space<vmem>>, vector<1x8x128xbf16>
      %58 = vector.shape_cast %57 : vector<1x8x128xbf16> to vector<8x128xbf16>
      %59 = vector.shape_cast %56 : vector<8x128xbf16> to vector<1x8x128xbf16>
      tpu.vector_store %arg5[%c0_47, %c0_48, %c0_49], %59 {strides = array<i32>} : memref<1x8x128xbf16, #tpu.memory_space<vmem>>, vector<1x8x128xbf16>,
    } else {
    }
    return
  }
  func.func @transform_0(%arg0: i32, %arg1: i32, %arg2: i32) -> (i32, i32, i32, i32) {
    %c1_i32 = arith.constant 1 : i32
    %0 = arith.muli %c1_i32, %arg1 : i32
    %1 = arith.addi %0, %arg2 : i32
    %c0_i32 = arith.constant 0 : i32
    %c0_i32_0 = arith.constant 0 : i32
    %c0_i32_1 = arith.constant 0 : i32
    return %arg0, %1, %c0_i32, %c0_i32_0 : i32, i32, i32, i32
  }
  func.func @transform_1(%arg0: i32, %arg1: i32, %arg2: i32) -> (i32, i32, i32, i32) {
    %c0_i32 = arith.constant 0 : i32
    %c0_i32_0 = arith.constant 0 : i32
    %c0_i32_1 = arith.constant 0 : i32
    %c0_i32_2 = arith.constant 0 : i32
    return %arg2, %c0_i32, %c0_i32_0, %c0_i32_1 : i32, i32, i32, i32
  }
  func.func @transform_2(%arg0: i32, %arg1: i32, %arg2: i32) -> (i32, i32, i32) {
    %c0_i32 = arith.constant 0 : i32
    %c0_i32_0 = arith.constant 0 : i32
    return %arg0, %c0_i32, %arg1 : i32, i32, i32
  }
}

module attributes {stable_mosaic.version = 11 : i64} {
  func.func @kernel(%arg0: i32, %arg1: i32, %arg2: memref<1x1x8x128xbf16, #tpu.memory_space<vmem>>, %arg3: memref<1x8x1xf32, #tpu.memory_space<vmem>>, %arg4: memref<1x8x1xf32, #tpu.memory_space<vmem>>, %arg5: memref<1x1x8x128xf32, #tpu.memory_space<vmem>>) attributes {dimension_semantics = [#tpu.dimension_semantics<parallel>, #tpu.dimension_semantics<parallel>], iteration_bounds = array<i64: 2, 2>, scalar_prefetch = 0 : i64, scratch_operands = 0 : i64, tpu.core_type = #tpu.core_type<tc>, window_params = [{transform_indices = @transform_0, window_bounds = array<i64: 1, 1, 8, 128>}, {transform_indices = @transform_1, window_bounds = array<i64: 1, 8, 1>}, {transform_indices = @transform_2, window_bounds = array<i64: 1, 8, 1>}, {transform_indices = @transform_3, window_bounds = array<i64: 1, 1, 8, 128>}]} {
    %c0 = arith.constant 0 : index
    %c0_0 = arith.constant 0 : index
    %c0_1 = arith.constant 0 : index
    %c0_2 = arith.constant 0 : index
    %0 = vector.load %arg2[%c0, %c0_0, %c0_1, %c0_2] : memref<1x1x8x128xbf16, #tpu.memory_space<vmem>>, vector<1x1x8x128xbf16>
    %1 = vector.shape_cast %0 : vector<1x1x8x128xbf16> to vector<8x128xbf16>
    %2 = arith.extf %1 : vector<8x128xbf16> to vector<8x128xf32>
    %3 = vector.shape_cast %2 : vector<8x128xf32> to vector<1x8x128xf32>
    %cst = arith.constant dense<0.000000e+00> : vector<1xf32>
    %4 = vector.multi_reduction <add>, %3, %cst [1, 2] : vector<1x8x128xf32> to vector<1xf32>
    %5 = vector.shape_cast %4 : vector<1xf32> to vector<1x1x1xf32>
    %6 = vector.extract %5[0, 0, 0] : f32 from vector<1x1x1xf32>
    %7 = vector.broadcast %6 : f32 to vector<1x1xf32>
    %8 = arith.mulf %2, %2 : vector<8x128xf32>
    %9 = vector.shape_cast %8 : vector<8x128xf32> to vector<1x8x128xf32>
    %cst_3 = arith.constant dense<0.000000e+00> : vector<1xf32>
    %10 = vector.multi_reduction <add>, %9, %cst_3 [1, 2] : vector<1x8x128xf32> to vector<1xf32>
    %11 = vector.shape_cast %10 : vector<1xf32> to vector<1x1x1xf32>
    %12 = vector.extract %11[0, 0, 0] : f32 from vector<1x1x1xf32>
    %13 = vector.broadcast %12 : f32 to vector<1x1xf32>
    %cst_4 = arith.constant 1.024000e+03 : f32
    %14 = vector.broadcast %cst_4 : f32 to vector<1x1xf32>
    %15 = arith.divf %7, %14 : vector<1x1xf32>
    %cst_5 = arith.constant 1.024000e+03 : f32
    %16 = vector.broadcast %cst_5 : f32 to vector<1x1xf32>
    %17 = arith.divf %13, %16 : vector<1x1xf32>
    %18 = arith.mulf %15, %15 : vector<1x1xf32>
    %19 = arith.subf %17, %18 : vector<1x1xf32>
    %cst_6 = arith.constant 0.000000e+00 : f32
    %20 = vector.broadcast %cst_6 : f32 to vector<1x1xf32>
    %21 = arith.maximumf %19, %20 : vector<1x1xf32>
    %cst_7 = arith.constant 9.99999974E-6 : f32
    %22 = vector.broadcast %cst_7 : f32 to vector<1x1xf32>
    %23 = arith.addf %21, %22 : vector<1x1xf32>
    %24 = math.rsqrt %23 : vector<1x1xf32>
    %25 = vector.broadcast %15 : vector<1x1xf32> to vector<8x128xf32>
    %26 = arith.subf %2, %25 : vector<8x128xf32>
    %27 = vector.broadcast %24 : vector<1x1xf32> to vector<8x128xf32>
    %28 = arith.mulf %26, %27 : vector<8x128xf32>
    %c0_8 = arith.constant 0 : index
    %c0_9 = arith.constant 0 : index
    %c0_10 = arith.constant 0 : index
    %29 = vector.load %arg3[%c0_8, %c0_9, %c0_10] : memref<1x8x1xf32, #tpu.memory_space<vmem>>, vector<1x8x1xf32>
    %30 = vector.shape_cast %29 : vector<1x8x1xf32> to vector<8x1xf32>
    %31 = vector.broadcast %30 : vector<8x1xf32> to vector<8x128xf32>
    %32 = arith.mulf %28, %31 : vector<8x128xf32>
    %c0_11 = arith.constant 0 : index
    %c0_12 = arith.constant 0 : index
    %c0_13 = arith.constant 0 : index
    %33 = vector.load %arg4[%c0_11, %c0_12, %c0_13] : memref<1x8x1xf32, #tpu.memory_space<vmem>>, vector<1x8x1xf32>
    %34 = vector.shape_cast %33 : vector<1x8x1xf32> to vector<8x1xf32>
    %35 = vector.broadcast %34 : vector<8x1xf32> to vector<8x128xf32>
    %36 = arith.addf %32, %35 : vector<8x128xf32>
    %cst_14 = arith.constant 0.000000e+00 : f32
    %37 = vector.broadcast %cst_14 : f32 to vector<8x128xf32>
    %38 = arith.maximumf %36, %37 : vector<8x128xf32>
    %c0_15 = arith.constant 0 : index
    %c0_16 = arith.constant 0 : index
    %c0_17 = arith.constant 0 : index
    %c0_18 = arith.constant 0 : index
    %39 = vector.load %arg5[%c0_15, %c0_16, %c0_17, %c0_18] : memref<1x1x8x128xf32, #tpu.memory_space<vmem>>, vector<1x1x8x128xf32>
    %40 = vector.shape_cast %39 : vector<1x1x8x128xf32> to vector<8x128xf32>
    %41 = vector.shape_cast %38 : vector<8x128xf32> to vector<1x1x8x128xf32>
    tpu.vector_store %arg5[%c0_15, %c0_16, %c0_17, %c0_18], %41 {strides = array<i32>} : memref<1x1x8x128xf32, #tpu.memory_space<vmem>>, vector<1x1x8x128xf32>,
    return
  }
  func.func @transform_0(%arg0: i32, %arg1: i32) -> (i32, i32, i32, i32) {
    %c0_i32 = arith.constant 0 : i32
    %c0_i32_0 = arith.constant 0 : i32
    %c0_i32_1 = arith.constant 0 : i32
    return %arg0, %arg1, %c0_i32, %c0_i32_0 : i32, i32, i32, i32
  }
  func.func @transform_1(%arg0: i32, %arg1: i32) -> (i32, i32, i32) {
    %c0_i32 = arith.constant 0 : i32
    %c0_i32_0 = arith.constant 0 : i32
    %c0_i32_1 = arith.constant 0 : i32
    return %arg1, %c0_i32, %c0_i32_0 : i32, i32, i32
  }
  func.func @transform_2(%arg0: i32, %arg1: i32) -> (i32, i32, i32) {
    %c0_i32 = arith.constant 0 : i32
    %c0_i32_0 = arith.constant 0 : i32
    %c0_i32_1 = arith.constant 0 : i32
    return %arg1, %c0_i32, %c0_i32_0 : i32, i32, i32
  }
  func.func @transform_3(%arg0: i32, %arg1: i32) -> (i32, i32, i32, i32) {
    %c0_i32 = arith.constant 0 : i32
    %c0_i32_0 = arith.constant 0 : i32
    %c0_i32_1 = arith.constant 0 : i32
    return %arg0, %arg1, %c0_i32, %c0_i32_0 : i32, i32, i32, i32
  }
}

module attributes {stable_mosaic.version = 11 : i64} {
  func.func @kernel(%arg0: i32, %arg1: i32, %arg2: i32, %arg3: memref<1x1x8x256xbf16, #tpu.memory_space<vmem>>, %arg4: memref<1x9x8x8xbf16, #tpu.memory_space<vmem>>, %arg5: memref<1x8x128xbf16, #tpu.memory_space<vmem>>, %arg6: memref<8x128xf32, #tpu.memory_space<vmem>>) attributes {dimension_semantics = [#tpu.dimension_semantics<parallel>, #tpu.dimension_semantics<parallel>, #tpu.dimension_semantics<arbitrary>], iteration_bounds = array<i64: 2, 2, 3>, scalar_prefetch = 0 : i64, scratch_operands = 1 : i64, tpu.core_type = #tpu.core_type<tc>, window_params = [{transform_indices = @transform_0, window_bounds = array<i64: 1, 1, 8, 256>}, {transform_indices = @transform_1, window_bounds = array<i64: 1, 9, 8, 8>}, {transform_indices = @transform_2, window_bounds = array<i64: 1, 8, 128>}]} {
    %c0_i32 = arith.constant 0 : i32
    %0 = arith.cmpi eq, %arg2, %c0_i32 : i32
    %1 = arith.extui %0 : i1 to i32
    %c0_i32_0 = arith.constant 0 : i32
    %2 = arith.cmpi ne, %1, %c0_i32_0 : i32
    scf.if %2 {
      %cst_45 = arith.constant 0.000000e+00 : f32
      %55 = vector.broadcast %cst_45 : f32 to vector<8x128xf32>
      %c0_46 = arith.constant 0 : index
      %c0_47 = arith.constant 0 : index
      %56 = vector.load %arg6[%c0_46, %c0_47] : memref<8x128xf32, #tpu.memory_space<vmem>>, vector<8x128xf32>
      tpu.vector_store %arg6[%c0_46, %c0_47], %55 {strides = array<i32>} : memref<8x128xf32, #tpu.memory_space<vmem>>, vector<8x128xf32>,
    } else {
    }
    %c0 = arith.constant 0 : index
    %c0_1 = arith.constant 0 : index
    %c0_2 = arith.constant 0 : index
    %c0_3 = arith.constant 0 : index
    %3 = vector.load %arg3[%c0, %c0_1, %c0_2, %c0_3] : memref<1x1x8x256xbf16, #tpu.memory_space<vmem>>, vector<1x1x8x256xbf16>
    %4 = vector.shape_cast %3 : vector<1x1x8x256xbf16> to vector<8x256xbf16>
    %c0_4 = arith.constant 0 : index
    %c0_5 = arith.constant 0 : index
    %5 = vector.load %arg6[%c0_4, %c0_5] : memref<8x128xf32, #tpu.memory_space<vmem>>, vector<8x128xf32>
    %c0_6 = arith.constant 0 : index
    %c0_7 = arith.constant 0 : index
    %c0_8 = arith.constant 0 : index
    %c0_9 = arith.constant 0 : index
    %6 = vector.load %arg4[%c0_6, %c0_7, %c0_8, %c0_9] : memref<1x9x8x8xbf16, #tpu.memory_space<vmem>>, vector<1x1x8x8xbf16>
    %7 = vector.shape_cast %6 : vector<1x1x8x8xbf16> to vector<8x8xbf16>
    %8 = vector.extract_strided_slice %4 {offsets = [0, 0], sizes = [8, 128], strides = [1, 1]} : vector<8x256xbf16> to vector<8x128xbf16>
    %cst = arith.constant dense<0.000000e+00> : vector<8x128xf32>
    %9 = tpu.matmul %7, %8, %cst {dimension_numbers = #tpu.dot_dimension_numbers<[1], [0], [0], [1], [0, 0, 1, 1], [], []>} : vector<8x8xbf16>, vector<8x128xbf16>, vector<8x128xf32> -> vector<8x128xf32>
    %10 = arith.addf %5, %9 : vector<8x128xf32>
    %c0_10 = arith.constant 0 : index
    %c1 = arith.constant 1 : index
    %c0_11 = arith.constant 0 : index
    %c0_12 = arith.constant 0 : index
    %11 = vector.load %arg4[%c0_10, %c1, %c0_11, %c0_12] : memref<1x9x8x8xbf16, #tpu.memory_space<vmem>>, vector<1x1x8x8xbf16>
    %12 = vector.shape_cast %11 : vector<1x1x8x8xbf16> to vector<8x8xbf16>
    %13 = vector.extract_strided_slice %4 {offsets = [0, 1], sizes = [8, 128], strides = [1, 1]} : vector<8x256xbf16> to vector<8x128xbf16>
    %cst_13 = arith.constant dense<0.000000e+00> : vector<8x128xf32>
    %14 = tpu.matmul %12, %13, %cst_13 {dimension_numbers = #tpu.dot_dimension_numbers<[1], [0], [0], [1], [0, 0, 1, 1], [], []>} : vector<8x8xbf16>, vector<8x128xbf16>, vector<8x128xf32> -> vector<8x128xf32>
    %15 = arith.addf %10, %14 : vector<8x128xf32>
    %c0_14 = arith.constant 0 : index
    %c2 = arith.constant 2 : index
    %c0_15 = arith.constant 0 : index
    %c0_16 = arith.constant 0 : index
    %16 = vector.load %arg4[%c0_14, %c2, %c0_15, %c0_16] : memref<1x9x8x8xbf16, #tpu.memory_space<vmem>>, vector<1x1x8x8xbf16>
    %17 = vector.shape_cast %16 : vector<1x1x8x8xbf16> to vector<8x8xbf16>
    %18 = vector.extract_strided_slice %4 {offsets = [0, 2], sizes = [8, 128], strides = [1, 1]} : vector<8x256xbf16> to vector<8x128xbf16>
    %cst_17 = arith.constant dense<0.000000e+00> : vector<8x128xf32>
    %19 = tpu.matmul %17, %18, %cst_17 {dimension_numbers = #tpu.dot_dimension_numbers<[1], [0], [0], [1], [0, 0, 1, 1], [], []>} : vector<8x8xbf16>, vector<8x128xbf16>, vector<8x128xf32> -> vector<8x128xf32>
    %20 = arith.addf %15, %19 : vector<8x128xf32>
    %c0_18 = arith.constant 0 : index
    %c3 = arith.constant 3 : index
    %c0_19 = arith.constant 0 : index
    %c0_20 = arith.constant 0 : index
    %21 = vector.load %arg4[%c0_18, %c3, %c0_19, %c0_20] : memref<1x9x8x8xbf16, #tpu.memory_space<vmem>>, vector<1x1x8x8xbf16>
    %22 = vector.shape_cast %21 : vector<1x1x8x8xbf16> to vector<8x8xbf16>
    %23 = vector.extract_strided_slice %4 {offsets = [0, 10], sizes = [8, 128], strides = [1, 1]} : vector<8x256xbf16> to vector<8x128xbf16>
    %cst_21 = arith.constant dense<0.000000e+00> : vector<8x128xf32>
    %24 = tpu.matmul %22, %23, %cst_21 {dimension_numbers = #tpu.dot_dimension_numbers<[1], [0], [0], [1], [0, 0, 1, 1], [], []>} : vector<8x8xbf16>, vector<8x128xbf16>, vector<8x128xf32> -> vector<8x128xf32>
    %25 = arith.addf %20, %24 : vector<8x128xf32>
    %c0_22 = arith.constant 0 : index
    %c4 = arith.constant 4 : index
    %c0_23 = arith.constant 0 : index
    %c0_24 = arith.constant 0 : index
    %26 = vector.load %arg4[%c0_22, %c4, %c0_23, %c0_24] : memref<1x9x8x8xbf16, #tpu.memory_space<vmem>>, vector<1x1x8x8xbf16>
    %27 = vector.shape_cast %26 : vector<1x1x8x8xbf16> to vector<8x8xbf16>
    %28 = vector.extract_strided_slice %4 {offsets = [0, 11], sizes = [8, 128], strides = [1, 1]} : vector<8x256xbf16> to vector<8x128xbf16>
    %cst_25 = arith.constant dense<0.000000e+00> : vector<8x128xf32>
    %29 = tpu.matmul %27, %28, %cst_25 {dimension_numbers = #tpu.dot_dimension_numbers<[1], [0], [0], [1], [0, 0, 1, 1], [], []>} : vector<8x8xbf16>, vector<8x128xbf16>, vector<8x128xf32> -> vector<8x128xf32>
    %30 = arith.addf %25, %29 : vector<8x128xf32>
    %c0_26 = arith.constant 0 : index
    %c5 = arith.constant 5 : index
    %c0_27 = arith.constant 0 : index
    %c0_28 = arith.constant 0 : index
    %31 = vector.load %arg4[%c0_26, %c5, %c0_27, %c0_28] : memref<1x9x8x8xbf16, #tpu.memory_space<vmem>>, vector<1x1x8x8xbf16>
    %32 = vector.shape_cast %31 : vector<1x1x8x8xbf16> to vector<8x8xbf16>
    %33 = vector.extract_strided_slice %4 {offsets = [0, 12], sizes = [8, 128], strides = [1, 1]} : vector<8x256xbf16> to vector<8x128xbf16>
    %cst_29 = arith.constant dense<0.000000e+00> : vector<8x128xf32>
    %34 = tpu.matmul %32, %33, %cst_29 {dimension_numbers = #tpu.dot_dimension_numbers<[1], [0], [0], [1], [0, 0, 1, 1], [], []>} : vector<8x8xbf16>, vector<8x128xbf16>, vector<8x128xf32> -> vector<8x128xf32>
    %35 = arith.addf %30, %34 : vector<8x128xf32>
    %c0_30 = arith.constant 0 : index
    %c6 = arith.constant 6 : index
    %c0_31 = arith.constant 0 : index
    %c0_32 = arith.constant 0 : index
    %36 = vector.load %arg4[%c0_30, %c6, %c0_31, %c0_32] : memref<1x9x8x8xbf16, #tpu.memory_space<vmem>>, vector<1x1x8x8xbf16>
    %37 = vector.shape_cast %36 : vector<1x1x8x8xbf16> to vector<8x8xbf16>
    %38 = vector.extract_strided_slice %4 {offsets = [0, 20], sizes = [8, 128], strides = [1, 1]} : vector<8x256xbf16> to vector<8x128xbf16>
    %cst_33 = arith.constant dense<0.000000e+00> : vector<8x128xf32>
    %39 = tpu.matmul %37, %38, %cst_33 {dimension_numbers = #tpu.dot_dimension_numbers<[1], [0], [0], [1], [0, 0, 1, 1], [], []>} : vector<8x8xbf16>, vector<8x128xbf16>, vector<8x128xf32> -> vector<8x128xf32>
    %40 = arith.addf %35, %39 : vector<8x128xf32>
    %c0_34 = arith.constant 0 : index
    %c7 = arith.constant 7 : index
    %c0_35 = arith.constant 0 : index
    %c0_36 = arith.constant 0 : index
    %41 = vector.load %arg4[%c0_34, %c7, %c0_35, %c0_36] : memref<1x9x8x8xbf16, #tpu.memory_space<vmem>>, vector<1x1x8x8xbf16>
    %42 = vector.shape_cast %41 : vector<1x1x8x8xbf16> to vector<8x8xbf16>
    %43 = vector.extract_strided_slice %4 {offsets = [0, 21], sizes = [8, 128], strides = [1, 1]} : vector<8x256xbf16> to vector<8x128xbf16>
    %cst_37 = arith.constant dense<0.000000e+00> : vector<8x128xf32>
    %44 = tpu.matmul %42, %43, %cst_37 {dimension_numbers = #tpu.dot_dimension_numbers<[1], [0], [0], [1], [0, 0, 1, 1], [], []>} : vector<8x8xbf16>, vector<8x128xbf16>, vector<8x128xf32> -> vector<8x128xf32>
    %45 = arith.addf %40, %44 : vector<8x128xf32>
    %c0_38 = arith.constant 0 : index
    %c8 = arith.constant 8 : index
    %c0_39 = arith.constant 0 : index
    %c0_40 = arith.constant 0 : index
    %46 = vector.load %arg4[%c0_38, %c8, %c0_39, %c0_40] : memref<1x9x8x8xbf16, #tpu.memory_space<vmem>>, vector<1x1x8x8xbf16>
    %47 = vector.shape_cast %46 : vector<1x1x8x8xbf16> to vector<8x8xbf16>
    %48 = vector.extract_strided_slice %4 {offsets = [0, 22], sizes = [8, 128], strides = [1, 1]} : vector<8x256xbf16> to vector<8x128xbf16>
    %cst_41 = arith.constant dense<0.000000e+00> : vector<8x128xf32>
    %49 = tpu.matmul %47, %48, %cst_41 {dimension_numbers = #tpu.dot_dimension_numbers<[1], [0], [0], [1], [0, 0, 1, 1], [], []>} : vector<8x8xbf16>, vector<8x128xbf16>, vector<8x128xf32> -> vector<8x128xf32>
    %50 = arith.addf %45, %49 : vector<8x128xf32>
    %c0_42 = arith.constant 0 : index
    %c0_43 = arith.constant 0 : index
    %51 = vector.load %arg6[%c0_42, %c0_43] : memref<8x128xf32, #tpu.memory_space<vmem>>, vector<8x128xf32>
    tpu.vector_store %arg6[%c0_42, %c0_43], %50 {strides = array<i32>} : memref<8x128xf32, #tpu.memory_space<vmem>>, vector<8x128xf32>,
    %c2_i32 = arith.constant 2 : i32
    %52 = arith.cmpi eq, %arg2, %c2_i32 : i32
    %53 = arith.extui %52 : i1 to i32
    %c0_i32_44 = arith.constant 0 : i32
    %54 = arith.cmpi ne, %53, %c0_i32_44 : i32
    scf.if %54 {
      %c0_45 = arith.constant 0 : index
      %c0_46 = arith.constant 0 : index
      %55 = vector.load %arg6[%c0_45, %c0_46] : memref<8x128xf32, #tpu.memory_space<vmem>>, vector<8x128xf32>
      %56 = arith.truncf %55 : vector<8x128xf32> to vector<8x128xbf16>
      %c0_47 = arith.constant 0 : index
      %c0_48 = arith.constant 0 : index
      %c0_49 = arith.constant 0 : index
      %57 = vector.load %arg5[%c0_47, %c0_48, %c0_49] : memref<1x8x128xbf16, #tpu.memory_space<vmem>>, vector<1x8x128xbf16>
      %58 = vector.shape_cast %57 : vector<1x8x128xbf16> to vector<8x128xbf16>
      %59 = vector.shape_cast %56 : vector<8x128xbf16> to vector<1x8x128xbf16>
      tpu.vector_store %arg5[%c0_47, %c0_48, %c0_49], %59 {strides = array<i32>} : memref<1x8x128xbf16, #tpu.memory_space<vmem>>, vector<1x8x128xbf16>,
    } else {
    }
    return
  }
  func.func @transform_0(%arg0: i32, %arg1: i32, %arg2: i32) -> (i32, i32, i32, i32) {
    %c2_i32 = arith.constant 2 : i32
    %0 = arith.muli %c2_i32, %arg1 : i32
    %1 = arith.addi %0, %arg2 : i32
    %c0_i32 = arith.constant 0 : i32
    %c0_i32_0 = arith.constant 0 : i32
    %c0_i32_1 = arith.constant 0 : i32
    return %arg0, %1, %c0_i32, %c0_i32_0 : i32, i32, i32, i32
  }
  func.func @transform_1(%arg0: i32, %arg1: i32, %arg2: i32) -> (i32, i32, i32, i32) {
    %c0_i32 = arith.constant 0 : i32
    %c0_i32_0 = arith.constant 0 : i32
    %c0_i32_1 = arith.constant 0 : i32
    %c0_i32_2 = arith.constant 0 : i32
    return %arg2, %c0_i32, %c0_i32_0, %c0_i32_1 : i32, i32, i32, i32
  }
  func.func @transform_2(%arg0: i32, %arg1: i32, %arg2: i32) -> (i32, i32, i32) {
    %c0_i32 = arith.constant 0 : i32
    %c0_i32_0 = arith.constant 0 : i32
    return %arg0, %c0_i32, %arg1 : i32, i32, i32
  }
}

module attributes {stable_mosaic.version = 11 : i64} {
  func.func @kernel(%arg0: i32, %arg1: i32, %arg2: memref<1x1x4x32xbf16, #tpu.memory_space<vmem>>, %arg3: memref<1x4x1xf32, #tpu.memory_space<vmem>>, %arg4: memref<1x4x1xf32, #tpu.memory_space<vmem>>, %arg5: memref<1x1x4x32xbf16, #tpu.memory_space<vmem>>) attributes {dimension_semantics = [#tpu.dimension_semantics<parallel>, #tpu.dimension_semantics<parallel>], iteration_bounds = array<i64: 2, 2>, scalar_prefetch = 0 : i64, scratch_operands = 0 : i64, tpu.core_type = #tpu.core_type<tc>, window_params = [{transform_indices = @transform_0, window_bounds = array<i64: 1, 1, 4, 32>}, {transform_indices = @transform_1, window_bounds = array<i64: 1, 4, 1>}, {transform_indices = @transform_2, window_bounds = array<i64: 1, 4, 1>}, {transform_indices = @transform_3, window_bounds = array<i64: 1, 1, 4, 32>}]} {
    %c0 = arith.constant 0 : index
    %c0_0 = arith.constant 0 : index
    %c0_1 = arith.constant 0 : index
    %c0_2 = arith.constant 0 : index
    %0 = vector.load %arg2[%c0, %c0_0, %c0_1, %c0_2] : memref<1x1x4x32xbf16, #tpu.memory_space<vmem>>, vector<1x1x4x32xbf16>
    %1 = vector.shape_cast %0 : vector<1x1x4x32xbf16> to vector<4x32xbf16>
    %2 = arith.extf %1 : vector<4x32xbf16> to vector<4x32xf32>
    %3 = vector.shape_cast %2 : vector<4x32xf32> to vector<1x4x32xf32>
    %cst = arith.constant dense<0.000000e+00> : vector<1xf32>
    %4 = vector.multi_reduction <add>, %3, %cst [1, 2] : vector<1x4x32xf32> to vector<1xf32>
    %5 = vector.shape_cast %4 : vector<1xf32> to vector<1x1x1xf32>
    %6 = vector.extract %5[0, 0, 0] : f32 from vector<1x1x1xf32>
    %7 = vector.broadcast %6 : f32 to vector<1x1xf32>
    %8 = arith.mulf %2, %2 : vector<4x32xf32>
    %9 = vector.shape_cast %8 : vector<4x32xf32> to vector<1x4x32xf32>
    %cst_3 = arith.constant dense<0.000000e+00> : vector<1xf32>
    %10 = vector.multi_reduction <add>, %9, %cst_3 [1, 2] : vector<1x4x32xf32> to vector<1xf32>
    %11 = vector.shape_cast %10 : vector<1xf32> to vector<1x1x1xf32>
    %12 = vector.extract %11[0, 0, 0] : f32 from vector<1x1x1xf32>
    %13 = vector.broadcast %12 : f32 to vector<1x1xf32>
    %cst_4 = arith.constant 1.280000e+02 : f32
    %14 = vector.broadcast %cst_4 : f32 to vector<1x1xf32>
    %15 = arith.divf %7, %14 : vector<1x1xf32>
    %cst_5 = arith.constant 1.280000e+02 : f32
    %16 = vector.broadcast %cst_5 : f32 to vector<1x1xf32>
    %17 = arith.divf %13, %16 : vector<1x1xf32>
    %18 = arith.mulf %15, %15 : vector<1x1xf32>
    %19 = arith.subf %17, %18 : vector<1x1xf32>
    %cst_6 = arith.constant 0.000000e+00 : f32
    %20 = vector.broadcast %cst_6 : f32 to vector<1x1xf32>
    %21 = arith.maximumf %19, %20 : vector<1x1xf32>
    %cst_7 = arith.constant 9.99999974E-6 : f32
    %22 = vector.broadcast %cst_7 : f32 to vector<1x1xf32>
    %23 = arith.addf %21, %22 : vector<1x1xf32>
    %24 = math.rsqrt %23 : vector<1x1xf32>
    %25 = vector.broadcast %15 : vector<1x1xf32> to vector<4x32xf32>
    %26 = arith.subf %2, %25 : vector<4x32xf32>
    %27 = vector.broadcast %24 : vector<1x1xf32> to vector<4x32xf32>
    %28 = arith.mulf %26, %27 : vector<4x32xf32>
    %c0_8 = arith.constant 0 : index
    %c0_9 = arith.constant 0 : index
    %c0_10 = arith.constant 0 : index
    %29 = vector.load %arg3[%c0_8, %c0_9, %c0_10] : memref<1x4x1xf32, #tpu.memory_space<vmem>>, vector<1x4x1xf32>
    %30 = vector.shape_cast %29 : vector<1x4x1xf32> to vector<4x1xf32>
    %31 = vector.broadcast %30 : vector<4x1xf32> to vector<4x32xf32>
    %32 = arith.mulf %28, %31 : vector<4x32xf32>
    %c0_11 = arith.constant 0 : index
    %c0_12 = arith.constant 0 : index
    %c0_13 = arith.constant 0 : index
    %33 = vector.load %arg4[%c0_11, %c0_12, %c0_13] : memref<1x4x1xf32, #tpu.memory_space<vmem>>, vector<1x4x1xf32>
    %34 = vector.shape_cast %33 : vector<1x4x1xf32> to vector<4x1xf32>
    %35 = vector.broadcast %34 : vector<4x1xf32> to vector<4x32xf32>
    %36 = arith.addf %32, %35 : vector<4x32xf32>
    %cst_14 = arith.constant 0.000000e+00 : f32
    %37 = vector.broadcast %cst_14 : f32 to vector<4x32xf32>
    %38 = arith.maximumf %36, %37 : vector<4x32xf32>
    %39 = arith.truncf %38 : vector<4x32xf32> to vector<4x32xbf16>
    %c0_15 = arith.constant 0 : index
    %c0_16 = arith.constant 0 : index
    %c0_17 = arith.constant 0 : index
    %c0_18 = arith.constant 0 : index
    %40 = vector.load %arg5[%c0_15, %c0_16, %c0_17, %c0_18] : memref<1x1x4x32xbf16, #tpu.memory_space<vmem>>, vector<1x1x4x32xbf16>
    %41 = vector.shape_cast %40 : vector<1x1x4x32xbf16> to vector<4x32xbf16>
    %42 = vector.shape_cast %39 : vector<4x32xbf16> to vector<1x1x4x32xbf16>
    tpu.vector_store %arg5[%c0_15, %c0_16, %c0_17, %c0_18], %42 {strides = array<i32>} : memref<1x1x4x32xbf16, #tpu.memory_space<vmem>>, vector<1x1x4x32xbf16>,
    return
  }
  func.func @transform_0(%arg0: i32, %arg1: i32) -> (i32, i32, i32, i32) {
    %c0_i32 = arith.constant 0 : i32
    %c0_i32_0 = arith.constant 0 : i32
    %c0_i32_1 = arith.constant 0 : i32
    return %arg0, %arg1, %c0_i32, %c0_i32_0 : i32, i32, i32, i32
  }
  func.func @transform_1(%arg0: i32, %arg1: i32) -> (i32, i32, i32) {
    %c0_i32 = arith.constant 0 : i32
    %c0_i32_0 = arith.constant 0 : i32
    %c0_i32_1 = arith.constant 0 : i32
    return %arg1, %c0_i32, %c0_i32_0 : i32, i32, i32
  }
  func.func @transform_2(%arg0: i32, %arg1: i32) -> (i32, i32, i32) {
    %c0_i32 = arith.constant 0 : i32
    %c0_i32_0 = arith.constant 0 : i32
    %c0_i32_1 = arith.constant 0 : i32
    return %arg1, %c0_i32, %c0_i32_0 : i32, i32, i32
  }
  func.func @transform_3(%arg0: i32, %arg1: i32) -> (i32, i32, i32, i32) {
    %c0_i32 = arith.constant 0 : i32
    %c0_i32_0 = arith.constant 0 : i32
    %c0_i32_1 = arith.constant 0 : i32
    return %arg0, %arg1, %c0_i32, %c0_i32_0 : i32, i32, i32, i32
  }
}

module attributes {stable_mosaic.version = 11 : i64} {
  func.func @kernel(%arg0: i32, %arg1: i32, %arg2: i32, %arg3: memref<1x1x8x256xbf16, #tpu.memory_space<vmem>>, %arg4: memref<1x9x8x8xbf16, #tpu.memory_space<vmem>>, %arg5: memref<1x8x128xbf16, #tpu.memory_space<vmem>>, %arg6: memref<8x128xf32, #tpu.memory_space<vmem>>) attributes {dimension_semantics = [#tpu.dimension_semantics<parallel>, #tpu.dimension_semantics<parallel>, #tpu.dimension_semantics<arbitrary>], iteration_bounds = array<i64: 2, 2, 3>, scalar_prefetch = 0 : i64, scratch_operands = 1 : i64, tpu.core_type = #tpu.core_type<tc>, window_params = [{transform_indices = @transform_0, window_bounds = array<i64: 1, 1, 8, 256>}, {transform_indices = @transform_1, window_bounds = array<i64: 1, 9, 8, 8>}, {transform_indices = @transform_2, window_bounds = array<i64: 1, 8, 128>}]} {
    %c0_i32 = arith.constant 0 : i32
    %0 = arith.cmpi eq, %arg2, %c0_i32 : i32
    %1 = arith.extui %0 : i1 to i32
    %c0_i32_0 = arith.constant 0 : i32
    %2 = arith.cmpi ne, %1, %c0_i32_0 : i32
    scf.if %2 {
      %cst_45 = arith.constant 0.000000e+00 : f32
      %55 = vector.broadcast %cst_45 : f32 to vector<8x128xf32>
      %c0_46 = arith.constant 0 : index
      %c0_47 = arith.constant 0 : index
      %56 = vector.load %arg6[%c0_46, %c0_47] : memref<8x128xf32, #tpu.memory_space<vmem>>, vector<8x128xf32>
      tpu.vector_store %arg6[%c0_46, %c0_47], %55 {strides = array<i32>} : memref<8x128xf32, #tpu.memory_space<vmem>>, vector<8x128xf32>,
    } else {
    }
    %c0 = arith.constant 0 : index
    %c0_1 = arith.constant 0 : index
    %c0_2 = arith.constant 0 : index
    %c0_3 = arith.constant 0 : index
    %3 = vector.load %arg3[%c0, %c0_1, %c0_2, %c0_3] : memref<1x1x8x256xbf16, #tpu.memory_space<vmem>>, vector<1x1x8x256xbf16>
    %4 = vector.shape_cast %3 : vector<1x1x8x256xbf16> to vector<8x256xbf16>
    %c0_4 = arith.constant 0 : index
    %c0_5 = arith.constant 0 : index
    %5 = vector.load %arg6[%c0_4, %c0_5] : memref<8x128xf32, #tpu.memory_space<vmem>>, vector<8x128xf32>
    %c0_6 = arith.constant 0 : index
    %c0_7 = arith.constant 0 : index
    %c0_8 = arith.constant 0 : index
    %c0_9 = arith.constant 0 : index
    %6 = vector.load %arg4[%c0_6, %c0_7, %c0_8, %c0_9] : memref<1x9x8x8xbf16, #tpu.memory_space<vmem>>, vector<1x1x8x8xbf16>
    %7 = vector.shape_cast %6 : vector<1x1x8x8xbf16> to vector<8x8xbf16>
    %8 = vector.extract_strided_slice %4 {offsets = [0, 0], sizes = [8, 128], strides = [1, 1]} : vector<8x256xbf16> to vector<8x128xbf16>
    %cst = arith.constant dense<0.000000e+00> : vector<8x128xf32>
    %9 = tpu.matmul %7, %8, %cst {dimension_numbers = #tpu.dot_dimension_numbers<[1], [0], [0], [1], [0, 0, 1, 1], [], []>} : vector<8x8xbf16>, vector<8x128xbf16>, vector<8x128xf32> -> vector<8x128xf32>
    %10 = arith.addf %5, %9 : vector<8x128xf32>
    %c0_10 = arith.constant 0 : index
    %c1 = arith.constant 1 : index
    %c0_11 = arith.constant 0 : index
    %c0_12 = arith.constant 0 : index
    %11 = vector.load %arg4[%c0_10, %c1, %c0_11, %c0_12] : memref<1x9x8x8xbf16, #tpu.memory_space<vmem>>, vector<1x1x8x8xbf16>
    %12 = vector.shape_cast %11 : vector<1x1x8x8xbf16> to vector<8x8xbf16>
    %13 = vector.extract_strided_slice %4 {offsets = [0, 1], sizes = [8, 128], strides = [1, 1]} : vector<8x256xbf16> to vector<8x128xbf16>
    %cst_13 = arith.constant dense<0.000000e+00> : vector<8x128xf32>
    %14 = tpu.matmul %12, %13, %cst_13 {dimension_numbers = #tpu.dot_dimension_numbers<[1], [0], [0], [1], [0, 0, 1, 1], [], []>} : vector<8x8xbf16>, vector<8x128xbf16>, vector<8x128xf32> -> vector<8x128xf32>
    %15 = arith.addf %10, %14 : vector<8x128xf32>
    %c0_14 = arith.constant 0 : index
    %c2 = arith.constant 2 : index
    %c0_15 = arith.constant 0 : index
    %c0_16 = arith.constant 0 : index
    %16 = vector.load %arg4[%c0_14, %c2, %c0_15, %c0_16] : memref<1x9x8x8xbf16, #tpu.memory_space<vmem>>, vector<1x1x8x8xbf16>
    %17 = vector.shape_cast %16 : vector<1x1x8x8xbf16> to vector<8x8xbf16>
    %18 = vector.extract_strided_slice %4 {offsets = [0, 2], sizes = [8, 128], strides = [1, 1]} : vector<8x256xbf16> to vector<8x128xbf16>
    %cst_17 = arith.constant dense<0.000000e+00> : vector<8x128xf32>
    %19 = tpu.matmul %17, %18, %cst_17 {dimension_numbers = #tpu.dot_dimension_numbers<[1], [0], [0], [1], [0, 0, 1, 1], [], []>} : vector<8x8xbf16>, vector<8x128xbf16>, vector<8x128xf32> -> vector<8x128xf32>
    %20 = arith.addf %15, %19 : vector<8x128xf32>
    %c0_18 = arith.constant 0 : index
    %c3 = arith.constant 3 : index
    %c0_19 = arith.constant 0 : index
    %c0_20 = arith.constant 0 : index
    %21 = vector.load %arg4[%c0_18, %c3, %c0_19, %c0_20] : memref<1x9x8x8xbf16, #tpu.memory_space<vmem>>, vector<1x1x8x8xbf16>
    %22 = vector.shape_cast %21 : vector<1x1x8x8xbf16> to vector<8x8xbf16>
    %23 = vector.extract_strided_slice %4 {offsets = [0, 6], sizes = [8, 128], strides = [1, 1]} : vector<8x256xbf16> to vector<8x128xbf16>
    %cst_21 = arith.constant dense<0.000000e+00> : vector<8x128xf32>
    %24 = tpu.matmul %22, %23, %cst_21 {dimension_numbers = #tpu.dot_dimension_numbers<[1], [0], [0], [1], [0, 0, 1, 1], [], []>} : vector<8x8xbf16>, vector<8x128xbf16>, vector<8x128xf32> -> vector<8x128xf32>
    %25 = arith.addf %20, %24 : vector<8x128xf32>
    %c0_22 = arith.constant 0 : index
    %c4 = arith.constant 4 : index
    %c0_23 = arith.constant 0 : index
    %c0_24 = arith.constant 0 : index
    %26 = vector.load %arg4[%c0_22, %c4, %c0_23, %c0_24] : memref<1x9x8x8xbf16, #tpu.memory_space<vmem>>, vector<1x1x8x8xbf16>
    %27 = vector.shape_cast %26 : vector<1x1x8x8xbf16> to vector<8x8xbf16>
    %28 = vector.extract_strided_slice %4 {offsets = [0, 7], sizes = [8, 128], strides = [1, 1]} : vector<8x256xbf16> to vector<8x128xbf16>
    %cst_25 = arith.constant dense<0.000000e+00> : vector<8x128xf32>
    %29 = tpu.matmul %27, %28, %cst_25 {dimension_numbers = #tpu.dot_dimension_numbers<[1], [0], [0], [1], [0, 0, 1, 1], [], []>} : vector<8x8xbf16>, vector<8x128xbf16>, vector<8x128xf32> -> vector<8x128xf32>
    %30 = arith.addf %25, %29 : vector<8x128xf32>
    %c0_26 = arith.constant 0 : index
    %c5 = arith.constant 5 : index
    %c0_27 = arith.constant 0 : index
    %c0_28 = arith.constant 0 : index
    %31 = vector.load %arg4[%c0_26, %c5, %c0_27, %c0_28] : memref<1x9x8x8xbf16, #tpu.memory_space<vmem>>, vector<1x1x8x8xbf16>
    %32 = vector.shape_cast %31 : vector<1x1x8x8xbf16> to vector<8x8xbf16>
    %33 = vector.extract_strided_slice %4 {offsets = [0, 8], sizes = [8, 128], strides = [1, 1]} : vector<8x256xbf16> to vector<8x128xbf16>
    %cst_29 = arith.constant dense<0.000000e+00> : vector<8x128xf32>
    %34 = tpu.matmul %32, %33, %cst_29 {dimension_numbers = #tpu.dot_dimension_numbers<[1], [0], [0], [1], [0, 0, 1, 1], [], []>} : vector<8x8xbf16>, vector<8x128xbf16>, vector<8x128xf32> -> vector<8x128xf32>
    %35 = arith.addf %30, %34 : vector<8x128xf32>
    %c0_30 = arith.constant 0 : index
    %c6 = arith.constant 6 : index
    %c0_31 = arith.constant 0 : index
    %c0_32 = arith.constant 0 : index
    %36 = vector.load %arg4[%c0_30, %c6, %c0_31, %c0_32] : memref<1x9x8x8xbf16, #tpu.memory_space<vmem>>, vector<1x1x8x8xbf16>
    %37 = vector.shape_cast %36 : vector<1x1x8x8xbf16> to vector<8x8xbf16>
    %38 = vector.extract_strided_slice %4 {offsets = [0, 12], sizes = [8, 128], strides = [1, 1]} : vector<8x256xbf16> to vector<8x128xbf16>
    %cst_33 = arith.constant dense<0.000000e+00> : vector<8x128xf32>
    %39 = tpu.matmul %37, %38, %cst_33 {dimension_numbers = #tpu.dot_dimension_numbers<[1], [0], [0], [1], [0, 0, 1, 1], [], []>} : vector<8x8xbf16>, vector<8x128xbf16>, vector<8x128xf32> -> vector<8x128xf32>
    %40 = arith.addf %35, %39 : vector<8x128xf32>
    %c0_34 = arith.constant 0 : index
    %c7 = arith.constant 7 : index
    %c0_35 = arith.constant 0 : index
    %c0_36 = arith.constant 0 : index
    %41 = vector.load %arg4[%c0_34, %c7, %c0_35, %c0_36] : memref<1x9x8x8xbf16, #tpu.memory_space<vmem>>, vector<1x1x8x8xbf16>
    %42 = vector.shape_cast %41 : vector<1x1x8x8xbf16> to vector<8x8xbf16>
    %43 = vector.extract_strided_slice %4 {offsets = [0, 13], sizes = [8, 128], strides = [1, 1]} : vector<8x256xbf16> to vector<8x128xbf16>
    %cst_37 = arith.constant dense<0.000000e+00> : vector<8x128xf32>
    %44 = tpu.matmul %42, %43, %cst_37 {dimension_numbers = #tpu.dot_dimension_numbers<[1], [0], [0], [1], [0, 0, 1, 1], [], []>} : vector<8x8xbf16>, vector<8x128xbf16>, vector<8x128xf32> -> vector<8x128xf32>
    %45 = arith.addf %40, %44 : vector<8x128xf32>
    %c0_38 = arith.constant 0 : index
    %c8 = arith.constant 8 : index
    %c0_39 = arith.constant 0 : index
    %c0_40 = arith.constant 0 : index
    %46 = vector.load %arg4[%c0_38, %c8, %c0_39, %c0_40] : memref<1x9x8x8xbf16, #tpu.memory_space<vmem>>, vector<1x1x8x8xbf16>
    %47 = vector.shape_cast %46 : vector<1x1x8x8xbf16> to vector<8x8xbf16>
    %48 = vector.extract_strided_slice %4 {offsets = [0, 14], sizes = [8, 128], strides = [1, 1]} : vector<8x256xbf16> to vector<8x128xbf16>
    %cst_41 = arith.constant dense<0.000000e+00> : vector<8x128xf32>
    %49 = tpu.matmul %47, %48, %cst_41 {dimension_numbers = #tpu.dot_dimension_numbers<[1], [0], [0], [1], [0, 0, 1, 1], [], []>} : vector<8x8xbf16>, vector<8x128xbf16>, vector<8x128xf32> -> vector<8x128xf32>
    %50 = arith.addf %45, %49 : vector<8x128xf32>
    %c0_42 = arith.constant 0 : index
    %c0_43 = arith.constant 0 : index
    %51 = vector.load %arg6[%c0_42, %c0_43] : memref<8x128xf32, #tpu.memory_space<vmem>>, vector<8x128xf32>
    tpu.vector_store %arg6[%c0_42, %c0_43], %50 {strides = array<i32>} : memref<8x128xf32, #tpu.memory_space<vmem>>, vector<8x128xf32>,
    %c2_i32 = arith.constant 2 : i32
    %52 = arith.cmpi eq, %arg2, %c2_i32 : i32
    %53 = arith.extui %52 : i1 to i32
    %c0_i32_44 = arith.constant 0 : i32
    %54 = arith.cmpi ne, %53, %c0_i32_44 : i32
    scf.if %54 {
      %c0_45 = arith.constant 0 : index
      %c0_46 = arith.constant 0 : index
      %55 = vector.load %arg6[%c0_45, %c0_46] : memref<8x128xf32, #tpu.memory_space<vmem>>, vector<8x128xf32>
      %56 = arith.truncf %55 : vector<8x128xf32> to vector<8x128xbf16>
      %c0_47 = arith.constant 0 : index
      %c0_48 = arith.constant 0 : index
      %c0_49 = arith.constant 0 : index
      %57 = vector.load %arg5[%c0_47, %c0_48, %c0_49] : memref<1x8x128xbf16, #tpu.memory_space<vmem>>, vector<1x8x128xbf16>
      %58 = vector.shape_cast %57 : vector<1x8x128xbf16> to vector<8x128xbf16>
      %59 = vector.shape_cast %56 : vector<8x128xbf16> to vector<1x8x128xbf16>
      tpu.vector_store %arg5[%c0_47, %c0_48, %c0_49], %59 {strides = array<i32>} : memref<1x8x128xbf16, #tpu.memory_space<vmem>>, vector<1x8x128xbf16>,
    } else {
    }
    return
  }
  func.func @transform_0(%arg0: i32, %arg1: i32, %arg2: i32) -> (i32, i32, i32, i32) {
    %c1_i32 = arith.constant 1 : i32
    %0 = arith.muli %c1_i32, %arg1 : i32
    %1 = arith.addi %0, %arg2 : i32
    %c0_i32 = arith.constant 0 : i32
    %c0_i32_0 = arith.constant 0 : i32
    %c0_i32_1 = arith.constant 0 : i32
    return %arg0, %1, %c0_i32, %c0_i32_0 : i32, i32, i32, i32
  }
  func.func @transform_1(%arg0: i32, %arg1: i32, %arg2: i32) -> (i32, i32, i32, i32) {
    %c0_i32 = arith.constant 0 : i32
    %c0_i32_0 = arith.constant 0 : i32
    %c0_i32_1 = arith.constant 0 : i32
    %c0_i32_2 = arith.constant 0 : i32
    return %arg2, %c0_i32, %c0_i32_0, %c0_i32_1 : i32, i32, i32, i32
  }
  func.func @transform_2(%arg0: i32, %arg1: i32, %arg2: i32) -> (i32, i32, i32) {
    %c0_i32 = arith.constant 0 : i32
    %c0_i32_0 = arith.constant 0 : i32
    return %arg0, %c0_i32, %arg1 : i32, i32, i32
  }
}

module attributes {stable_mosaic.version = 11 : i64} {
  func.func @kernel(%arg0: i32, %arg1: i32, %arg2: i32, %arg3: memref<1x1x8x256xbf16, #tpu.memory_space<vmem>>, %arg4: memref<1x4x64x8xbf16, #tpu.memory_space<vmem>>, %arg5: memref<1x64x128xbf16, #tpu.memory_space<vmem>>, %arg6: memref<64x128xf32, #tpu.memory_space<vmem>>) attributes {dimension_semantics = [#tpu.dimension_semantics<parallel>, #tpu.dimension_semantics<parallel>, #tpu.dimension_semantics<arbitrary>], iteration_bounds = array<i64: 2, 2, 2>, scalar_prefetch = 0 : i64, scratch_operands = 1 : i64, tpu.core_type = #tpu.core_type<tc>, window_params = [{transform_indices = @transform_0, window_bounds = array<i64: 1, 1, 8, 256>}, {transform_indices = @transform_1, window_bounds = array<i64: 1, 4, 64, 8>}, {transform_indices = @transform_2, window_bounds = array<i64: 1, 64, 128>}]} {
    %c0_i32 = arith.constant 0 : i32
    %0 = arith.cmpi eq, %arg2, %c0_i32 : i32
    %1 = arith.extui %0 : i1 to i32
    %c0_i32_0 = arith.constant 0 : i32
    %2 = arith.cmpi ne, %1, %c0_i32_0 : i32
    scf.if %2 {
      %cst_25 = arith.constant 0.000000e+00 : f32
      %30 = vector.broadcast %cst_25 : f32 to vector<64x128xf32>
      %c0_26 = arith.constant 0 : index
      %c0_27 = arith.constant 0 : index
      %31 = vector.load %arg6[%c0_26, %c0_27] : memref<64x128xf32, #tpu.memory_space<vmem>>, vector<64x128xf32>
      tpu.vector_store %arg6[%c0_26, %c0_27], %30 {strides = array<i32>} : memref<64x128xf32, #tpu.memory_space<vmem>>, vector<64x128xf32>,
    } else {
    }
    %c0 = arith.constant 0 : index
    %c0_1 = arith.constant 0 : index
    %c0_2 = arith.constant 0 : index
    %c0_3 = arith.constant 0 : index
    %3 = vector.load %arg3[%c0, %c0_1, %c0_2, %c0_3] : memref<1x1x8x256xbf16, #tpu.memory_space<vmem>>, vector<1x1x8x256xbf16>
    %4 = vector.shape_cast %3 : vector<1x1x8x256xbf16> to vector<8x256xbf16>
    %c0_4 = arith.constant 0 : index
    %c0_5 = arith.constant 0 : index
    %5 = vector.load %arg6[%c0_4, %c0_5] : memref<64x128xf32, #tpu.memory_space<vmem>>, vector<64x128xf32>
    %c0_6 = arith.constant 0 : index
    %c0_7 = arith.constant 0 : index
    %c0_8 = arith.constant 0 : index
    %c0_9 = arith.constant 0 : index
    %6 = vector.load %arg4[%c0_6, %c0_7, %c0_8, %c0_9] : memref<1x4x64x8xbf16, #tpu.memory_space<vmem>>, vector<1x1x64x8xbf16>
    %7 = vector.shape_cast %6 : vector<1x1x64x8xbf16> to vector<64x8xbf16>
    %8 = vector.extract_strided_slice %4 {offsets = [0, 0], sizes = [8, 128], strides = [1, 1]} : vector<8x256xbf16> to vector<8x128xbf16>
    %cst = arith.constant dense<0.000000e+00> : vector<64x128xf32>
    %9 = tpu.matmul %7, %8, %cst {dimension_numbers = #tpu.dot_dimension_numbers<[1], [0], [0], [1], [0, 0, 1, 1], [], []>} : vector<64x8xbf16>, vector<8x128xbf16>, vector<64x128xf32> -> vector<64x128xf32>
    %10 = arith.addf %5, %9 : vector<64x128xf32>
    %c0_10 = arith.constant 0 : index
    %c1 = arith.constant 1 : index
    %c0_11 = arith.constant 0 : index
    %c0_12 = arith.constant 0 : index
    %11 = vector.load %arg4[%c0_10, %c1, %c0_11, %c0_12] : memref<1x4x64x8xbf16, #tpu.memory_space<vmem>>, vector<1x1x64x8xbf16>
    %12 = vector.shape_cast %11 : vector<1x1x64x8xbf16> to vector<64x8xbf16>
    %13 = vector.extract_strided_slice %4 {offsets = [0, 1], sizes = [8, 128], strides = [1, 1]} : vector<8x256xbf16> to vector<8x128xbf16>
    %cst_13 = arith.constant dense<0.000000e+00> : vector<64x128xf32>
    %14 = tpu.matmul %12, %13, %cst_13 {dimension_numbers = #tpu.dot_dimension_numbers<[1], [0], [0], [1], [0, 0, 1, 1], [], []>} : vector<64x8xbf16>, vector<8x128xbf16>, vector<64x128xf32> -> vector<64x128xf32>
    %15 = arith.addf %10, %14 : vector<64x128xf32>
    %c0_14 = arith.constant 0 : index
    %c2 = arith.constant 2 : index
    %c0_15 = arith.constant 0 : index
    %c0_16 = arith.constant 0 : index
    %16 = vector.load %arg4[%c0_14, %c2, %c0_15, %c0_16] : memref<1x4x64x8xbf16, #tpu.memory_space<vmem>>, vector<1x1x64x8xbf16>
    %17 = vector.shape_cast %16 : vector<1x1x64x8xbf16> to vector<64x8xbf16>
    %18 = vector.extract_strided_slice %4 {offsets = [0, 5], sizes = [8, 128], strides = [1, 1]} : vector<8x256xbf16> to vector<8x128xbf16>
    %cst_17 = arith.constant dense<0.000000e+00> : vector<64x128xf32>
    %19 = tpu.matmul %17, %18, %cst_17 {dimension_numbers = #tpu.dot_dimension_numbers<[1], [0], [0], [1], [0, 0, 1, 1], [], []>} : vector<64x8xbf16>, vector<8x128xbf16>, vector<64x128xf32> -> vector<64x128xf32>
    %20 = arith.addf %15, %19 : vector<64x128xf32>
    %c0_18 = arith.constant 0 : index
    %c3 = arith.constant 3 : index
    %c0_19 = arith.constant 0 : index
    %c0_20 = arith.constant 0 : index
    %21 = vector.load %arg4[%c0_18, %c3, %c0_19, %c0_20] : memref<1x4x64x8xbf16, #tpu.memory_space<vmem>>, vector<1x1x64x8xbf16>
    %22 = vector.shape_cast %21 : vector<1x1x64x8xbf16> to vector<64x8xbf16>
    %23 = vector.extract_strided_slice %4 {offsets = [0, 6], sizes = [8, 128], strides = [1, 1]} : vector<8x256xbf16> to vector<8x128xbf16>
    %cst_21 = arith.constant dense<0.000000e+00> : vector<64x128xf32>
    %24 = tpu.matmul %22, %23, %cst_21 {dimension_numbers = #tpu.dot_dimension_numbers<[1], [0], [0], [1], [0, 0, 1, 1], [], []>} : vector<64x8xbf16>, vector<8x128xbf16>, vector<64x128xf32> -> vector<64x128xf32>
    %25 = arith.addf %20, %24 : vector<64x128xf32>
    %c0_22 = arith.constant 0 : index
    %c0_23 = arith.constant 0 : index
    %26 = vector.load %arg6[%c0_22, %c0_23] : memref<64x128xf32, #tpu.memory_space<vmem>>, vector<64x128xf32>
    tpu.vector_store %arg6[%c0_22, %c0_23], %25 {strides = array<i32>} : memref<64x128xf32, #tpu.memory_space<vmem>>, vector<64x128xf32>,
    %c1_i32 = arith.constant 1 : i32
    %27 = arith.cmpi eq, %arg2, %c1_i32 : i32
    %28 = arith.extui %27 : i1 to i32
    %c0_i32_24 = arith.constant 0 : i32
    %29 = arith.cmpi ne, %28, %c0_i32_24 : i32
    scf.if %29 {
      %c0_25 = arith.constant 0 : index
      %c0_26 = arith.constant 0 : index
      %30 = vector.load %arg6[%c0_25, %c0_26] : memref<64x128xf32, #tpu.memory_space<vmem>>, vector<64x128xf32>
      %31 = arith.truncf %30 : vector<64x128xf32> to vector<64x128xbf16>
      %c0_27 = arith.constant 0 : index
      %c0_28 = arith.constant 0 : index
      %c0_29 = arith.constant 0 : index
      %32 = vector.load %arg5[%c0_27, %c0_28, %c0_29] : memref<1x64x128xbf16, #tpu.memory_space<vmem>>, vector<1x64x128xbf16>
      %33 = vector.shape_cast %32 : vector<1x64x128xbf16> to vector<64x128xbf16>
      %34 = vector.shape_cast %31 : vector<64x128xbf16> to vector<1x64x128xbf16>
      tpu.vector_store %arg5[%c0_27, %c0_28, %c0_29], %34 {strides = array<i32>} : memref<1x64x128xbf16, #tpu.memory_space<vmem>>, vector<1x64x128xbf16>,
    } else {
    }
    return
  }
  func.func @transform_0(%arg0: i32, %arg1: i32, %arg2: i32) -> (i32, i32, i32, i32) {
    %c1_i32 = arith.constant 1 : i32
    %0 = arith.muli %c1_i32, %arg1 : i32
    %1 = arith.addi %0, %arg2 : i32
    %c0_i32 = arith.constant 0 : i32
    %c0_i32_0 = arith.constant 0 : i32
    %c0_i32_1 = arith.constant 0 : i32
    return %arg0, %1, %c0_i32, %c0_i32_0 : i32, i32, i32, i32
  }
  func.func @transform_1(%arg0: i32, %arg1: i32, %arg2: i32) -> (i32, i32, i32, i32) {
    %c0_i32 = arith.constant 0 : i32
    %c0_i32_0 = arith.constant 0 : i32
    %c0_i32_1 = arith.constant 0 : i32
    %c0_i32_2 = arith.constant 0 : i32
    return %arg2, %c0_i32, %c0_i32_0, %c0_i32_1 : i32, i32, i32, i32
  }
  func.func @transform_2(%arg0: i32, %arg1: i32, %arg2: i32) -> (i32, i32, i32) {
    %c0_i32 = arith.constant 0 : i32
    %c0_i32_0 = arith.constant 0 : i32
    return %arg0, %c0_i32, %arg1 : i32, i32, i32
  }
}

module attributes {stable_mosaic.version = 11 : i64} {
  func.func @kernel(%arg0: i32, %arg1: i32, %arg2: memref<1x1x8x128xbf16, #tpu.memory_space<vmem>>, %arg3: memref<1x8x1xf32, #tpu.memory_space<vmem>>, %arg4: memref<1x8x1xf32, #tpu.memory_space<vmem>>, %arg5: memref<1x1x8x128xf32, #tpu.memory_space<vmem>>, %arg6: memref<1x1x8x128xf32, #tpu.memory_space<vmem>>) attributes {dimension_semantics = [#tpu.dimension_semantics<parallel>, #tpu.dimension_semantics<parallel>], iteration_bounds = array<i64: 2, 2>, scalar_prefetch = 0 : i64, scratch_operands = 0 : i64, tpu.core_type = #tpu.core_type<tc>, window_params = [{transform_indices = @transform_0, window_bounds = array<i64: 1, 1, 8, 128>}, {transform_indices = @transform_1, window_bounds = array<i64: 1, 8, 1>}, {transform_indices = @transform_2, window_bounds = array<i64: 1, 8, 1>}, {transform_indices = @transform_3, window_bounds = array<i64: 1, 1, 8, 128>}, {transform_indices = @transform_4, window_bounds = array<i64: 1, 1, 8, 128>}]} {
    %c0 = arith.constant 0 : index
    %c0_0 = arith.constant 0 : index
    %c0_1 = arith.constant 0 : index
    %c0_2 = arith.constant 0 : index
    %0 = vector.load %arg2[%c0, %c0_0, %c0_1, %c0_2] : memref<1x1x8x128xbf16, #tpu.memory_space<vmem>>, vector<1x1x8x128xbf16>
    %1 = vector.shape_cast %0 : vector<1x1x8x128xbf16> to vector<8x128xbf16>
    %2 = arith.extf %1 : vector<8x128xbf16> to vector<8x128xf32>
    %3 = vector.shape_cast %2 : vector<8x128xf32> to vector<1x8x128xf32>
    %cst = arith.constant dense<0.000000e+00> : vector<1xf32>
    %4 = vector.multi_reduction <add>, %3, %cst [1, 2] : vector<1x8x128xf32> to vector<1xf32>
    %5 = vector.shape_cast %4 : vector<1xf32> to vector<1x1x1xf32>
    %6 = vector.extract %5[0, 0, 0] : f32 from vector<1x1x1xf32>
    %7 = vector.broadcast %6 : f32 to vector<1x1xf32>
    %8 = arith.mulf %2, %2 : vector<8x128xf32>
    %9 = vector.shape_cast %8 : vector<8x128xf32> to vector<1x8x128xf32>
    %cst_3 = arith.constant dense<0.000000e+00> : vector<1xf32>
    %10 = vector.multi_reduction <add>, %9, %cst_3 [1, 2] : vector<1x8x128xf32> to vector<1xf32>
    %11 = vector.shape_cast %10 : vector<1xf32> to vector<1x1x1xf32>
    %12 = vector.extract %11[0, 0, 0] : f32 from vector<1x1x1xf32>
    %13 = vector.broadcast %12 : f32 to vector<1x1xf32>
    %cst_4 = arith.constant 1.024000e+03 : f32
    %14 = vector.broadcast %cst_4 : f32 to vector<1x1xf32>
    %15 = arith.divf %7, %14 : vector<1x1xf32>
    %cst_5 = arith.constant 1.024000e+03 : f32
    %16 = vector.broadcast %cst_5 : f32 to vector<1x1xf32>
    %17 = arith.divf %13, %16 : vector<1x1xf32>
    %18 = arith.mulf %15, %15 : vector<1x1xf32>
    %19 = arith.subf %17, %18 : vector<1x1xf32>
    %cst_6 = arith.constant 0.000000e+00 : f32
    %20 = vector.broadcast %cst_6 : f32 to vector<1x1xf32>
    %21 = arith.maximumf %19, %20 : vector<1x1xf32>
    %cst_7 = arith.constant 9.99999974E-6 : f32
    %22 = vector.broadcast %cst_7 : f32 to vector<1x1xf32>
    %23 = arith.addf %21, %22 : vector<1x1xf32>
    %24 = math.rsqrt %23 : vector<1x1xf32>
    %25 = vector.broadcast %15 : vector<1x1xf32> to vector<8x128xf32>
    %26 = arith.subf %2, %25 : vector<8x128xf32>
    %27 = vector.broadcast %24 : vector<1x1xf32> to vector<8x128xf32>
    %28 = arith.mulf %26, %27 : vector<8x128xf32>
    %c0_8 = arith.constant 0 : index
    %c0_9 = arith.constant 0 : index
    %c0_10 = arith.constant 0 : index
    %29 = vector.load %arg3[%c0_8, %c0_9, %c0_10] : memref<1x8x1xf32, #tpu.memory_space<vmem>>, vector<1x8x1xf32>
    %30 = vector.shape_cast %29 : vector<1x8x1xf32> to vector<8x1xf32>
    %31 = vector.broadcast %30 : vector<8x1xf32> to vector<8x128xf32>
    %32 = arith.mulf %28, %31 : vector<8x128xf32>
    %c0_11 = arith.constant 0 : index
    %c0_12 = arith.constant 0 : index
    %c0_13 = arith.constant 0 : index
    %33 = vector.load %arg4[%c0_11, %c0_12, %c0_13] : memref<1x8x1xf32, #tpu.memory_space<vmem>>, vector<1x8x1xf32>
    %34 = vector.shape_cast %33 : vector<1x8x1xf32> to vector<8x1xf32>
    %35 = vector.broadcast %34 : vector<8x1xf32> to vector<8x128xf32>
    %36 = arith.addf %32, %35 : vector<8x128xf32>
    %c0_14 = arith.constant 0 : index
    %c0_15 = arith.constant 0 : index
    %c0_16 = arith.constant 0 : index
    %c0_17 = arith.constant 0 : index
    %37 = vector.load %arg5[%c0_14, %c0_15, %c0_16, %c0_17] : memref<1x1x8x128xf32, #tpu.memory_space<vmem>>, vector<1x1x8x128xf32>
    %38 = vector.shape_cast %37 : vector<1x1x8x128xf32> to vector<8x128xf32>
    %39 = arith.addf %36, %38 : vector<8x128xf32>
    %cst_18 = arith.constant 0.000000e+00 : f32
    %40 = vector.broadcast %cst_18 : f32 to vector<8x128xf32>
    %41 = arith.maximumf %39, %40 : vector<8x128xf32>
    %c0_19 = arith.constant 0 : index
    %c0_20 = arith.constant 0 : index
    %c0_21 = arith.constant 0 : index
    %c0_22 = arith.constant 0 : index
    %42 = vector.load %arg6[%c0_19, %c0_20, %c0_21, %c0_22] : memref<1x1x8x128xf32, #tpu.memory_space<vmem>>, vector<1x1x8x128xf32>
    %43 = vector.shape_cast %42 : vector<1x1x8x128xf32> to vector<8x128xf32>
    %44 = vector.shape_cast %41 : vector<8x128xf32> to vector<1x1x8x128xf32>
    tpu.vector_store %arg6[%c0_19, %c0_20, %c0_21, %c0_22], %44 {strides = array<i32>} : memref<1x1x8x128xf32, #tpu.memory_space<vmem>>, vector<1x1x8x128xf32>,
    return
  }
  func.func @transform_0(%arg0: i32, %arg1: i32) -> (i32, i32, i32, i32) {
    %c0_i32 = arith.constant 0 : i32
    %c0_i32_0 = arith.constant 0 : i32
    %c0_i32_1 = arith.constant 0 : i32
    return %arg0, %arg1, %c0_i32, %c0_i32_0 : i32, i32, i32, i32
  }
  func.func @transform_1(%arg0: i32, %arg1: i32) -> (i32, i32, i32) {
    %c0_i32 = arith.constant 0 : i32
    %c0_i32_0 = arith.constant 0 : i32
    %c0_i32_1 = arith.constant 0 : i32
    return %arg1, %c0_i32, %c0_i32_0 : i32, i32, i32
  }
  func.func @transform_2(%arg0: i32, %arg1: i32) -> (i32, i32, i32) {
    %c0_i32 = arith.constant 0 : i32
    %c0_i32_0 = arith.constant 0 : i32
    %c0_i32_1 = arith.constant 0 : i32
    return %arg1, %c0_i32, %c0_i32_0 : i32, i32, i32
  }
  func.func @transform_3(%arg0: i32, %arg1: i32) -> (i32, i32, i32, i32) {
    %c0_i32 = arith.constant 0 : i32
    %c0_i32_0 = arith.constant 0 : i32
    %c0_i32_1 = arith.constant 0 : i32
    return %arg0, %arg1, %c0_i32, %c0_i32_0 : i32, i32, i32, i32
  }
  func.func @transform_4(%arg0: i32, %arg1: i32) -> (i32, i32, i32, i32) {
    %c0_i32 = arith.constant 0 : i32
    %c0_i32_0 = arith.constant 0 : i32
    %c0_i32_1 = arith.constant 0 : i32
    return %arg0, %arg1, %c0_i32, %c0_i32_0 : i32, i32, i32, i32
  }
}

module attributes {stable_mosaic.version = 11 : i64} {
  func.func @kernel(%arg0: i32, %arg1: i32, %arg2: i32, %arg3: memref<1x1x8x256xbf16, #tpu.memory_space<vmem>>, %arg4: memref<1x4x32x8xbf16, #tpu.memory_space<vmem>>, %arg5: memref<1x32x128xbf16, #tpu.memory_space<vmem>>, %arg6: memref<32x128xf32, #tpu.memory_space<vmem>>) attributes {dimension_semantics = [#tpu.dimension_semantics<parallel>, #tpu.dimension_semantics<parallel>, #tpu.dimension_semantics<arbitrary>], iteration_bounds = array<i64: 2, 4, 2>, scalar_prefetch = 0 : i64, scratch_operands = 1 : i64, tpu.core_type = #tpu.core_type<tc>, window_params = [{transform_indices = @transform_0, window_bounds = array<i64: 1, 1, 8, 256>}, {transform_indices = @transform_1, window_bounds = array<i64: 1, 4, 32, 8>}, {transform_indices = @transform_2, window_bounds = array<i64: 1, 32, 128>}]} {
    %c0_i32 = arith.constant 0 : i32
    %0 = arith.cmpi eq, %arg2, %c0_i32 : i32
    %1 = arith.extui %0 : i1 to i32
    %c0_i32_0 = arith.constant 0 : i32
    %2 = arith.cmpi ne, %1, %c0_i32_0 : i32
    scf.if %2 {
      %cst_25 = arith.constant 0.000000e+00 : f32
      %30 = vector.broadcast %cst_25 : f32 to vector<32x128xf32>
      %c0_26 = arith.constant 0 : index
      %c0_27 = arith.constant 0 : index
      %31 = vector.load %arg6[%c0_26, %c0_27] : memref<32x128xf32, #tpu.memory_space<vmem>>, vector<32x128xf32>
      tpu.vector_store %arg6[%c0_26, %c0_27], %30 {strides = array<i32>} : memref<32x128xf32, #tpu.memory_space<vmem>>, vector<32x128xf32>,
    } else {
    }
    %c0 = arith.constant 0 : index
    %c0_1 = arith.constant 0 : index
    %c0_2 = arith.constant 0 : index
    %c0_3 = arith.constant 0 : index
    %3 = vector.load %arg3[%c0, %c0_1, %c0_2, %c0_3] : memref<1x1x8x256xbf16, #tpu.memory_space<vmem>>, vector<1x1x8x256xbf16>
    %4 = vector.shape_cast %3 : vector<1x1x8x256xbf16> to vector<8x256xbf16>
    %c0_4 = arith.constant 0 : index
    %c0_5 = arith.constant 0 : index
    %5 = vector.load %arg6[%c0_4, %c0_5] : memref<32x128xf32, #tpu.memory_space<vmem>>, vector<32x128xf32>
    %c0_6 = arith.constant 0 : index
    %c0_7 = arith.constant 0 : index
    %c0_8 = arith.constant 0 : index
    %c0_9 = arith.constant 0 : index
    %6 = vector.load %arg4[%c0_6, %c0_7, %c0_8, %c0_9] : memref<1x4x32x8xbf16, #tpu.memory_space<vmem>>, vector<1x1x32x8xbf16>
    %7 = vector.shape_cast %6 : vector<1x1x32x8xbf16> to vector<32x8xbf16>
    %8 = vector.extract_strided_slice %4 {offsets = [0, 0], sizes = [8, 128], strides = [1, 1]} : vector<8x256xbf16> to vector<8x128xbf16>
    %cst = arith.constant dense<0.000000e+00> : vector<32x128xf32>
    %9 = tpu.matmul %7, %8, %cst {dimension_numbers = #tpu.dot_dimension_numbers<[1], [0], [0], [1], [0, 0, 1, 1], [], []>} : vector<32x8xbf16>, vector<8x128xbf16>, vector<32x128xf32> -> vector<32x128xf32>
    %10 = arith.addf %5, %9 : vector<32x128xf32>
    %c0_10 = arith.constant 0 : index
    %c1 = arith.constant 1 : index
    %c0_11 = arith.constant 0 : index
    %c0_12 = arith.constant 0 : index
    %11 = vector.load %arg4[%c0_10, %c1, %c0_11, %c0_12] : memref<1x4x32x8xbf16, #tpu.memory_space<vmem>>, vector<1x1x32x8xbf16>
    %12 = vector.shape_cast %11 : vector<1x1x32x8xbf16> to vector<32x8xbf16>
    %13 = vector.extract_strided_slice %4 {offsets = [0, 1], sizes = [8, 128], strides = [1, 1]} : vector<8x256xbf16> to vector<8x128xbf16>
    %cst_13 = arith.constant dense<0.000000e+00> : vector<32x128xf32>
    %14 = tpu.matmul %12, %13, %cst_13 {dimension_numbers = #tpu.dot_dimension_numbers<[1], [0], [0], [1], [0, 0, 1, 1], [], []>} : vector<32x8xbf16>, vector<8x128xbf16>, vector<32x128xf32> -> vector<32x128xf32>
    %15 = arith.addf %10, %14 : vector<32x128xf32>
    %c0_14 = arith.constant 0 : index
    %c2 = arith.constant 2 : index
    %c0_15 = arith.constant 0 : index
    %c0_16 = arith.constant 0 : index
    %16 = vector.load %arg4[%c0_14, %c2, %c0_15, %c0_16] : memref<1x4x32x8xbf16, #tpu.memory_space<vmem>>, vector<1x1x32x8xbf16>
    %17 = vector.shape_cast %16 : vector<1x1x32x8xbf16> to vector<32x8xbf16>
    %18 = vector.extract_strided_slice %4 {offsets = [0, 9], sizes = [8, 128], strides = [1, 1]} : vector<8x256xbf16> to vector<8x128xbf16>
    %cst_17 = arith.constant dense<0.000000e+00> : vector<32x128xf32>
    %19 = tpu.matmul %17, %18, %cst_17 {dimension_numbers = #tpu.dot_dimension_numbers<[1], [0], [0], [1], [0, 0, 1, 1], [], []>} : vector<32x8xbf16>, vector<8x128xbf16>, vector<32x128xf32> -> vector<32x128xf32>
    %20 = arith.addf %15, %19 : vector<32x128xf32>
    %c0_18 = arith.constant 0 : index
    %c3 = arith.constant 3 : index
    %c0_19 = arith.constant 0 : index
    %c0_20 = arith.constant 0 : index
    %21 = vector.load %arg4[%c0_18, %c3, %c0_19, %c0_20] : memref<1x4x32x8xbf16, #tpu.memory_space<vmem>>, vector<1x1x32x8xbf16>
    %22 = vector.shape_cast %21 : vector<1x1x32x8xbf16> to vector<32x8xbf16>
    %23 = vector.extract_strided_slice %4 {offsets = [0, 10], sizes = [8, 128], strides = [1, 1]} : vector<8x256xbf16> to vector<8x128xbf16>
    %cst_21 = arith.constant dense<0.000000e+00> : vector<32x128xf32>
    %24 = tpu.matmul %22, %23, %cst_21 {dimension_numbers = #tpu.dot_dimension_numbers<[1], [0], [0], [1], [0, 0, 1, 1], [], []>} : vector<32x8xbf16>, vector<8x128xbf16>, vector<32x128xf32> -> vector<32x128xf32>
    %25 = arith.addf %20, %24 : vector<32x128xf32>
    %c0_22 = arith.constant 0 : index
    %c0_23 = arith.constant 0 : index
    %26 = vector.load %arg6[%c0_22, %c0_23] : memref<32x128xf32, #tpu.memory_space<vmem>>, vector<32x128xf32>
    tpu.vector_store %arg6[%c0_22, %c0_23], %25 {strides = array<i32>} : memref<32x128xf32, #tpu.memory_space<vmem>>, vector<32x128xf32>,
    %c1_i32 = arith.constant 1 : i32
    %27 = arith.cmpi eq, %arg2, %c1_i32 : i32
    %28 = arith.extui %27 : i1 to i32
    %c0_i32_24 = arith.constant 0 : i32
    %29 = arith.cmpi ne, %28, %c0_i32_24 : i32
    scf.if %29 {
      %c0_25 = arith.constant 0 : index
      %c0_26 = arith.constant 0 : index
      %30 = vector.load %arg6[%c0_25, %c0_26] : memref<32x128xf32, #tpu.memory_space<vmem>>, vector<32x128xf32>
      %31 = arith.truncf %30 : vector<32x128xf32> to vector<32x128xbf16>
      %c0_27 = arith.constant 0 : index
      %c0_28 = arith.constant 0 : index
      %c0_29 = arith.constant 0 : index
      %32 = vector.load %arg5[%c0_27, %c0_28, %c0_29] : memref<1x32x128xbf16, #tpu.memory_space<vmem>>, vector<1x32x128xbf16>
      %33 = vector.shape_cast %32 : vector<1x32x128xbf16> to vector<32x128xbf16>
      %34 = vector.shape_cast %31 : vector<32x128xbf16> to vector<1x32x128xbf16>
      tpu.vector_store %arg5[%c0_27, %c0_28, %c0_29], %34 {strides = array<i32>} : memref<1x32x128xbf16, #tpu.memory_space<vmem>>, vector<1x32x128xbf16>,
    } else {
    }
    return
  }
  func.func @transform_0(%arg0: i32, %arg1: i32, %arg2: i32) -> (i32, i32, i32, i32) {
    %c1_i32 = arith.constant 1 : i32
    %0 = arith.muli %c1_i32, %arg1 : i32
    %1 = arith.addi %0, %arg2 : i32
    %c0_i32 = arith.constant 0 : i32
    %c0_i32_0 = arith.constant 0 : i32
    %c0_i32_1 = arith.constant 0 : i32
    return %arg0, %1, %c0_i32, %c0_i32_0 : i32, i32, i32, i32
  }
  func.func @transform_1(%arg0: i32, %arg1: i32, %arg2: i32) -> (i32, i32, i32, i32) {
    %c0_i32 = arith.constant 0 : i32
    %c0_i32_0 = arith.constant 0 : i32
    %c0_i32_1 = arith.constant 0 : i32
    %c0_i32_2 = arith.constant 0 : i32
    return %arg2, %c0_i32, %c0_i32_0, %c0_i32_1 : i32, i32, i32, i32
  }
  func.func @transform_2(%arg0: i32, %arg1: i32, %arg2: i32) -> (i32, i32, i32) {
    %c0_i32 = arith.constant 0 : i32
    %c0_i32_0 = arith.constant 0 : i32
    return %arg0, %c0_i32, %arg1 : i32, i32, i32
  }
}

module attributes {stable_mosaic.version = 11 : i64} {
  func.func @kernel(%arg0: i32, %arg1: i32, %arg2: memref<1x1x56x128xbf16, #tpu.memory_space<vmem>>, %arg3: memref<1x56x1xf32, #tpu.memory_space<vmem>>, %arg4: memref<1x56x1xf32, #tpu.memory_space<vmem>>, %arg5: memref<1x1x56x128xf32, #tpu.memory_space<vmem>>) attributes {dimension_semantics = [#tpu.dimension_semantics<parallel>, #tpu.dimension_semantics<parallel>], iteration_bounds = array<i64: 2, 1>, scalar_prefetch = 0 : i64, scratch_operands = 0 : i64, tpu.core_type = #tpu.core_type<tc>, window_params = [{transform_indices = @transform_0, window_bounds = array<i64: 1, 1, 56, 128>}, {transform_indices = @transform_1, window_bounds = array<i64: 1, 56, 1>}, {transform_indices = @transform_2, window_bounds = array<i64: 1, 56, 1>}, {transform_indices = @transform_3, window_bounds = array<i64: 1, 1, 56, 128>}]} {
    %c0 = arith.constant 0 : index
    %c0_0 = arith.constant 0 : index
    %c0_1 = arith.constant 0 : index
    %c0_2 = arith.constant 0 : index
    %0 = vector.load %arg2[%c0, %c0_0, %c0_1, %c0_2] : memref<1x1x56x128xbf16, #tpu.memory_space<vmem>>, vector<1x1x56x128xbf16>
    %1 = vector.shape_cast %0 : vector<1x1x56x128xbf16> to vector<56x128xbf16>
    %2 = arith.extf %1 : vector<56x128xbf16> to vector<56x128xf32>
    %3 = vector.shape_cast %2 : vector<56x128xf32> to vector<1x56x128xf32>
    %cst = arith.constant dense<0.000000e+00> : vector<1xf32>
    %4 = vector.multi_reduction <add>, %3, %cst [1, 2] : vector<1x56x128xf32> to vector<1xf32>
    %5 = vector.shape_cast %4 : vector<1xf32> to vector<1x1x1xf32>
    %6 = vector.extract %5[0, 0, 0] : f32 from vector<1x1x1xf32>
    %7 = vector.broadcast %6 : f32 to vector<1x1xf32>
    %8 = arith.mulf %2, %2 : vector<56x128xf32>
    %9 = vector.shape_cast %8 : vector<56x128xf32> to vector<1x56x128xf32>
    %cst_3 = arith.constant dense<0.000000e+00> : vector<1xf32>
    %10 = vector.multi_reduction <add>, %9, %cst_3 [1, 2] : vector<1x56x128xf32> to vector<1xf32>
    %11 = vector.shape_cast %10 : vector<1xf32> to vector<1x1x1xf32>
    %12 = vector.extract %11[0, 0, 0] : f32 from vector<1x1x1xf32>
    %13 = vector.broadcast %12 : f32 to vector<1x1xf32>
    %cst_4 = arith.constant 7.168000e+03 : f32
    %14 = vector.broadcast %cst_4 : f32 to vector<1x1xf32>
    %15 = arith.divf %7, %14 : vector<1x1xf32>
    %cst_5 = arith.constant 7.168000e+03 : f32
    %16 = vector.broadcast %cst_5 : f32 to vector<1x1xf32>
    %17 = arith.divf %13, %16 : vector<1x1xf32>
    %18 = arith.mulf %15, %15 : vector<1x1xf32>
    %19 = arith.subf %17, %18 : vector<1x1xf32>
    %cst_6 = arith.constant 0.000000e+00 : f32
    %20 = vector.broadcast %cst_6 : f32 to vector<1x1xf32>
    %21 = arith.maximumf %19, %20 : vector<1x1xf32>
    %cst_7 = arith.constant 9.99999974E-6 : f32
    %22 = vector.broadcast %cst_7 : f32 to vector<1x1xf32>
    %23 = arith.addf %21, %22 : vector<1x1xf32>
    %24 = math.rsqrt %23 : vector<1x1xf32>
    %25 = vector.broadcast %15 : vector<1x1xf32> to vector<56x128xf32>
    %26 = arith.subf %2, %25 : vector<56x128xf32>
    %27 = vector.broadcast %24 : vector<1x1xf32> to vector<56x128xf32>
    %28 = arith.mulf %26, %27 : vector<56x128xf32>
    %c0_8 = arith.constant 0 : index
    %c0_9 = arith.constant 0 : index
    %c0_10 = arith.constant 0 : index
    %29 = vector.load %arg3[%c0_8, %c0_9, %c0_10] : memref<1x56x1xf32, #tpu.memory_space<vmem>>, vector<1x56x1xf32>
    %30 = vector.shape_cast %29 : vector<1x56x1xf32> to vector<56x1xf32>
    %31 = vector.broadcast %30 : vector<56x1xf32> to vector<56x128xf32>
    %32 = arith.mulf %28, %31 : vector<56x128xf32>
    %c0_11 = arith.constant 0 : index
    %c0_12 = arith.constant 0 : index
    %c0_13 = arith.constant 0 : index
    %33 = vector.load %arg4[%c0_11, %c0_12, %c0_13] : memref<1x56x1xf32, #tpu.memory_space<vmem>>, vector<1x56x1xf32>
    %34 = vector.shape_cast %33 : vector<1x56x1xf32> to vector<56x1xf32>
    %35 = vector.broadcast %34 : vector<56x1xf32> to vector<56x128xf32>
    %36 = arith.addf %32, %35 : vector<56x128xf32>
    %c0_14 = arith.constant 0 : index
    %c0_15 = arith.constant 0 : index
    %c0_16 = arith.constant 0 : index
    %c0_17 = arith.constant 0 : index
    %37 = vector.load %arg5[%c0_14, %c0_15, %c0_16, %c0_17] : memref<1x1x56x128xf32, #tpu.memory_space<vmem>>, vector<1x1x56x128xf32>
    %38 = vector.shape_cast %37 : vector<1x1x56x128xf32> to vector<56x128xf32>
    %39 = vector.shape_cast %36 : vector<56x128xf32> to vector<1x1x56x128xf32>
    tpu.vector_store %arg5[%c0_14, %c0_15, %c0_16, %c0_17], %39 {strides = array<i32>} : memref<1x1x56x128xf32, #tpu.memory_space<vmem>>, vector<1x1x56x128xf32>,
    return
  }
  func.func @transform_0(%arg0: i32, %arg1: i32) -> (i32, i32, i32, i32) {
    %c0_i32 = arith.constant 0 : i32
    %c0_i32_0 = arith.constant 0 : i32
    %c0_i32_1 = arith.constant 0 : i32
    return %arg0, %arg1, %c0_i32, %c0_i32_0 : i32, i32, i32, i32
  }
  func.func @transform_1(%arg0: i32, %arg1: i32) -> (i32, i32, i32) {
    %c0_i32 = arith.constant 0 : i32
    %c0_i32_0 = arith.constant 0 : i32
    %c0_i32_1 = arith.constant 0 : i32
    return %arg1, %c0_i32, %c0_i32_0 : i32, i32, i32
  }
  func.func @transform_2(%arg0: i32, %arg1: i32) -> (i32, i32, i32) {
    %c0_i32 = arith.constant 0 : i32
    %c0_i32_0 = arith.constant 0 : i32
    %c0_i32_1 = arith.constant 0 : i32
    return %arg1, %c0_i32, %c0_i32_0 : i32, i32, i32
  }
  func.func @transform_3(%arg0: i32, %arg1: i32) -> (i32, i32, i32, i32) {
    %c0_i32 = arith.constant 0 : i32
    %c0_i32_0 = arith.constant 0 : i32
    %c0_i32_1 = arith.constant 0 : i32
    return %arg0, %arg1, %c0_i32, %c0_i32_0 : i32, i32, i32, i32
  }
}

</mosaic_0001>

<llo_original>
// kernel: hourglass_forward.12
$region0: #{hourglass_forward.12}
  #allocation0 [shape = 'u32[]', space=smem, size = 0x4, offset = 0x4, fixed_abs, tag = 'smem constant byte address 0x4 - core index']
  #allocation1 [shape = 'u32[144,128]{1,0:T(1,128)}', space=vmem, size = 0x12000, scoped, tag = 'internal scratch']
  #allocation2 [shape = 'f32[8,384]{1,0:T(8,128)}', space=vmem, size = 0x3000, scoped, tag = 'scratch operand']
  %s0 = inlined_call_operand.vmem [shape: bf16[2,10,4,512], index: 0, kind: input, shape index: {}]
  %s1 = inlined_call_operand.vmem [shape: bf16[3,9,8,4], index: 1, kind: input, shape index: {}]
  %s2 = inlined_call_operand.vmem [shape: bf16[2,8,1536], index: 2, kind: output, shape index: {}]
  %s3 = sld [smem:[#allocation0]]
  $region49: #{hourglass_forward.12} parent=0
    _
  %s5 = ssub.s32 1, %s3
  %s6 = scalar_select 0, %s5, %s3
  loop: start=0, step=1, limit=26
  $region2: #{hourglass_forward.12} parent=0 // loop_pre_header
    _
  $region3: #{hourglass_forward.12} parent=0 // loop_header
    %s8 = sphi 0, %s12
    %p9 = scmp.ge.s32.totalorder %s8, 26
    %s15 = sphi 0, %s34
    %s16 = sphi 0, %s30
    %s17 = sphi 0, %s26
    %s18 = sphi 0, %s15
    %s19 = sphi 0, %s16
    %s20 = sphi 0, %s17
    %s21 = sphi 0, %s18
    %s22 = sphi 0, %s19
    %s23 = sphi 0, %s20
    %s43 = sphi 0, %s45
    %s46 = sphi 0, %s43
    %s47 = sphi 0, %s46
    %s63 = sphi 0, %s47
    %s69 = sphi 0, %s71
    %s72 = sphi 0, %s69
    %s73 = sphi 0, %s72
    %s89 = sphi 0, %s73
    %s97 = sphi 0, %s99
    %s100 = sphi 0, %s97
    %s101 = sphi 0, %s100
    %s117 = sphi 0, %s101
  $region4: #{hourglass_forward.12} parent=0 // loop_header_branch
    %11 = sbr.rel (%p9) target = $region8
  $region5: #{hourglass_forward.12} parent=0 // loop_body
    %s13 = ssub.s32 %s8, 1
    %s14 = ssub.s32 %s8, 2
    %s24 = sadd.s32 1, %s17
    %p25 = scmp.ge.s32.totalorder %s24, 3
    %s26 = scalar_select %p25, 0, %s24
    %s27 = sadd.s32 1, %s16
    %s28 = scalar_select %p25, %s27, %s16
    %p29 = scmp.ge.s32.totalorder %s28, 4
    %s30 = scalar_select %p29, 0, %s28
    %s31 = sadd.s32 1, %s15
    %s32 = scalar_select %p29, %s31, %s15
    %p33 = scmp.ge.s32.totalorder %s32, 2
    %s34 = scalar_select %p33, 0, %s32
    %s35 = smul.u32 %s16, 2
    %s36 = sadd.s32 %s35, %s17
    %s37 = smul.u32 %s30, 2
    %s38 = sadd.s32 %s37, %s26
    %s39 = ssub.s32 %s15, %s34
    %s40 = ssub.s32 %s36, %s38
    %s41 = sor.u32 %s39, %s40
    %p42 = scmp.eq.s32.totalorder %s41, 0
    %s44 = sadd.s32 %s43, 1
    %s45 = scalar_select %p42, %s43, %s44
    %p48 = pneg %p42
    %p49 = scmp.eq.s32.totalorder %s8, 23
    %p50 = por %p48, %p49
    %p51 = scmp.ne.s32.totalorder %s43, %s46
    %p52 = scmp.eq.s32.totalorder %s8, 0
    %p53 = por %p51, %p52
    %p54 = scmp.ne.s32.totalorder %s43, %s46
    %p55 = scmp.eq.s32.totalorder %s13, 23
    %p56 = por %p54, %p55
    %p57 = scmp.ne.s32.totalorder %s46, %s47
    %p58 = scmp.eq.s32.totalorder %s13, 0
    %p59 = por %p57, %p58
    %p60 = scmp.ne.s32.totalorder %s46, %s47
    %p61 = scmp.eq.s32.totalorder %s14, 23
    %p62 = por %p60, %p61
    %p64 = scmp.ne.s32.totalorder %s47, %s63
    %p65 = scmp.eq.s32.totalorder %s14, 0
    %p66 = por %p64, %p65
    %s67 = ssub.s32 %s17, %s26
    %p68 = scmp.eq.s32.totalorder %s67, 0
    %s70 = sadd.s32 %s69, 1
    %s71 = scalar_select %p68, %s69, %s70
    %p74 = pneg %p68
    %p75 = scmp.eq.s32.totalorder %s8, 23
    %p76 = por %p74, %p75
    %p77 = scmp.ne.s32.totalorder %s69, %s72
    %p78 = scmp.eq.s32.totalorder %s8, 0
    %p79 = por %p77, %p78
    %p80 = scmp.ne.s32.totalorder %s69, %s72
    %p81 = scmp.eq.s32.totalorder %s13, 23
    %p82 = por %p80, %p81
    %p83 = scmp.ne.s32.totalorder %s72, %s73
    %p84 = scmp.eq.s32.totalorder %s13, 0
    %p85 = por %p83, %p84
    %p86 = scmp.ne.s32.totalorder %s72, %s73
    %p87 = scmp.eq.s32.totalorder %s14, 23
    %p88 = por %p86, %p87
    %p90 = scmp.ne.s32.totalorder %s73, %s89
    %p91 = scmp.eq.s32.totalorder %s14, 0
    %p92 = por %p90, %p91
    %s93 = ssub.s32 %s15, %s34
    %s94 = ssub.s32 %s16, %s30
    %s95 = sor.u32 %s93, %s94
    %p96 = scmp.eq.s32.totalorder %s95, 0
    %s98 = sadd.s32 %s97, 1
    %s99 = scalar_select %p96, %s97, %s98
    %p102 = pneg %p96
    %p103 = scmp.eq.s32.totalorder %s8, 23
    %p104 = por %p102, %p103
    %p105 = scmp.ne.s32.totalorder %s97, %s100
    %p106 = scmp.eq.s32.totalorder %s8, 0
    %p107 = por %p105, %p106
    %p108 = scmp.ne.s32.totalorder %s97, %s100
    %p109 = scmp.eq.s32.totalorder %s13, 23
    %p110 = por %p108, %p109
    %p111 = scmp.ne.s32.totalorder %s100, %s101
    %p112 = scmp.eq.s32.totalorder %s13, 0
    %p113 = por %p111, %p112
    %p114 = scmp.ne.s32.totalorder %s100, %s101
    %p115 = scmp.eq.s32.totalorder %s14, 23
    %p116 = por %p114, %p115
    %p118 = scmp.ne.s32.totalorder %s101, %s117
    %p119 = scmp.eq.s32.totalorder %s14, 0
    %p120 = por %p118, %p119
    %p121 = scmp.le.s32.totalorder 1, %s8
    %p122 = scmp.lt.s32.totalorder %s8, 25
    %p123 = pnand %p121, %p122
    %p124 = pneg %p123
    // Predicated region
    $region9: #{hourglass_forward.12} parent=5 // pred_check
      _
    $region10: #{hourglass_forward.12} parent=5 // pred_check_branch
      %126 = sbr.rel (%p123) target = $region12
    $region11: #{hourglass_forward.12} parent=5 // pred_region
      %s127 = ssub.s32 %s8, 1
    $region12: #{hourglass_forward.12} parent=5 // pred_fallthru
      _
    %p128 = scmp.lt.s32.totalorder %s8, 24
    // Predicated region
    $region13: #{hourglass_forward.12} parent=5 // pred_check
      %p129 = pneg %p128
    $region14: #{hourglass_forward.12} parent=5 // pred_check_branch
      %131 = sbr.rel (%p129) target = $region16
    $region15: #{hourglass_forward.12} parent=5 // pred_region
      // Predicated region
      $region17: #{hourglass_forward.12} parent=15 // pred_check
        %p132 = pneg %p53
      $region18: #{hourglass_forward.12} parent=15 // pred_check_branch
        %134 = sbr.rel (%p132) target = $region20
      $region19: #{hourglass_forward.12} parent=15 // pred_region
        %s135 = smul.u32 %s16, 2
        %s136 = sadd.s32 %s135, %s17
        %p137 = scmp.lt.s32.totalorder %s15, 1
        %s138 = scalar_select %p137, %s15, 1
        %p139 = scmp.lt.s32.totalorder %s136, 9
        %s140 = scalar_select %p139, %s136, 9
        %s141 = smul.addr %s140, 4
        %s142 = smul.addr %s138, 40
        %s143 = sadd.s32 %s141, %s142
        %s144 = smul.addr %s143, 2
        %s145 = scalar_lea.vmem %s0, %s144
        %s146 = smul.u32 %s16, 2
        %s147 = sadd.s32 %s146, %s17
      $region20: #{hourglass_forward.12} parent=15 // pred_fallthru
        _
      // Predicated region
      $region21: #{hourglass_forward.12} parent=15 // pred_check
        %p148 = pneg %p79
      $region22: #{hourglass_forward.12} parent=15 // pred_check_branch
        %150 = sbr.rel (%p148) target = $region24
      $region23: #{hourglass_forward.12} parent=15 // pred_region
        %p151 = scmp.lt.s32.totalorder %s17, 2
        %s152 = scalar_select %p151, %s17, 2
        %s153 = smul.addr %s152, 9
        %s154 = smul.addr %s153, 4
        %s155 = scalar_lea.vmem %s1, %s154
      $region24: #{hourglass_forward.12} parent=15 // pred_fallthru
        _
    $region16: #{hourglass_forward.12} parent=5 // pred_fallthru
      _
    %p156 = scmp.le.s32.totalorder 1, %s8
    %p157 = scmp.lt.s32.totalorder %s8, 25
    %p158 = pnand %p156, %p157
    %p159 = pneg %p158
    // Predicated region
    $region25: #{hourglass_forward.12} parent=5 // pred_check
      _
    $region26: #{hourglass_forward.12} parent=5 // pred_check_branch
      %161 = sbr.rel (%p158) target = $region28
    $region27: #{hourglass_forward.12} parent=5 // pred_region
      %s162 = ssub.s32 %s8, 1
      %s163 = smul.u32 %s19, 2
      %s164 = sadd.s32 %s163, %s20
      %p165 = scmp.lt.s32.totalorder %s18, 1
      %s166 = scalar_select %p165, %s18, 1
      %p167 = scmp.lt.s32.totalorder %s164, 9
      %s168 = scalar_select %p167, %s164, 9
      %s169 = smul.addr %s168, 4
      %s170 = smul.addr %s166, 40
      %s171 = sadd.s32 %s169, %s170
      %s172 = smul.addr %s171, 2
      %s173 = scalar_lea.vmem %s0, %s172
      %p174 = pneg %p59
      %p175 = pneg %p56
      %p176 = scmp.lt.s32.totalorder %s20, 2
      %s177 = scalar_select %p176, %s20, 2
      %s178 = smul.addr %s177, 9
      %s179 = smul.addr %s178, 4
      %s180 = scalar_lea.vmem %s1, %s179
      %p181 = pneg %p85
      %p182 = pneg %p82
      %p183 = pneg %p113
      %p184 = pneg %p110
      %s185 = smul.u32 3, %s19
      %p186 = scmp.lt.s32.totalorder %s18, 1
      %s187 = scalar_select %p186, %s18, 1
      %p188 = scmp.lt.s32.totalorder %s185, 11
      %s189 = scalar_select %p188, %s185, 11
      %s190 = smul.addr %s187, 12
      %s191 = sadd.s32 %s189, %s190
      %s192 = smul.addr %s191, 4
      %s193 = scalar_lea.vmem %s2, %s192
      %s194 = smul.u32 %s19, 2
      %s195 = sadd.s32 %s194, %s20
      %p196 = scmp.lt.s32.totalorder %s18, 1
      %s197 = scalar_select %p196, %s18, 1
      %p198 = scmp.lt.s32.totalorder %s195, 9
      %s199 = scalar_select %p198, %s195, 9
      %s200 = smul.addr %s199, 4
      %s201 = smul.addr %s197, 40
      %s202 = sadd.s32 %s200, %s201
      %s203 = smul.addr %s202, 2
      %s204 = scalar_lea.vmem %s0, %s203
      %s205 = smul.u32 %s19, 2
      %s206 = sadd.s32 %s205, %s20
      %p207 = scmp.lt.s32.totalorder %s20, 2
      %s208 = scalar_select %p207, %s20, 2
      %s209 = smul.addr %s208, 9
      %s210 = smul.addr %s209, 4
      %s211 = scalar_lea.vmem %s1, %s210
      %s212 = smul.u32 3, %s19
      %p213 = scmp.lt.s32.totalorder %s18, 1
      %s214 = scalar_select %p213, %s18, 1
      %p215 = scmp.lt.s32.totalorder %s212, 11
      %s216 = scalar_select %p215, %s212, 11
      %s217 = smul.addr %s214, 12
      %s218 = sadd.s32 %s216, %s217
      %s219 = smul.addr %s218, 4
      %s220 = scalar_lea.vmem %s2, %s219
      %s221 = smul.u32 3, %s19
      %p223 = scmp.eq.s32.totalorder %s20, 0
      // Predicated region
      $region29: #{hourglass_forward.12} parent=27 // pred_check
        %p224 = pneg %p223
      $region30: #{hourglass_forward.12} parent=27 // pred_check_branch
        %226 = sbr.rel (%p224) target = $region32
      $region31: #{hourglass_forward.12} parent=27 // pred_region
        %227 = vst [vmem:[#allocation2] sm:$0xff] 0.0
        %228 = vst [vmem:[#allocation2 + $0x8] sm:$0xff] 0.0
        %229 = vst [vmem:[#allocation2 + $0x10] sm:$0xff] 0.0
      $region32: #{hourglass_forward.12} parent=27 // pred_fallthru
        _
      %v230 = vld [vmem:[%s204] sm:$0xff]
      %v231 = vld [vmem:[#allocation2] sm:$0xff]
      %v232 = vld [vmem:[#allocation2 + $0x8] sm:$0xff]
      %v233 = vld [vmem:[#allocation2 + $0x10] sm:$0xff]
      %v234 = vld [vmem:[%s211] sm:$0xf]
      %v236 = vcombine.high %v230, %v230
      %v238 = vunpack.c.l.s4 1983009808
      %v239 = vunpack.c.0.s8 %v238
      %v240 = vlaneseq
      %v241 = vshrl.u32 %v240, 7
      %v242 = vsub.s32 %v239, %v241
      %v243 = vrot.slane %v230, %v242
      %v245 = vunpack.c.l.s4 1983009808
      %v246 = vunpack.c.0.s8 %v245
      %v247 = vlaneseq
      %v248 = vshrl.u32 %v247, 7
      %v249 = vsub.s32 %v246, %v248
      %v250 = vrot.slane %v236, %v249
      %v251 = vcombine.high %v243, %v243
      %vm252 = vcmask 31744
      %v254 = vsel %vm252, %v234, 0
      %vm256 = vcmask 1041408
      %v258 = vsel %vm256, %v243, 0
      %v261 = vsel %vm256, %v251, 0
      %v264 = vsel %vm256, %v250, 0
      %266 = vmatprep.subr.bf16.mxu0 %v261
      %267 = vmatpush1.bf16.msra.mxu0 %v258
      %268 = vmatprep.subr.bf16.mxu0 0
      %269 = vmatpush1.bf16.msra.mxu0 0
      %270 = vmatprep.subr.bf16.mxu0 0
      %271 = vmatpush1.bf16.msra.mxu0 0
      %272 = vmatprep.subr.bf16.mxu0 0
      %273 = vmatpush1.bf16.msra.mxu0 0
      %274 = vmatprep.subr.bf16.mxu0 0
      %275 = vmatpush1.bf16.msra.mxu0 0
      %276 = vmatprep.subr.bf16.mxu0 0
      %277 = vmatpush1.bf16.msra.mxu0 0
      %278 = vmatprep.subr.bf16.mxu0 0
      %279 = vmatpush1.bf16.msra.mxu0 0
      %280 = vmatprep.subr.bf16.mxu0 0
      %281 = vmatpush1.bf16.msra.mxu0 0
      %282 = vmatprep.subr.bf16.mxu0 0
      %283 = vmatpush1.bf16.msra.mxu0 0
      %284 = vmatprep.subr.bf16.mxu0 0
      %285 = vmatpush1.bf16.msra.mxu0 0
      %286 = vmatprep.subr.bf16.mxu0 0
      %287 = vmatpush1.bf16.msra.mxu0 0
      %288 = vmatprep.subr.bf16.mxu0 0
      %289 = vmatpush1.bf16.msra.mxu0 0
      %290 = vmatprep.subr.bf16.mxu0 0
      %291 = vmatpush1.bf16.msra.mxu0 0
      %292 = vmatprep.subr.bf16.mxu0 0
      %293 = vmatpush1.bf16.msra.mxu0 0
      %294 = vmatprep.subr.bf16.mxu0 0
      %295 = vmatpush1.bf16.msra.mxu0 0
      %296 = vmatprep.subr.bf16.mxu0 0
      %297 = vmatpush1.bf16.msra.mxu0 0
      %298 = vmatprep.mubr.bf16.mxu0 0
      %299 = vmatmul.mubr.bf16.gmra.mrb[0].mxu0 %v254
      %v300 = vpop.f32.mrb[0].mxu0
      %v301 = vadd.f32 0.0, %v300
      %v302 = vpop.f32.mrb[0].mxu0
      %v303 = vadd.f32 0.0, %v302
      %v304 = vpop.f32.mrb[0].mxu0
      %v305 = vpop.f32.mrb[0].mxu0
      %306 = vdwg.mxu0
      %307 = vmatprep.subr.bf16.mxu0 0
      %308 = vmatpush1.bf16.msra.mxu0 %v264
      %309 = vmatprep.subr.bf16.mxu0 0
      %310 = vmatpush1.bf16.msra.mxu0 0
      %311 = vmatprep.subr.bf16.mxu0 0
      %312 = vmatpush1.bf16.msra.mxu0 0
      %313 = vmatprep.subr.bf16.mxu0 0
      %314 = vmatpush1.bf16.msra.mxu0 0
      %315 = vmatprep.subr.bf16.mxu0 0
      %316 = vmatpush1.bf16.msra.mxu0 0
      %317 = vmatprep.subr.bf16.mxu0 0
      %318 = vmatpush1.bf16.msra.mxu0 0
      %319 = vmatprep.subr.bf16.mxu0 0
      %320 = vmatpush1.bf16.msra.mxu0 0
      %321 = vmatprep.subr.bf16.mxu0 0
      %322 = vmatpush1.bf16.msra.mxu0 0
      %323 = vmatprep.subr.bf16.mxu0 0
      %324 = vmatpush1.bf16.msra.mxu0 0
      %325 = vmatprep.subr.bf16.mxu0 0
      %326 = vmatpush1.bf16.msra.mxu0 0
      %327 = vmatprep.subr.bf16.mxu0 0
      %328 = vmatpush1.bf16.msra.mxu0 0
      %329 = vmatprep.subr.bf16.mxu0 0
      %330 = vmatpush1.bf16.msra.mxu0 0
      %331 = vmatprep.subr.bf16.mxu0 0
      %332 = vmatpush1.bf16.msra.mxu0 0
      %333 = vmatprep.subr.bf16.mxu0 0
      %334 = vmatpush1.bf16.msra.mxu0 0
      %335 = vmatprep.subr.bf16.mxu0 0
      %336 = vmatpush1.bf16.msra.mxu0 0
      %337 = vmatprep.subr.bf16.mxu0 0
      %338 = vmatpush1.bf16.msra.mxu0 0
      %339 = vmatprep.mubr.bf16.mxu0 0
      %340 = vmatmul.mubr.bf16.gmra.mrb[0].mxu0 %v254
      %v341 = vpop.f32.mrb[0].mxu0
      %v342 = vadd.f32 0.0, %v341
      %v343 = vpop.f32.mrb[0].mxu0
      %v344 = vpop.f32.mrb[0].mxu0
      %v345 = vpop.f32.mrb[0].mxu0
      %346 = vdwg.mxu0
      %v347 = vadd.f32 %v231, %v301
      %v348 = vadd.f32 %v232, %v303
      %v349 = vadd.f32 %v233, %v342
      %s350 = scalar_lea.vmem %s211, 4
      %v351 = vld [vmem:[%s350] sm:$0xf]
      %v352 = vcombine.high %v250, %v250
      %353 = vrot.lane.b32.xlu0 %v243, 127
      %v354 = vpop.permute.xlu0 %353
      %355 = vrot.lane.b32.xlu0 %v251, 127
      %v356 = vpop.permute.xlu0 %355
      %357 = vrot.lane.b32.xlu0 %v250, 127
      %v358 = vpop.permute.xlu0 %357
      %359 = vrot.lane.b32.xlu0 %v352, 127
      %v360 = vpop.permute.xlu0 %359
      %vm361 = vcmask 1039360
      %v362 = vsel %vm361, %v354, %v356
      %v363 = vsel %vm361, %v356, %v358
      %v364 = vsel %vm361, %v358, %v360
      %v366 = vsel %vm252, %v351, 0
      %v369 = vsel %vm256, %v362, 0
      %v372 = vsel %vm256, %v363, 0
      %v375 = vsel %vm256, %v364, 0
      %377 = vmatprep.subr.bf16.mxu0 %v372
      %378 = vmatpush1.bf16.msra.mxu0 %v369
      %379 = vmatprep.subr.bf16.mxu0 0
      %380 = vmatpush1.bf16.msra.mxu0 0
      %381 = vmatprep.subr.bf16.mxu0 0
      %382 = vmatpush1.bf16.msra.mxu0 0
      %383 = vmatprep.subr.bf16.mxu0 0
      %384 = vmatpush1.bf16.msra.mxu0 0
      %385 = vmatprep.subr.bf16.mxu0 0
      %386 = vmatpush1.bf16.msra.mxu0 0
      %387 = vmatprep.subr.bf16.mxu0 0
      %388 = vmatpush1.bf16.msra.mxu0 0
      %389 = vmatprep.subr.bf16.mxu0 0
      %390 = vmatpush1.bf16.msra.mxu0 0
      %391 = vmatprep.subr.bf16.mxu0 0
      %392 = vmatpush1.bf16.msra.mxu0 0
      %393 = vmatprep.subr.bf16.mxu0 0
      %394 = vmatpush1.bf16.msra.mxu0 0
      %395 = vmatprep.subr.bf16.mxu0 0
      %396 = vmatpush1.bf16.msra.mxu0 0
      %397 = vmatprep.subr.bf16.mxu0 0
      %398 = vmatpush1.bf16.msra.mxu0 0
      %399 = vmatprep.subr.bf16.mxu0 0
      %400 = vmatpush1.bf16.msra.mxu0 0
      %401 = vmatprep.subr.bf16.mxu0 0
      %402 = vmatpush1.bf16.msra.mxu0 0
      %403 = vmatprep.subr.bf16.mxu0 0
      %404 = vmatpush1.bf16.msra.mxu0 0
      %405 = vmatprep.subr.bf16.mxu0 0
      %406 = vmatpush1.bf16.msra.mxu0 0
      %407 = vmatprep.subr.bf16.mxu0 0
      %408 = vmatpush1.bf16.msra.mxu0 0
      %409 = vmatprep.mubr.bf16.mxu0 0
      %410 = vmatmul.mubr.bf16.gmra.mrb[0].mxu0 %v366
      %v411 = vpop.f32.mrb[0].mxu0
      %v412 = vadd.f32 0.0, %v411
      %v413 = vpop.f32.mrb[0].mxu0
      %v414 = vadd.f32 0.0, %v413
      %v415 = vpop.f32.mrb[0].mxu0
      %v416 = vpop.f32.mrb[0].mxu0
      %417 = vdwg.mxu0
      %418 = vmatprep.subr.bf16.mxu0 0
      %419 = vmatpush1.bf16.msra.mxu0 %v375
      %420 = vmatprep.subr.bf16.mxu0 0
      %421 = vmatpush1.bf16.msra.mxu0 0
      %422 = vmatprep.subr.bf16.mxu0 0
      %423 = vmatpush1.bf16.msra.mxu0 0
      %424 = vmatprep.subr.bf16.mxu0 0
      %425 = vmatpush1.bf16.msra.mxu0 0
      %426 = vmatprep.subr.bf16.mxu0 0
      %427 = vmatpush1.bf16.msra.mxu0 0
      %428 = vmatprep.subr.bf16.mxu0 0
      %429 = vmatpush1.bf16.msra.mxu0 0
      %430 = vmatprep.subr.bf16.mxu0 0
      %431 = vmatpush1.bf16.msra.mxu0 0
      %432 = vmatprep.subr.bf16.mxu0 0
      %433 = vmatpush1.bf16.msra.mxu0 0
      %434 = vmatprep.subr.bf16.mxu0 0
      %435 = vmatpush1.bf16.msra.mxu0 0
      %436 = vmatprep.subr.bf16.mxu0 0
      %437 = vmatpush1.bf16.msra.mxu0 0
      %438 = vmatprep.subr.bf16.mxu0 0
      %439 = vmatpush1.bf16.msra.mxu0 0
      %440 = vmatprep.subr.bf16.mxu0 0
      %441 = vmatpush1.bf16.msra.mxu0 0
      %442 = vmatprep.subr.bf16.mxu0 0
      %443 = vmatpush1.bf16.msra.mxu0 0
      %444 = vmatprep.subr.bf16.mxu0 0
      %445 = vmatpush1.bf16.msra.mxu0 0
      %446 = vmatprep.subr.bf16.mxu0 0
      %447 = vmatpush1.bf16.msra.mxu0 0
      %448 = vmatprep.subr.bf16.mxu0 0
      %449 = vmatpush1.bf16.msra.mxu0 0
      %450 = vmatprep.mubr.bf16.mxu0 0
      %451 = vmatmul.mubr.bf16.gmra.mrb[0].mxu0 %v366
      %v452 = vpop.f32.mrb[0].mxu0
      %v453 = vadd.f32 0.0, %v452
      %v454 = vpop.f32.mrb[0].mxu0
      %v455 = vpop.f32.mrb[0].mxu0
      %v456 = vpop.f32.mrb[0].mxu0
      %457 = vdwg.mxu0
      %v458 = vadd.f32 %v347, %v412
      %v459 = vadd.f32 %v348, %v414
      %v460 = vadd.f32 %v349, %v453
      %s461 = scalar_lea.vmem %s211, 8
      %v462 = vld [vmem:[%s461] sm:$0xf]
      %463 = vrot.lane.b32.xlu0 %v243, 126
      %v464 = vpop.permute.xlu0 %463
      %465 = vrot.lane.b32.xlu0 %v251, 126
      %v466 = vpop.permute.xlu0 %465
      %467 = vrot.lane.b32.xlu0 %v250, 126
      %v468 = vpop.permute.xlu0 %467
      %469 = vrot.lane.b32.xlu0 %v352, 126
      %v470 = vpop.permute.xlu0 %469
      %vm471 = vcmask 1031168
      %v472 = vsel %vm471, %v464, %v466
      %v473 = vsel %vm471, %v466, %v468
      %v474 = vsel %vm471, %v468, %v470
      %v476 = vsel %vm252, %v462, 0
      %v479 = vsel %vm256, %v472, 0
      %v482 = vsel %vm256, %v473, 0
      %v485 = vsel %vm256, %v474, 0
      %487 = vmatprep.subr.bf16.mxu0 %v482
      %488 = vmatpush1.bf16.msra.mxu0 %v479
      %489 = vmatprep.subr.bf16.mxu0 0
      %490 = vmatpush1.bf16.msra.mxu0 0
      %491 = vmatprep.subr.bf16.mxu0 0
      %492 = vmatpush1.bf16.msra.mxu0 0
      %493 = vmatprep.subr.bf16.mxu0 0
      %494 = vmatpush1.bf16.msra.mxu0 0
      %495 = vmatprep.subr.bf16.mxu0 0
      %496 = vmatpush1.bf16.msra.mxu0 0
      %497 = vmatprep.subr.bf16.mxu0 0
      %498 = vmatpush1.bf16.msra.mxu0 0
      %499 = vmatprep.subr.bf16.mxu0 0
      %500 = vmatpush1.bf16.msra.mxu0 0
      %501 = vmatprep.subr.bf16.mxu0 0
      %502 = vmatpush1.bf16.msra.mxu0 0
      %503 = vmatprep.subr.bf16.mxu0 0
      %504 = vmatpush1.bf16.msra.mxu0 0
      %505 = vmatprep.subr.bf16.mxu0 0
      %506 = vmatpush1.bf16.msra.mxu0 0
      %507 = vmatprep.subr.bf16.mxu0 0
      %508 = vmatpush1.bf16.msra.mxu0 0
      %509 = vmatprep.subr.bf16.mxu0 0
      %510 = vmatpush1.bf16.msra.mxu0 0
      %511 = vmatprep.subr.bf16.mxu0 0
      %512 = vmatpush1.bf16.msra.mxu0 0
      %513 = vmatprep.subr.bf16.mxu0 0
      %514 = vmatpush1.bf16.msra.mxu0 0
      %515 = vmatprep.subr.bf16.mxu0 0
      %516 = vmatpush1.bf16.msra.mxu0 0
      %517 = vmatprep.subr.bf16.mxu0 0
      %518 = vmatpush1.bf16.msra.mxu0 0
      %519 = vmatprep.mubr.bf16.mxu0 0
      %520 = vmatmul.mubr.bf16.gmra.mrb[0].mxu0 %v476
      %v521 = vpop.f32.mrb[0].mxu0
      %v522 = vadd.f32 0.0, %v521
      %v523 = vpop.f32.mrb[0].mxu0
      %v524 = vadd.f32 0.0, %v523
      %v525 = vpop.f32.mrb[0].mxu0
      %v526 = vpop.f32.mrb[0].mxu0
      %527 = vdwg.mxu0
      %528 = vmatprep.subr.bf16.mxu0 0
      %529 = vmatpush1.bf16.msra.mxu0 %v485
      %530 = vmatprep.subr.bf16.mxu0 0
      %531 = vmatpush1.bf16.msra.mxu0 0
      %532 = vmatprep.subr.bf16.mxu0 0
      %533 = vmatpush1.bf16.msra.mxu0 0
      %534 = vmatprep.subr.bf16.mxu0 0
      %535 = vmatpush1.bf16.msra.mxu0 0
      %536 = vmatprep.subr.bf16.mxu0 0
      %537 = vmatpush1.bf16.msra.mxu0 0
      %538 = vmatprep.subr.bf16.mxu0 0
      %539 = vmatpush1.bf16.msra.mxu0 0
      %540 = vmatprep.subr.bf16.mxu0 0
      %541 = vmatpush1.bf16.msra.mxu0 0
      %542 = vmatprep.subr.bf16.mxu0 0
      %543 = vmatpush1.bf16.msra.mxu0 0
      %544 = vmatprep.subr.bf16.mxu0 0
      %545 = vmatpush1.bf16.msra.mxu0 0
      %546 = vmatprep.subr.bf16.mxu0 0
      %547 = vmatpush1.bf16.msra.mxu0 0
      %548 = vmatprep.subr.bf16.mxu0 0
      %549 = vmatpush1.bf16.msra.mxu0 0
      %550 = vmatprep.subr.bf16.mxu0 0
      %551 = vmatpush1.bf16.msra.mxu0 0
      %552 = vmatprep.subr.bf16.mxu0 0
      %553 = vmatpush1.bf16.msra.mxu0 0
      %554 = vmatprep.subr.bf16.mxu0 0
      %555 = vmatpush1.bf16.msra.mxu0 0
      %556 = vmatprep.subr.bf16.mxu0 0
      %557 = vmatpush1.bf16.msra.mxu0 0
      %558 = vmatprep.subr.bf16.mxu0 0
      %559 = vmatpush1.bf16.msra.mxu0 0
      %560 = vmatprep.mubr.bf16.mxu0 0
      %561 = vmatmul.mubr.bf16.gmra.mrb[0].mxu0 %v476
      %v562 = vpop.f32.mrb[0].mxu0
      %v563 = vadd.f32 0.0, %v562
      %v564 = vpop.f32.mrb[0].mxu0
      %v565 = vpop.f32.mrb[0].mxu0
      %v566 = vpop.f32.mrb[0].mxu0
      %567 = vdwg.mxu0
      %v568 = vadd.f32 %v458, %v522
      %v569 = vadd.f32 %v459, %v524
      %v570 = vadd.f32 %v460, %v563
      %s571 = scalar_lea.vmem %s211, 12
      %v572 = vld [vmem:[%s571] sm:$0xf]
      %573 = vrot.lane.b32.xlu0 %v243, 110
      %v574 = vpop.permute.xlu0 %573
      %575 = vrot.lane.b32.xlu0 %v251, 110
      %v576 = vpop.permute.xlu0 %575
      %577 = vrot.lane.b32.xlu0 %v250, 110
      %v578 = vpop.permute.xlu0 %577
      %579 = vrot.lane.b32.xlu0 %v352, 110
      %v580 = vpop.permute.xlu0 %579
      %vm581 = vcmask 900096
      %v582 = vsel %vm581, %v574, %v576
      %v583 = vsel %vm581, %v576, %v578
      %v584 = vsel %vm581, %v578, %v580
      %v586 = vsel %vm252, %v572, 0
      %v589 = vsel %vm256, %v582, 0
      %v592 = vsel %vm256, %v583, 0
      %v595 = vsel %vm256, %v584, 0
      %597 = vmatprep.subr.bf16.mxu0 %v592
      %598 = vmatpush1.bf16.msra.mxu0 %v589
      %599 = vmatprep.subr.bf16.mxu0 0
      %600 = vmatpush1.bf16.msra.mxu0 0
      %601 = vmatprep.subr.bf16.mxu0 0
      %602 = vmatpush1.bf16.msra.mxu0 0
      %603 = vmatprep.subr.bf16.mxu0 0
      %604 = vmatpush1.bf16.msra.mxu0 0
      %605 = vmatprep.subr.bf16.mxu0 0
      %606 = vmatpush1.bf16.msra.mxu0 0
      %607 = vmatprep.subr.bf16.mxu0 0
      %608 = vmatpush1.bf16.msra.mxu0 0
      %609 = vmatprep.subr.bf16.mxu0 0
      %610 = vmatpush1.bf16.msra.mxu0 0
      %611 = vmatprep.subr.bf16.mxu0 0
      %612 = vmatpush1.bf16.msra.mxu0 0
      %613 = vmatprep.subr.bf16.mxu0 0
      %614 = vmatpush1.bf16.msra.mxu0 0
      %615 = vmatprep.subr.bf16.mxu0 0
      %616 = vmatpush1.bf16.msra.mxu0 0
      %617 = vmatprep.subr.bf16.mxu0 0
      %618 = vmatpush1.bf16.msra.mxu0 0
      %619 = vmatprep.subr.bf16.mxu0 0
      %620 = vmatpush1.bf16.msra.mxu0 0
      %621 = vmatprep.subr.bf16.mxu0 0
      %622 = vmatpush1.bf16.msra.mxu0 0
      %623 = vmatprep.subr.bf16.mxu0 0
      %624 = vmatpush1.bf16.msra.mxu0 0
      %625 = vmatprep.subr.bf16.mxu0 0
      %626 = vmatpush1.bf16.msra.mxu0 0
      %627 = vmatprep.subr.bf16.mxu0 0
      %628 = vmatpush1.bf16.msra.mxu0 0
      %629 = vmatprep.mubr.bf16.mxu0 0
      %630 = vmatmul.mubr.bf16.gmra.mrb[0].mxu0 %v586
      %v631 = vpop.f32.mrb[0].mxu0
      %v632 = vadd.f32 0.0, %v631
      %v633 = vpop.f32.mrb[0].mxu0
      %v634 = vadd.f32 0.0, %v633
      %v635 = vpop.f32.mrb[0].mxu0
      %v636 = vpop.f32.mrb[0].mxu0
      %637 = vdwg.mxu0
      %638 = vmatprep.subr.bf16.mxu0 0
      %639 = vmatpush1.bf16.msra.mxu0 %v595
      %640 = vmatprep.subr.bf16.mxu0 0
      %641 = vmatpush1.bf16.msra.mxu0 0
      %642 = vmatprep.subr.bf16.mxu0 0
      %643 = vmatpush1.bf16.msra.mxu0 0
      %644 = vmatprep.subr.bf16.mxu0 0
      %645 = vmatpush1.bf16.msra.mxu0 0
      %646 = vmatprep.subr.bf16.mxu0 0
      %647 = vmatpush1.bf16.msra.mxu0 0
      %648 = vmatprep.subr.bf16.mxu0 0
      %649 = vmatpush1.bf16.msra.mxu0 0
      %650 = vmatprep.subr.bf16.mxu0 0
      %651 = vmatpush1.bf16.msra.mxu0 0
      %652 = vmatprep.subr.bf16.mxu0 0
      %653 = vmatpush1.bf16.msra.mxu0 0
      %654 = vmatprep.subr.bf16.mxu0 0
      %655 = vmatpush1.bf16.msra.mxu0 0
      %656 = vmatprep.subr.bf16.mxu0 0
      %657 = vmatpush1.bf16.msra.mxu0 0
      %658 = vmatprep.subr.bf16.mxu0 0
      %659 = vmatpush1.bf16.msra.mxu0 0
      %660 = vmatprep.subr.bf16.mxu0 0
      %661 = vmatpush1.bf16.msra.mxu0 0
      %662 = vmatprep.subr.bf16.mxu0 0
      %663 = vmatpush1.bf16.msra.mxu0 0
      %664 = vmatprep.subr.bf16.mxu0 0
      %665 = vmatpush1.bf16.msra.mxu0 0
      %666 = vmatprep.subr.bf16.mxu0 0
      %667 = vmatpush1.bf16.msra.mxu0 0
      %668 = vmatprep.subr.bf16.mxu0 0
      %669 = vmatpush1.bf16.msra.mxu0 0
      %670 = vmatprep.mubr.bf16.mxu0 0
      %671 = vmatmul.mubr.bf16.gmra.mrb[0].mxu0 %v586
      %v672 = vpop.f32.mrb[0].mxu0
      %v673 = vadd.f32 0.0, %v672
      %v674 = vpop.f32.mrb[0].mxu0
      %v675 = vpop.f32.mrb[0].mxu0
      %v676 = vpop.f32.mrb[0].mxu0
      %677 = vdwg.mxu0
      %v678 = vadd.f32 %v568, %v632
      %v679 = vadd.f32 %v569, %v634
      %v680 = vadd.f32 %v570, %v673
      %s681 = scalar_lea.vmem %s211, 16
      %v682 = vld [vmem:[%s681] sm:$0xf]
      %683 = vrot.lane.b32.xlu0 %v243, 109
      %v684 = vpop.permute.xlu0 %683
      %685 = vrot.lane.b32.xlu0 %v251, 109
      %v686 = vpop.permute.xlu0 %685
      %687 = vrot.lane.b32.xlu0 %v250, 109
      %v688 = vpop.permute.xlu0 %687
      %689 = vrot.lane.b32.xlu0 %v352, 109
      %v690 = vpop.permute.xlu0 %689
      %vm691 = vcmask 891904
      %v692 = vsel %vm691, %v684, %v686
      %v693 = vsel %vm691, %v686, %v688
      %v694 = vsel %vm691, %v688, %v690
      %v696 = vsel %vm252, %v682, 0
      %v699 = vsel %vm256, %v692, 0
      %v702 = vsel %vm256, %v693, 0
      %v705 = vsel %vm256, %v694, 0
      %707 = vmatprep.subr.bf16.mxu0 %v702
      %708 = vmatpush1.bf16.msra.mxu0 %v699
      %709 = vmatprep.subr.bf16.mxu0 0
      %710 = vmatpush1.bf16.msra.mxu0 0
      %711 = vmatprep.subr.bf16.mxu0 0
      %712 = vmatpush1.bf16.msra.mxu0 0
      %713 = vmatprep.subr.bf16.mxu0 0
      %714 = vmatpush1.bf16.msra.mxu0 0
      %715 = vmatprep.subr.bf16.mxu0 0
      %716 = vmatpush1.bf16.msra.mxu0 0
      %717 = vmatprep.subr.bf16.mxu0 0
      %718 = vmatpush1.bf16.msra.mxu0 0
      %719 = vmatprep.subr.bf16.mxu0 0
      %720 = vmatpush1.bf16.msra.mxu0 0
      %721 = vmatprep.subr.bf16.mxu0 0
      %722 = vmatpush1.bf16.msra.mxu0 0
      %723 = vmatprep.subr.bf16.mxu0 0
      %724 = vmatpush1.bf16.msra.mxu0 0
      %725 = vmatprep.subr.bf16.mxu0 0
      %726 = vmatpush1.bf16.msra.mxu0 0
      %727 = vmatprep.subr.bf16.mxu0 0
      %728 = vmatpush1.bf16.msra.mxu0 0
      %729 = vmatprep.subr.bf16.mxu0 0
      %730 = vmatpush1.bf16.msra.mxu0 0
      %731 = vmatprep.subr.bf16.mxu0 0
      %732 = vmatpush1.bf16.msra.mxu0 0
      %733 = vmatprep.subr.bf16.mxu0 0
      %734 = vmatpush1.bf16.msra.mxu0 0
      %735 = vmatprep.subr.bf16.mxu0 0
      %736 = vmatpush1.bf16.msra.mxu0 0
      %737 = vmatprep.subr.bf16.mxu0 0
      %738 = vmatpush1.bf16.msra.mxu0 0
      %739 = vmatprep.mubr.bf16.mxu0 0
      %740 = vmatmul.mubr.bf16.gmra.mrb[0].mxu0 %v696
      %v741 = vpop.f32.mrb[0].mxu0
      %v742 = vadd.f32 0.0, %v741
      %v743 = vpop.f32.mrb[0].mxu0
      %v744 = vadd.f32 0.0, %v743
      %v745 = vpop.f32.mrb[0].mxu0
      %v746 = vpop.f32.mrb[0].mxu0
      %747 = vdwg.mxu0
      %748 = vmatprep.subr.bf16.mxu0 0
      %749 = vmatpush1.bf16.msra.mxu0 %v705
      %750 = vmatprep.subr.bf16.mxu0 0
      %751 = vmatpush1.bf16.msra.mxu0 0
      %752 = vmatprep.subr.bf16.mxu0 0
      %753 = vmatpush1.bf16.msra.mxu0 0
      %754 = vmatprep.subr.bf16.mxu0 0
      %755 = vmatpush1.bf16.msra.mxu0 0
      %756 = vmatprep.subr.bf16.mxu0 0
      %757 = vmatpush1.bf16.msra.mxu0 0
      %758 = vmatprep.subr.bf16.mxu0 0
      %759 = vmatpush1.bf16.msra.mxu0 0
      %760 = vmatprep.subr.bf16.mxu0 0
      %761 = vmatpush1.bf16.msra.mxu0 0
      %762 = vmatprep.subr.bf16.mxu0 0
      %763 = vmatpush1.bf16.msra.mxu0 0
      %764 = vmatprep.subr.bf16.mxu0 0
      %765 = vmatpush1.bf16.msra.mxu0 0
      %766 = vmatprep.subr.bf16.mxu0 0
      %767 = vmatpush1.bf16.msra.mxu0 0
      %768 = vmatprep.subr.bf16.mxu0 0
      %769 = vmatpush1.bf16.msra.mxu0 0
      %770 = vmatprep.subr.bf16.mxu0 0
      %771 = vmatpush1.bf16.msra.mxu0 0
      %772 = vmatprep.subr.bf16.mxu0 0
      %773 = vmatpush1.bf16.msra.mxu0 0
      %774 = vmatprep.subr.bf16.mxu0 0
      %775 = vmatpush1.bf16.msra.mxu0 0
      %776 = vmatprep.subr.bf16.mxu0 0
      %777 = vmatpush1.bf16.msra.mxu0 0
      %778 = vmatprep.subr.bf16.mxu0 0
      %779 = vmatpush1.bf16.msra.mxu0 0
      %780 = vmatprep.mubr.bf16.mxu0 0
      %781 = vmatmul.mubr.bf16.gmra.mrb[0].mxu0 %v696
      %v782 = vpop.f32.mrb[0].mxu0
      %v783 = vadd.f32 0.0, %v782
      %v784 = vpop.f32.mrb[0].mxu0
      %v785 = vpop.f32.mrb[0].mxu0
      %v786 = vpop.f32.mrb[0].mxu0
      %787 = vdwg.mxu0
      %v788 = vadd.f32 %v678, %v742
      %v789 = vadd.f32 %v679, %v744
      %v790 = vadd.f32 %v680, %v783
      %s791 = scalar_lea.vmem %s211, 20
      %v792 = vld [vmem:[%s791] sm:$0xf]
      %793 = vrot.lane.b32.xlu0 %v243, 108
      %v794 = vpop.permute.xlu0 %793
      %795 = vrot.lane.b32.xlu0 %v251, 108
      %v796 = vpop.permute.xlu0 %795
      %797 = vrot.lane.b32.xlu0 %v250, 108
      %v798 = vpop.permute.xlu0 %797
      %799 = vrot.lane.b32.xlu0 %v352, 108
      %v800 = vpop.permute.xlu0 %799
      %vm801 = vcmask 883712
      %v802 = vsel %vm801, %v794, %v796
      %v803 = vsel %vm801, %v796, %v798
      %v804 = vsel %vm801, %v798, %v800
      %v806 = vsel %vm252, %v792, 0
      %v809 = vsel %vm256, %v802, 0
      %v812 = vsel %vm256, %v803, 0
      %v815 = vsel %vm256, %v804, 0
      %817 = vmatprep.subr.bf16.mxu0 %v812
      %818 = vmatpush1.bf16.msra.mxu0 %v809
      %819 = vmatprep.subr.bf16.mxu0 0
      %820 = vmatpush1.bf16.msra.mxu0 0
      %821 = vmatprep.subr.bf16.mxu0 0
      %822 = vmatpush1.bf16.msra.mxu0 0
      %823 = vmatprep.subr.bf16.mxu0 0
      %824 = vmatpush1.bf16.msra.mxu0 0
      %825 = vmatprep.subr.bf16.mxu0 0
      %826 = vmatpush1.bf16.msra.mxu0 0
      %827 = vmatprep.subr.bf16.mxu0 0
      %828 = vmatpush1.bf16.msra.mxu0 0
      %829 = vmatprep.subr.bf16.mxu0 0
      %830 = vmatpush1.bf16.msra.mxu0 0
      %831 = vmatprep.subr.bf16.mxu0 0
      %832 = vmatpush1.bf16.msra.mxu0 0
      %833 = vmatprep.subr.bf16.mxu0 0
      %834 = vmatpush1.bf16.msra.mxu0 0
      %835 = vmatprep.subr.bf16.mxu0 0
      %836 = vmatpush1.bf16.msra.mxu0 0
      %837 = vmatprep.subr.bf16.mxu0 0
      %838 = vmatpush1.bf16.msra.mxu0 0
      %839 = vmatprep.subr.bf16.mxu0 0
      %840 = vmatpush1.bf16.msra.mxu0 0
      %841 = vmatprep.subr.bf16.mxu0 0
      %842 = vmatpush1.bf16.msra.mxu0 0
      %843 = vmatprep.subr.bf16.mxu0 0
      %844 = vmatpush1.bf16.msra.mxu0 0
      %845 = vmatprep.subr.bf16.mxu0 0
      %846 = vmatpush1.bf16.msra.mxu0 0
      %847 = vmatprep.subr.bf16.mxu0 0
      %848 = vmatpush1.bf16.msra.mxu0 0
      %849 = vmatprep.mubr.bf16.mxu0 0
      %850 = vmatmul.mubr.bf16.gmra.mrb[0].mxu0 %v806
      %v851 = vpop.f32.mrb[0].mxu0
      %v852 = vadd.f32 0.0, %v851
      %v853 = vpop.f32.mrb[0].mxu0
      %v854 = vadd.f32 0.0, %v853
      %v855 = vpop.f32.mrb[0].mxu0
      %v856 = vpop.f32.mrb[0].mxu0
      %857 = vdwg.mxu0
      %858 = vmatprep.subr.bf16.mxu0 0
      %859 = vmatpush1.bf16.msra.mxu0 %v815
      %860 = vmatprep.subr.bf16.mxu0 0
      %861 = vmatpush1.bf16.msra.mxu0 0
      %862 = vmatprep.subr.bf16.mxu0 0
      %863 = vmatpush1.bf16.msra.mxu0 0
      %864 = vmatprep.subr.bf16.mxu0 0
      %865 = vmatpush1.bf16.msra.mxu0 0
      %866 = vmatprep.subr.bf16.mxu0 0
      %867 = vmatpush1.bf16.msra.mxu0 0
      %868 = vmatprep.subr.bf16.mxu0 0
      %869 = vmatpush1.bf16.msra.mxu0 0
      %870 = vmatprep.subr.bf16.mxu0 0
      %871 = vmatpush1.bf16.msra.mxu0 0
      %872 = vmatprep.subr.bf16.mxu0 0
      %873 = vmatpush1.bf16.msra.mxu0 0
      %874 = vmatprep.subr.bf16.mxu0 0
      %875 = vmatpush1.bf16.msra.mxu0 0
      %876 = vmatprep.subr.bf16.mxu0 0
      %877 = vmatpush1.bf16.msra.mxu0 0
      %878 = vmatprep.subr.bf16.mxu0 0
      %879 = vmatpush1.bf16.msra.mxu0 0
      %880 = vmatprep.subr.bf16.mxu0 0
      %881 = vmatpush1.bf16.msra.mxu0 0
      %882 = vmatprep.subr.bf16.mxu0 0
      %883 = vmatpush1.bf16.msra.mxu0 0
      %884 = vmatprep.subr.bf16.mxu0 0
      %885 = vmatpush1.bf16.msra.mxu0 0
      %886 = vmatprep.subr.bf16.mxu0 0
      %887 = vmatpush1.bf16.msra.mxu0 0
      %888 = vmatprep.subr.bf16.mxu0 0
      %889 = vmatpush1.bf16.msra.mxu0 0
      %890 = vmatprep.mubr.bf16.mxu0 0
      %891 = vmatmul.mubr.bf16.gmra.mrb[0].mxu0 %v806
      %v892 = vpop.f32.mrb[0].mxu0
      %v893 = vadd.f32 0.0, %v892
      %v894 = vpop.f32.mrb[0].mxu0
      %v895 = vpop.f32.mrb[0].mxu0
      %v896 = vpop.f32.mrb[0].mxu0
      %897 = vdwg.mxu0
      %v898 = vadd.f32 %v788, %v852
      %v899 = vadd.f32 %v789, %v854
      %v900 = vadd.f32 %v790, %v893
      %s901 = scalar_lea.vmem %s211, 24
      %v902 = vld [vmem:[%s901] sm:$0xf]
      %903 = vrot.lane.b32.xlu0 %v243, 92
      %v904 = vpop.permute.xlu0 %903
      %905 = vrot.lane.b32.xlu0 %v251, 92
      %v906 = vpop.permute.xlu0 %905
      %907 = vrot.lane.b32.xlu0 %v250, 92
      %v908 = vpop.permute.xlu0 %907
      %909 = vrot.lane.b32.xlu0 %v352, 92
      %v910 = vpop.permute.xlu0 %909
      %vm911 = vcmask 752640
      %v912 = vsel %vm911, %v904, %v906
      %v913 = vsel %vm911, %v906, %v908
      %v914 = vsel %vm911, %v908, %v910
      %v916 = vsel %vm252, %v902, 0
      %v919 = vsel %vm256, %v912, 0
      %v922 = vsel %vm256, %v913, 0
      %v925 = vsel %vm256, %v914, 0
      %927 = vmatprep.subr.bf16.mxu0 %v922
      %928 = vmatpush1.bf16.msra.mxu0 %v919
      %929 = vmatprep.subr.bf16.mxu0 0
      %930 = vmatpush1.bf16.msra.mxu0 0
      %931 = vmatprep.subr.bf16.mxu0 0
      %932 = vmatpush1.bf16.msra.mxu0 0
      %933 = vmatprep.subr.bf16.mxu0 0
      %934 = vmatpush1.bf16.msra.mxu0 0
      %935 = vmatprep.subr.bf16.mxu0 0
      %936 = vmatpush1.bf16.msra.mxu0 0
      %937 = vmatprep.subr.bf16.mxu0 0
      %938 = vmatpush1.bf16.msra.mxu0 0
      %939 = vmatprep.subr.bf16.mxu0 0
      %940 = vmatpush1.bf16.msra.mxu0 0
      %941 = vmatprep.subr.bf16.mxu0 0
      %942 = vmatpush1.bf16.msra.mxu0 0
      %943 = vmatprep.subr.bf16.mxu0 0
      %944 = vmatpush1.bf16.msra.mxu0 0
      %945 = vmatprep.subr.bf16.mxu0 0
      %946 = vmatpush1.bf16.msra.mxu0 0
      %947 = vmatprep.subr.bf16.mxu0 0
      %948 = vmatpush1.bf16.msra.mxu0 0
      %949 = vmatprep.subr.bf16.mxu0 0
      %950 = vmatpush1.bf16.msra.mxu0 0
      %951 = vmatprep.subr.bf16.mxu0 0
      %952 = vmatpush1.bf16.msra.mxu0 0
      %953 = vmatprep.subr.bf16.mxu0 0
      %954 = vmatpush1.bf16.msra.mxu0 0
      %955 = vmatprep.subr.bf16.mxu0 0
      %956 = vmatpush1.bf16.msra.mxu0 0
      %957 = vmatprep.subr.bf16.mxu0 0
      %958 = vmatpush1.bf16.msra.mxu0 0
      %959 = vmatprep.mubr.bf16.mxu0 0
      %960 = vmatmul.mubr.bf16.gmra.mrb[0].mxu0 %v916
      %v961 = vpop.f32.mrb[0].mxu0
      %v962 = vadd.f32 0.0, %v961
      %v963 = vpop.f32.mrb[0].mxu0
      %v964 = vadd.f32 0.0, %v963
      %v965 = vpop.f32.mrb[0].mxu0
      %v966 = vpop.f32.mrb[0].mxu0
      %967 = vdwg.mxu0
      %968 = vmatprep.subr.bf16.mxu0 0
      %969 = vmatpush1.bf16.msra.mxu0 %v925
      %970 = vmatprep.subr.bf16.mxu0 0
      %971 = vmatpush1.bf16.msra.mxu0 0
      %972 = vmatprep.subr.bf16.mxu0 0
      %973 = vmatpush1.bf16.msra.mxu0 0
      %974 = vmatprep.subr.bf16.mxu0 0
      %975 = vmatpush1.bf16.msra.mxu0 0
      %976 = vmatprep.subr.bf16.mxu0 0
      %977 = vmatpush1.bf16.msra.mxu0 0
      %978 = vmatprep.subr.bf16.mxu0 0
      %979 = vmatpush1.bf16.msra.mxu0 0
      %980 = vmatprep.subr.bf16.mxu0 0
      %981 = vmatpush1.bf16.msra.mxu0 0
      %982 = vmatprep.subr.bf16.mxu0 0
      %983 = vmatpush1.bf16.msra.mxu0 0
      %984 = vmatprep.subr.bf16.mxu0 0
      %985 = vmatpush1.bf16.msra.mxu0 0
      %986 = vmatprep.subr.bf16.mxu0 0
      %987 = vmatpush1.bf16.msra.mxu0 0
      %988 = vmatprep.subr.bf16.mxu0 0
      %989 = vmatpush1.bf16.msra.mxu0 0
      %990 = vmatprep.subr.bf16.mxu0 0
      %991 = vmatpush1.bf16.msra.mxu0 0
      %992 = vmatprep.subr.bf16.mxu0 0
      %993 = vmatpush1.bf16.msra.mxu0 0
      %994 = vmatprep.subr.bf16.mxu0 0
      %995 = vmatpush1.bf16.msra.mxu0 0
      %996 = vmatprep.subr.bf16.mxu0 0
      %997 = vmatpush1.bf16.msra.mxu0 0
      %998 = vmatprep.subr.bf16.mxu0 0
      %999 = vmatpush1.bf16.msra.mxu0 0
      %1000 = vmatprep.mubr.bf16.mxu0 0
      %1001 = vmatmul.mubr.bf16.gmra.mrb[0].mxu0 %v916
      %v1002 = vpop.f32.mrb[0].mxu0
      %v1003 = vadd.f32 0.0, %v1002
      %v1004 = vpop.f32.mrb[0].mxu0
      %v1005 = vpop.f32.mrb[0].mxu0
      %v1006 = vpop.f32.mrb[0].mxu0
      %1007 = vdwg.mxu0
      %v1008 = vadd.f32 %v898, %v962
      %v1009 = vadd.f32 %v899, %v964
      %v1010 = vadd.f32 %v900, %v1003
      %s1011 = scalar_lea.vmem %s211, 28
      %v1012 = vld [vmem:[%s1011] sm:$0xf]
      %1013 = vrot.lane.b32.xlu0 %v243, 91
      %v1014 = vpop.permute.xlu0 %1013
      %1015 = vrot.lane.b32.xlu0 %v251, 91
      %v1016 = vpop.permute.xlu0 %1015
      %1017 = vrot.lane.b32.xlu0 %v250, 91
      %v1018 = vpop.permute.xlu0 %1017
      %1019 = vrot.lane.b32.xlu0 %v352, 91
      %v1020 = vpop.permute.xlu0 %1019
      %vm1021 = vcmask 744448
      %v1022 = vsel %vm1021, %v1014, %v1016
      %v1023 = vsel %vm1021, %v1016, %v1018
      %v1024 = vsel %vm1021, %v1018, %v1020
      %v1026 = vsel %vm252, %v1012, 0
      %v1029 = vsel %vm256, %v1022, 0
      %v1032 = vsel %vm256, %v1023, 0
      %v1035 = vsel %vm256, %v1024, 0
      %1037 = vmatprep.subr.bf16.mxu0 %v1032
      %1038 = vmatpush1.bf16.msra.mxu0 %v1029
      %1039 = vmatprep.subr.bf16.mxu0 0
      %1040 = vmatpush1.bf16.msra.mxu0 0
      %1041 = vmatprep.subr.bf16.mxu0 0
      %1042 = vmatpush1.bf16.msra.mxu0 0
      %1043 = vmatprep.subr.bf16.mxu0 0
      %1044 = vmatpush1.bf16.msra.mxu0 0
      %1045 = vmatprep.subr.bf16.mxu0 0
      %1046 = vmatpush1.bf16.msra.mxu0 0
      %1047 = vmatprep.subr.bf16.mxu0 0
      %1048 = vmatpush1.bf16.msra.mxu0 0
      %1049 = vmatprep.subr.bf16.mxu0 0
      %1050 = vmatpush1.bf16.msra.mxu0 0
      %1051 = vmatprep.subr.bf16.mxu0 0
      %1052 = vmatpush1.bf16.msra.mxu0 0
      %1053 = vmatprep.subr.bf16.mxu0 0
      %1054 = vmatpush1.bf16.msra.mxu0 0
      %1055 = vmatprep.subr.bf16.mxu0 0
      %1056 = vmatpush1.bf16.msra.mxu0 0
      %1057 = vmatprep.subr.bf16.mxu0 0
      %1058 = vmatpush1.bf16.msra.mxu0 0
      %1059 = vmatprep.subr.bf16.mxu0 0
      %1060 = vmatpush1.bf16.msra.mxu0 0
      %1061 = vmatprep.subr.bf16.mxu0 0
      %1062 = vmatpush1.bf16.msra.mxu0 0
      %1063 = vmatprep.subr.bf16.mxu0 0
      %1064 = vmatpush1.bf16.msra.mxu0 0
      %1065 = vmatprep.subr.bf16.mxu0 0
      %1066 = vmatpush1.bf16.msra.mxu0 0
      %1067 = vmatprep.subr.bf16.mxu0 0
      %1068 = vmatpush1.bf16.msra.mxu0 0
      %1069 = vmatprep.mubr.bf16.mxu0 0
      %1070 = vmatmul.mubr.bf16.gmra.mrb[0].mxu0 %v1026
      %v1071 = vpop.f32.mrb[0].mxu0
      %v1072 = vadd.f32 0.0, %v1071
      %v1073 = vpop.f32.mrb[0].mxu0
      %v1074 = vadd.f32 0.0, %v1073
      %v1075 = vpop.f32.mrb[0].mxu0
      %v1076 = vpop.f32.mrb[0].mxu0
      %1077 = vdwg.mxu0
      %1078 = vmatprep.subr.bf16.mxu0 0
      %1079 = vmatpush1.bf16.msra.mxu0 %v1035
      %1080 = vmatprep.subr.bf16.mxu0 0
      %1081 = vmatpush1.bf16.msra.mxu0 0
      %1082 = vmatprep.subr.bf16.mxu0 0
      %1083 = vmatpush1.bf16.msra.mxu0 0
      %1084 = vmatprep.subr.bf16.mxu0 0
      %1085 = vmatpush1.bf16.msra.mxu0 0
      %1086 = vmatprep.subr.bf16.mxu0 0
      %1087 = vmatpush1.bf16.msra.mxu0 0
      %1088 = vmatprep.subr.bf16.mxu0 0
      %1089 = vmatpush1.bf16.msra.mxu0 0
      %1090 = vmatprep.subr.bf16.mxu0 0
      %1091 = vmatpush1.bf16.msra.mxu0 0
      %1092 = vmatprep.subr.bf16.mxu0 0
      %1093 = vmatpush1.bf16.msra.mxu0 0
      %1094 = vmatprep.subr.bf16.mxu0 0
      %1095 = vmatpush1.bf16.msra.mxu0 0
      %1096 = vmatprep.subr.bf16.mxu0 0
      %1097 = vmatpush1.bf16.msra.mxu0 0
      %1098 = vmatprep.subr.bf16.mxu0 0
      %1099 = vmatpush1.bf16.msra.mxu0 0
      %1100 = vmatprep.subr.bf16.mxu0 0
      %1101 = vmatpush1.bf16.msra.mxu0 0
      %1102 = vmatprep.subr.bf16.mxu0 0
      %1103 = vmatpush1.bf16.msra.mxu0 0
      %1104 = vmatprep.subr.bf16.mxu0 0
      %1105 = vmatpush1.bf16.msra.mxu0 0
      %1106 = vmatprep.subr.bf16.mxu0 0
      %1107 = vmatpush1.bf16.msra.mxu0 0
      %1108 = vmatprep.subr.bf16.mxu0 0
      %1109 = vmatpush1.bf16.msra.mxu0 0
      %1110 = vmatprep.mubr.bf16.mxu0 0
      %1111 = vmatmul.mubr.bf16.gmra.mrb[0].mxu0 %v1026
      %v1112 = vpop.f32.mrb[0].mxu0
      %v1113 = vadd.f32 0.0, %v1112
      %v1114 = vpop.f32.mrb[0].mxu0
      %v1115 = vpop.f32.mrb[0].mxu0
      %v1116 = vpop.f32.mrb[0].mxu0
      %1117 = vdwg.mxu0
      %v1118 = vadd.f32 %v1008, %v1072
      %v1119 = vadd.f32 %v1009, %v1074
      %v1120 = vadd.f32 %v1010, %v1113
      %s1121 = scalar_lea.vmem %s211, 32
      %v1122 = vld [vmem:[%s1121] sm:$0xf]
      %1123 = vrot.lane.b32.xlu0 %v243, 90
      %v1124 = vpop.permute.xlu0 %1123
      %1125 = vrot.lane.b32.xlu0 %v251, 90
      %v1126 = vpop.permute.xlu0 %1125
      %1127 = vrot.lane.b32.xlu0 %v250, 90
      %v1128 = vpop.permute.xlu0 %1127
      %1129 = vrot.lane.b32.xlu0 %v352, 90
      %v1130 = vpop.permute.xlu0 %1129
      %vm1131 = vcmask 736256
      %v1132 = vsel %vm1131, %v1124, %v1126
      %v1133 = vsel %vm1131, %v1126, %v1128
      %v1134 = vsel %vm1131, %v1128, %v1130
      %v1136 = vsel %vm252, %v1122, 0
      %v1139 = vsel %vm256, %v1132, 0
      %v1142 = vsel %vm256, %v1133, 0
      %v1145 = vsel %vm256, %v1134, 0
      %1147 = vmatprep.subr.bf16.mxu0 %v1142
      %1148 = vmatpush1.bf16.msra.mxu0 %v1139
      %1149 = vmatprep.subr.bf16.mxu0 0
      %1150 = vmatpush1.bf16.msra.mxu0 0
      %1151 = vmatprep.subr.bf16.mxu0 0
      %1152 = vmatpush1.bf16.msra.mxu0 0
      %1153 = vmatprep.subr.bf16.mxu0 0
      %1154 = vmatpush1.bf16.msra.mxu0 0
      %1155 = vmatprep.subr.bf16.mxu0 0
      %1156 = vmatpush1.bf16.msra.mxu0 0
      %1157 = vmatprep.subr.bf16.mxu0 0
      %1158 = vmatpush1.bf16.msra.mxu0 0
      %1159 = vmatprep.subr.bf16.mxu0 0
      %1160 = vmatpush1.bf16.msra.mxu0 0
      %1161 = vmatprep.subr.bf16.mxu0 0
      %1162 = vmatpush1.bf16.msra.mxu0 0
      %1163 = vmatprep.subr.bf16.mxu0 0
      %1164 = vmatpush1.bf16.msra.mxu0 0
      %1165 = vmatprep.subr.bf16.mxu0 0
      %1166 = vmatpush1.bf16.msra.mxu0 0
      %1167 = vmatprep.subr.bf16.mxu0 0
      %1168 = vmatpush1.bf16.msra.mxu0 0
      %1169 = vmatprep.subr.bf16.mxu0 0
      %1170 = vmatpush1.bf16.msra.mxu0 0
      %1171 = vmatprep.subr.bf16.mxu0 0
      %1172 = vmatpush1.bf16.msra.mxu0 0
      %1173 = vmatprep.subr.bf16.mxu0 0
      %1174 = vmatpush1.bf16.msra.mxu0 0
      %1175 = vmatprep.subr.bf16.mxu0 0
      %1176 = vmatpush1.bf16.msra.mxu0 0
      %1177 = vmatprep.subr.bf16.mxu0 0
      %1178 = vmatpush1.bf16.msra.mxu0 0
      %1179 = vmatprep.mubr.bf16.mxu0 0
      %1180 = vmatmul.mubr.bf16.gmra.mrb[0].mxu0 %v1136
      %v1181 = vpop.f32.mrb[0].mxu0
      %v1182 = vadd.f32 0.0, %v1181
      %v1183 = vpop.f32.mrb[0].mxu0
      %v1184 = vadd.f32 0.0, %v1183
      %v1185 = vpop.f32.mrb[0].mxu0
      %v1186 = vpop.f32.mrb[0].mxu0
      %1187 = vdwg.mxu0
      %1188 = vmatprep.subr.bf16.mxu0 0
      %1189 = vmatpush1.bf16.msra.mxu0 %v1145
      %1190 = vmatprep.subr.bf16.mxu0 0
      %1191 = vmatpush1.bf16.msra.mxu0 0
      %1192 = vmatprep.subr.bf16.mxu0 0
      %1193 = vmatpush1.bf16.msra.mxu0 0
      %1194 = vmatprep.subr.bf16.mxu0 0
      %1195 = vmatpush1.bf16.msra.mxu0 0
      %1196 = vmatprep.subr.bf16.mxu0 0
      %1197 = vmatpush1.bf16.msra.mxu0 0
      %1198 = vmatprep.subr.bf16.mxu0 0
      %1199 = vmatpush1.bf16.msra.mxu0 0
      %1200 = vmatprep.subr.bf16.mxu0 0
      %1201 = vmatpush1.bf16.msra.mxu0 0
      %1202 = vmatprep.subr.bf16.mxu0 0
      %1203 = vmatpush1.bf16.msra.mxu0 0
      %1204 = vmatprep.subr.bf16.mxu0 0
      %1205 = vmatpush1.bf16.msra.mxu0 0
      %1206 = vmatprep.subr.bf16.mxu0 0
      %1207 = vmatpush1.bf16.msra.mxu0 0
      %1208 = vmatprep.subr.bf16.mxu0 0
      %1209 = vmatpush1.bf16.msra.mxu0 0
      %1210 = vmatprep.subr.bf16.mxu0 0
      %1211 = vmatpush1.bf16.msra.mxu0 0
      %1212 = vmatprep.subr.bf16.mxu0 0
      %1213 = vmatpush1.bf16.msra.mxu0 0
      %1214 = vmatprep.subr.bf16.mxu0 0
      %1215 = vmatpush1.bf16.msra.mxu0 0
      %1216 = vmatprep.subr.bf16.mxu0 0
      %1217 = vmatpush1.bf16.msra.mxu0 0
      %1218 = vmatprep.subr.bf16.mxu0 0
      %1219 = vmatpush1.bf16.msra.mxu0 0
      %1220 = vmatprep.mubr.bf16.mxu0 0
      %1221 = vmatmul.mubr.bf16.gmra.mrb[0].mxu0 %v1136
      %v1222 = vpop.f32.mrb[0].mxu0
      %v1223 = vadd.f32 0.0, %v1222
      %v1224 = vpop.f32.mrb[0].mxu0
      %v1225 = vpop.f32.mrb[0].mxu0
      %v1226 = vpop.f32.mrb[0].mxu0
      %1227 = vdwg.mxu0
      %v1228 = vadd.f32 %v1118, %v1182
      %v1229 = vadd.f32 %v1119, %v1184
      %v1230 = vadd.f32 %v1120, %v1223
      %1231 = vst [vmem:[#allocation2] sm:$0xff] %v1228
      %1232 = vst [vmem:[#allocation2 + $0x8] sm:$0xff] %v1229
      %1233 = vst [vmem:[#allocation2 + $0x10] sm:$0xff] %v1230
      %p1234 = scmp.eq.s32.totalorder %s20, 2
      // Predicated region
      $region33: #{hourglass_forward.12} parent=27 // pred_check
        %p1235 = pneg %p1234
      $region34: #{hourglass_forward.12} parent=27 // pred_check_branch
        %1237 = sbr.rel (%p1235) target = $region36
      $region35: #{hourglass_forward.12} parent=27 // pred_region
        %v1238 = vld [vmem:[#allocation2] sm:$0xff]
        %v1239 = vld [vmem:[#allocation2 + $0x8] sm:$0xff]
        %v1240 = vld [vmem:[#allocation2 + $0x10] sm:$0xff]
        %v1241 = vpack.c.bf16 %v1238, %v1238
        %v1242 = vpack.c.bf16 %v1239, %v1239
        %v1243 = vpack.c.bf16 %v1240, %v1240
        %v1247 = vunpack.c.l.b16 %v1241
        %v1248 = vunpack.c.l.b16 %v1242
        %v1249 = vunpack.c.l.b16 %v1243
        %v1250 = vpack.c.b16 %v1248, %v1247
        %v1251 = vpack.c.b16 %v1249, %v1249
        %1254 = vst [vmem:[%s220] sm:$0xff] %v1250
        %1255 = vst [vmem:[%s220 + $0x8] sm:$0xf] %v1251
      $region36: #{hourglass_forward.12} parent=27 // pred_fallthru
        _
      %s1256 = smul.u32 3, %s19
      %p1257 = scmp.lt.s32.totalorder %s18, 1
      %s1258 = scalar_select %p1257, %s18, 1
      %p1259 = scmp.lt.s32.totalorder %s1256, 11
      %s1260 = scalar_select %p1259, %s1256, 11
      %s1261 = smul.addr %s1258, 12
      %s1262 = sadd.s32 %s1260, %s1261
      %s1263 = smul.addr %s1262, 4
      %s1264 = scalar_lea.vmem %s2, %s1263
      // Predicated region
      $region37: #{hourglass_forward.12} parent=27 // pred_check
        %p1265 = pneg %p110
      $region38: #{hourglass_forward.12} parent=27 // pred_check_branch
        %1267 = sbr.rel (%p1265) target = $region40
      $region39: #{hourglass_forward.12} parent=27 // pred_region
        %s1268 = smul.u32 3, %s19
      $region40: #{hourglass_forward.12} parent=27 // pred_fallthru
        _
    $region28: #{hourglass_forward.12} parent=5 // pred_fallthru
      _
    %p1269 = scmp.le.s32.totalorder 2, %s8
    // Predicated region
    $region41: #{hourglass_forward.12} parent=5 // pred_check
      %p1270 = pneg %p1269
    $region42: #{hourglass_forward.12} parent=5 // pred_check_branch
      %1272 = sbr.rel (%p1270) target = $region44
    $region43: #{hourglass_forward.12} parent=5 // pred_region
      %s1273 = ssub.s32 %s8, 2
      // Predicated region
      $region45: #{hourglass_forward.12} parent=43 // pred_check
        %p1274 = pneg %p116
      $region46: #{hourglass_forward.12} parent=43 // pred_check_branch
        %1276 = sbr.rel (%p1274) target = $region48
      $region47: #{hourglass_forward.12} parent=43 // pred_region
        %s1277 = smul.u32 3, %s22
        %p1278 = scmp.lt.s32.totalorder %s21, 1
        %s1279 = scalar_select %p1278, %s21, 1
        %p1280 = scmp.lt.s32.totalorder %s1277, 11
        %s1281 = scalar_select %p1280, %s1277, 11
        %s1282 = smul.addr %s1279, 12
        %s1283 = sadd.s32 %s1281, %s1282
        %s1284 = smul.addr %s1283, 4
        %s1285 = scalar_lea.vmem %s2, %s1284
      $region48: #{hourglass_forward.12} parent=43 // pred_fallthru
        _
    $region44: #{hourglass_forward.12} parent=5 // pred_fallthru
      _
  $region6: #{hourglass_forward.12} parent=0 // loop_footer
    %s12 = sadd.s32 1, %s8
  $region7: #{hourglass_forward.12} parent=0 // loop_footer_branch
    %7 = sbr.rel target = $region3
  $region8: #{hourglass_forward.12} parent=0 // loop_exit
    _

// kernel: hourglass_forward.13
$region0: #{hourglass_forward.13}
  #allocation0 [shape = 'u32[]', space=smem, size = 0x4, offset = 0x4, fixed_abs, tag = 'smem constant byte address 0x4 - core index']
  #allocation1 [shape = 'u32[144,128]{1,0:T(1,128)}', space=vmem, size = 0x12000, scoped, tag = 'internal scratch']
  %s0 = inlined_call_operand.vmem [shape: bf16[2,2,8,128], index: 0, kind: input, shape index: {}]
  %s1 = inlined_call_operand.vmem [shape: f32[2,8,1], index: 1, kind: input, shape index: {}]
  %s2 = inlined_call_operand.vmem [shape: f32[2,8,1], index: 2, kind: input, shape index: {}]
  %s3 = inlined_call_operand.vmem [shape: bf16[2,2,8,128], index: 3, kind: output, shape index: {}]
  %s4 = sld [smem:[#allocation0]]
  $region45: #{hourglass_forward.13} parent=0
    _
  %s6 = ssub.s32 1, %s4
  %s7 = scalar_select 0, %s6, %s4
  loop: start=0, step=1, limit=6
  $region2: #{hourglass_forward.13} parent=0 // loop_pre_header
    _
  $region3: #{hourglass_forward.13} parent=0 // loop_header
    %s9 = sphi 0, %s13
    %p10 = scmp.ge.s32.totalorder %s9, 6
    %s16 = sphi 0, %s28
    %s17 = sphi 0, %s24
    %s18 = sphi 0, %s16
    %s19 = sphi 0, %s17
    %s20 = sphi 0, %s18
    %s21 = sphi 0, %s19
    %s33 = sphi 0, %s35
    %s36 = sphi 0, %s33
    %s37 = sphi 0, %s36
    %s53 = sphi 0, %s37
    %s59 = sphi 0, %s61
    %s62 = sphi 0, %s59
    %s63 = sphi 0, %s62
    %s79 = sphi 0, %s63
    %s85 = sphi 0, %s87
    %s88 = sphi 0, %s85
    %s89 = sphi 0, %s88
    %s105 = sphi 0, %s89
    %s113 = sphi 0, %s115
    %s116 = sphi 0, %s113
    %s117 = sphi 0, %s116
    %s133 = sphi 0, %s117
  $region4: #{hourglass_forward.13} parent=0 // loop_header_branch
    %12 = sbr.rel (%p10) target = $region8
  $region5: #{hourglass_forward.13} parent=0 // loop_body
    %s14 = ssub.s32 %s9, 1
    %s15 = ssub.s32 %s9, 2
    %s22 = sadd.s32 1, %s17
    %p23 = scmp.ge.s32.totalorder %s22, 2
    %s24 = scalar_select %p23, 0, %s22
    %s25 = sadd.s32 1, %s16
    %s26 = scalar_select %p23, %s25, %s16
    %p27 = scmp.ge.s32.totalorder %s26, 2
    %s28 = scalar_select %p27, 0, %s26
    %s29 = ssub.s32 %s16, %s28
    %s30 = ssub.s32 %s17, %s24
    %s31 = sor.u32 %s29, %s30
    %p32 = scmp.eq.s32.totalorder %s31, 0
    %s34 = sadd.s32 %s33, 1
    %s35 = scalar_select %p32, %s33, %s34
    %p38 = pneg %p32
    %p39 = scmp.eq.s32.totalorder %s9, 3
    %p40 = por %p38, %p39
    %p41 = scmp.ne.s32.totalorder %s33, %s36
    %p42 = scmp.eq.s32.totalorder %s9, 0
    %p43 = por %p41, %p42
    %p44 = scmp.ne.s32.totalorder %s33, %s36
    %p45 = scmp.eq.s32.totalorder %s14, 3
    %p46 = por %p44, %p45
    %p47 = scmp.ne.s32.totalorder %s36, %s37
    %p48 = scmp.eq.s32.totalorder %s14, 0
    %p49 = por %p47, %p48
    %p50 = scmp.ne.s32.totalorder %s36, %s37
    %p51 = scmp.eq.s32.totalorder %s15, 3
    %p52 = por %p50, %p51
    %p54 = scmp.ne.s32.totalorder %s37, %s53
    %p55 = scmp.eq.s32.totalorder %s15, 0
    %p56 = por %p54, %p55
    %s57 = ssub.s32 %s17, %s24
    %p58 = scmp.eq.s32.totalorder %s57, 0
    %s60 = sadd.s32 %s59, 1
    %s61 = scalar_select %p58, %s59, %s60
    %p64 = pneg %p58
    %p65 = scmp.eq.s32.totalorder %s9, 3
    %p66 = por %p64, %p65
    %p67 = scmp.ne.s32.totalorder %s59, %s62
    %p68 = scmp.eq.s32.totalorder %s9, 0
    %p69 = por %p67, %p68
    %p70 = scmp.ne.s32.totalorder %s59, %s62
    %p71 = scmp.eq.s32.totalorder %s14, 3
    %p72 = por %p70, %p71
    %p73 = scmp.ne.s32.totalorder %s62, %s63
    %p74 = scmp.eq.s32.totalorder %s14, 0
    %p75 = por %p73, %p74
    %p76 = scmp.ne.s32.totalorder %s62, %s63
    %p77 = scmp.eq.s32.totalorder %s15, 3
    %p78 = por %p76, %p77
    %p80 = scmp.ne.s32.totalorder %s63, %s79
    %p81 = scmp.eq.s32.totalorder %s15, 0
    %p82 = por %p80, %p81
    %s83 = ssub.s32 %s17, %s24
    %p84 = scmp.eq.s32.totalorder %s83, 0
    %s86 = sadd.s32 %s85, 1
    %s87 = scalar_select %p84, %s85, %s86
    %p90 = pneg %p84
    %p91 = scmp.eq.s32.totalorder %s9, 3
    %p92 = por %p90, %p91
    %p93 = scmp.ne.s32.totalorder %s85, %s88
    %p94 = scmp.eq.s32.totalorder %s9, 0
    %p95 = por %p93, %p94
    %p96 = scmp.ne.s32.totalorder %s85, %s88
    %p97 = scmp.eq.s32.totalorder %s14, 3
    %p98 = por %p96, %p97
    %p99 = scmp.ne.s32.totalorder %s88, %s89
    %p100 = scmp.eq.s32.totalorder %s14, 0
    %p101 = por %p99, %p100
    %p102 = scmp.ne.s32.totalorder %s88, %s89
    %p103 = scmp.eq.s32.totalorder %s15, 3
    %p104 = por %p102, %p103
    %p106 = scmp.ne.s32.totalorder %s89, %s105
    %p107 = scmp.eq.s32.totalorder %s15, 0
    %p108 = por %p106, %p107
    %s109 = ssub.s32 %s16, %s28
    %s110 = ssub.s32 %s17, %s24
    %s111 = sor.u32 %s109, %s110
    %p112 = scmp.eq.s32.totalorder %s111, 0
    %s114 = sadd.s32 %s113, 1
    %s115 = scalar_select %p112, %s113, %s114
    %p118 = pneg %p112
    %p119 = scmp.eq.s32.totalorder %s9, 3
    %p120 = por %p118, %p119
    %p121 = scmp.ne.s32.totalorder %s113, %s116
    %p122 = scmp.eq.s32.totalorder %s9, 0
    %p123 = por %p121, %p122
    %p124 = scmp.ne.s32.totalorder %s113, %s116
    %p125 = scmp.eq.s32.totalorder %s14, 3
    %p126 = por %p124, %p125
    %p127 = scmp.ne.s32.totalorder %s116, %s117
    %p128 = scmp.eq.s32.totalorder %s14, 0
    %p129 = por %p127, %p128
    %p130 = scmp.ne.s32.totalorder %s116, %s117
    %p131 = scmp.eq.s32.totalorder %s15, 3
    %p132 = por %p130, %p131
    %p134 = scmp.ne.s32.totalorder %s117, %s133
    %p135 = scmp.eq.s32.totalorder %s15, 0
    %p136 = por %p134, %p135
    %p137 = scmp.le.s32.totalorder 1, %s9
    %p138 = scmp.lt.s32.totalorder %s9, 5
    %p139 = pnand %p137, %p138
    %p140 = pneg %p139
    // Predicated region
    $region9: #{hourglass_forward.13} parent=5 // pred_check
      _
    $region10: #{hourglass_forward.13} parent=5 // pred_check_branch
      %142 = sbr.rel (%p139) target = $region12
    $region11: #{hourglass_forward.13} parent=5 // pred_region
      %s143 = ssub.s32 %s9, 1
    $region12: #{hourglass_forward.13} parent=5 // pred_fallthru
      _
    %p144 = scmp.lt.s32.totalorder %s9, 4
    // Predicated region
    $region13: #{hourglass_forward.13} parent=5 // pred_check
      %p145 = pneg %p144
    $region14: #{hourglass_forward.13} parent=5 // pred_check_branch
      %147 = sbr.rel (%p145) target = $region16
    $region15: #{hourglass_forward.13} parent=5 // pred_region
      // Predicated region
      $region17: #{hourglass_forward.13} parent=15 // pred_check
        %p148 = pneg %p43
      $region18: #{hourglass_forward.13} parent=15 // pred_check_branch
        %150 = sbr.rel (%p148) target = $region20
      $region19: #{hourglass_forward.13} parent=15 // pred_region
        %p151 = scmp.lt.s32.totalorder %s16, 1
        %s152 = scalar_select %p151, %s16, 1
        %p153 = scmp.lt.s32.totalorder %s17, 1
        %s154 = scalar_select %p153, %s17, 1
        %s155 = smul.addr %s152, 2
        %s156 = sadd.s32 %s154, %s155
        %s157 = smul.addr %s156, 4
        %s158 = scalar_lea.vmem %s0, %s157
      $region20: #{hourglass_forward.13} parent=15 // pred_fallthru
        _
      // Predicated region
      $region21: #{hourglass_forward.13} parent=15 // pred_check
        %p159 = pneg %p69
      $region22: #{hourglass_forward.13} parent=15 // pred_check_branch
        %161 = sbr.rel (%p159) target = $region24
      $region23: #{hourglass_forward.13} parent=15 // pred_region
        %p162 = scmp.lt.s32.totalorder %s17, 1
        %s163 = scalar_select %p162, %s17, 1
        %s164 = smul.addr %s163, 8
        %s165 = scalar_lea.vmem %s1, %s164
      $region24: #{hourglass_forward.13} parent=15 // pred_fallthru
        _
      // Predicated region
      $region25: #{hourglass_forward.13} parent=15 // pred_check
        %p166 = pneg %p95
      $region26: #{hourglass_forward.13} parent=15 // pred_check_branch
        %168 = sbr.rel (%p166) target = $region28
      $region27: #{hourglass_forward.13} parent=15 // pred_region
        %p169 = scmp.lt.s32.totalorder %s17, 1
        %s170 = scalar_select %p169, %s17, 1
        %s171 = smul.addr %s170, 8
        %s172 = scalar_lea.vmem %s2, %s171
      $region28: #{hourglass_forward.13} parent=15 // pred_fallthru
        _
    $region16: #{hourglass_forward.13} parent=5 // pred_fallthru
      _
    %p173 = scmp.le.s32.totalorder 1, %s9
    %p174 = scmp.lt.s32.totalorder %s9, 5
    %p175 = pnand %p173, %p174
    %p176 = pneg %p175
    // Predicated region
    $region29: #{hourglass_forward.13} parent=5 // pred_check
      _
    $region30: #{hourglass_forward.13} parent=5 // pred_check_branch
      %178 = sbr.rel (%p175) target = $region32
    $region31: #{hourglass_forward.13} parent=5 // pred_region
      %s179 = ssub.s32 %s9, 1
      %p180 = scmp.lt.s32.totalorder %s18, 1
      %s181 = scalar_select %p180, %s18, 1
      %p182 = scmp.lt.s32.totalorder %s19, 1
      %s183 = scalar_select %p182, %s19, 1
      %s184 = smul.addr %s181, 2
      %s185 = sadd.s32 %s183, %s184
      %s186 = smul.addr %s185, 4
      %s187 = scalar_lea.vmem %s0, %s186
      %p188 = pneg %p49
      %p189 = pneg %p46
      %p190 = scmp.lt.s32.totalorder %s19, 1
      %s191 = scalar_select %p190, %s19, 1
      %s192 = smul.addr %s191, 8
      %s193 = scalar_lea.vmem %s1, %s192
      %p194 = pneg %p75
      %p195 = pneg %p72
      %p196 = scmp.lt.s32.totalorder %s19, 1
      %s197 = scalar_select %p196, %s19, 1
      %s198 = smul.addr %s197, 8
      %s199 = scalar_lea.vmem %s2, %s198
      %p200 = pneg %p101
      %p201 = pneg %p98
      %p202 = pneg %p129
      %p203 = pneg %p126
      %p204 = scmp.lt.s32.totalorder %s18, 1
      %s205 = scalar_select %p204, %s18, 1
      %p206 = scmp.lt.s32.totalorder %s19, 1
      %s207 = scalar_select %p206, %s19, 1
      %s208 = smul.addr %s205, 2
      %s209 = sadd.s32 %s207, %s208
      %s210 = smul.addr %s209, 4
      %s211 = scalar_lea.vmem %s3, %s210
      %p212 = scmp.lt.s32.totalorder %s18, 1
      %s213 = scalar_select %p212, %s18, 1
      %p214 = scmp.lt.s32.totalorder %s19, 1
      %s215 = scalar_select %p214, %s19, 1
      %s216 = smul.addr %s213, 2
      %s217 = sadd.s32 %s215, %s216
      %s218 = smul.addr %s217, 4
      %s219 = scalar_lea.vmem %s0, %s218
      %p220 = scmp.lt.s32.totalorder %s19, 1
      %s221 = scalar_select %p220, %s19, 1
      %s222 = smul.addr %s221, 8
      %s223 = scalar_lea.vmem %s1, %s222
      %p224 = scmp.lt.s32.totalorder %s19, 1
      %s225 = scalar_select %p224, %s19, 1
      %s226 = smul.addr %s225, 8
      %s227 = scalar_lea.vmem %s2, %s226
      %p228 = scmp.lt.s32.totalorder %s18, 1
      %s229 = scalar_select %p228, %s18, 1
      %p230 = scmp.lt.s32.totalorder %s19, 1
      %s231 = scalar_select %p230, %s19, 1
      %s232 = smul.addr %s229, 2
      %s233 = sadd.s32 %s231, %s232
      %s234 = smul.addr %s233, 4
      %s235 = scalar_lea.vmem %s3, %s234
      %v236 = vld [vmem:[%s219] sm:$0xf]
      %v237 = vunpack.c.l.bf16 %v236
      %238 = vadd.xlane.f32.xlu0 %v237
      %v239 = vpop.xlane.xlu0 %238
      %v240 = vrot.slane %v239, 4
      %v241 = vadd.f32 %v239, %v240
      %v242 = vrot.slane %v241, 2
      %v243 = vadd.f32 %v241, %v242
      %v244 = vrot.slane %v243, 1
      %v245 = vadd.f32 %v243, %v244
      %s246 = vtos %v245
      %v247 = vstv %s246
      %v248 = vmul.f32 %v237, %v237
      %249 = vadd.xlane.f32.xlu0 %v248
      %v250 = vpop.xlane.xlu0 %249
      %v251 = vrot.slane %v250, 4
      %v252 = vadd.f32 %v250, %v251
      %v253 = vrot.slane %v252, 2
      %v254 = vadd.f32 %v252, %v253
      %v255 = vrot.slane %v254, 1
      %v256 = vadd.f32 %v254, %v255
      %s257 = vtos %v256
      %v258 = vstv %s257
      %v259 = vrcp.pop 1024.0
      %v260 = vmul.f32 %v247, %v259
      %v261 = vmul.f32 %v258, %v259
      %v262 = vmul.f32 %v260, %v260
      %v263 = vsub.f32 %v261, %v262
      %v264 = vmax.f32 %v263, 0.0
      %v265 = vadd.f32 %v264, 1e-05
      %v266 = vrsqrt.pop %v265
      %v267 = vsub.f32 %v237, %v260
      %v268 = vmul.f32 %v267, %v266
      %v269 = vld [vmem:[%s223] sm:$0xff]
      %271 = vset.pattern.permute.xlu0 0
      %272 = vperm.xlu0 %271, %v269
      %v273 = vpop.permute.xlu0 %272
      %v275 = vmul.f32 %v268, %v273
      %v276 = vld [vmem:[%s227] sm:$0xff]
      %278 = vset.pattern.permute.xlu0 0
      %279 = vperm.xlu0 %278, %v276
      %v280 = vpop.permute.xlu0 %279
      %v282 = vadd.f32 %v275, %v280
      %v283 = vmax.f32 %v282, 0.0
      %v284 = vpack.c.bf16 %v283, %v283
      %285 = vst [vmem:[%s235] sm:$0xf] %v284
      %p286 = scmp.lt.s32.totalorder %s18, 1
      %s287 = scalar_select %p286, %s18, 1
      %p288 = scmp.lt.s32.totalorder %s19, 1
      %s289 = scalar_select %p288, %s19, 1
      %s290 = smul.addr %s287, 2
      %s291 = sadd.s32 %s289, %s290
      %s292 = smul.addr %s291, 4
      %s293 = scalar_lea.vmem %s3, %s292
      // Predicated region
      $region33: #{hourglass_forward.13} parent=31 // pred_check
        %p294 = pneg %p126
      $region34: #{hourglass_forward.13} parent=31 // pred_check_branch
        %296 = sbr.rel (%p294) target = $region36
      $region35: #{hourglass_forward.13} parent=31 // pred_region
        _
      $region36: #{hourglass_forward.13} parent=31 // pred_fallthru
        _
    $region32: #{hourglass_forward.13} parent=5 // pred_fallthru
      _
    %p297 = scmp.le.s32.totalorder 2, %s9
    // Predicated region
    $region37: #{hourglass_forward.13} parent=5 // pred_check
      %p298 = pneg %p297
    $region38: #{hourglass_forward.13} parent=5 // pred_check_branch
      %300 = sbr.rel (%p298) target = $region40
    $region39: #{hourglass_forward.13} parent=5 // pred_region
      %s301 = ssub.s32 %s9, 2
      // Predicated region
      $region41: #{hourglass_forward.13} parent=39 // pred_check
        %p302 = pneg %p132
      $region42: #{hourglass_forward.13} parent=39 // pred_check_branch
        %304 = sbr.rel (%p302) target = $region44
      $region43: #{hourglass_forward.13} parent=39 // pred_region
        %p305 = scmp.lt.s32.totalorder %s20, 1
        %s306 = scalar_select %p305, %s20, 1
        %p307 = scmp.lt.s32.totalorder %s21, 1
        %s308 = scalar_select %p307, %s21, 1
        %s309 = smul.addr %s306, 2
        %s310 = sadd.s32 %s308, %s309
        %s311 = smul.addr %s310, 4
        %s312 = scalar_lea.vmem %s3, %s311
      $region44: #{hourglass_forward.13} parent=39 // pred_fallthru
        _
    $region40: #{hourglass_forward.13} parent=5 // pred_fallthru
      _
  $region6: #{hourglass_forward.13} parent=0 // loop_footer
    %s13 = sadd.s32 1, %s9
  $region7: #{hourglass_forward.13} parent=0 // loop_footer_branch
    %8 = sbr.rel target = $region3
  $region8: #{hourglass_forward.13} parent=0 // loop_exit
    _

// kernel: hourglass_forward.14
$region0: #{hourglass_forward.14}
  #allocation0 [shape = 'u32[]', space=smem, size = 0x4, offset = 0x4, fixed_abs, tag = 'smem constant byte address 0x4 - core index']
  #allocation1 [shape = 'u32[144,128]{1,0:T(1,128)}', space=vmem, size = 0x12000, scoped, tag = 'internal scratch']
  #allocation2 [shape = 'f32[8,128]{1,0:T(8,128)}', space=vmem, size = 0x1000, scoped, tag = 'scratch operand']
  %s0 = inlined_call_operand.vmem [shape: bf16[2,6,8,256], index: 0, kind: input, shape index: {}]
  %s1 = inlined_call_operand.vmem [shape: bf16[3,9,8,8], index: 1, kind: input, shape index: {}]
  %s2 = inlined_call_operand.vmem [shape: bf16[2,8,512], index: 2, kind: output, shape index: {}]
  %s3 = sld [smem:[#allocation0]]
  $region49: #{hourglass_forward.14} parent=0
    _
  %s5 = ssub.s32 1, %s3
  %s6 = scalar_select 0, %s5, %s3
  loop: start=0, step=1, limit=26
  $region2: #{hourglass_forward.14} parent=0 // loop_pre_header
    _
  $region3: #{hourglass_forward.14} parent=0 // loop_header
    %s8 = sphi 0, %s12
    %p9 = scmp.ge.s32.totalorder %s8, 26
    %s15 = sphi 0, %s34
    %s16 = sphi 0, %s30
    %s17 = sphi 0, %s26
    %s18 = sphi 0, %s15
    %s19 = sphi 0, %s16
    %s20 = sphi 0, %s17
    %s21 = sphi 0, %s18
    %s22 = sphi 0, %s19
    %s23 = sphi 0, %s20
    %s41 = sphi 0, %s43
    %s44 = sphi 0, %s41
    %s45 = sphi 0, %s44
    %s61 = sphi 0, %s45
    %s67 = sphi 0, %s69
    %s70 = sphi 0, %s67
    %s71 = sphi 0, %s70
    %s87 = sphi 0, %s71
    %s95 = sphi 0, %s97
    %s98 = sphi 0, %s95
    %s99 = sphi 0, %s98
    %s115 = sphi 0, %s99
  $region4: #{hourglass_forward.14} parent=0 // loop_header_branch
    %11 = sbr.rel (%p9) target = $region8
  $region5: #{hourglass_forward.14} parent=0 // loop_body
    %s13 = ssub.s32 %s8, 1
    %s14 = ssub.s32 %s8, 2
    %s24 = sadd.s32 1, %s17
    %p25 = scmp.ge.s32.totalorder %s24, 3
    %s26 = scalar_select %p25, 0, %s24
    %s27 = sadd.s32 1, %s16
    %s28 = scalar_select %p25, %s27, %s16
    %p29 = scmp.ge.s32.totalorder %s28, 4
    %s30 = scalar_select %p29, 0, %s28
    %s31 = sadd.s32 1, %s15
    %s32 = scalar_select %p29, %s31, %s15
    %p33 = scmp.ge.s32.totalorder %s32, 2
    %s34 = scalar_select %p33, 0, %s32
    %s35 = sadd.s32 %s16, %s17
    %s36 = sadd.s32 %s30, %s26
    %s37 = ssub.s32 %s15, %s34
    %s38 = ssub.s32 %s35, %s36
    %s39 = sor.u32 %s37, %s38
    %p40 = scmp.eq.s32.totalorder %s39, 0
    %s42 = sadd.s32 %s41, 1
    %s43 = scalar_select %p40, %s41, %s42
    %p46 = pneg %p40
    %p47 = scmp.eq.s32.totalorder %s8, 23
    %p48 = por %p46, %p47
    %p49 = scmp.ne.s32.totalorder %s41, %s44
    %p50 = scmp.eq.s32.totalorder %s8, 0
    %p51 = por %p49, %p50
    %p52 = scmp.ne.s32.totalorder %s41, %s44
    %p53 = scmp.eq.s32.totalorder %s13, 23
    %p54 = por %p52, %p53
    %p55 = scmp.ne.s32.totalorder %s44, %s45
    %p56 = scmp.eq.s32.totalorder %s13, 0
    %p57 = por %p55, %p56
    %p58 = scmp.ne.s32.totalorder %s44, %s45
    %p59 = scmp.eq.s32.totalorder %s14, 23
    %p60 = por %p58, %p59
    %p62 = scmp.ne.s32.totalorder %s45, %s61
    %p63 = scmp.eq.s32.totalorder %s14, 0
    %p64 = por %p62, %p63
    %s65 = ssub.s32 %s17, %s26
    %p66 = scmp.eq.s32.totalorder %s65, 0
    %s68 = sadd.s32 %s67, 1
    %s69 = scalar_select %p66, %s67, %s68
    %p72 = pneg %p66
    %p73 = scmp.eq.s32.totalorder %s8, 23
    %p74 = por %p72, %p73
    %p75 = scmp.ne.s32.totalorder %s67, %s70
    %p76 = scmp.eq.s32.totalorder %s8, 0
    %p77 = por %p75, %p76
    %p78 = scmp.ne.s32.totalorder %s67, %s70
    %p79 = scmp.eq.s32.totalorder %s13, 23
    %p80 = por %p78, %p79
    %p81 = scmp.ne.s32.totalorder %s70, %s71
    %p82 = scmp.eq.s32.totalorder %s13, 0
    %p83 = por %p81, %p82
    %p84 = scmp.ne.s32.totalorder %s70, %s71
    %p85 = scmp.eq.s32.totalorder %s14, 23
    %p86 = por %p84, %p85
    %p88 = scmp.ne.s32.totalorder %s71, %s87
    %p89 = scmp.eq.s32.totalorder %s14, 0
    %p90 = por %p88, %p89
    %s91 = ssub.s32 %s15, %s34
    %s92 = ssub.s32 %s16, %s30
    %s93 = sor.u32 %s91, %s92
    %p94 = scmp.eq.s32.totalorder %s93, 0
    %s96 = sadd.s32 %s95, 1
    %s97 = scalar_select %p94, %s95, %s96
    %p100 = pneg %p94
    %p101 = scmp.eq.s32.totalorder %s8, 23
    %p102 = por %p100, %p101
    %p103 = scmp.ne.s32.totalorder %s95, %s98
    %p104 = scmp.eq.s32.totalorder %s8, 0
    %p105 = por %p103, %p104
    %p106 = scmp.ne.s32.totalorder %s95, %s98
    %p107 = scmp.eq.s32.totalorder %s13, 23
    %p108 = por %p106, %p107
    %p109 = scmp.ne.s32.totalorder %s98, %s99
    %p110 = scmp.eq.s32.totalorder %s13, 0
    %p111 = por %p109, %p110
    %p112 = scmp.ne.s32.totalorder %s98, %s99
    %p113 = scmp.eq.s32.totalorder %s14, 23
    %p114 = por %p112, %p113
    %p116 = scmp.ne.s32.totalorder %s99, %s115
    %p117 = scmp.eq.s32.totalorder %s14, 0
    %p118 = por %p116, %p117
    %p119 = scmp.le.s32.totalorder 1, %s8
    %p120 = scmp.lt.s32.totalorder %s8, 25
    %p121 = pnand %p119, %p120
    %p122 = pneg %p121
    // Predicated region
    $region9: #{hourglass_forward.14} parent=5 // pred_check
      _
    $region10: #{hourglass_forward.14} parent=5 // pred_check_branch
      %124 = sbr.rel (%p121) target = $region12
    $region11: #{hourglass_forward.14} parent=5 // pred_region
      %s125 = ssub.s32 %s8, 1
    $region12: #{hourglass_forward.14} parent=5 // pred_fallthru
      _
    %p126 = scmp.lt.s32.totalorder %s8, 24
    // Predicated region
    $region13: #{hourglass_forward.14} parent=5 // pred_check
      %p127 = pneg %p126
    $region14: #{hourglass_forward.14} parent=5 // pred_check_branch
      %129 = sbr.rel (%p127) target = $region16
    $region15: #{hourglass_forward.14} parent=5 // pred_region
      // Predicated region
      $region17: #{hourglass_forward.14} parent=15 // pred_check
        %p130 = pneg %p51
      $region18: #{hourglass_forward.14} parent=15 // pred_check_branch
        %132 = sbr.rel (%p130) target = $region20
      $region19: #{hourglass_forward.14} parent=15 // pred_region
        %s133 = sadd.s32 %s16, %s17
        %p134 = scmp.lt.s32.totalorder %s15, 1
        %s135 = scalar_select %p134, %s15, 1
        %p136 = scmp.lt.s32.totalorder %s133, 5
        %s137 = scalar_select %p136, %s133, 5
        %s138 = smul.addr %s137, 2
        %s139 = smul.addr %s135, 12
        %s140 = sadd.s32 %s138, %s139
        %s141 = smul.addr %s140, 4
        %s142 = scalar_lea.vmem %s0, %s141
        %s143 = sadd.s32 %s16, %s17
      $region20: #{hourglass_forward.14} parent=15 // pred_fallthru
        _
      // Predicated region
      $region21: #{hourglass_forward.14} parent=15 // pred_check
        %p144 = pneg %p77
      $region22: #{hourglass_forward.14} parent=15 // pred_check_branch
        %146 = sbr.rel (%p144) target = $region24
      $region23: #{hourglass_forward.14} parent=15 // pred_region
        %p147 = scmp.lt.s32.totalorder %s17, 2
        %s148 = scalar_select %p147, %s17, 2
        %s149 = smul.addr %s148, 9
        %s150 = smul.addr %s149, 4
        %s151 = scalar_lea.vmem %s1, %s150
      $region24: #{hourglass_forward.14} parent=15 // pred_fallthru
        _
    $region16: #{hourglass_forward.14} parent=5 // pred_fallthru
      _
    %p152 = scmp.le.s32.totalorder 1, %s8
    %p153 = scmp.lt.s32.totalorder %s8, 25
    %p154 = pnand %p152, %p153
    %p155 = pneg %p154
    // Predicated region
    $region25: #{hourglass_forward.14} parent=5 // pred_check
      _
    $region26: #{hourglass_forward.14} parent=5 // pred_check_branch
      %157 = sbr.rel (%p154) target = $region28
    $region27: #{hourglass_forward.14} parent=5 // pred_region
      %s158 = ssub.s32 %s8, 1
      %s159 = sadd.s32 %s19, %s20
      %p160 = scmp.lt.s32.totalorder %s18, 1
      %s161 = scalar_select %p160, %s18, 1
      %p162 = scmp.lt.s32.totalorder %s159, 5
      %s163 = scalar_select %p162, %s159, 5
      %s164 = smul.addr %s163, 2
      %s165 = smul.addr %s161, 12
      %s166 = sadd.s32 %s164, %s165
      %s167 = smul.addr %s166, 4
      %s168 = scalar_lea.vmem %s0, %s167
      %p169 = pneg %p57
      %p170 = pneg %p54
      %p171 = scmp.lt.s32.totalorder %s20, 2
      %s172 = scalar_select %p171, %s20, 2
      %s173 = smul.addr %s172, 9
      %s174 = smul.addr %s173, 4
      %s175 = scalar_lea.vmem %s1, %s174
      %p176 = pneg %p83
      %p177 = pneg %p80
      %p178 = pneg %p111
      %p179 = pneg %p108
      %p180 = scmp.lt.s32.totalorder %s18, 1
      %s181 = scalar_select %p180, %s18, 1
      %p182 = scmp.lt.s32.totalorder %s19, 3
      %s183 = scalar_select %p182, %s19, 3
      %s184 = smul.addr %s181, 4
      %s185 = sadd.s32 %s183, %s184
      %s186 = smul.addr %s185, 4
      %s187 = scalar_lea.vmem %s2, %s186
      %s188 = sadd.s32 %s19, %s20
      %p189 = scmp.lt.s32.totalorder %s18, 1
      %s190 = scalar_select %p189, %s18, 1
      %p191 = scmp.lt.s32.totalorder %s188, 5
      %s192 = scalar_select %p191, %s188, 5
      %s193 = smul.addr %s192, 2
      %s194 = smul.addr %s190, 12
      %s195 = sadd.s32 %s193, %s194
      %s196 = smul.addr %s195, 4
      %s197 = scalar_lea.vmem %s0, %s196
      %s198 = sadd.s32 %s19, %s20
      %p199 = scmp.lt.s32.totalorder %s20, 2
      %s200 = scalar_select %p199, %s20, 2
      %s201 = smul.addr %s200, 9
      %s202 = smul.addr %s201, 4
      %s203 = scalar_lea.vmem %s1, %s202
      %p204 = scmp.lt.s32.totalorder %s18, 1
      %s205 = scalar_select %p204, %s18, 1
      %p206 = scmp.lt.s32.totalorder %s19, 3
      %s207 = scalar_select %p206, %s19, 3
      %s208 = smul.addr %s205, 4
      %s209 = sadd.s32 %s207, %s208
      %s210 = smul.addr %s209, 4
      %s211 = scalar_lea.vmem %s2, %s210
      %p213 = scmp.eq.s32.totalorder %s20, 0
      // Predicated region
      $region29: #{hourglass_forward.14} parent=27 // pred_check
        %p214 = pneg %p213
      $region30: #{hourglass_forward.14} parent=27 // pred_check_branch
        %216 = sbr.rel (%p214) target = $region32
      $region31: #{hourglass_forward.14} parent=27 // pred_region
        %217 = vst [vmem:[#allocation2] sm:$0xff] 0.0
      $region32: #{hourglass_forward.14} parent=27 // pred_fallthru
        _
      %v218 = vld [vmem:[%s197] sm:$0xff]
      %v219 = vld [vmem:[#allocation2] sm:$0xff]
      %v220 = vld [vmem:[%s203] sm:$0xf]
      %vm221 = vcmask 64512
      %v223 = vsel %vm221, %v220, 0
      %vm225 = vcmask 1043456
      %v227 = vsel %vm225, %v218, 0
      %229 = vmatprep.subr.bf16.mxu0 0
      %230 = vmatpush1.bf16.msra.mxu0 %v227
      %231 = vmatprep.subr.bf16.mxu0 0
      %232 = vmatpush1.bf16.msra.mxu0 0
      %233 = vmatprep.subr.bf16.mxu0 0
      %234 = vmatpush1.bf16.msra.mxu0 0
      %235 = vmatprep.subr.bf16.mxu0 0
      %236 = vmatpush1.bf16.msra.mxu0 0
      %237 = vmatprep.subr.bf16.mxu0 0
      %238 = vmatpush1.bf16.msra.mxu0 0
      %239 = vmatprep.subr.bf16.mxu0 0
      %240 = vmatpush1.bf16.msra.mxu0 0
      %241 = vmatprep.subr.bf16.mxu0 0
      %242 = vmatpush1.bf16.msra.mxu0 0
      %243 = vmatprep.subr.bf16.mxu0 0
      %244 = vmatpush1.bf16.msra.mxu0 0
      %245 = vmatprep.subr.bf16.mxu0 0
      %246 = vmatpush1.bf16.msra.mxu0 0
      %247 = vmatprep.subr.bf16.mxu0 0
      %248 = vmatpush1.bf16.msra.mxu0 0
      %249 = vmatprep.subr.bf16.mxu0 0
      %250 = vmatpush1.bf16.msra.mxu0 0
      %251 = vmatprep.subr.bf16.mxu0 0
      %252 = vmatpush1.bf16.msra.mxu0 0
      %253 = vmatprep.subr.bf16.mxu0 0
      %254 = vmatpush1.bf16.msra.mxu0 0
      %255 = vmatprep.subr.bf16.mxu0 0
      %256 = vmatpush1.bf16.msra.mxu0 0
      %257 = vmatprep.subr.bf16.mxu0 0
      %258 = vmatpush1.bf16.msra.mxu0 0
      %259 = vmatprep.subr.bf16.mxu0 0
      %260 = vmatpush1.bf16.msra.mxu0 0
      %261 = vmatprep.mubr.bf16.mxu0 0
      %262 = vmatmul.mubr.bf16.gmra.mrb[0].mxu0 %v223
      %v263 = vpop.f32.mrb[0].mxu0
      %v264 = vadd.f32 0.0, %v263
      %v265 = vpop.f32.mrb[0].mxu0
      %v266 = vpop.f32.mrb[0].mxu0
      %v267 = vpop.f32.mrb[0].mxu0
      %268 = vdwg.mxu0
      %v269 = vadd.f32 %v219, %v264
      %s270 = scalar_lea.vmem %s203, 4
      %v271 = vld [vmem:[%s270] sm:$0xf]
      %v273 = vunpack.c.l.b16 %v218
      %v274 = vunpack.c.h.b16 %v218
      %v275 = vpack.c.b16 %v273, %v273
      %v276 = vpack.c.b16 %v274, %v274
      %277 = vrot.lane.b32.xlu0 %v275, 127
      %v278 = vpop.permute.xlu0 %277
      %279 = vrot.lane.b32.xlu0 %v276, 127
      %v280 = vpop.permute.xlu0 %279
      %vm281 = vcmask 1039360
      %v282 = vsel %vm281, %v278, %v280
      %v284 = vsel %vm221, %v271, 0
      %v287 = vsel %vm225, %v282, 0
      %289 = vmatprep.subr.bf16.mxu0 0
      %290 = vmatpush1.bf16.msra.mxu0 %v287
      %291 = vmatprep.subr.bf16.mxu0 0
      %292 = vmatpush1.bf16.msra.mxu0 0
      %293 = vmatprep.subr.bf16.mxu0 0
      %294 = vmatpush1.bf16.msra.mxu0 0
      %295 = vmatprep.subr.bf16.mxu0 0
      %296 = vmatpush1.bf16.msra.mxu0 0
      %297 = vmatprep.subr.bf16.mxu0 0
      %298 = vmatpush1.bf16.msra.mxu0 0
      %299 = vmatprep.subr.bf16.mxu0 0
      %300 = vmatpush1.bf16.msra.mxu0 0
      %301 = vmatprep.subr.bf16.mxu0 0
      %302 = vmatpush1.bf16.msra.mxu0 0
      %303 = vmatprep.subr.bf16.mxu0 0
      %304 = vmatpush1.bf16.msra.mxu0 0
      %305 = vmatprep.subr.bf16.mxu0 0
      %306 = vmatpush1.bf16.msra.mxu0 0
      %307 = vmatprep.subr.bf16.mxu0 0
      %308 = vmatpush1.bf16.msra.mxu0 0
      %309 = vmatprep.subr.bf16.mxu0 0
      %310 = vmatpush1.bf16.msra.mxu0 0
      %311 = vmatprep.subr.bf16.mxu0 0
      %312 = vmatpush1.bf16.msra.mxu0 0
      %313 = vmatprep.subr.bf16.mxu0 0
      %314 = vmatpush1.bf16.msra.mxu0 0
      %315 = vmatprep.subr.bf16.mxu0 0
      %316 = vmatpush1.bf16.msra.mxu0 0
      %317 = vmatprep.subr.bf16.mxu0 0
      %318 = vmatpush1.bf16.msra.mxu0 0
      %319 = vmatprep.subr.bf16.mxu0 0
      %320 = vmatpush1.bf16.msra.mxu0 0
      %321 = vmatprep.mubr.bf16.mxu0 0
      %322 = vmatmul.mubr.bf16.gmra.mrb[0].mxu0 %v284
      %v323 = vpop.f32.mrb[0].mxu0
      %v324 = vadd.f32 0.0, %v323
      %v325 = vpop.f32.mrb[0].mxu0
      %v326 = vpop.f32.mrb[0].mxu0
      %v327 = vpop.f32.mrb[0].mxu0
      %328 = vdwg.mxu0
      %v329 = vadd.f32 %v269, %v324
      %s330 = scalar_lea.vmem %s203, 8
      %v331 = vld [vmem:[%s330] sm:$0xf]
      %332 = vrot.lane.b32.xlu0 %v275, 126
      %v333 = vpop.permute.xlu0 %332
      %334 = vrot.lane.b32.xlu0 %v276, 126
      %v335 = vpop.permute.xlu0 %334
      %vm336 = vcmask 1031168
      %v337 = vsel %vm336, %v333, %v335
      %v339 = vsel %vm221, %v331, 0
      %v342 = vsel %vm225, %v337, 0
      %344 = vmatprep.subr.bf16.mxu0 0
      %345 = vmatpush1.bf16.msra.mxu0 %v342
      %346 = vmatprep.subr.bf16.mxu0 0
      %347 = vmatpush1.bf16.msra.mxu0 0
      %348 = vmatprep.subr.bf16.mxu0 0
      %349 = vmatpush1.bf16.msra.mxu0 0
      %350 = vmatprep.subr.bf16.mxu0 0
      %351 = vmatpush1.bf16.msra.mxu0 0
      %352 = vmatprep.subr.bf16.mxu0 0
      %353 = vmatpush1.bf16.msra.mxu0 0
      %354 = vmatprep.subr.bf16.mxu0 0
      %355 = vmatpush1.bf16.msra.mxu0 0
      %356 = vmatprep.subr.bf16.mxu0 0
      %357 = vmatpush1.bf16.msra.mxu0 0
      %358 = vmatprep.subr.bf16.mxu0 0
      %359 = vmatpush1.bf16.msra.mxu0 0
      %360 = vmatprep.subr.bf16.mxu0 0
      %361 = vmatpush1.bf16.msra.mxu0 0
      %362 = vmatprep.subr.bf16.mxu0 0
      %363 = vmatpush1.bf16.msra.mxu0 0
      %364 = vmatprep.subr.bf16.mxu0 0
      %365 = vmatpush1.bf16.msra.mxu0 0
      %366 = vmatprep.subr.bf16.mxu0 0
      %367 = vmatpush1.bf16.msra.mxu0 0
      %368 = vmatprep.subr.bf16.mxu0 0
      %369 = vmatpush1.bf16.msra.mxu0 0
      %370 = vmatprep.subr.bf16.mxu0 0
      %371 = vmatpush1.bf16.msra.mxu0 0
      %372 = vmatprep.subr.bf16.mxu0 0
      %373 = vmatpush1.bf16.msra.mxu0 0
      %374 = vmatprep.subr.bf16.mxu0 0
      %375 = vmatpush1.bf16.msra.mxu0 0
      %376 = vmatprep.mubr.bf16.mxu0 0
      %377 = vmatmul.mubr.bf16.gmra.mrb[0].mxu0 %v339
      %v378 = vpop.f32.mrb[0].mxu0
      %v379 = vadd.f32 0.0, %v378
      %v380 = vpop.f32.mrb[0].mxu0
      %v381 = vpop.f32.mrb[0].mxu0
      %v382 = vpop.f32.mrb[0].mxu0
      %383 = vdwg.mxu0
      %v384 = vadd.f32 %v329, %v379
      %s385 = scalar_lea.vmem %s203, 12
      %v386 = vld [vmem:[%s385] sm:$0xf]
      %387 = vrot.lane.b32.xlu0 %v275, 118
      %v388 = vpop.permute.xlu0 %387
      %389 = vrot.lane.b32.xlu0 %v276, 118
      %v390 = vpop.permute.xlu0 %389
      %vm391 = vcmask 965632
      %v392 = vsel %vm391, %v388, %v390
      %v394 = vsel %vm221, %v386, 0
      %v397 = vsel %vm225, %v392, 0
      %399 = vmatprep.subr.bf16.mxu0 0
      %400 = vmatpush1.bf16.msra.mxu0 %v397
      %401 = vmatprep.subr.bf16.mxu0 0
      %402 = vmatpush1.bf16.msra.mxu0 0
      %403 = vmatprep.subr.bf16.mxu0 0
      %404 = vmatpush1.bf16.msra.mxu0 0
      %405 = vmatprep.subr.bf16.mxu0 0
      %406 = vmatpush1.bf16.msra.mxu0 0
      %407 = vmatprep.subr.bf16.mxu0 0
      %408 = vmatpush1.bf16.msra.mxu0 0
      %409 = vmatprep.subr.bf16.mxu0 0
      %410 = vmatpush1.bf16.msra.mxu0 0
      %411 = vmatprep.subr.bf16.mxu0 0
      %412 = vmatpush1.bf16.msra.mxu0 0
      %413 = vmatprep.subr.bf16.mxu0 0
      %414 = vmatpush1.bf16.msra.mxu0 0
      %415 = vmatprep.subr.bf16.mxu0 0
      %416 = vmatpush1.bf16.msra.mxu0 0
      %417 = vmatprep.subr.bf16.mxu0 0
      %418 = vmatpush1.bf16.msra.mxu0 0
      %419 = vmatprep.subr.bf16.mxu0 0
      %420 = vmatpush1.bf16.msra.mxu0 0
      %421 = vmatprep.subr.bf16.mxu0 0
      %422 = vmatpush1.bf16.msra.mxu0 0
      %423 = vmatprep.subr.bf16.mxu0 0
      %424 = vmatpush1.bf16.msra.mxu0 0
      %425 = vmatprep.subr.bf16.mxu0 0
      %426 = vmatpush1.bf16.msra.mxu0 0
      %427 = vmatprep.subr.bf16.mxu0 0
      %428 = vmatpush1.bf16.msra.mxu0 0
      %429 = vmatprep.subr.bf16.mxu0 0
      %430 = vmatpush1.bf16.msra.mxu0 0
      %431 = vmatprep.mubr.bf16.mxu0 0
      %432 = vmatmul.mubr.bf16.gmra.mrb[0].mxu0 %v394
      %v433 = vpop.f32.mrb[0].mxu0
      %v434 = vadd.f32 0.0, %v433
      %v435 = vpop.f32.mrb[0].mxu0
      %v436 = vpop.f32.mrb[0].mxu0
      %v437 = vpop.f32.mrb[0].mxu0
      %438 = vdwg.mxu0
      %v439 = vadd.f32 %v384, %v434
      %s440 = scalar_lea.vmem %s203, 16
      %v441 = vld [vmem:[%s440] sm:$0xf]
      %442 = vrot.lane.b32.xlu0 %v275, 117
      %v443 = vpop.permute.xlu0 %442
      %444 = vrot.lane.b32.xlu0 %v276, 117
      %v445 = vpop.permute.xlu0 %444
      %vm446 = vcmask 957440
      %v447 = vsel %vm446, %v443, %v445
      %v449 = vsel %vm221, %v441, 0
      %v452 = vsel %vm225, %v447, 0
      %454 = vmatprep.subr.bf16.mxu0 0
      %455 = vmatpush1.bf16.msra.mxu0 %v452
      %456 = vmatprep.subr.bf16.mxu0 0
      %457 = vmatpush1.bf16.msra.mxu0 0
      %458 = vmatprep.subr.bf16.mxu0 0
      %459 = vmatpush1.bf16.msra.mxu0 0
      %460 = vmatprep.subr.bf16.mxu0 0
      %461 = vmatpush1.bf16.msra.mxu0 0
      %462 = vmatprep.subr.bf16.mxu0 0
      %463 = vmatpush1.bf16.msra.mxu0 0
      %464 = vmatprep.subr.bf16.mxu0 0
      %465 = vmatpush1.bf16.msra.mxu0 0
      %466 = vmatprep.subr.bf16.mxu0 0
      %467 = vmatpush1.bf16.msra.mxu0 0
      %468 = vmatprep.subr.bf16.mxu0 0
      %469 = vmatpush1.bf16.msra.mxu0 0
      %470 = vmatprep.subr.bf16.mxu0 0
      %471 = vmatpush1.bf16.msra.mxu0 0
      %472 = vmatprep.subr.bf16.mxu0 0
      %473 = vmatpush1.bf16.msra.mxu0 0
      %474 = vmatprep.subr.bf16.mxu0 0
      %475 = vmatpush1.bf16.msra.mxu0 0
      %476 = vmatprep.subr.bf16.mxu0 0
      %477 = vmatpush1.bf16.msra.mxu0 0
      %478 = vmatprep.subr.bf16.mxu0 0
      %479 = vmatpush1.bf16.msra.mxu0 0
      %480 = vmatprep.subr.bf16.mxu0 0
      %481 = vmatpush1.bf16.msra.mxu0 0
      %482 = vmatprep.subr.bf16.mxu0 0
      %483 = vmatpush1.bf16.msra.mxu0 0
      %484 = vmatprep.subr.bf16.mxu0 0
      %485 = vmatpush1.bf16.msra.mxu0 0
      %486 = vmatprep.mubr.bf16.mxu0 0
      %487 = vmatmul.mubr.bf16.gmra.mrb[0].mxu0 %v449
      %v488 = vpop.f32.mrb[0].mxu0
      %v489 = vadd.f32 0.0, %v488
      %v490 = vpop.f32.mrb[0].mxu0
      %v491 = vpop.f32.mrb[0].mxu0
      %v492 = vpop.f32.mrb[0].mxu0
      %493 = vdwg.mxu0
      %v494 = vadd.f32 %v439, %v489
      %s495 = scalar_lea.vmem %s203, 20
      %v496 = vld [vmem:[%s495] sm:$0xf]
      %497 = vrot.lane.b32.xlu0 %v275, 116
      %v498 = vpop.permute.xlu0 %497
      %499 = vrot.lane.b32.xlu0 %v276, 116
      %v500 = vpop.permute.xlu0 %499
      %vm501 = vcmask 949248
      %v502 = vsel %vm501, %v498, %v500
      %v504 = vsel %vm221, %v496, 0
      %v507 = vsel %vm225, %v502, 0
      %509 = vmatprep.subr.bf16.mxu0 0
      %510 = vmatpush1.bf16.msra.mxu0 %v507
      %511 = vmatprep.subr.bf16.mxu0 0
      %512 = vmatpush1.bf16.msra.mxu0 0
      %513 = vmatprep.subr.bf16.mxu0 0
      %514 = vmatpush1.bf16.msra.mxu0 0
      %515 = vmatprep.subr.bf16.mxu0 0
      %516 = vmatpush1.bf16.msra.mxu0 0
      %517 = vmatprep.subr.bf16.mxu0 0
      %518 = vmatpush1.bf16.msra.mxu0 0
      %519 = vmatprep.subr.bf16.mxu0 0
      %520 = vmatpush1.bf16.msra.mxu0 0
      %521 = vmatprep.subr.bf16.mxu0 0
      %522 = vmatpush1.bf16.msra.mxu0 0
      %523 = vmatprep.subr.bf16.mxu0 0
      %524 = vmatpush1.bf16.msra.mxu0 0
      %525 = vmatprep.subr.bf16.mxu0 0
      %526 = vmatpush1.bf16.msra.mxu0 0
      %527 = vmatprep.subr.bf16.mxu0 0
      %528 = vmatpush1.bf16.msra.mxu0 0
      %529 = vmatprep.subr.bf16.mxu0 0
      %530 = vmatpush1.bf16.msra.mxu0 0
      %531 = vmatprep.subr.bf16.mxu0 0
      %532 = vmatpush1.bf16.msra.mxu0 0
      %533 = vmatprep.subr.bf16.mxu0 0
      %534 = vmatpush1.bf16.msra.mxu0 0
      %535 = vmatprep.subr.bf16.mxu0 0
      %536 = vmatpush1.bf16.msra.mxu0 0
      %537 = vmatprep.subr.bf16.mxu0 0
      %538 = vmatpush1.bf16.msra.mxu0 0
      %539 = vmatprep.subr.bf16.mxu0 0
      %540 = vmatpush1.bf16.msra.mxu0 0
      %541 = vmatprep.mubr.bf16.mxu0 0
      %542 = vmatmul.mubr.bf16.gmra.mrb[0].mxu0 %v504
      %v543 = vpop.f32.mrb[0].mxu0
      %v544 = vadd.f32 0.0, %v543
      %v545 = vpop.f32.mrb[0].mxu0
      %v546 = vpop.f32.mrb[0].mxu0
      %v547 = vpop.f32.mrb[0].mxu0
      %548 = vdwg.mxu0
      %v549 = vadd.f32 %v494, %v544
      %s550 = scalar_lea.vmem %s203, 24
      %v551 = vld [vmem:[%s550] sm:$0xf]
      %552 = vrot.lane.b32.xlu0 %v275, 108
      %v553 = vpop.permute.xlu0 %552
      %554 = vrot.lane.b32.xlu0 %v276, 108
      %v555 = vpop.permute.xlu0 %554
      %vm556 = vcmask 883712
      %v557 = vsel %vm556, %v553, %v555
      %v559 = vsel %vm221, %v551, 0
      %v562 = vsel %vm225, %v557, 0
      %564 = vmatprep.subr.bf16.mxu0 0
      %565 = vmatpush1.bf16.msra.mxu0 %v562
      %566 = vmatprep.subr.bf16.mxu0 0
      %567 = vmatpush1.bf16.msra.mxu0 0
      %568 = vmatprep.subr.bf16.mxu0 0
      %569 = vmatpush1.bf16.msra.mxu0 0
      %570 = vmatprep.subr.bf16.mxu0 0
      %571 = vmatpush1.bf16.msra.mxu0 0
      %572 = vmatprep.subr.bf16.mxu0 0
      %573 = vmatpush1.bf16.msra.mxu0 0
      %574 = vmatprep.subr.bf16.mxu0 0
      %575 = vmatpush1.bf16.msra.mxu0 0
      %576 = vmatprep.subr.bf16.mxu0 0
      %577 = vmatpush1.bf16.msra.mxu0 0
      %578 = vmatprep.subr.bf16.mxu0 0
      %579 = vmatpush1.bf16.msra.mxu0 0
      %580 = vmatprep.subr.bf16.mxu0 0
      %581 = vmatpush1.bf16.msra.mxu0 0
      %582 = vmatprep.subr.bf16.mxu0 0
      %583 = vmatpush1.bf16.msra.mxu0 0
      %584 = vmatprep.subr.bf16.mxu0 0
      %585 = vmatpush1.bf16.msra.mxu0 0
      %586 = vmatprep.subr.bf16.mxu0 0
      %587 = vmatpush1.bf16.msra.mxu0 0
      %588 = vmatprep.subr.bf16.mxu0 0
      %589 = vmatpush1.bf16.msra.mxu0 0
      %590 = vmatprep.subr.bf16.mxu0 0
      %591 = vmatpush1.bf16.msra.mxu0 0
      %592 = vmatprep.subr.bf16.mxu0 0
      %593 = vmatpush1.bf16.msra.mxu0 0
      %594 = vmatprep.subr.bf16.mxu0 0
      %595 = vmatpush1.bf16.msra.mxu0 0
      %596 = vmatprep.mubr.bf16.mxu0 0
      %597 = vmatmul.mubr.bf16.gmra.mrb[0].mxu0 %v559
      %v598 = vpop.f32.mrb[0].mxu0
      %v599 = vadd.f32 0.0, %v598
      %v600 = vpop.f32.mrb[0].mxu0
      %v601 = vpop.f32.mrb[0].mxu0
      %v602 = vpop.f32.mrb[0].mxu0
      %603 = vdwg.mxu0
      %v604 = vadd.f32 %v549, %v599
      %s605 = scalar_lea.vmem %s203, 28
      %v606 = vld [vmem:[%s605] sm:$0xf]
      %607 = vrot.lane.b32.xlu0 %v275, 107
      %v608 = vpop.permute.xlu0 %607
      %609 = vrot.lane.b32.xlu0 %v276, 107
      %v610 = vpop.permute.xlu0 %609
      %vm611 = vcmask 875520
      %v612 = vsel %vm611, %v608, %v610
      %v614 = vsel %vm221, %v606, 0
      %v617 = vsel %vm225, %v612, 0
      %619 = vmatprep.subr.bf16.mxu0 0
      %620 = vmatpush1.bf16.msra.mxu0 %v617
      %621 = vmatprep.subr.bf16.mxu0 0
      %622 = vmatpush1.bf16.msra.mxu0 0
      %623 = vmatprep.subr.bf16.mxu0 0
      %624 = vmatpush1.bf16.msra.mxu0 0
      %625 = vmatprep.subr.bf16.mxu0 0
      %626 = vmatpush1.bf16.msra.mxu0 0
      %627 = vmatprep.subr.bf16.mxu0 0
      %628 = vmatpush1.bf16.msra.mxu0 0
      %629 = vmatprep.subr.bf16.mxu0 0
      %630 = vmatpush1.bf16.msra.mxu0 0
      %631 = vmatprep.subr.bf16.mxu0 0
      %632 = vmatpush1.bf16.msra.mxu0 0
      %633 = vmatprep.subr.bf16.mxu0 0
      %634 = vmatpush1.bf16.msra.mxu0 0
      %635 = vmatprep.subr.bf16.mxu0 0
      %636 = vmatpush1.bf16.msra.mxu0 0
      %637 = vmatprep.subr.bf16.mxu0 0
      %638 = vmatpush1.bf16.msra.mxu0 0
      %639 = vmatprep.subr.bf16.mxu0 0
      %640 = vmatpush1.bf16.msra.mxu0 0
      %641 = vmatprep.subr.bf16.mxu0 0
      %642 = vmatpush1.bf16.msra.mxu0 0
      %643 = vmatprep.subr.bf16.mxu0 0
      %644 = vmatpush1.bf16.msra.mxu0 0
      %645 = vmatprep.subr.bf16.mxu0 0
      %646 = vmatpush1.bf16.msra.mxu0 0
      %647 = vmatprep.subr.bf16.mxu0 0
      %648 = vmatpush1.bf16.msra.mxu0 0
      %649 = vmatprep.subr.bf16.mxu0 0
      %650 = vmatpush1.bf16.msra.mxu0 0
      %651 = vmatprep.mubr.bf16.mxu0 0
      %652 = vmatmul.mubr.bf16.gmra.mrb[0].mxu0 %v614
      %v653 = vpop.f32.mrb[0].mxu0
      %v654 = vadd.f32 0.0, %v653
      %v655 = vpop.f32.mrb[0].mxu0
      %v656 = vpop.f32.mrb[0].mxu0
      %v657 = vpop.f32.mrb[0].mxu0
      %658 = vdwg.mxu0
      %v659 = vadd.f32 %v604, %v654
      %s660 = scalar_lea.vmem %s203, 32
      %v661 = vld [vmem:[%s660] sm:$0xf]
      %662 = vrot.lane.b32.xlu0 %v275, 106
      %v663 = vpop.permute.xlu0 %662
      %664 = vrot.lane.b32.xlu0 %v276, 106
      %v665 = vpop.permute.xlu0 %664
      %vm666 = vcmask 867328
      %v667 = vsel %vm666, %v663, %v665
      %v669 = vsel %vm221, %v661, 0
      %v672 = vsel %vm225, %v667, 0
      %674 = vmatprep.subr.bf16.mxu0 0
      %675 = vmatpush1.bf16.msra.mxu0 %v672
      %676 = vmatprep.subr.bf16.mxu0 0
      %677 = vmatpush1.bf16.msra.mxu0 0
      %678 = vmatprep.subr.bf16.mxu0 0
      %679 = vmatpush1.bf16.msra.mxu0 0
      %680 = vmatprep.subr.bf16.mxu0 0
      %681 = vmatpush1.bf16.msra.mxu0 0
      %682 = vmatprep.subr.bf16.mxu0 0
      %683 = vmatpush1.bf16.msra.mxu0 0
      %684 = vmatprep.subr.bf16.mxu0 0
      %685 = vmatpush1.bf16.msra.mxu0 0
      %686 = vmatprep.subr.bf16.mxu0 0
      %687 = vmatpush1.bf16.msra.mxu0 0
      %688 = vmatprep.subr.bf16.mxu0 0
      %689 = vmatpush1.bf16.msra.mxu0 0
      %690 = vmatprep.subr.bf16.mxu0 0
      %691 = vmatpush1.bf16.msra.mxu0 0
      %692 = vmatprep.subr.bf16.mxu0 0
      %693 = vmatpush1.bf16.msra.mxu0 0
      %694 = vmatprep.subr.bf16.mxu0 0
      %695 = vmatpush1.bf16.msra.mxu0 0
      %696 = vmatprep.subr.bf16.mxu0 0
      %697 = vmatpush1.bf16.msra.mxu0 0
      %698 = vmatprep.subr.bf16.mxu0 0
      %699 = vmatpush1.bf16.msra.mxu0 0
      %700 = vmatprep.subr.bf16.mxu0 0
      %701 = vmatpush1.bf16.msra.mxu0 0
      %702 = vmatprep.subr.bf16.mxu0 0
      %703 = vmatpush1.bf16.msra.mxu0 0
      %704 = vmatprep.subr.bf16.mxu0 0
      %705 = vmatpush1.bf16.msra.mxu0 0
      %706 = vmatprep.mubr.bf16.mxu0 0
      %707 = vmatmul.mubr.bf16.gmra.mrb[0].mxu0 %v669
      %v708 = vpop.f32.mrb[0].mxu0
      %v709 = vadd.f32 0.0, %v708
      %v710 = vpop.f32.mrb[0].mxu0
      %v711 = vpop.f32.mrb[0].mxu0
      %v712 = vpop.f32.mrb[0].mxu0
      %713 = vdwg.mxu0
      %v714 = vadd.f32 %v659, %v709
      %715 = vst [vmem:[#allocation2] sm:$0xff] %v714
      %p716 = scmp.eq.s32.totalorder %s20, 2
      // Predicated region
      $region33: #{hourglass_forward.14} parent=27 // pred_check
        %p717 = pneg %p716
      $region34: #{hourglass_forward.14} parent=27 // pred_check_branch
        %719 = sbr.rel (%p717) target = $region36
      $region35: #{hourglass_forward.14} parent=27 // pred_region
        %v720 = vld [vmem:[#allocation2] sm:$0xff]
        %v721 = vpack.c.bf16 %v720, %v720
        %722 = vst [vmem:[%s211] sm:$0xf] %v721
      $region36: #{hourglass_forward.14} parent=27 // pred_fallthru
        _
      %p723 = scmp.lt.s32.totalorder %s18, 1
      %s724 = scalar_select %p723, %s18, 1
      %p725 = scmp.lt.s32.totalorder %s19, 3
      %s726 = scalar_select %p725, %s19, 3
      %s727 = smul.addr %s724, 4
      %s728 = sadd.s32 %s726, %s727
      %s729 = smul.addr %s728, 4
      %s730 = scalar_lea.vmem %s2, %s729
      // Predicated region
      $region37: #{hourglass_forward.14} parent=27 // pred_check
        %p731 = pneg %p108
      $region38: #{hourglass_forward.14} parent=27 // pred_check_branch
        %733 = sbr.rel (%p731) target = $region40
      $region39: #{hourglass_forward.14} parent=27 // pred_region
        _
      $region40: #{hourglass_forward.14} parent=27 // pred_fallthru
        _
    $region28: #{hourglass_forward.14} parent=5 // pred_fallthru
      _
    %p734 = scmp.le.s32.totalorder 2, %s8
    // Predicated region
    $region41: #{hourglass_forward.14} parent=5 // pred_check
      %p735 = pneg %p734
    $region42: #{hourglass_forward.14} parent=5 // pred_check_branch
      %737 = sbr.rel (%p735) target = $region44
    $region43: #{hourglass_forward.14} parent=5 // pred_region
      %s738 = ssub.s32 %s8, 2
      // Predicated region
      $region45: #{hourglass_forward.14} parent=43 // pred_check
        %p739 = pneg %p114
      $region46: #{hourglass_forward.14} parent=43 // pred_check_branch
        %741 = sbr.rel (%p739) target = $region48
      $region47: #{hourglass_forward.14} parent=43 // pred_region
        %p742 = scmp.lt.s32.totalorder %s21, 1
        %s743 = scalar_select %p742, %s21, 1
        %p744 = scmp.lt.s32.totalorder %s22, 3
        %s745 = scalar_select %p744, %s22, 3
        %s746 = smul.addr %s743, 4
        %s747 = sadd.s32 %s745, %s746
        %s748 = smul.addr %s747, 4
        %s749 = scalar_lea.vmem %s2, %s748
      $region48: #{hourglass_forward.14} parent=43 // pred_fallthru
        _
    $region44: #{hourglass_forward.14} parent=5 // pred_fallthru
      _
  $region6: #{hourglass_forward.14} parent=0 // loop_footer
    %s12 = sadd.s32 1, %s8
  $region7: #{hourglass_forward.14} parent=0 // loop_footer_branch
    %7 = sbr.rel target = $region3
  $region8: #{hourglass_forward.14} parent=0 // loop_exit
    _

// kernel: hourglass_forward.15
$region0: #{hourglass_forward.15}
  #allocation0 [shape = 'u32[]', space=smem, size = 0x4, offset = 0x4, fixed_abs, tag = 'smem constant byte address 0x4 - core index']
  #allocation1 [shape = 'u32[144,128]{1,0:T(1,128)}', space=vmem, size = 0x12000, scoped, tag = 'internal scratch']
  %s0 = inlined_call_operand.vmem [shape: bf16[2,2,8,128], index: 0, kind: input, shape index: {}]
  %s1 = inlined_call_operand.vmem [shape: f32[2,8,1], index: 1, kind: input, shape index: {}]
  %s2 = inlined_call_operand.vmem [shape: f32[2,8,1], index: 2, kind: input, shape index: {}]
  %s3 = inlined_call_operand.vmem [shape: f32[2,2,8,128], index: 3, kind: output, shape index: {}]
  %s4 = sld [smem:[#allocation0]]
  $region45: #{hourglass_forward.15} parent=0
    _
  %s6 = ssub.s32 1, %s4
  %s7 = scalar_select 0, %s6, %s4
  loop: start=0, step=1, limit=6
  $region2: #{hourglass_forward.15} parent=0 // loop_pre_header
    _
  $region3: #{hourglass_forward.15} parent=0 // loop_header
    %s9 = sphi 0, %s13
    %p10 = scmp.ge.s32.totalorder %s9, 6
    %s16 = sphi 0, %s28
    %s17 = sphi 0, %s24
    %s18 = sphi 0, %s16
    %s19 = sphi 0, %s17
    %s20 = sphi 0, %s18
    %s21 = sphi 0, %s19
    %s33 = sphi 0, %s35
    %s36 = sphi 0, %s33
    %s37 = sphi 0, %s36
    %s53 = sphi 0, %s37
    %s59 = sphi 0, %s61
    %s62 = sphi 0, %s59
    %s63 = sphi 0, %s62
    %s79 = sphi 0, %s63
    %s85 = sphi 0, %s87
    %s88 = sphi 0, %s85
    %s89 = sphi 0, %s88
    %s105 = sphi 0, %s89
    %s113 = sphi 0, %s115
    %s116 = sphi 0, %s113
    %s117 = sphi 0, %s116
    %s133 = sphi 0, %s117
  $region4: #{hourglass_forward.15} parent=0 // loop_header_branch
    %12 = sbr.rel (%p10) target = $region8
  $region5: #{hourglass_forward.15} parent=0 // loop_body
    %s14 = ssub.s32 %s9, 1
    %s15 = ssub.s32 %s9, 2
    %s22 = sadd.s32 1, %s17
    %p23 = scmp.ge.s32.totalorder %s22, 2
    %s24 = scalar_select %p23, 0, %s22
    %s25 = sadd.s32 1, %s16
    %s26 = scalar_select %p23, %s25, %s16
    %p27 = scmp.ge.s32.totalorder %s26, 2
    %s28 = scalar_select %p27, 0, %s26
    %s29 = ssub.s32 %s16, %s28
    %s30 = ssub.s32 %s17, %s24
    %s31 = sor.u32 %s29, %s30
    %p32 = scmp.eq.s32.totalorder %s31, 0
    %s34 = sadd.s32 %s33, 1
    %s35 = scalar_select %p32, %s33, %s34
    %p38 = pneg %p32
    %p39 = scmp.eq.s32.totalorder %s9, 3
    %p40 = por %p38, %p39
    %p41 = scmp.ne.s32.totalorder %s33, %s36
    %p42 = scmp.eq.s32.totalorder %s9, 0
    %p43 = por %p41, %p42
    %p44 = scmp.ne.s32.totalorder %s33, %s36
    %p45 = scmp.eq.s32.totalorder %s14, 3
    %p46 = por %p44, %p45
    %p47 = scmp.ne.s32.totalorder %s36, %s37
    %p48 = scmp.eq.s32.totalorder %s14, 0
    %p49 = por %p47, %p48
    %p50 = scmp.ne.s32.totalorder %s36, %s37
    %p51 = scmp.eq.s32.totalorder %s15, 3
    %p52 = por %p50, %p51
    %p54 = scmp.ne.s32.totalorder %s37, %s53
    %p55 = scmp.eq.s32.totalorder %s15, 0
    %p56 = por %p54, %p55
    %s57 = ssub.s32 %s17, %s24
    %p58 = scmp.eq.s32.totalorder %s57, 0
    %s60 = sadd.s32 %s59, 1
    %s61 = scalar_select %p58, %s59, %s60
    %p64 = pneg %p58
    %p65 = scmp.eq.s32.totalorder %s9, 3
    %p66 = por %p64, %p65
    %p67 = scmp.ne.s32.totalorder %s59, %s62
    %p68 = scmp.eq.s32.totalorder %s9, 0
    %p69 = por %p67, %p68
    %p70 = scmp.ne.s32.totalorder %s59, %s62
    %p71 = scmp.eq.s32.totalorder %s14, 3
    %p72 = por %p70, %p71
    %p73 = scmp.ne.s32.totalorder %s62, %s63
    %p74 = scmp.eq.s32.totalorder %s14, 0
    %p75 = por %p73, %p74
    %p76 = scmp.ne.s32.totalorder %s62, %s63
    %p77 = scmp.eq.s32.totalorder %s15, 3
    %p78 = por %p76, %p77
    %p80 = scmp.ne.s32.totalorder %s63, %s79
    %p81 = scmp.eq.s32.totalorder %s15, 0
    %p82 = por %p80, %p81
    %s83 = ssub.s32 %s17, %s24
    %p84 = scmp.eq.s32.totalorder %s83, 0
    %s86 = sadd.s32 %s85, 1
    %s87 = scalar_select %p84, %s85, %s86
    %p90 = pneg %p84
    %p91 = scmp.eq.s32.totalorder %s9, 3
    %p92 = por %p90, %p91
    %p93 = scmp.ne.s32.totalorder %s85, %s88
    %p94 = scmp.eq.s32.totalorder %s9, 0
    %p95 = por %p93, %p94
    %p96 = scmp.ne.s32.totalorder %s85, %s88
    %p97 = scmp.eq.s32.totalorder %s14, 3
    %p98 = por %p96, %p97
    %p99 = scmp.ne.s32.totalorder %s88, %s89
    %p100 = scmp.eq.s32.totalorder %s14, 0
    %p101 = por %p99, %p100
    %p102 = scmp.ne.s32.totalorder %s88, %s89
    %p103 = scmp.eq.s32.totalorder %s15, 3
    %p104 = por %p102, %p103
    %p106 = scmp.ne.s32.totalorder %s89, %s105
    %p107 = scmp.eq.s32.totalorder %s15, 0
    %p108 = por %p106, %p107
    %s109 = ssub.s32 %s16, %s28
    %s110 = ssub.s32 %s17, %s24
    %s111 = sor.u32 %s109, %s110
    %p112 = scmp.eq.s32.totalorder %s111, 0
    %s114 = sadd.s32 %s113, 1
    %s115 = scalar_select %p112, %s113, %s114
    %p118 = pneg %p112
    %p119 = scmp.eq.s32.totalorder %s9, 3
    %p120 = por %p118, %p119
    %p121 = scmp.ne.s32.totalorder %s113, %s116
    %p122 = scmp.eq.s32.totalorder %s9, 0
    %p123 = por %p121, %p122
    %p124 = scmp.ne.s32.totalorder %s113, %s116
    %p125 = scmp.eq.s32.totalorder %s14, 3
    %p126 = por %p124, %p125
    %p127 = scmp.ne.s32.totalorder %s116, %s117
    %p128 = scmp.eq.s32.totalorder %s14, 0
    %p129 = por %p127, %p128
    %p130 = scmp.ne.s32.totalorder %s116, %s117
    %p131 = scmp.eq.s32.totalorder %s15, 3
    %p132 = por %p130, %p131
    %p134 = scmp.ne.s32.totalorder %s117, %s133
    %p135 = scmp.eq.s32.totalorder %s15, 0
    %p136 = por %p134, %p135
    %p137 = scmp.le.s32.totalorder 1, %s9
    %p138 = scmp.lt.s32.totalorder %s9, 5
    %p139 = pnand %p137, %p138
    %p140 = pneg %p139
    // Predicated region
    $region9: #{hourglass_forward.15} parent=5 // pred_check
      _
    $region10: #{hourglass_forward.15} parent=5 // pred_check_branch
      %142 = sbr.rel (%p139) target = $region12
    $region11: #{hourglass_forward.15} parent=5 // pred_region
      %s143 = ssub.s32 %s9, 1
    $region12: #{hourglass_forward.15} parent=5 // pred_fallthru
      _
    %p144 = scmp.lt.s32.totalorder %s9, 4
    // Predicated region
    $region13: #{hourglass_forward.15} parent=5 // pred_check
      %p145 = pneg %p144
    $region14: #{hourglass_forward.15} parent=5 // pred_check_branch
      %147 = sbr.rel (%p145) target = $region16
    $region15: #{hourglass_forward.15} parent=5 // pred_region
      // Predicated region
      $region17: #{hourglass_forward.15} parent=15 // pred_check
        %p148 = pneg %p43
      $region18: #{hourglass_forward.15} parent=15 // pred_check_branch
        %150 = sbr.rel (%p148) target = $region20
      $region19: #{hourglass_forward.15} parent=15 // pred_region
        %p151 = scmp.lt.s32.totalorder %s16, 1
        %s152 = scalar_select %p151, %s16, 1
        %p153 = scmp.lt.s32.totalorder %s17, 1
        %s154 = scalar_select %p153, %s17, 1
        %s155 = smul.addr %s152, 2
        %s156 = sadd.s32 %s154, %s155
        %s157 = smul.addr %s156, 4
        %s158 = scalar_lea.vmem %s0, %s157
      $region20: #{hourglass_forward.15} parent=15 // pred_fallthru
        _
      // Predicated region
      $region21: #{hourglass_forward.15} parent=15 // pred_check
        %p159 = pneg %p69
      $region22: #{hourglass_forward.15} parent=15 // pred_check_branch
        %161 = sbr.rel (%p159) target = $region24
      $region23: #{hourglass_forward.15} parent=15 // pred_region
        %p162 = scmp.lt.s32.totalorder %s17, 1
        %s163 = scalar_select %p162, %s17, 1
        %s164 = smul.addr %s163, 8
        %s165 = scalar_lea.vmem %s1, %s164
      $region24: #{hourglass_forward.15} parent=15 // pred_fallthru
        _
      // Predicated region
      $region25: #{hourglass_forward.15} parent=15 // pred_check
        %p166 = pneg %p95
      $region26: #{hourglass_forward.15} parent=15 // pred_check_branch
        %168 = sbr.rel (%p166) target = $region28
      $region27: #{hourglass_forward.15} parent=15 // pred_region
        %p169 = scmp.lt.s32.totalorder %s17, 1
        %s170 = scalar_select %p169, %s17, 1
        %s171 = smul.addr %s170, 8
        %s172 = scalar_lea.vmem %s2, %s171
      $region28: #{hourglass_forward.15} parent=15 // pred_fallthru
        _
    $region16: #{hourglass_forward.15} parent=5 // pred_fallthru
      _
    %p173 = scmp.le.s32.totalorder 1, %s9
    %p174 = scmp.lt.s32.totalorder %s9, 5
    %p175 = pnand %p173, %p174
    %p176 = pneg %p175
    // Predicated region
    $region29: #{hourglass_forward.15} parent=5 // pred_check
      _
    $region30: #{hourglass_forward.15} parent=5 // pred_check_branch
      %178 = sbr.rel (%p175) target = $region32
    $region31: #{hourglass_forward.15} parent=5 // pred_region
      %s179 = ssub.s32 %s9, 1
      %p180 = scmp.lt.s32.totalorder %s18, 1
      %s181 = scalar_select %p180, %s18, 1
      %p182 = scmp.lt.s32.totalorder %s19, 1
      %s183 = scalar_select %p182, %s19, 1
      %s184 = smul.addr %s181, 2
      %s185 = sadd.s32 %s183, %s184
      %s186 = smul.addr %s185, 4
      %s187 = scalar_lea.vmem %s0, %s186
      %p188 = pneg %p49
      %p189 = pneg %p46
      %p190 = scmp.lt.s32.totalorder %s19, 1
      %s191 = scalar_select %p190, %s19, 1
      %s192 = smul.addr %s191, 8
      %s193 = scalar_lea.vmem %s1, %s192
      %p194 = pneg %p75
      %p195 = pneg %p72
      %p196 = scmp.lt.s32.totalorder %s19, 1
      %s197 = scalar_select %p196, %s19, 1
      %s198 = smul.addr %s197, 8
      %s199 = scalar_lea.vmem %s2, %s198
      %p200 = pneg %p101
      %p201 = pneg %p98
      %p202 = pneg %p129
      %p203 = pneg %p126
      %p204 = scmp.lt.s32.totalorder %s18, 1
      %s205 = scalar_select %p204, %s18, 1
      %p206 = scmp.lt.s32.totalorder %s19, 1
      %s207 = scalar_select %p206, %s19, 1
      %s208 = smul.addr %s205, 2
      %s209 = sadd.s32 %s207, %s208
      %s210 = smul.addr %s209, 8
      %s211 = scalar_lea.vmem %s3, %s210
      %p212 = scmp.lt.s32.totalorder %s18, 1
      %s213 = scalar_select %p212, %s18, 1
      %p214 = scmp.lt.s32.totalorder %s19, 1
      %s215 = scalar_select %p214, %s19, 1
      %s216 = smul.addr %s213, 2
      %s217 = sadd.s32 %s215, %s216
      %s218 = smul.addr %s217, 4
      %s219 = scalar_lea.vmem %s0, %s218
      %p220 = scmp.lt.s32.totalorder %s19, 1
      %s221 = scalar_select %p220, %s19, 1
      %s222 = smul.addr %s221, 8
      %s223 = scalar_lea.vmem %s1, %s222
      %p224 = scmp.lt.s32.totalorder %s19, 1
      %s225 = scalar_select %p224, %s19, 1
      %s226 = smul.addr %s225, 8
      %s227 = scalar_lea.vmem %s2, %s226
      %p228 = scmp.lt.s32.totalorder %s18, 1
      %s229 = scalar_select %p228, %s18, 1
      %p230 = scmp.lt.s32.totalorder %s19, 1
      %s231 = scalar_select %p230, %s19, 1
      %s232 = smul.addr %s229, 2
      %s233 = sadd.s32 %s231, %s232
      %s234 = smul.addr %s233, 8
      %s235 = scalar_lea.vmem %s3, %s234
      %v236 = vld [vmem:[%s219] sm:$0xf]
      %v237 = vunpack.c.l.bf16 %v236
      %238 = vadd.xlane.f32.xlu0 %v237
      %v239 = vpop.xlane.xlu0 %238
      %v240 = vrot.slane %v239, 4
      %v241 = vadd.f32 %v239, %v240
      %v242 = vrot.slane %v241, 2
      %v243 = vadd.f32 %v241, %v242
      %v244 = vrot.slane %v243, 1
      %v245 = vadd.f32 %v243, %v244
      %s246 = vtos %v245
      %v247 = vstv %s246
      %v248 = vmul.f32 %v237, %v237
      %249 = vadd.xlane.f32.xlu0 %v248
      %v250 = vpop.xlane.xlu0 %249
      %v251 = vrot.slane %v250, 4
      %v252 = vadd.f32 %v250, %v251
      %v253 = vrot.slane %v252, 2
      %v254 = vadd.f32 %v252, %v253
      %v255 = vrot.slane %v254, 1
      %v256 = vadd.f32 %v254, %v255
      %s257 = vtos %v256
      %v258 = vstv %s257
      %v259 = vrcp.pop 1024.0
      %v260 = vmul.f32 %v247, %v259
      %v261 = vmul.f32 %v258, %v259
      %v262 = vmul.f32 %v260, %v260
      %v263 = vsub.f32 %v261, %v262
      %v264 = vmax.f32 %v263, 0.0
      %v265 = vadd.f32 %v264, 1e-05
      %v266 = vrsqrt.pop %v265
      %v267 = vsub.f32 %v237, %v260
      %v268 = vmul.f32 %v267, %v266
      %v269 = vld [vmem:[%s223] sm:$0xff]
      %271 = vset.pattern.permute.xlu0 0
      %272 = vperm.xlu0 %271, %v269
      %v273 = vpop.permute.xlu0 %272
      %v275 = vmul.f32 %v268, %v273
      %v276 = vld [vmem:[%s227] sm:$0xff]
      %278 = vset.pattern.permute.xlu0 0
      %279 = vperm.xlu0 %278, %v276
      %v280 = vpop.permute.xlu0 %279
      %v282 = vadd.f32 %v275, %v280
      %v283 = vmax.f32 %v282, 0.0
      %284 = vst [vmem:[%s235] sm:$0xff] %v283
      %p285 = scmp.lt.s32.totalorder %s18, 1
      %s286 = scalar_select %p285, %s18, 1
      %p287 = scmp.lt.s32.totalorder %s19, 1
      %s288 = scalar_select %p287, %s19, 1
      %s289 = smul.addr %s286, 2
      %s290 = sadd.s32 %s288, %s289
      %s291 = smul.addr %s290, 8
      %s292 = scalar_lea.vmem %s3, %s291
      // Predicated region
      $region33: #{hourglass_forward.15} parent=31 // pred_check
        %p293 = pneg %p126
      $region34: #{hourglass_forward.15} parent=31 // pred_check_branch
        %295 = sbr.rel (%p293) target = $region36
      $region35: #{hourglass_forward.15} parent=31 // pred_region
        _
      $region36: #{hourglass_forward.15} parent=31 // pred_fallthru
        _
    $region32: #{hourglass_forward.15} parent=5 // pred_fallthru
      _
    %p296 = scmp.le.s32.totalorder 2, %s9
    // Predicated region
    $region37: #{hourglass_forward.15} parent=5 // pred_check
      %p297 = pneg %p296
    $region38: #{hourglass_forward.15} parent=5 // pred_check_branch
      %299 = sbr.rel (%p297) target = $region40
    $region39: #{hourglass_forward.15} parent=5 // pred_region
      %s300 = ssub.s32 %s9, 2
      // Predicated region
      $region41: #{hourglass_forward.15} parent=39 // pred_check
        %p301 = pneg %p132
      $region42: #{hourglass_forward.15} parent=39 // pred_check_branch
        %303 = sbr.rel (%p301) target = $region44
      $region43: #{hourglass_forward.15} parent=39 // pred_region
        %p304 = scmp.lt.s32.totalorder %s20, 1
        %s305 = scalar_select %p304, %s20, 1
        %p306 = scmp.lt.s32.totalorder %s21, 1
        %s307 = scalar_select %p306, %s21, 1
        %s308 = smul.addr %s305, 2
        %s309 = sadd.s32 %s307, %s308
        %s310 = smul.addr %s309, 8
        %s311 = scalar_lea.vmem %s3, %s310
      $region44: #{hourglass_forward.15} parent=39 // pred_fallthru
        _
    $region40: #{hourglass_forward.15} parent=5 // pred_fallthru
      _
  $region6: #{hourglass_forward.15} parent=0 // loop_footer
    %s13 = sadd.s32 1, %s9
  $region7: #{hourglass_forward.15} parent=0 // loop_footer_branch
    %8 = sbr.rel target = $region3
  $region8: #{hourglass_forward.15} parent=0 // loop_exit
    _

// kernel: hourglass_forward.16
$region0: #{hourglass_forward.16}
  #allocation0 [shape = 'u32[]', space=smem, size = 0x4, offset = 0x4, fixed_abs, tag = 'smem constant byte address 0x4 - core index']
  #allocation1 [shape = 'u32[144,128]{1,0:T(1,128)}', space=vmem, size = 0x12000, scoped, tag = 'internal scratch']
  #allocation2 [shape = 'f32[8,128]{1,0:T(8,128)}', space=vmem, size = 0x1000, scoped, tag = 'scratch operand']
  %s0 = inlined_call_operand.vmem [shape: bf16[2,6,8,256], index: 0, kind: input, shape index: {}]
  %s1 = inlined_call_operand.vmem [shape: bf16[3,9,8,8], index: 1, kind: input, shape index: {}]
  %s2 = inlined_call_operand.vmem [shape: bf16[2,8,256], index: 2, kind: output, shape index: {}]
  %s3 = sld [smem:[#allocation0]]
  $region49: #{hourglass_forward.16} parent=0
    _
  %s5 = ssub.s32 1, %s3
  %s6 = scalar_select 0, %s5, %s3
  loop: start=0, step=1, limit=14
  $region2: #{hourglass_forward.16} parent=0 // loop_pre_header
    _
  $region3: #{hourglass_forward.16} parent=0 // loop_header
    %s8 = sphi 0, %s12
    %p9 = scmp.ge.s32.totalorder %s8, 14
    %s15 = sphi 0, %s34
    %s16 = sphi 0, %s30
    %s17 = sphi 0, %s26
    %s18 = sphi 0, %s15
    %s19 = sphi 0, %s16
    %s20 = sphi 0, %s17
    %s21 = sphi 0, %s18
    %s22 = sphi 0, %s19
    %s23 = sphi 0, %s20
    %s43 = sphi 0, %s45
    %s46 = sphi 0, %s43
    %s47 = sphi 0, %s46
    %s63 = sphi 0, %s47
    %s69 = sphi 0, %s71
    %s72 = sphi 0, %s69
    %s73 = sphi 0, %s72
    %s89 = sphi 0, %s73
    %s97 = sphi 0, %s99
    %s100 = sphi 0, %s97
    %s101 = sphi 0, %s100
    %s117 = sphi 0, %s101
  $region4: #{hourglass_forward.16} parent=0 // loop_header_branch
    %11 = sbr.rel (%p9) target = $region8
  $region5: #{hourglass_forward.16} parent=0 // loop_body
    %s13 = ssub.s32 %s8, 1
    %s14 = ssub.s32 %s8, 2
    %s24 = sadd.s32 1, %s17
    %p25 = scmp.ge.s32.totalorder %s24, 3
    %s26 = scalar_select %p25, 0, %s24
    %s27 = sadd.s32 1, %s16
    %s28 = scalar_select %p25, %s27, %s16
    %p29 = scmp.ge.s32.totalorder %s28, 2
    %s30 = scalar_select %p29, 0, %s28
    %s31 = sadd.s32 1, %s15
    %s32 = scalar_select %p29, %s31, %s15
    %p33 = scmp.ge.s32.totalorder %s32, 2
    %s34 = scalar_select %p33, 0, %s32
    %s35 = smul.u32 %s16, 2
    %s36 = sadd.s32 %s35, %s17
    %s37 = smul.u32 %s30, 2
    %s38 = sadd.s32 %s37, %s26
    %s39 = ssub.s32 %s15, %s34
    %s40 = ssub.s32 %s36, %s38
    %s41 = sor.u32 %s39, %s40
    %p42 = scmp.eq.s32.totalorder %s41, 0
    %s44 = sadd.s32 %s43, 1
    %s45 = scalar_select %p42, %s43, %s44
    %p48 = pneg %p42
    %p49 = scmp.eq.s32.totalorder %s8, 11
    %p50 = por %p48, %p49
    %p51 = scmp.ne.s32.totalorder %s43, %s46
    %p52 = scmp.eq.s32.totalorder %s8, 0
    %p53 = por %p51, %p52
    %p54 = scmp.ne.s32.totalorder %s43, %s46
    %p55 = scmp.eq.s32.totalorder %s13, 11
    %p56 = por %p54, %p55
    %p57 = scmp.ne.s32.totalorder %s46, %s47
    %p58 = scmp.eq.s32.totalorder %s13, 0
    %p59 = por %p57, %p58
    %p60 = scmp.ne.s32.totalorder %s46, %s47
    %p61 = scmp.eq.s32.totalorder %s14, 11
    %p62 = por %p60, %p61
    %p64 = scmp.ne.s32.totalorder %s47, %s63
    %p65 = scmp.eq.s32.totalorder %s14, 0
    %p66 = por %p64, %p65
    %s67 = ssub.s32 %s17, %s26
    %p68 = scmp.eq.s32.totalorder %s67, 0
    %s70 = sadd.s32 %s69, 1
    %s71 = scalar_select %p68, %s69, %s70
    %p74 = pneg %p68
    %p75 = scmp.eq.s32.totalorder %s8, 11
    %p76 = por %p74, %p75
    %p77 = scmp.ne.s32.totalorder %s69, %s72
    %p78 = scmp.eq.s32.totalorder %s8, 0
    %p79 = por %p77, %p78
    %p80 = scmp.ne.s32.totalorder %s69, %s72
    %p81 = scmp.eq.s32.totalorder %s13, 11
    %p82 = por %p80, %p81
    %p83 = scmp.ne.s32.totalorder %s72, %s73
    %p84 = scmp.eq.s32.totalorder %s13, 0
    %p85 = por %p83, %p84
    %p86 = scmp.ne.s32.totalorder %s72, %s73
    %p87 = scmp.eq.s32.totalorder %s14, 11
    %p88 = por %p86, %p87
    %p90 = scmp.ne.s32.totalorder %s73, %s89
    %p91 = scmp.eq.s32.totalorder %s14, 0
    %p92 = por %p90, %p91
    %s93 = ssub.s32 %s15, %s34
    %s94 = ssub.s32 %s16, %s30
    %s95 = sor.u32 %s93, %s94
    %p96 = scmp.eq.s32.totalorder %s95, 0
    %s98 = sadd.s32 %s97, 1
    %s99 = scalar_select %p96, %s97, %s98
    %p102 = pneg %p96
    %p103 = scmp.eq.s32.totalorder %s8, 11
    %p104 = por %p102, %p103
    %p105 = scmp.ne.s32.totalorder %s97, %s100
    %p106 = scmp.eq.s32.totalorder %s8, 0
    %p107 = por %p105, %p106
    %p108 = scmp.ne.s32.totalorder %s97, %s100
    %p109 = scmp.eq.s32.totalorder %s13, 11
    %p110 = por %p108, %p109
    %p111 = scmp.ne.s32.totalorder %s100, %s101
    %p112 = scmp.eq.s32.totalorder %s13, 0
    %p113 = por %p111, %p112
    %p114 = scmp.ne.s32.totalorder %s100, %s101
    %p115 = scmp.eq.s32.totalorder %s14, 11
    %p116 = por %p114, %p115
    %p118 = scmp.ne.s32.totalorder %s101, %s117
    %p119 = scmp.eq.s32.totalorder %s14, 0
    %p120 = por %p118, %p119
    %p121 = scmp.le.s32.totalorder 1, %s8
    %p122 = scmp.lt.s32.totalorder %s8, 13
    %p123 = pnand %p121, %p122
    %p124 = pneg %p123
    // Predicated region
    $region9: #{hourglass_forward.16} parent=5 // pred_check
      _
    $region10: #{hourglass_forward.16} parent=5 // pred_check_branch
      %126 = sbr.rel (%p123) target = $region12
    $region11: #{hourglass_forward.16} parent=5 // pred_region
      %s127 = ssub.s32 %s8, 1
    $region12: #{hourglass_forward.16} parent=5 // pred_fallthru
      _
    %p128 = scmp.lt.s32.totalorder %s8, 12
    // Predicated region
    $region13: #{hourglass_forward.16} parent=5 // pred_check
      %p129 = pneg %p128
    $region14: #{hourglass_forward.16} parent=5 // pred_check_branch
      %131 = sbr.rel (%p129) target = $region16
    $region15: #{hourglass_forward.16} parent=5 // pred_region
      // Predicated region
      $region17: #{hourglass_forward.16} parent=15 // pred_check
        %p132 = pneg %p53
      $region18: #{hourglass_forward.16} parent=15 // pred_check_branch
        %134 = sbr.rel (%p132) target = $region20
      $region19: #{hourglass_forward.16} parent=15 // pred_region
        %s135 = smul.u32 %s16, 2
        %s136 = sadd.s32 %s135, %s17
        %p137 = scmp.lt.s32.totalorder %s15, 1
        %s138 = scalar_select %p137, %s15, 1
        %p139 = scmp.lt.s32.totalorder %s136, 5
        %s140 = scalar_select %p139, %s136, 5
        %s141 = smul.addr %s140, 2
        %s142 = smul.addr %s138, 12
        %s143 = sadd.s32 %s141, %s142
        %s144 = smul.addr %s143, 4
        %s145 = scalar_lea.vmem %s0, %s144
        %s146 = smul.u32 %s16, 2
        %s147 = sadd.s32 %s146, %s17
      $region20: #{hourglass_forward.16} parent=15 // pred_fallthru
        _
      // Predicated region
      $region21: #{hourglass_forward.16} parent=15 // pred_check
        %p148 = pneg %p79
      $region22: #{hourglass_forward.16} parent=15 // pred_check_branch
        %150 = sbr.rel (%p148) target = $region24
      $region23: #{hourglass_forward.16} parent=15 // pred_region
        %p151 = scmp.lt.s32.totalorder %s17, 2
        %s152 = scalar_select %p151, %s17, 2
        %s153 = smul.addr %s152, 9
        %s154 = smul.addr %s153, 4
        %s155 = scalar_lea.vmem %s1, %s154
      $region24: #{hourglass_forward.16} parent=15 // pred_fallthru
        _
    $region16: #{hourglass_forward.16} parent=5 // pred_fallthru
      _
    %p156 = scmp.le.s32.totalorder 1, %s8
    %p157 = scmp.lt.s32.totalorder %s8, 13
    %p158 = pnand %p156, %p157
    %p159 = pneg %p158
    // Predicated region
    $region25: #{hourglass_forward.16} parent=5 // pred_check
      _
    $region26: #{hourglass_forward.16} parent=5 // pred_check_branch
      %161 = sbr.rel (%p158) target = $region28
    $region27: #{hourglass_forward.16} parent=5 // pred_region
      %s162 = ssub.s32 %s8, 1
      %s163 = smul.u32 %s19, 2
      %s164 = sadd.s32 %s163, %s20
      %p165 = scmp.lt.s32.totalorder %s18, 1
      %s166 = scalar_select %p165, %s18, 1
      %p167 = scmp.lt.s32.totalorder %s164, 5
      %s168 = scalar_select %p167, %s164, 5
      %s169 = smul.addr %s168, 2
      %s170 = smul.addr %s166, 12
      %s171 = sadd.s32 %s169, %s170
      %s172 = smul.addr %s171, 4
      %s173 = scalar_lea.vmem %s0, %s172
      %p174 = pneg %p59
      %p175 = pneg %p56
      %p176 = scmp.lt.s32.totalorder %s20, 2
      %s177 = scalar_select %p176, %s20, 2
      %s178 = smul.addr %s177, 9
      %s179 = smul.addr %s178, 4
      %s180 = scalar_lea.vmem %s1, %s179
      %p181 = pneg %p85
      %p182 = pneg %p82
      %p183 = pneg %p113
      %p184 = pneg %p110
      %p185 = scmp.lt.s32.totalorder %s18, 1
      %s186 = scalar_select %p185, %s18, 1
      %p187 = scmp.lt.s32.totalorder %s19, 1
      %s188 = scalar_select %p187, %s19, 1
      %s189 = smul.addr %s186, 2
      %s190 = sadd.s32 %s188, %s189
      %s191 = smul.addr %s190, 4
      %s192 = scalar_lea.vmem %s2, %s191
      %s193 = smul.u32 %s19, 2
      %s194 = sadd.s32 %s193, %s20
      %p195 = scmp.lt.s32.totalorder %s18, 1
      %s196 = scalar_select %p195, %s18, 1
      %p197 = scmp.lt.s32.totalorder %s194, 5
      %s198 = scalar_select %p197, %s194, 5
      %s199 = smul.addr %s198, 2
      %s200 = smul.addr %s196, 12
      %s201 = sadd.s32 %s199, %s200
      %s202 = smul.addr %s201, 4
      %s203 = scalar_lea.vmem %s0, %s202
      %s204 = smul.u32 %s19, 2
      %s205 = sadd.s32 %s204, %s20
      %p206 = scmp.lt.s32.totalorder %s20, 2
      %s207 = scalar_select %p206, %s20, 2
      %s208 = smul.addr %s207, 9
      %s209 = smul.addr %s208, 4
      %s210 = scalar_lea.vmem %s1, %s209
      %p211 = scmp.lt.s32.totalorder %s18, 1
      %s212 = scalar_select %p211, %s18, 1
      %p213 = scmp.lt.s32.totalorder %s19, 1
      %s214 = scalar_select %p213, %s19, 1
      %s215 = smul.addr %s212, 2
      %s216 = sadd.s32 %s214, %s215
      %s217 = smul.addr %s216, 4
      %s218 = scalar_lea.vmem %s2, %s217
      %p220 = scmp.eq.s32.totalorder %s20, 0
      // Predicated region
      $region29: #{hourglass_forward.16} parent=27 // pred_check
        %p221 = pneg %p220
      $region30: #{hourglass_forward.16} parent=27 // pred_check_branch
        %223 = sbr.rel (%p221) target = $region32
      $region31: #{hourglass_forward.16} parent=27 // pred_region
        %224 = vst [vmem:[#allocation2] sm:$0xff] 0.0
      $region32: #{hourglass_forward.16} parent=27 // pred_fallthru
        _
      %v225 = vld [vmem:[%s203] sm:$0xff]
      %v226 = vld [vmem:[#allocation2] sm:$0xff]
      %v227 = vld [vmem:[%s210] sm:$0xf]
      %vm228 = vcmask 64512
      %v230 = vsel %vm228, %v227, 0
      %vm232 = vcmask 1043456
      %v234 = vsel %vm232, %v225, 0
      %236 = vmatprep.subr.bf16.mxu0 0
      %237 = vmatpush1.bf16.msra.mxu0 %v234
      %238 = vmatprep.subr.bf16.mxu0 0
      %239 = vmatpush1.bf16.msra.mxu0 0
      %240 = vmatprep.subr.bf16.mxu0 0
      %241 = vmatpush1.bf16.msra.mxu0 0
      %242 = vmatprep.subr.bf16.mxu0 0
      %243 = vmatpush1.bf16.msra.mxu0 0
      %244 = vmatprep.subr.bf16.mxu0 0
      %245 = vmatpush1.bf16.msra.mxu0 0
      %246 = vmatprep.subr.bf16.mxu0 0
      %247 = vmatpush1.bf16.msra.mxu0 0
      %248 = vmatprep.subr.bf16.mxu0 0
      %249 = vmatpush1.bf16.msra.mxu0 0
      %250 = vmatprep.subr.bf16.mxu0 0
      %251 = vmatpush1.bf16.msra.mxu0 0
      %252 = vmatprep.subr.bf16.mxu0 0
      %253 = vmatpush1.bf16.msra.mxu0 0
      %254 = vmatprep.subr.bf16.mxu0 0
      %255 = vmatpush1.bf16.msra.mxu0 0
      %256 = vmatprep.subr.bf16.mxu0 0
      %257 = vmatpush1.bf16.msra.mxu0 0
      %258 = vmatprep.subr.bf16.mxu0 0
      %259 = vmatpush1.bf16.msra.mxu0 0
      %260 = vmatprep.subr.bf16.mxu0 0
      %261 = vmatpush1.bf16.msra.mxu0 0
      %262 = vmatprep.subr.bf16.mxu0 0
      %263 = vmatpush1.bf16.msra.mxu0 0
      %264 = vmatprep.subr.bf16.mxu0 0
      %265 = vmatpush1.bf16.msra.mxu0 0
      %266 = vmatprep.subr.bf16.mxu0 0
      %267 = vmatpush1.bf16.msra.mxu0 0
      %268 = vmatprep.mubr.bf16.mxu0 0
      %269 = vmatmul.mubr.bf16.gmra.mrb[0].mxu0 %v230
      %v270 = vpop.f32.mrb[0].mxu0
      %v271 = vadd.f32 0.0, %v270
      %v272 = vpop.f32.mrb[0].mxu0
      %v273 = vpop.f32.mrb[0].mxu0
      %v274 = vpop.f32.mrb[0].mxu0
      %275 = vdwg.mxu0
      %v276 = vadd.f32 %v226, %v271
      %s277 = scalar_lea.vmem %s210, 4
      %v278 = vld [vmem:[%s277] sm:$0xf]
      %v280 = vunpack.c.l.b16 %v225
      %v281 = vunpack.c.h.b16 %v225
      %v282 = vpack.c.b16 %v280, %v280
      %v283 = vpack.c.b16 %v281, %v281
      %284 = vrot.lane.b32.xlu0 %v282, 127
      %v285 = vpop.permute.xlu0 %284
      %286 = vrot.lane.b32.xlu0 %v283, 127
      %v287 = vpop.permute.xlu0 %286
      %vm288 = vcmask 1039360
      %v289 = vsel %vm288, %v285, %v287
      %v291 = vsel %vm228, %v278, 0
      %v294 = vsel %vm232, %v289, 0
      %296 = vmatprep.subr.bf16.mxu0 0
      %297 = vmatpush1.bf16.msra.mxu0 %v294
      %298 = vmatprep.subr.bf16.mxu0 0
      %299 = vmatpush1.bf16.msra.mxu0 0
      %300 = vmatprep.subr.bf16.mxu0 0
      %301 = vmatpush1.bf16.msra.mxu0 0
      %302 = vmatprep.subr.bf16.mxu0 0
      %303 = vmatpush1.bf16.msra.mxu0 0
      %304 = vmatprep.subr.bf16.mxu0 0
      %305 = vmatpush1.bf16.msra.mxu0 0
      %306 = vmatprep.subr.bf16.mxu0 0
      %307 = vmatpush1.bf16.msra.mxu0 0
      %308 = vmatprep.subr.bf16.mxu0 0
      %309 = vmatpush1.bf16.msra.mxu0 0
      %310 = vmatprep.subr.bf16.mxu0 0
      %311 = vmatpush1.bf16.msra.mxu0 0
      %312 = vmatprep.subr.bf16.mxu0 0
      %313 = vmatpush1.bf16.msra.mxu0 0
      %314 = vmatprep.subr.bf16.mxu0 0
      %315 = vmatpush1.bf16.msra.mxu0 0
      %316 = vmatprep.subr.bf16.mxu0 0
      %317 = vmatpush1.bf16.msra.mxu0 0
      %318 = vmatprep.subr.bf16.mxu0 0
      %319 = vmatpush1.bf16.msra.mxu0 0
      %320 = vmatprep.subr.bf16.mxu0 0
      %321 = vmatpush1.bf16.msra.mxu0 0
      %322 = vmatprep.subr.bf16.mxu0 0
      %323 = vmatpush1.bf16.msra.mxu0 0
      %324 = vmatprep.subr.bf16.mxu0 0
      %325 = vmatpush1.bf16.msra.mxu0 0
      %326 = vmatprep.subr.bf16.mxu0 0
      %327 = vmatpush1.bf16.msra.mxu0 0
      %328 = vmatprep.mubr.bf16.mxu0 0
      %329 = vmatmul.mubr.bf16.gmra.mrb[0].mxu0 %v291
      %v330 = vpop.f32.mrb[0].mxu0
      %v331 = vadd.f32 0.0, %v330
      %v332 = vpop.f32.mrb[0].mxu0
      %v333 = vpop.f32.mrb[0].mxu0
      %v334 = vpop.f32.mrb[0].mxu0
      %335 = vdwg.mxu0
      %v336 = vadd.f32 %v276, %v331
      %s337 = scalar_lea.vmem %s210, 8
      %v338 = vld [vmem:[%s337] sm:$0xf]
      %339 = vrot.lane.b32.xlu0 %v282, 126
      %v340 = vpop.permute.xlu0 %339
      %341 = vrot.lane.b32.xlu0 %v283, 126
      %v342 = vpop.permute.xlu0 %341
      %vm343 = vcmask 1031168
      %v344 = vsel %vm343, %v340, %v342
      %v346 = vsel %vm228, %v338, 0
      %v349 = vsel %vm232, %v344, 0
      %351 = vmatprep.subr.bf16.mxu0 0
      %352 = vmatpush1.bf16.msra.mxu0 %v349
      %353 = vmatprep.subr.bf16.mxu0 0
      %354 = vmatpush1.bf16.msra.mxu0 0
      %355 = vmatprep.subr.bf16.mxu0 0
      %356 = vmatpush1.bf16.msra.mxu0 0
      %357 = vmatprep.subr.bf16.mxu0 0
      %358 = vmatpush1.bf16.msra.mxu0 0
      %359 = vmatprep.subr.bf16.mxu0 0
      %360 = vmatpush1.bf16.msra.mxu0 0
      %361 = vmatprep.subr.bf16.mxu0 0
      %362 = vmatpush1.bf16.msra.mxu0 0
      %363 = vmatprep.subr.bf16.mxu0 0
      %364 = vmatpush1.bf16.msra.mxu0 0
      %365 = vmatprep.subr.bf16.mxu0 0
      %366 = vmatpush1.bf16.msra.mxu0 0
      %367 = vmatprep.subr.bf16.mxu0 0
      %368 = vmatpush1.bf16.msra.mxu0 0
      %369 = vmatprep.subr.bf16.mxu0 0
      %370 = vmatpush1.bf16.msra.mxu0 0
      %371 = vmatprep.subr.bf16.mxu0 0
      %372 = vmatpush1.bf16.msra.mxu0 0
      %373 = vmatprep.subr.bf16.mxu0 0
      %374 = vmatpush1.bf16.msra.mxu0 0
      %375 = vmatprep.subr.bf16.mxu0 0
      %376 = vmatpush1.bf16.msra.mxu0 0
      %377 = vmatprep.subr.bf16.mxu0 0
      %378 = vmatpush1.bf16.msra.mxu0 0
      %379 = vmatprep.subr.bf16.mxu0 0
      %380 = vmatpush1.bf16.msra.mxu0 0
      %381 = vmatprep.subr.bf16.mxu0 0
      %382 = vmatpush1.bf16.msra.mxu0 0
      %383 = vmatprep.mubr.bf16.mxu0 0
      %384 = vmatmul.mubr.bf16.gmra.mrb[0].mxu0 %v346
      %v385 = vpop.f32.mrb[0].mxu0
      %v386 = vadd.f32 0.0, %v385
      %v387 = vpop.f32.mrb[0].mxu0
      %v388 = vpop.f32.mrb[0].mxu0
      %v389 = vpop.f32.mrb[0].mxu0
      %390 = vdwg.mxu0
      %v391 = vadd.f32 %v336, %v386
      %s392 = scalar_lea.vmem %s210, 12
      %v393 = vld [vmem:[%s392] sm:$0xf]
      %394 = vrot.lane.b32.xlu0 %v282, 118
      %v395 = vpop.permute.xlu0 %394
      %396 = vrot.lane.b32.xlu0 %v283, 118
      %v397 = vpop.permute.xlu0 %396
      %vm398 = vcmask 965632
      %v399 = vsel %vm398, %v395, %v397
      %v401 = vsel %vm228, %v393, 0
      %v404 = vsel %vm232, %v399, 0
      %406 = vmatprep.subr.bf16.mxu0 0
      %407 = vmatpush1.bf16.msra.mxu0 %v404
      %408 = vmatprep.subr.bf16.mxu0 0
      %409 = vmatpush1.bf16.msra.mxu0 0
      %410 = vmatprep.subr.bf16.mxu0 0
      %411 = vmatpush1.bf16.msra.mxu0 0
      %412 = vmatprep.subr.bf16.mxu0 0
      %413 = vmatpush1.bf16.msra.mxu0 0
      %414 = vmatprep.subr.bf16.mxu0 0
      %415 = vmatpush1.bf16.msra.mxu0 0
      %416 = vmatprep.subr.bf16.mxu0 0
      %417 = vmatpush1.bf16.msra.mxu0 0
      %418 = vmatprep.subr.bf16.mxu0 0
      %419 = vmatpush1.bf16.msra.mxu0 0
      %420 = vmatprep.subr.bf16.mxu0 0
      %421 = vmatpush1.bf16.msra.mxu0 0
      %422 = vmatprep.subr.bf16.mxu0 0
      %423 = vmatpush1.bf16.msra.mxu0 0
      %424 = vmatprep.subr.bf16.mxu0 0
      %425 = vmatpush1.bf16.msra.mxu0 0
      %426 = vmatprep.subr.bf16.mxu0 0
      %427 = vmatpush1.bf16.msra.mxu0 0
      %428 = vmatprep.subr.bf16.mxu0 0
      %429 = vmatpush1.bf16.msra.mxu0 0
      %430 = vmatprep.subr.bf16.mxu0 0
      %431 = vmatpush1.bf16.msra.mxu0 0
      %432 = vmatprep.subr.bf16.mxu0 0
      %433 = vmatpush1.bf16.msra.mxu0 0
      %434 = vmatprep.subr.bf16.mxu0 0
      %435 = vmatpush1.bf16.msra.mxu0 0
      %436 = vmatprep.subr.bf16.mxu0 0
      %437 = vmatpush1.bf16.msra.mxu0 0
      %438 = vmatprep.mubr.bf16.mxu0 0
      %439 = vmatmul.mubr.bf16.gmra.mrb[0].mxu0 %v401
      %v440 = vpop.f32.mrb[0].mxu0
      %v441 = vadd.f32 0.0, %v440
      %v442 = vpop.f32.mrb[0].mxu0
      %v443 = vpop.f32.mrb[0].mxu0
      %v444 = vpop.f32.mrb[0].mxu0
      %445 = vdwg.mxu0
      %v446 = vadd.f32 %v391, %v441
      %s447 = scalar_lea.vmem %s210, 16
      %v448 = vld [vmem:[%s447] sm:$0xf]
      %449 = vrot.lane.b32.xlu0 %v282, 117
      %v450 = vpop.permute.xlu0 %449
      %451 = vrot.lane.b32.xlu0 %v283, 117
      %v452 = vpop.permute.xlu0 %451
      %vm453 = vcmask 957440
      %v454 = vsel %vm453, %v450, %v452
      %v456 = vsel %vm228, %v448, 0
      %v459 = vsel %vm232, %v454, 0
      %461 = vmatprep.subr.bf16.mxu0 0
      %462 = vmatpush1.bf16.msra.mxu0 %v459
      %463 = vmatprep.subr.bf16.mxu0 0
      %464 = vmatpush1.bf16.msra.mxu0 0
      %465 = vmatprep.subr.bf16.mxu0 0
      %466 = vmatpush1.bf16.msra.mxu0 0
      %467 = vmatprep.subr.bf16.mxu0 0
      %468 = vmatpush1.bf16.msra.mxu0 0
      %469 = vmatprep.subr.bf16.mxu0 0
      %470 = vmatpush1.bf16.msra.mxu0 0
      %471 = vmatprep.subr.bf16.mxu0 0
      %472 = vmatpush1.bf16.msra.mxu0 0
      %473 = vmatprep.subr.bf16.mxu0 0
      %474 = vmatpush1.bf16.msra.mxu0 0
      %475 = vmatprep.subr.bf16.mxu0 0
      %476 = vmatpush1.bf16.msra.mxu0 0
      %477 = vmatprep.subr.bf16.mxu0 0
      %478 = vmatpush1.bf16.msra.mxu0 0
      %479 = vmatprep.subr.bf16.mxu0 0
      %480 = vmatpush1.bf16.msra.mxu0 0
      %481 = vmatprep.subr.bf16.mxu0 0
      %482 = vmatpush1.bf16.msra.mxu0 0
      %483 = vmatprep.subr.bf16.mxu0 0
      %484 = vmatpush1.bf16.msra.mxu0 0
      %485 = vmatprep.subr.bf16.mxu0 0
      %486 = vmatpush1.bf16.msra.mxu0 0
      %487 = vmatprep.subr.bf16.mxu0 0
      %488 = vmatpush1.bf16.msra.mxu0 0
      %489 = vmatprep.subr.bf16.mxu0 0
      %490 = vmatpush1.bf16.msra.mxu0 0
      %491 = vmatprep.subr.bf16.mxu0 0
      %492 = vmatpush1.bf16.msra.mxu0 0
      %493 = vmatprep.mubr.bf16.mxu0 0
      %494 = vmatmul.mubr.bf16.gmra.mrb[0].mxu0 %v456
      %v495 = vpop.f32.mrb[0].mxu0
      %v496 = vadd.f32 0.0, %v495
      %v497 = vpop.f32.mrb[0].mxu0
      %v498 = vpop.f32.mrb[0].mxu0
      %v499 = vpop.f32.mrb[0].mxu0
      %500 = vdwg.mxu0
      %v501 = vadd.f32 %v446, %v496
      %s502 = scalar_lea.vmem %s210, 20
      %v503 = vld [vmem:[%s502] sm:$0xf]
      %504 = vrot.lane.b32.xlu0 %v282, 116
      %v505 = vpop.permute.xlu0 %504
      %506 = vrot.lane.b32.xlu0 %v283, 116
      %v507 = vpop.permute.xlu0 %506
      %vm508 = vcmask 949248
      %v509 = vsel %vm508, %v505, %v507
      %v511 = vsel %vm228, %v503, 0
      %v514 = vsel %vm232, %v509, 0
      %516 = vmatprep.subr.bf16.mxu0 0
      %517 = vmatpush1.bf16.msra.mxu0 %v514
      %518 = vmatprep.subr.bf16.mxu0 0
      %519 = vmatpush1.bf16.msra.mxu0 0
      %520 = vmatprep.subr.bf16.mxu0 0
      %521 = vmatpush1.bf16.msra.mxu0 0
      %522 = vmatprep.subr.bf16.mxu0 0
      %523 = vmatpush1.bf16.msra.mxu0 0
      %524 = vmatprep.subr.bf16.mxu0 0
      %525 = vmatpush1.bf16.msra.mxu0 0
      %526 = vmatprep.subr.bf16.mxu0 0
      %527 = vmatpush1.bf16.msra.mxu0 0
      %528 = vmatprep.subr.bf16.mxu0 0
      %529 = vmatpush1.bf16.msra.mxu0 0
      %530 = vmatprep.subr.bf16.mxu0 0
      %531 = vmatpush1.bf16.msra.mxu0 0
      %532 = vmatprep.subr.bf16.mxu0 0
      %533 = vmatpush1.bf16.msra.mxu0 0
      %534 = vmatprep.subr.bf16.mxu0 0
      %535 = vmatpush1.bf16.msra.mxu0 0
      %536 = vmatprep.subr.bf16.mxu0 0
      %537 = vmatpush1.bf16.msra.mxu0 0
      %538 = vmatprep.subr.bf16.mxu0 0
      %539 = vmatpush1.bf16.msra.mxu0 0
      %540 = vmatprep.subr.bf16.mxu0 0
      %541 = vmatpush1.bf16.msra.mxu0 0
      %542 = vmatprep.subr.bf16.mxu0 0
      %543 = vmatpush1.bf16.msra.mxu0 0
      %544 = vmatprep.subr.bf16.mxu0 0
      %545 = vmatpush1.bf16.msra.mxu0 0
      %546 = vmatprep.subr.bf16.mxu0 0
      %547 = vmatpush1.bf16.msra.mxu0 0
      %548 = vmatprep.mubr.bf16.mxu0 0
      %549 = vmatmul.mubr.bf16.gmra.mrb[0].mxu0 %v511
      %v550 = vpop.f32.mrb[0].mxu0
      %v551 = vadd.f32 0.0, %v550
      %v552 = vpop.f32.mrb[0].mxu0
      %v553 = vpop.f32.mrb[0].mxu0
      %v554 = vpop.f32.mrb[0].mxu0
      %555 = vdwg.mxu0
      %v556 = vadd.f32 %v501, %v551
      %s557 = scalar_lea.vmem %s210, 24
      %v558 = vld [vmem:[%s557] sm:$0xf]
      %559 = vrot.lane.b32.xlu0 %v282, 108
      %v560 = vpop.permute.xlu0 %559
      %561 = vrot.lane.b32.xlu0 %v283, 108
      %v562 = vpop.permute.xlu0 %561
      %vm563 = vcmask 883712
      %v564 = vsel %vm563, %v560, %v562
      %v566 = vsel %vm228, %v558, 0
      %v569 = vsel %vm232, %v564, 0
      %571 = vmatprep.subr.bf16.mxu0 0
      %572 = vmatpush1.bf16.msra.mxu0 %v569
      %573 = vmatprep.subr.bf16.mxu0 0
      %574 = vmatpush1.bf16.msra.mxu0 0
      %575 = vmatprep.subr.bf16.mxu0 0
      %576 = vmatpush1.bf16.msra.mxu0 0
      %577 = vmatprep.subr.bf16.mxu0 0
      %578 = vmatpush1.bf16.msra.mxu0 0
      %579 = vmatprep.subr.bf16.mxu0 0
      %580 = vmatpush1.bf16.msra.mxu0 0
      %581 = vmatprep.subr.bf16.mxu0 0
      %582 = vmatpush1.bf16.msra.mxu0 0
      %583 = vmatprep.subr.bf16.mxu0 0
      %584 = vmatpush1.bf16.msra.mxu0 0
      %585 = vmatprep.subr.bf16.mxu0 0
      %586 = vmatpush1.bf16.msra.mxu0 0
      %587 = vmatprep.subr.bf16.mxu0 0
      %588 = vmatpush1.bf16.msra.mxu0 0
      %589 = vmatprep.subr.bf16.mxu0 0
      %590 = vmatpush1.bf16.msra.mxu0 0
      %591 = vmatprep.subr.bf16.mxu0 0
      %592 = vmatpush1.bf16.msra.mxu0 0
      %593 = vmatprep.subr.bf16.mxu0 0
      %594 = vmatpush1.bf16.msra.mxu0 0
      %595 = vmatprep.subr.bf16.mxu0 0
      %596 = vmatpush1.bf16.msra.mxu0 0
      %597 = vmatprep.subr.bf16.mxu0 0
      %598 = vmatpush1.bf16.msra.mxu0 0
      %599 = vmatprep.subr.bf16.mxu0 0
      %600 = vmatpush1.bf16.msra.mxu0 0
      %601 = vmatprep.subr.bf16.mxu0 0
      %602 = vmatpush1.bf16.msra.mxu0 0
      %603 = vmatprep.mubr.bf16.mxu0 0
      %604 = vmatmul.mubr.bf16.gmra.mrb[0].mxu0 %v566
      %v605 = vpop.f32.mrb[0].mxu0
      %v606 = vadd.f32 0.0, %v605
      %v607 = vpop.f32.mrb[0].mxu0
      %v608 = vpop.f32.mrb[0].mxu0
      %v609 = vpop.f32.mrb[0].mxu0
      %610 = vdwg.mxu0
      %v611 = vadd.f32 %v556, %v606
      %s612 = scalar_lea.vmem %s210, 28
      %v613 = vld [vmem:[%s612] sm:$0xf]
      %614 = vrot.lane.b32.xlu0 %v282, 107
      %v615 = vpop.permute.xlu0 %614
      %616 = vrot.lane.b32.xlu0 %v283, 107
      %v617 = vpop.permute.xlu0 %616
      %vm618 = vcmask 875520
      %v619 = vsel %vm618, %v615, %v617
      %v621 = vsel %vm228, %v613, 0
      %v624 = vsel %vm232, %v619, 0
      %626 = vmatprep.subr.bf16.mxu0 0
      %627 = vmatpush1.bf16.msra.mxu0 %v624
      %628 = vmatprep.subr.bf16.mxu0 0
      %629 = vmatpush1.bf16.msra.mxu0 0
      %630 = vmatprep.subr.bf16.mxu0 0
      %631 = vmatpush1.bf16.msra.mxu0 0
      %632 = vmatprep.subr.bf16.mxu0 0
      %633 = vmatpush1.bf16.msra.mxu0 0
      %634 = vmatprep.subr.bf16.mxu0 0
      %635 = vmatpush1.bf16.msra.mxu0 0
      %636 = vmatprep.subr.bf16.mxu0 0
      %637 = vmatpush1.bf16.msra.mxu0 0
      %638 = vmatprep.subr.bf16.mxu0 0
      %639 = vmatpush1.bf16.msra.mxu0 0
      %640 = vmatprep.subr.bf16.mxu0 0
      %641 = vmatpush1.bf16.msra.mxu0 0
      %642 = vmatprep.subr.bf16.mxu0 0
      %643 = vmatpush1.bf16.msra.mxu0 0
      %644 = vmatprep.subr.bf16.mxu0 0
      %645 = vmatpush1.bf16.msra.mxu0 0
      %646 = vmatprep.subr.bf16.mxu0 0
      %647 = vmatpush1.bf16.msra.mxu0 0
      %648 = vmatprep.subr.bf16.mxu0 0
      %649 = vmatpush1.bf16.msra.mxu0 0
      %650 = vmatprep.subr.bf16.mxu0 0
      %651 = vmatpush1.bf16.msra.mxu0 0
      %652 = vmatprep.subr.bf16.mxu0 0
      %653 = vmatpush1.bf16.msra.mxu0 0
      %654 = vmatprep.subr.bf16.mxu0 0
      %655 = vmatpush1.bf16.msra.mxu0 0
      %656 = vmatprep.subr.bf16.mxu0 0
      %657 = vmatpush1.bf16.msra.mxu0 0
      %658 = vmatprep.mubr.bf16.mxu0 0
      %659 = vmatmul.mubr.bf16.gmra.mrb[0].mxu0 %v621
      %v660 = vpop.f32.mrb[0].mxu0
      %v661 = vadd.f32 0.0, %v660
      %v662 = vpop.f32.mrb[0].mxu0
      %v663 = vpop.f32.mrb[0].mxu0
      %v664 = vpop.f32.mrb[0].mxu0
      %665 = vdwg.mxu0
      %v666 = vadd.f32 %v611, %v661
      %s667 = scalar_lea.vmem %s210, 32
      %v668 = vld [vmem:[%s667] sm:$0xf]
      %669 = vrot.lane.b32.xlu0 %v282, 106
      %v670 = vpop.permute.xlu0 %669
      %671 = vrot.lane.b32.xlu0 %v283, 106
      %v672 = vpop.permute.xlu0 %671
      %vm673 = vcmask 867328
      %v674 = vsel %vm673, %v670, %v672
      %v676 = vsel %vm228, %v668, 0
      %v679 = vsel %vm232, %v674, 0
      %681 = vmatprep.subr.bf16.mxu0 0
      %682 = vmatpush1.bf16.msra.mxu0 %v679
      %683 = vmatprep.subr.bf16.mxu0 0
      %684 = vmatpush1.bf16.msra.mxu0 0
      %685 = vmatprep.subr.bf16.mxu0 0
      %686 = vmatpush1.bf16.msra.mxu0 0
      %687 = vmatprep.subr.bf16.mxu0 0
      %688 = vmatpush1.bf16.msra.mxu0 0
      %689 = vmatprep.subr.bf16.mxu0 0
      %690 = vmatpush1.bf16.msra.mxu0 0
      %691 = vmatprep.subr.bf16.mxu0 0
      %692 = vmatpush1.bf16.msra.mxu0 0
      %693 = vmatprep.subr.bf16.mxu0 0
      %694 = vmatpush1.bf16.msra.mxu0 0
      %695 = vmatprep.subr.bf16.mxu0 0
      %696 = vmatpush1.bf16.msra.mxu0 0
      %697 = vmatprep.subr.bf16.mxu0 0
      %698 = vmatpush1.bf16.msra.mxu0 0
      %699 = vmatprep.subr.bf16.mxu0 0
      %700 = vmatpush1.bf16.msra.mxu0 0
      %701 = vmatprep.subr.bf16.mxu0 0
      %702 = vmatpush1.bf16.msra.mxu0 0
      %703 = vmatprep.subr.bf16.mxu0 0
      %704 = vmatpush1.bf16.msra.mxu0 0
      %705 = vmatprep.subr.bf16.mxu0 0
      %706 = vmatpush1.bf16.msra.mxu0 0
      %707 = vmatprep.subr.bf16.mxu0 0
      %708 = vmatpush1.bf16.msra.mxu0 0
      %709 = vmatprep.subr.bf16.mxu0 0
      %710 = vmatpush1.bf16.msra.mxu0 0
      %711 = vmatprep.subr.bf16.mxu0 0
      %712 = vmatpush1.bf16.msra.mxu0 0
      %713 = vmatprep.mubr.bf16.mxu0 0
      %714 = vmatmul.mubr.bf16.gmra.mrb[0].mxu0 %v676
      %v715 = vpop.f32.mrb[0].mxu0
      %v716 = vadd.f32 0.0, %v715
      %v717 = vpop.f32.mrb[0].mxu0
      %v718 = vpop.f32.mrb[0].mxu0
      %v719 = vpop.f32.mrb[0].mxu0
      %720 = vdwg.mxu0
      %v721 = vadd.f32 %v666, %v716
      %722 = vst [vmem:[#allocation2] sm:$0xff] %v721
      %p723 = scmp.eq.s32.totalorder %s20, 2
      // Predicated region
      $region33: #{hourglass_forward.16} parent=27 // pred_check
        %p724 = pneg %p723
      $region34: #{hourglass_forward.16} parent=27 // pred_check_branch
        %726 = sbr.rel (%p724) target = $region36
      $region35: #{hourglass_forward.16} parent=27 // pred_region
        %v727 = vld [vmem:[#allocation2] sm:$0xff]
        %v728 = vpack.c.bf16 %v727, %v727
        %729 = vst [vmem:[%s218] sm:$0xf] %v728
      $region36: #{hourglass_forward.16} parent=27 // pred_fallthru
        _
      %p730 = scmp.lt.s32.totalorder %s18, 1
      %s731 = scalar_select %p730, %s18, 1
      %p732 = scmp.lt.s32.totalorder %s19, 1
      %s733 = scalar_select %p732, %s19, 1
      %s734 = smul.addr %s731, 2
      %s735 = sadd.s32 %s733, %s734
      %s736 = smul.addr %s735, 4
      %s737 = scalar_lea.vmem %s2, %s736
      // Predicated region
      $region37: #{hourglass_forward.16} parent=27 // pred_check
        %p738 = pneg %p110
      $region38: #{hourglass_forward.16} parent=27 // pred_check_branch
        %740 = sbr.rel (%p738) target = $region40
      $region39: #{hourglass_forward.16} parent=27 // pred_region
        _
      $region40: #{hourglass_forward.16} parent=27 // pred_fallthru
        _
    $region28: #{hourglass_forward.16} parent=5 // pred_fallthru
      _
    %p741 = scmp.le.s32.totalorder 2, %s8
    // Predicated region
    $region41: #{hourglass_forward.16} parent=5 // pred_check
      %p742 = pneg %p741
    $region42: #{hourglass_forward.16} parent=5 // pred_check_branch
      %744 = sbr.rel (%p742) target = $region44
    $region43: #{hourglass_forward.16} parent=5 // pred_region
      %s745 = ssub.s32 %s8, 2
      // Predicated region
      $region45: #{hourglass_forward.16} parent=43 // pred_check
        %p746 = pneg %p116
      $region46: #{hourglass_forward.16} parent=43 // pred_check_branch
        %748 = sbr.rel (%p746) target = $region48
      $region47: #{hourglass_forward.16} parent=43 // pred_region
        %p749 = scmp.lt.s32.totalorder %s21, 1
        %s750 = scalar_select %p749, %s21, 1
        %p751 = scmp.lt.s32.totalorder %s22, 1
        %s752 = scalar_select %p751, %s22, 1
        %s753 = smul.addr %s750, 2
        %s754 = sadd.s32 %s752, %s753
        %s755 = smul.addr %s754, 4
        %s756 = scalar_lea.vmem %s2, %s755
      $region48: #{hourglass_forward.16} parent=43 // pred_fallthru
        _
    $region44: #{hourglass_forward.16} parent=5 // pred_fallthru
      _
  $region6: #{hourglass_forward.16} parent=0 // loop_footer
    %s12 = sadd.s32 1, %s8
  $region7: #{hourglass_forward.16} parent=0 // loop_footer_branch
    %7 = sbr.rel target = $region3
  $region8: #{hourglass_forward.16} parent=0 // loop_exit
    _

// kernel: hourglass_forward.17
$region0: #{hourglass_forward.17}
  #allocation0 [shape = 'u32[]', space=smem, size = 0x4, offset = 0x4, fixed_abs, tag = 'smem constant byte address 0x4 - core index']
  #allocation1 [shape = 'u32[144,128]{1,0:T(1,128)}', space=vmem, size = 0x12000, scoped, tag = 'internal scratch']
  %s0 = inlined_call_operand.vmem [shape: bf16[2,2,4,32], index: 0, kind: input, shape index: {}]
  %s1 = inlined_call_operand.vmem [shape: f32[2,4,1], index: 1, kind: input, shape index: {}]
  %s2 = inlined_call_operand.vmem [shape: f32[2,4,1], index: 2, kind: input, shape index: {}]
  %s3 = inlined_call_operand.vmem [shape: bf16[2,2,4,32], index: 3, kind: output, shape index: {}]
  %s4 = sld [smem:[#allocation0]]
  $region45: #{hourglass_forward.17} parent=0
    _
  %s6 = ssub.s32 1, %s4
  %s7 = scalar_select 0, %s6, %s4
  loop: start=0, step=1, limit=6
  $region2: #{hourglass_forward.17} parent=0 // loop_pre_header
    _
  $region3: #{hourglass_forward.17} parent=0 // loop_header
    %s9 = sphi 0, %s13
    %p10 = scmp.ge.s32.totalorder %s9, 6
    %s16 = sphi 0, %s28
    %s17 = sphi 0, %s24
    %s18 = sphi 0, %s16
    %s19 = sphi 0, %s17
    %s20 = sphi 0, %s18
    %s21 = sphi 0, %s19
    %s33 = sphi 0, %s35
    %s36 = sphi 0, %s33
    %s37 = sphi 0, %s36
    %s53 = sphi 0, %s37
    %s59 = sphi 0, %s61
    %s62 = sphi 0, %s59
    %s63 = sphi 0, %s62
    %s79 = sphi 0, %s63
    %s85 = sphi 0, %s87
    %s88 = sphi 0, %s85
    %s89 = sphi 0, %s88
    %s105 = sphi 0, %s89
    %s113 = sphi 0, %s115
    %s116 = sphi 0, %s113
    %s117 = sphi 0, %s116
    %s133 = sphi 0, %s117
  $region4: #{hourglass_forward.17} parent=0 // loop_header_branch
    %12 = sbr.rel (%p10) target = $region8
  $region5: #{hourglass_forward.17} parent=0 // loop_body
    %s14 = ssub.s32 %s9, 1
    %s15 = ssub.s32 %s9, 2
    %s22 = sadd.s32 1, %s17
    %p23 = scmp.ge.s32.totalorder %s22, 2
    %s24 = scalar_select %p23, 0, %s22
    %s25 = sadd.s32 1, %s16
    %s26 = scalar_select %p23, %s25, %s16
    %p27 = scmp.ge.s32.totalorder %s26, 2
    %s28 = scalar_select %p27, 0, %s26
    %s29 = ssub.s32 %s16, %s28
    %s30 = ssub.s32 %s17, %s24
    %s31 = sor.u32 %s29, %s30
    %p32 = scmp.eq.s32.totalorder %s31, 0
    %s34 = sadd.s32 %s33, 1
    %s35 = scalar_select %p32, %s33, %s34
    %p38 = pneg %p32
    %p39 = scmp.eq.s32.totalorder %s9, 3
    %p40 = por %p38, %p39
    %p41 = scmp.ne.s32.totalorder %s33, %s36
    %p42 = scmp.eq.s32.totalorder %s9, 0
    %p43 = por %p41, %p42
    %p44 = scmp.ne.s32.totalorder %s33, %s36
    %p45 = scmp.eq.s32.totalorder %s14, 3
    %p46 = por %p44, %p45
    %p47 = scmp.ne.s32.totalorder %s36, %s37
    %p48 = scmp.eq.s32.totalorder %s14, 0
    %p49 = por %p47, %p48
    %p50 = scmp.ne.s32.totalorder %s36, %s37
    %p51 = scmp.eq.s32.totalorder %s15, 3
    %p52 = por %p50, %p51
    %p54 = scmp.ne.s32.totalorder %s37, %s53
    %p55 = scmp.eq.s32.totalorder %s15, 0
    %p56 = por %p54, %p55
    %s57 = ssub.s32 %s17, %s24
    %p58 = scmp.eq.s32.totalorder %s57, 0
    %s60 = sadd.s32 %s59, 1
    %s61 = scalar_select %p58, %s59, %s60
    %p64 = pneg %p58
    %p65 = scmp.eq.s32.totalorder %s9, 3
    %p66 = por %p64, %p65
    %p67 = scmp.ne.s32.totalorder %s59, %s62
    %p68 = scmp.eq.s32.totalorder %s9, 0
    %p69 = por %p67, %p68
    %p70 = scmp.ne.s32.totalorder %s59, %s62
    %p71 = scmp.eq.s32.totalorder %s14, 3
    %p72 = por %p70, %p71
    %p73 = scmp.ne.s32.totalorder %s62, %s63
    %p74 = scmp.eq.s32.totalorder %s14, 0
    %p75 = por %p73, %p74
    %p76 = scmp.ne.s32.totalorder %s62, %s63
    %p77 = scmp.eq.s32.totalorder %s15, 3
    %p78 = por %p76, %p77
    %p80 = scmp.ne.s32.totalorder %s63, %s79
    %p81 = scmp.eq.s32.totalorder %s15, 0
    %p82 = por %p80, %p81
    %s83 = ssub.s32 %s17, %s24
    %p84 = scmp.eq.s32.totalorder %s83, 0
    %s86 = sadd.s32 %s85, 1
    %s87 = scalar_select %p84, %s85, %s86
    %p90 = pneg %p84
    %p91 = scmp.eq.s32.totalorder %s9, 3
    %p92 = por %p90, %p91
    %p93 = scmp.ne.s32.totalorder %s85, %s88
    %p94 = scmp.eq.s32.totalorder %s9, 0
    %p95 = por %p93, %p94
    %p96 = scmp.ne.s32.totalorder %s85, %s88
    %p97 = scmp.eq.s32.totalorder %s14, 3
    %p98 = por %p96, %p97
    %p99 = scmp.ne.s32.totalorder %s88, %s89
    %p100 = scmp.eq.s32.totalorder %s14, 0
    %p101 = por %p99, %p100
    %p102 = scmp.ne.s32.totalorder %s88, %s89
    %p103 = scmp.eq.s32.totalorder %s15, 3
    %p104 = por %p102, %p103
    %p106 = scmp.ne.s32.totalorder %s89, %s105
    %p107 = scmp.eq.s32.totalorder %s15, 0
    %p108 = por %p106, %p107
    %s109 = ssub.s32 %s16, %s28
    %s110 = ssub.s32 %s17, %s24
    %s111 = sor.u32 %s109, %s110
    %p112 = scmp.eq.s32.totalorder %s111, 0
    %s114 = sadd.s32 %s113, 1
    %s115 = scalar_select %p112, %s113, %s114
    %p118 = pneg %p112
    %p119 = scmp.eq.s32.totalorder %s9, 3
    %p120 = por %p118, %p119
    %p121 = scmp.ne.s32.totalorder %s113, %s116
    %p122 = scmp.eq.s32.totalorder %s9, 0
    %p123 = por %p121, %p122
    %p124 = scmp.ne.s32.totalorder %s113, %s116
    %p125 = scmp.eq.s32.totalorder %s14, 3
    %p126 = por %p124, %p125
    %p127 = scmp.ne.s32.totalorder %s116, %s117
    %p128 = scmp.eq.s32.totalorder %s14, 0
    %p129 = por %p127, %p128
    %p130 = scmp.ne.s32.totalorder %s116, %s117
    %p131 = scmp.eq.s32.totalorder %s15, 3
    %p132 = por %p130, %p131
    %p134 = scmp.ne.s32.totalorder %s117, %s133
    %p135 = scmp.eq.s32.totalorder %s15, 0
    %p136 = por %p134, %p135
    %p137 = scmp.le.s32.totalorder 1, %s9
    %p138 = scmp.lt.s32.totalorder %s9, 5
    %p139 = pnand %p137, %p138
    %p140 = pneg %p139
    // Predicated region
    $region9: #{hourglass_forward.17} parent=5 // pred_check
      _
    $region10: #{hourglass_forward.17} parent=5 // pred_check_branch
      %142 = sbr.rel (%p139) target = $region12
    $region11: #{hourglass_forward.17} parent=5 // pred_region
      %s143 = ssub.s32 %s9, 1
    $region12: #{hourglass_forward.17} parent=5 // pred_fallthru
      _
    %p144 = scmp.lt.s32.totalorder %s9, 4
    // Predicated region
    $region13: #{hourglass_forward.17} parent=5 // pred_check
      %p145 = pneg %p144
    $region14: #{hourglass_forward.17} parent=5 // pred_check_branch
      %147 = sbr.rel (%p145) target = $region16
    $region15: #{hourglass_forward.17} parent=5 // pred_region
      // Predicated region
      $region17: #{hourglass_forward.17} parent=15 // pred_check
        %p148 = pneg %p43
      $region18: #{hourglass_forward.17} parent=15 // pred_check_branch
        %150 = sbr.rel (%p148) target = $region20
      $region19: #{hourglass_forward.17} parent=15 // pred_region
        %p151 = scmp.lt.s32.totalorder %s16, 1
        %s152 = scalar_select %p151, %s16, 1
        %p153 = scmp.lt.s32.totalorder %s17, 1
        %s154 = scalar_select %p153, %s17, 1
        %s155 = smul.addr %s152, 2
        %s156 = sadd.s32 %s154, %s155
        %s157 = smul.addr %s156, 2
        %s158 = scalar_lea.vmem %s0, %s157
      $region20: #{hourglass_forward.17} parent=15 // pred_fallthru
        _
      // Predicated region
      $region21: #{hourglass_forward.17} parent=15 // pred_check
        %p159 = pneg %p69
      $region22: #{hourglass_forward.17} parent=15 // pred_check_branch
        %161 = sbr.rel (%p159) target = $region24
      $region23: #{hourglass_forward.17} parent=15 // pred_region
        %p162 = scmp.lt.s32.totalorder %s17, 1
        %s163 = scalar_select %p162, %s17, 1
        %s164 = smul.addr %s163, 4
        %s165 = scalar_lea.vmem %s1, %s164
      $region24: #{hourglass_forward.17} parent=15 // pred_fallthru
        _
      // Predicated region
      $region25: #{hourglass_forward.17} parent=15 // pred_check
        %p166 = pneg %p95
      $region26: #{hourglass_forward.17} parent=15 // pred_check_branch
        %168 = sbr.rel (%p166) target = $region28
      $region27: #{hourglass_forward.17} parent=15 // pred_region
        %p169 = scmp.lt.s32.totalorder %s17, 1
        %s170 = scalar_select %p169, %s17, 1
        %s171 = smul.addr %s170, 4
        %s172 = scalar_lea.vmem %s2, %s171
      $region28: #{hourglass_forward.17} parent=15 // pred_fallthru
        _
    $region16: #{hourglass_forward.17} parent=5 // pred_fallthru
      _
    %p173 = scmp.le.s32.totalorder 1, %s9
    %p174 = scmp.lt.s32.totalorder %s9, 5
    %p175 = pnand %p173, %p174
    %p176 = pneg %p175
    // Predicated region
    $region29: #{hourglass_forward.17} parent=5 // pred_check
      _
    $region30: #{hourglass_forward.17} parent=5 // pred_check_branch
      %178 = sbr.rel (%p175) target = $region32
    $region31: #{hourglass_forward.17} parent=5 // pred_region
      %s179 = ssub.s32 %s9, 1
      %p180 = scmp.lt.s32.totalorder %s18, 1
      %s181 = scalar_select %p180, %s18, 1
      %p182 = scmp.lt.s32.totalorder %s19, 1
      %s183 = scalar_select %p182, %s19, 1
      %s184 = smul.addr %s181, 2
      %s185 = sadd.s32 %s183, %s184
      %s186 = smul.addr %s185, 2
      %s187 = scalar_lea.vmem %s0, %s186
      %p188 = pneg %p49
      %p189 = pneg %p46
      %p190 = scmp.lt.s32.totalorder %s19, 1
      %s191 = scalar_select %p190, %s19, 1
      %s192 = smul.addr %s191, 4
      %s193 = scalar_lea.vmem %s1, %s192
      %p194 = pneg %p75
      %p195 = pneg %p72
      %p196 = scmp.lt.s32.totalorder %s19, 1
      %s197 = scalar_select %p196, %s19, 1
      %s198 = smul.addr %s197, 4
      %s199 = scalar_lea.vmem %s2, %s198
      %p200 = pneg %p101
      %p201 = pneg %p98
      %p202 = pneg %p129
      %p203 = pneg %p126
      %p204 = scmp.lt.s32.totalorder %s18, 1
      %s205 = scalar_select %p204, %s18, 1
      %p206 = scmp.lt.s32.totalorder %s19, 1
      %s207 = scalar_select %p206, %s19, 1
      %s208 = smul.addr %s205, 2
      %s209 = sadd.s32 %s207, %s208
      %s210 = smul.addr %s209, 2
      %s211 = scalar_lea.vmem %s3, %s210
      %p212 = scmp.lt.s32.totalorder %s18, 1
      %s213 = scalar_select %p212, %s18, 1
      %p214 = scmp.lt.s32.totalorder %s19, 1
      %s215 = scalar_select %p214, %s19, 1
      %s216 = smul.addr %s213, 2
      %s217 = sadd.s32 %s215, %s216
      %s218 = smul.addr %s217, 2
      %s219 = scalar_lea.vmem %s0, %s218
      %p220 = scmp.lt.s32.totalorder %s19, 1
      %s221 = scalar_select %p220, %s19, 1
      %s222 = smul.addr %s221, 4
      %s223 = scalar_lea.vmem %s1, %s222
      %p224 = scmp.lt.s32.totalorder %s19, 1
      %s225 = scalar_select %p224, %s19, 1
      %s226 = smul.addr %s225, 4
      %s227 = scalar_lea.vmem %s2, %s226
      %p228 = scmp.lt.s32.totalorder %s18, 1
      %s229 = scalar_select %p228, %s18, 1
      %p230 = scmp.lt.s32.totalorder %s19, 1
      %s231 = scalar_select %p230, %s19, 1
      %s232 = smul.addr %s229, 2
      %s233 = sadd.s32 %s231, %s232
      %s234 = smul.addr %s233, 2
      %s235 = scalar_lea.vmem %s3, %s234
      %v236 = vld [vmem:[%s219] sm:$0x3]
      %v237 = vunpack.c.l.bf16 %v236
      %vm238 = vcmask 257024
      %v239 = vsel %vm238, %v237, 0.0
      %240 = vadd.xlane.f32.xlu0 %v239
      %v241 = vpop.xlane.xlu0 %240
      %v242 = vrot.slane %v241, 4
      %v243 = vadd.f32 %v241, %v242
      %v244 = vrot.slane %v243, 2
      %v245 = vadd.f32 %v243, %v244
      %v246 = vrot.slane %v245, 1
      %v247 = vadd.f32 %v245, %v246
      %s248 = vtos %v247
      %v249 = vstv %s248
      %v250 = vmul.f32 %v237, %v237
      %v251 = vsel %vm238, %v250, 0.0
      %252 = vadd.xlane.f32.xlu0 %v251
      %v253 = vpop.xlane.xlu0 %252
      %v254 = vrot.slane %v253, 4
      %v255 = vadd.f32 %v253, %v254
      %v256 = vrot.slane %v255, 2
      %v257 = vadd.f32 %v255, %v256
      %v258 = vrot.slane %v257, 1
      %v259 = vadd.f32 %v257, %v258
      %s260 = vtos %v259
      %v261 = vstv %s260
      %v262 = vrcp.pop 128.0
      %v263 = vmul.f32 %v249, %v262
      %v264 = vmul.f32 %v261, %v262
      %v265 = vmul.f32 %v263, %v263
      %v266 = vsub.f32 %v264, %v265
      %v267 = vmax.f32 %v266, 0.0
      %v268 = vadd.f32 %v267, 1e-05
      %v269 = vrsqrt.pop %v268
      %v270 = vsub.f32 %v237, %v263
      %v271 = vmul.f32 %v270, %v269
      %v272 = vld [vmem:[%s223] sm:$0xf]
      %274 = vset.pattern.permute.xlu0 0
      %275 = vperm.xlu0 %274, %v272
      %v276 = vpop.permute.xlu0 %275
      %v278 = vmul.f32 %v271, %v276
      %v279 = vld [vmem:[%s227] sm:$0xf]
      %281 = vset.pattern.permute.xlu0 0
      %282 = vperm.xlu0 %281, %v279
      %v283 = vpop.permute.xlu0 %282
      %v285 = vadd.f32 %v278, %v283
      %v286 = vmax.f32 %v285, 0.0
      %v287 = vpack.c.bf16 %v286, %v286
      %vm288 = vcmask 254976
      %289 = vst.msk [vmem:[%s235] sm:$0x3] %vm288, %v287
      %p290 = scmp.lt.s32.totalorder %s18, 1
      %s291 = scalar_select %p290, %s18, 1
      %p292 = scmp.lt.s32.totalorder %s19, 1
      %s293 = scalar_select %p292, %s19, 1
      %s294 = smul.addr %s291, 2
      %s295 = sadd.s32 %s293, %s294
      %s296 = smul.addr %s295, 2
      %s297 = scalar_lea.vmem %s3, %s296
      // Predicated region
      $region33: #{hourglass_forward.17} parent=31 // pred_check
        %p298 = pneg %p126
      $region34: #{hourglass_forward.17} parent=31 // pred_check_branch
        %300 = sbr.rel (%p298) target = $region36
      $region35: #{hourglass_forward.17} parent=31 // pred_region
        _
      $region36: #{hourglass_forward.17} parent=31 // pred_fallthru
        _
    $region32: #{hourglass_forward.17} parent=5 // pred_fallthru
      _
    %p301 = scmp.le.s32.totalorder 2, %s9
    // Predicated region
    $region37: #{hourglass_forward.17} parent=5 // pred_check
      %p302 = pneg %p301
    $region38: #{hourglass_forward.17} parent=5 // pred_check_branch
      %304 = sbr.rel (%p302) target = $region40
    $region39: #{hourglass_forward.17} parent=5 // pred_region
      %s305 = ssub.s32 %s9, 2
      // Predicated region
      $region41: #{hourglass_forward.17} parent=39 // pred_check
        %p306 = pneg %p132
      $region42: #{hourglass_forward.17} parent=39 // pred_check_branch
        %308 = sbr.rel (%p306) target = $region44
      $region43: #{hourglass_forward.17} parent=39 // pred_region
        %p309 = scmp.lt.s32.totalorder %s20, 1
        %s310 = scalar_select %p309, %s20, 1
        %p311 = scmp.lt.s32.totalorder %s21, 1
        %s312 = scalar_select %p311, %s21, 1
        %s313 = smul.addr %s310, 2
        %s314 = sadd.s32 %s312, %s313
        %s315 = smul.addr %s314, 2
        %s316 = scalar_lea.vmem %s3, %s315
      $region44: #{hourglass_forward.17} parent=39 // pred_fallthru
        _
    $region40: #{hourglass_forward.17} parent=5 // pred_fallthru
      _
  $region6: #{hourglass_forward.17} parent=0 // loop_footer
    %s13 = sadd.s32 1, %s9
  $region7: #{hourglass_forward.17} parent=0 // loop_footer_branch
    %8 = sbr.rel target = $region3
  $region8: #{hourglass_forward.17} parent=0 // loop_exit
    _

// kernel: hourglass_forward.18
$region0: #{hourglass_forward.18}
  #allocation0 [shape = 'u32[]', space=smem, size = 0x4, offset = 0x4, fixed_abs, tag = 'smem constant byte address 0x4 - core index']
  #allocation1 [shape = 'u32[144,128]{1,0:T(1,128)}', space=vmem, size = 0x12000, scoped, tag = 'internal scratch']
  #allocation2 [shape = 'f32[8,128]{1,0:T(8,128)}', space=vmem, size = 0x1000, scoped, tag = 'scratch operand']
  %s0 = inlined_call_operand.vmem [shape: bf16[2,4,8,256], index: 0, kind: input, shape index: {}]
  %s1 = inlined_call_operand.vmem [shape: bf16[3,9,8,8], index: 1, kind: input, shape index: {}]
  %s2 = inlined_call_operand.vmem [shape: bf16[2,8,256], index: 2, kind: output, shape index: {}]
  %s3 = sld [smem:[#allocation0]]
  $region49: #{hourglass_forward.18} parent=0
    _
  %s5 = ssub.s32 1, %s3
  %s6 = scalar_select 0, %s5, %s3
  loop: start=0, step=1, limit=14
  $region2: #{hourglass_forward.18} parent=0 // loop_pre_header
    _
  $region3: #{hourglass_forward.18} parent=0 // loop_header
    %s8 = sphi 0, %s12
    %p9 = scmp.ge.s32.totalorder %s8, 14
    %s15 = sphi 0, %s34
    %s16 = sphi 0, %s30
    %s17 = sphi 0, %s26
    %s18 = sphi 0, %s15
    %s19 = sphi 0, %s16
    %s20 = sphi 0, %s17
    %s21 = sphi 0, %s18
    %s22 = sphi 0, %s19
    %s23 = sphi 0, %s20
    %s41 = sphi 0, %s43
    %s44 = sphi 0, %s41
    %s45 = sphi 0, %s44
    %s61 = sphi 0, %s45
    %s67 = sphi 0, %s69
    %s70 = sphi 0, %s67
    %s71 = sphi 0, %s70
    %s87 = sphi 0, %s71
    %s95 = sphi 0, %s97
    %s98 = sphi 0, %s95
    %s99 = sphi 0, %s98
    %s115 = sphi 0, %s99
  $region4: #{hourglass_forward.18} parent=0 // loop_header_branch
    %11 = sbr.rel (%p9) target = $region8
  $region5: #{hourglass_forward.18} parent=0 // loop_body
    %s13 = ssub.s32 %s8, 1
    %s14 = ssub.s32 %s8, 2
    %s24 = sadd.s32 1, %s17
    %p25 = scmp.ge.s32.totalorder %s24, 3
    %s26 = scalar_select %p25, 0, %s24
    %s27 = sadd.s32 1, %s16
    %s28 = scalar_select %p25, %s27, %s16
    %p29 = scmp.ge.s32.totalorder %s28, 2
    %s30 = scalar_select %p29, 0, %s28
    %s31 = sadd.s32 1, %s15
    %s32 = scalar_select %p29, %s31, %s15
    %p33 = scmp.ge.s32.totalorder %s32, 2
    %s34 = scalar_select %p33, 0, %s32
    %s35 = sadd.s32 %s16, %s17
    %s36 = sadd.s32 %s30, %s26
    %s37 = ssub.s32 %s15, %s34
    %s38 = ssub.s32 %s35, %s36
    %s39 = sor.u32 %s37, %s38
    %p40 = scmp.eq.s32.totalorder %s39, 0
    %s42 = sadd.s32 %s41, 1
    %s43 = scalar_select %p40, %s41, %s42
    %p46 = pneg %p40
    %p47 = scmp.eq.s32.totalorder %s8, 11
    %p48 = por %p46, %p47
    %p49 = scmp.ne.s32.totalorder %s41, %s44
    %p50 = scmp.eq.s32.totalorder %s8, 0
    %p51 = por %p49, %p50
    %p52 = scmp.ne.s32.totalorder %s41, %s44
    %p53 = scmp.eq.s32.totalorder %s13, 11
    %p54 = por %p52, %p53
    %p55 = scmp.ne.s32.totalorder %s44, %s45
    %p56 = scmp.eq.s32.totalorder %s13, 0
    %p57 = por %p55, %p56
    %p58 = scmp.ne.s32.totalorder %s44, %s45
    %p59 = scmp.eq.s32.totalorder %s14, 11
    %p60 = por %p58, %p59
    %p62 = scmp.ne.s32.totalorder %s45, %s61
    %p63 = scmp.eq.s32.totalorder %s14, 0
    %p64 = por %p62, %p63
    %s65 = ssub.s32 %s17, %s26
    %p66 = scmp.eq.s32.totalorder %s65, 0
    %s68 = sadd.s32 %s67, 1
    %s69 = scalar_select %p66, %s67, %s68
    %p72 = pneg %p66
    %p73 = scmp.eq.s32.totalorder %s8, 11
    %p74 = por %p72, %p73
    %p75 = scmp.ne.s32.totalorder %s67, %s70
    %p76 = scmp.eq.s32.totalorder %s8, 0
    %p77 = por %p75, %p76
    %p78 = scmp.ne.s32.totalorder %s67, %s70
    %p79 = scmp.eq.s32.totalorder %s13, 11
    %p80 = por %p78, %p79
    %p81 = scmp.ne.s32.totalorder %s70, %s71
    %p82 = scmp.eq.s32.totalorder %s13, 0
    %p83 = por %p81, %p82
    %p84 = scmp.ne.s32.totalorder %s70, %s71
    %p85 = scmp.eq.s32.totalorder %s14, 11
    %p86 = por %p84, %p85
    %p88 = scmp.ne.s32.totalorder %s71, %s87
    %p89 = scmp.eq.s32.totalorder %s14, 0
    %p90 = por %p88, %p89
    %s91 = ssub.s32 %s15, %s34
    %s92 = ssub.s32 %s16, %s30
    %s93 = sor.u32 %s91, %s92
    %p94 = scmp.eq.s32.totalorder %s93, 0
    %s96 = sadd.s32 %s95, 1
    %s97 = scalar_select %p94, %s95, %s96
    %p100 = pneg %p94
    %p101 = scmp.eq.s32.totalorder %s8, 11
    %p102 = por %p100, %p101
    %p103 = scmp.ne.s32.totalorder %s95, %s98
    %p104 = scmp.eq.s32.totalorder %s8, 0
    %p105 = por %p103, %p104
    %p106 = scmp.ne.s32.totalorder %s95, %s98
    %p107 = scmp.eq.s32.totalorder %s13, 11
    %p108 = por %p106, %p107
    %p109 = scmp.ne.s32.totalorder %s98, %s99
    %p110 = scmp.eq.s32.totalorder %s13, 0
    %p111 = por %p109, %p110
    %p112 = scmp.ne.s32.totalorder %s98, %s99
    %p113 = scmp.eq.s32.totalorder %s14, 11
    %p114 = por %p112, %p113
    %p116 = scmp.ne.s32.totalorder %s99, %s115
    %p117 = scmp.eq.s32.totalorder %s14, 0
    %p118 = por %p116, %p117
    %p119 = scmp.le.s32.totalorder 1, %s8
    %p120 = scmp.lt.s32.totalorder %s8, 13
    %p121 = pnand %p119, %p120
    %p122 = pneg %p121
    // Predicated region
    $region9: #{hourglass_forward.18} parent=5 // pred_check
      _
    $region10: #{hourglass_forward.18} parent=5 // pred_check_branch
      %124 = sbr.rel (%p121) target = $region12
    $region11: #{hourglass_forward.18} parent=5 // pred_region
      %s125 = ssub.s32 %s8, 1
    $region12: #{hourglass_forward.18} parent=5 // pred_fallthru
      _
    %p126 = scmp.lt.s32.totalorder %s8, 12
    // Predicated region
    $region13: #{hourglass_forward.18} parent=5 // pred_check
      %p127 = pneg %p126
    $region14: #{hourglass_forward.18} parent=5 // pred_check_branch
      %129 = sbr.rel (%p127) target = $region16
    $region15: #{hourglass_forward.18} parent=5 // pred_region
      // Predicated region
      $region17: #{hourglass_forward.18} parent=15 // pred_check
        %p130 = pneg %p51
      $region18: #{hourglass_forward.18} parent=15 // pred_check_branch
        %132 = sbr.rel (%p130) target = $region20
      $region19: #{hourglass_forward.18} parent=15 // pred_region
        %s133 = sadd.s32 %s16, %s17
        %p134 = scmp.lt.s32.totalorder %s15, 1
        %s135 = scalar_select %p134, %s15, 1
        %p136 = scmp.lt.s32.totalorder %s133, 3
        %s137 = scalar_select %p136, %s133, 3
        %s138 = smul.addr %s137, 2
        %s139 = smul.addr %s135, 8
        %s140 = sadd.s32 %s138, %s139
        %s141 = smul.addr %s140, 4
        %s142 = scalar_lea.vmem %s0, %s141
        %s143 = sadd.s32 %s16, %s17
      $region20: #{hourglass_forward.18} parent=15 // pred_fallthru
        _
      // Predicated region
      $region21: #{hourglass_forward.18} parent=15 // pred_check
        %p144 = pneg %p77
      $region22: #{hourglass_forward.18} parent=15 // pred_check_branch
        %146 = sbr.rel (%p144) target = $region24
      $region23: #{hourglass_forward.18} parent=15 // pred_region
        %p147 = scmp.lt.s32.totalorder %s17, 2
        %s148 = scalar_select %p147, %s17, 2
        %s149 = smul.addr %s148, 9
        %s150 = smul.addr %s149, 4
        %s151 = scalar_lea.vmem %s1, %s150
      $region24: #{hourglass_forward.18} parent=15 // pred_fallthru
        _
    $region16: #{hourglass_forward.18} parent=5 // pred_fallthru
      _
    %p152 = scmp.le.s32.totalorder 1, %s8
    %p153 = scmp.lt.s32.totalorder %s8, 13
    %p154 = pnand %p152, %p153
    %p155 = pneg %p154
    // Predicated region
    $region25: #{hourglass_forward.18} parent=5 // pred_check
      _
    $region26: #{hourglass_forward.18} parent=5 // pred_check_branch
      %157 = sbr.rel (%p154) target = $region28
    $region27: #{hourglass_forward.18} parent=5 // pred_region
      %s158 = ssub.s32 %s8, 1
      %s159 = sadd.s32 %s19, %s20
      %p160 = scmp.lt.s32.totalorder %s18, 1
      %s161 = scalar_select %p160, %s18, 1
      %p162 = scmp.lt.s32.totalorder %s159, 3
      %s163 = scalar_select %p162, %s159, 3
      %s164 = smul.addr %s163, 2
      %s165 = smul.addr %s161, 8
      %s166 = sadd.s32 %s164, %s165
      %s167 = smul.addr %s166, 4
      %s168 = scalar_lea.vmem %s0, %s167
      %p169 = pneg %p57
      %p170 = pneg %p54
      %p171 = scmp.lt.s32.totalorder %s20, 2
      %s172 = scalar_select %p171, %s20, 2
      %s173 = smul.addr %s172, 9
      %s174 = smul.addr %s173, 4
      %s175 = scalar_lea.vmem %s1, %s174
      %p176 = pneg %p83
      %p177 = pneg %p80
      %p178 = pneg %p111
      %p179 = pneg %p108
      %p180 = scmp.lt.s32.totalorder %s18, 1
      %s181 = scalar_select %p180, %s18, 1
      %p182 = scmp.lt.s32.totalorder %s19, 1
      %s183 = scalar_select %p182, %s19, 1
      %s184 = smul.addr %s181, 2
      %s185 = sadd.s32 %s183, %s184
      %s186 = smul.addr %s185, 4
      %s187 = scalar_lea.vmem %s2, %s186
      %s188 = sadd.s32 %s19, %s20
      %p189 = scmp.lt.s32.totalorder %s18, 1
      %s190 = scalar_select %p189, %s18, 1
      %p191 = scmp.lt.s32.totalorder %s188, 3
      %s192 = scalar_select %p191, %s188, 3
      %s193 = smul.addr %s192, 2
      %s194 = smul.addr %s190, 8
      %s195 = sadd.s32 %s193, %s194
      %s196 = smul.addr %s195, 4
      %s197 = scalar_lea.vmem %s0, %s196
      %s198 = sadd.s32 %s19, %s20
      %p199 = scmp.lt.s32.totalorder %s20, 2
      %s200 = scalar_select %p199, %s20, 2
      %s201 = smul.addr %s200, 9
      %s202 = smul.addr %s201, 4
      %s203 = scalar_lea.vmem %s1, %s202
      %p204 = scmp.lt.s32.totalorder %s18, 1
      %s205 = scalar_select %p204, %s18, 1
      %p206 = scmp.lt.s32.totalorder %s19, 1
      %s207 = scalar_select %p206, %s19, 1
      %s208 = smul.addr %s205, 2
      %s209 = sadd.s32 %s207, %s208
      %s210 = smul.addr %s209, 4
      %s211 = scalar_lea.vmem %s2, %s210
      %p213 = scmp.eq.s32.totalorder %s20, 0
      // Predicated region
      $region29: #{hourglass_forward.18} parent=27 // pred_check
        %p214 = pneg %p213
      $region30: #{hourglass_forward.18} parent=27 // pred_check_branch
        %216 = sbr.rel (%p214) target = $region32
      $region31: #{hourglass_forward.18} parent=27 // pred_region
        %217 = vst [vmem:[#allocation2] sm:$0xff] 0.0
      $region32: #{hourglass_forward.18} parent=27 // pred_fallthru
        _
      %v218 = vld [vmem:[%s197] sm:$0xff]
      %v219 = vld [vmem:[#allocation2] sm:$0xff]
      %v220 = vld [vmem:[%s203] sm:$0xf]
      %vm221 = vcmask 64512
      %v223 = vsel %vm221, %v220, 0
      %vm225 = vcmask 1043456
      %v227 = vsel %vm225, %v218, 0
      %229 = vmatprep.subr.bf16.mxu0 0
      %230 = vmatpush1.bf16.msra.mxu0 %v227
      %231 = vmatprep.subr.bf16.mxu0 0
      %232 = vmatpush1.bf16.msra.mxu0 0
      %233 = vmatprep.subr.bf16.mxu0 0
      %234 = vmatpush1.bf16.msra.mxu0 0
      %235 = vmatprep.subr.bf16.mxu0 0
      %236 = vmatpush1.bf16.msra.mxu0 0
      %237 = vmatprep.subr.bf16.mxu0 0
      %238 = vmatpush1.bf16.msra.mxu0 0
      %239 = vmatprep.subr.bf16.mxu0 0
      %240 = vmatpush1.bf16.msra.mxu0 0
      %241 = vmatprep.subr.bf16.mxu0 0
      %242 = vmatpush1.bf16.msra.mxu0 0
      %243 = vmatprep.subr.bf16.mxu0 0
      %244 = vmatpush1.bf16.msra.mxu0 0
      %245 = vmatprep.subr.bf16.mxu0 0
      %246 = vmatpush1.bf16.msra.mxu0 0
      %247 = vmatprep.subr.bf16.mxu0 0
      %248 = vmatpush1.bf16.msra.mxu0 0
      %249 = vmatprep.subr.bf16.mxu0 0
      %250 = vmatpush1.bf16.msra.mxu0 0
      %251 = vmatprep.subr.bf16.mxu0 0
      %252 = vmatpush1.bf16.msra.mxu0 0
      %253 = vmatprep.subr.bf16.mxu0 0
      %254 = vmatpush1.bf16.msra.mxu0 0
      %255 = vmatprep.subr.bf16.mxu0 0
      %256 = vmatpush1.bf16.msra.mxu0 0
      %257 = vmatprep.subr.bf16.mxu0 0
      %258 = vmatpush1.bf16.msra.mxu0 0
      %259 = vmatprep.subr.bf16.mxu0 0
      %260 = vmatpush1.bf16.msra.mxu0 0
      %261 = vmatprep.mubr.bf16.mxu0 0
      %262 = vmatmul.mubr.bf16.gmra.mrb[0].mxu0 %v223
      %v263 = vpop.f32.mrb[0].mxu0
      %v264 = vadd.f32 0.0, %v263
      %v265 = vpop.f32.mrb[0].mxu0
      %v266 = vpop.f32.mrb[0].mxu0
      %v267 = vpop.f32.mrb[0].mxu0
      %268 = vdwg.mxu0
      %v269 = vadd.f32 %v219, %v264
      %s270 = scalar_lea.vmem %s203, 4
      %v271 = vld [vmem:[%s270] sm:$0xf]
      %v273 = vunpack.c.l.b16 %v218
      %v274 = vunpack.c.h.b16 %v218
      %v275 = vpack.c.b16 %v273, %v273
      %v276 = vpack.c.b16 %v274, %v274
      %277 = vrot.lane.b32.xlu0 %v275, 127
      %v278 = vpop.permute.xlu0 %277
      %279 = vrot.lane.b32.xlu0 %v276, 127
      %v280 = vpop.permute.xlu0 %279
      %vm281 = vcmask 1039360
      %v282 = vsel %vm281, %v278, %v280
      %v284 = vsel %vm221, %v271, 0
      %v287 = vsel %vm225, %v282, 0
      %289 = vmatprep.subr.bf16.mxu0 0
      %290 = vmatpush1.bf16.msra.mxu0 %v287
      %291 = vmatprep.subr.bf16.mxu0 0
      %292 = vmatpush1.bf16.msra.mxu0 0
      %293 = vmatprep.subr.bf16.mxu0 0
      %294 = vmatpush1.bf16.msra.mxu0 0
      %295 = vmatprep.subr.bf16.mxu0 0
      %296 = vmatpush1.bf16.msra.mxu0 0
      %297 = vmatprep.subr.bf16.mxu0 0
      %298 = vmatpush1.bf16.msra.mxu0 0
      %299 = vmatprep.subr.bf16.mxu0 0
      %300 = vmatpush1.bf16.msra.mxu0 0
      %301 = vmatprep.subr.bf16.mxu0 0
      %302 = vmatpush1.bf16.msra.mxu0 0
      %303 = vmatprep.subr.bf16.mxu0 0
      %304 = vmatpush1.bf16.msra.mxu0 0
      %305 = vmatprep.subr.bf16.mxu0 0
      %306 = vmatpush1.bf16.msra.mxu0 0
      %307 = vmatprep.subr.bf16.mxu0 0
      %308 = vmatpush1.bf16.msra.mxu0 0
      %309 = vmatprep.subr.bf16.mxu0 0
      %310 = vmatpush1.bf16.msra.mxu0 0
      %311 = vmatprep.subr.bf16.mxu0 0
      %312 = vmatpush1.bf16.msra.mxu0 0
      %313 = vmatprep.subr.bf16.mxu0 0
      %314 = vmatpush1.bf16.msra.mxu0 0
      %315 = vmatprep.subr.bf16.mxu0 0
      %316 = vmatpush1.bf16.msra.mxu0 0
      %317 = vmatprep.subr.bf16.mxu0 0
      %318 = vmatpush1.bf16.msra.mxu0 0
      %319 = vmatprep.subr.bf16.mxu0 0
      %320 = vmatpush1.bf16.msra.mxu0 0
      %321 = vmatprep.mubr.bf16.mxu0 0
      %322 = vmatmul.mubr.bf16.gmra.mrb[0].mxu0 %v284
      %v323 = vpop.f32.mrb[0].mxu0
      %v324 = vadd.f32 0.0, %v323
      %v325 = vpop.f32.mrb[0].mxu0
      %v326 = vpop.f32.mrb[0].mxu0
      %v327 = vpop.f32.mrb[0].mxu0
      %328 = vdwg.mxu0
      %v329 = vadd.f32 %v269, %v324
      %s330 = scalar_lea.vmem %s203, 8
      %v331 = vld [vmem:[%s330] sm:$0xf]
      %332 = vrot.lane.b32.xlu0 %v275, 126
      %v333 = vpop.permute.xlu0 %332
      %334 = vrot.lane.b32.xlu0 %v276, 126
      %v335 = vpop.permute.xlu0 %334
      %vm336 = vcmask 1031168
      %v337 = vsel %vm336, %v333, %v335
      %v339 = vsel %vm221, %v331, 0
      %v342 = vsel %vm225, %v337, 0
      %344 = vmatprep.subr.bf16.mxu0 0
      %345 = vmatpush1.bf16.msra.mxu0 %v342
      %346 = vmatprep.subr.bf16.mxu0 0
      %347 = vmatpush1.bf16.msra.mxu0 0
      %348 = vmatprep.subr.bf16.mxu0 0
      %349 = vmatpush1.bf16.msra.mxu0 0
      %350 = vmatprep.subr.bf16.mxu0 0
      %351 = vmatpush1.bf16.msra.mxu0 0
      %352 = vmatprep.subr.bf16.mxu0 0
      %353 = vmatpush1.bf16.msra.mxu0 0
      %354 = vmatprep.subr.bf16.mxu0 0
      %355 = vmatpush1.bf16.msra.mxu0 0
      %356 = vmatprep.subr.bf16.mxu0 0
      %357 = vmatpush1.bf16.msra.mxu0 0
      %358 = vmatprep.subr.bf16.mxu0 0
      %359 = vmatpush1.bf16.msra.mxu0 0
      %360 = vmatprep.subr.bf16.mxu0 0
      %361 = vmatpush1.bf16.msra.mxu0 0
      %362 = vmatprep.subr.bf16.mxu0 0
      %363 = vmatpush1.bf16.msra.mxu0 0
      %364 = vmatprep.subr.bf16.mxu0 0
      %365 = vmatpush1.bf16.msra.mxu0 0
      %366 = vmatprep.subr.bf16.mxu0 0
      %367 = vmatpush1.bf16.msra.mxu0 0
      %368 = vmatprep.subr.bf16.mxu0 0
      %369 = vmatpush1.bf16.msra.mxu0 0
      %370 = vmatprep.subr.bf16.mxu0 0
      %371 = vmatpush1.bf16.msra.mxu0 0
      %372 = vmatprep.subr.bf16.mxu0 0
      %373 = vmatpush1.bf16.msra.mxu0 0
      %374 = vmatprep.subr.bf16.mxu0 0
      %375 = vmatpush1.bf16.msra.mxu0 0
      %376 = vmatprep.mubr.bf16.mxu0 0
      %377 = vmatmul.mubr.bf16.gmra.mrb[0].mxu0 %v339
      %v378 = vpop.f32.mrb[0].mxu0
      %v379 = vadd.f32 0.0, %v378
      %v380 = vpop.f32.mrb[0].mxu0
      %v381 = vpop.f32.mrb[0].mxu0
      %v382 = vpop.f32.mrb[0].mxu0
      %383 = vdwg.mxu0
      %v384 = vadd.f32 %v329, %v379
      %s385 = scalar_lea.vmem %s203, 12
      %v386 = vld [vmem:[%s385] sm:$0xf]
      %387 = vrot.lane.b32.xlu0 %v275, 122
      %v388 = vpop.permute.xlu0 %387
      %389 = vrot.lane.b32.xlu0 %v276, 122
      %v390 = vpop.permute.xlu0 %389
      %vm391 = vcmask 998400
      %v392 = vsel %vm391, %v388, %v390
      %v394 = vsel %vm221, %v386, 0
      %v397 = vsel %vm225, %v392, 0
      %399 = vmatprep.subr.bf16.mxu0 0
      %400 = vmatpush1.bf16.msra.mxu0 %v397
      %401 = vmatprep.subr.bf16.mxu0 0
      %402 = vmatpush1.bf16.msra.mxu0 0
      %403 = vmatprep.subr.bf16.mxu0 0
      %404 = vmatpush1.bf16.msra.mxu0 0
      %405 = vmatprep.subr.bf16.mxu0 0
      %406 = vmatpush1.bf16.msra.mxu0 0
      %407 = vmatprep.subr.bf16.mxu0 0
      %408 = vmatpush1.bf16.msra.mxu0 0
      %409 = vmatprep.subr.bf16.mxu0 0
      %410 = vmatpush1.bf16.msra.mxu0 0
      %411 = vmatprep.subr.bf16.mxu0 0
      %412 = vmatpush1.bf16.msra.mxu0 0
      %413 = vmatprep.subr.bf16.mxu0 0
      %414 = vmatpush1.bf16.msra.mxu0 0
      %415 = vmatprep.subr.bf16.mxu0 0
      %416 = vmatpush1.bf16.msra.mxu0 0
      %417 = vmatprep.subr.bf16.mxu0 0
      %418 = vmatpush1.bf16.msra.mxu0 0
      %419 = vmatprep.subr.bf16.mxu0 0
      %420 = vmatpush1.bf16.msra.mxu0 0
      %421 = vmatprep.subr.bf16.mxu0 0
      %422 = vmatpush1.bf16.msra.mxu0 0
      %423 = vmatprep.subr.bf16.mxu0 0
      %424 = vmatpush1.bf16.msra.mxu0 0
      %425 = vmatprep.subr.bf16.mxu0 0
      %426 = vmatpush1.bf16.msra.mxu0 0
      %427 = vmatprep.subr.bf16.mxu0 0
      %428 = vmatpush1.bf16.msra.mxu0 0
      %429 = vmatprep.subr.bf16.mxu0 0
      %430 = vmatpush1.bf16.msra.mxu0 0
      %431 = vmatprep.mubr.bf16.mxu0 0
      %432 = vmatmul.mubr.bf16.gmra.mrb[0].mxu0 %v394
      %v433 = vpop.f32.mrb[0].mxu0
      %v434 = vadd.f32 0.0, %v433
      %v435 = vpop.f32.mrb[0].mxu0
      %v436 = vpop.f32.mrb[0].mxu0
      %v437 = vpop.f32.mrb[0].mxu0
      %438 = vdwg.mxu0
      %v439 = vadd.f32 %v384, %v434
      %s440 = scalar_lea.vmem %s203, 16
      %v441 = vld [vmem:[%s440] sm:$0xf]
      %442 = vrot.lane.b32.xlu0 %v275, 121
      %v443 = vpop.permute.xlu0 %442
      %444 = vrot.lane.b32.xlu0 %v276, 121
      %v445 = vpop.permute.xlu0 %444
      %vm446 = vcmask 990208
      %v447 = vsel %vm446, %v443, %v445
      %v449 = vsel %vm221, %v441, 0
      %v452 = vsel %vm225, %v447, 0
      %454 = vmatprep.subr.bf16.mxu0 0
      %455 = vmatpush1.bf16.msra.mxu0 %v452
      %456 = vmatprep.subr.bf16.mxu0 0
      %457 = vmatpush1.bf16.msra.mxu0 0
      %458 = vmatprep.subr.bf16.mxu0 0
      %459 = vmatpush1.bf16.msra.mxu0 0
      %460 = vmatprep.subr.bf16.mxu0 0
      %461 = vmatpush1.bf16.msra.mxu0 0
      %462 = vmatprep.subr.bf16.mxu0 0
      %463 = vmatpush1.bf16.msra.mxu0 0
      %464 = vmatprep.subr.bf16.mxu0 0
      %465 = vmatpush1.bf16.msra.mxu0 0
      %466 = vmatprep.subr.bf16.mxu0 0
      %467 = vmatpush1.bf16.msra.mxu0 0
      %468 = vmatprep.subr.bf16.mxu0 0
      %469 = vmatpush1.bf16.msra.mxu0 0
      %470 = vmatprep.subr.bf16.mxu0 0
      %471 = vmatpush1.bf16.msra.mxu0 0
      %472 = vmatprep.subr.bf16.mxu0 0
      %473 = vmatpush1.bf16.msra.mxu0 0
      %474 = vmatprep.subr.bf16.mxu0 0
      %475 = vmatpush1.bf16.msra.mxu0 0
      %476 = vmatprep.subr.bf16.mxu0 0
      %477 = vmatpush1.bf16.msra.mxu0 0
      %478 = vmatprep.subr.bf16.mxu0 0
      %479 = vmatpush1.bf16.msra.mxu0 0
      %480 = vmatprep.subr.bf16.mxu0 0
      %481 = vmatpush1.bf16.msra.mxu0 0
      %482 = vmatprep.subr.bf16.mxu0 0
      %483 = vmatpush1.bf16.msra.mxu0 0
      %484 = vmatprep.subr.bf16.mxu0 0
      %485 = vmatpush1.bf16.msra.mxu0 0
      %486 = vmatprep.mubr.bf16.mxu0 0
      %487 = vmatmul.mubr.bf16.gmra.mrb[0].mxu0 %v449
      %v488 = vpop.f32.mrb[0].mxu0
      %v489 = vadd.f32 0.0, %v488
      %v490 = vpop.f32.mrb[0].mxu0
      %v491 = vpop.f32.mrb[0].mxu0
      %v492 = vpop.f32.mrb[0].mxu0
      %493 = vdwg.mxu0
      %v494 = vadd.f32 %v439, %v489
      %s495 = scalar_lea.vmem %s203, 20
      %v496 = vld [vmem:[%s495] sm:$0xf]
      %497 = vrot.lane.b32.xlu0 %v275, 120
      %v498 = vpop.permute.xlu0 %497
      %499 = vrot.lane.b32.xlu0 %v276, 120
      %v500 = vpop.permute.xlu0 %499
      %vm501 = vcmask 982016
      %v502 = vsel %vm501, %v498, %v500
      %v504 = vsel %vm221, %v496, 0
      %v507 = vsel %vm225, %v502, 0
      %509 = vmatprep.subr.bf16.mxu0 0
      %510 = vmatpush1.bf16.msra.mxu0 %v507
      %511 = vmatprep.subr.bf16.mxu0 0
      %512 = vmatpush1.bf16.msra.mxu0 0
      %513 = vmatprep.subr.bf16.mxu0 0
      %514 = vmatpush1.bf16.msra.mxu0 0
      %515 = vmatprep.subr.bf16.mxu0 0
      %516 = vmatpush1.bf16.msra.mxu0 0
      %517 = vmatprep.subr.bf16.mxu0 0
      %518 = vmatpush1.bf16.msra.mxu0 0
      %519 = vmatprep.subr.bf16.mxu0 0
      %520 = vmatpush1.bf16.msra.mxu0 0
      %521 = vmatprep.subr.bf16.mxu0 0
      %522 = vmatpush1.bf16.msra.mxu0 0
      %523 = vmatprep.subr.bf16.mxu0 0
      %524 = vmatpush1.bf16.msra.mxu0 0
      %525 = vmatprep.subr.bf16.mxu0 0
      %526 = vmatpush1.bf16.msra.mxu0 0
      %527 = vmatprep.subr.bf16.mxu0 0
      %528 = vmatpush1.bf16.msra.mxu0 0
      %529 = vmatprep.subr.bf16.mxu0 0
      %530 = vmatpush1.bf16.msra.mxu0 0
      %531 = vmatprep.subr.bf16.mxu0 0
      %532 = vmatpush1.bf16.msra.mxu0 0
      %533 = vmatprep.subr.bf16.mxu0 0
      %534 = vmatpush1.bf16.msra.mxu0 0
      %535 = vmatprep.subr.bf16.mxu0 0
      %536 = vmatpush1.bf16.msra.mxu0 0
      %537 = vmatprep.subr.bf16.mxu0 0
      %538 = vmatpush1.bf16.msra.mxu0 0
      %539 = vmatprep.subr.bf16.mxu0 0
      %540 = vmatpush1.bf16.msra.mxu0 0
      %541 = vmatprep.mubr.bf16.mxu0 0
      %542 = vmatmul.mubr.bf16.gmra.mrb[0].mxu0 %v504
      %v543 = vpop.f32.mrb[0].mxu0
      %v544 = vadd.f32 0.0, %v543
      %v545 = vpop.f32.mrb[0].mxu0
      %v546 = vpop.f32.mrb[0].mxu0
      %v547 = vpop.f32.mrb[0].mxu0
      %548 = vdwg.mxu0
      %v549 = vadd.f32 %v494, %v544
      %s550 = scalar_lea.vmem %s203, 24
      %v551 = vld [vmem:[%s550] sm:$0xf]
      %552 = vrot.lane.b32.xlu0 %v275, 116
      %v553 = vpop.permute.xlu0 %552
      %554 = vrot.lane.b32.xlu0 %v276, 116
      %v555 = vpop.permute.xlu0 %554
      %vm556 = vcmask 949248
      %v557 = vsel %vm556, %v553, %v555
      %v559 = vsel %vm221, %v551, 0
      %v562 = vsel %vm225, %v557, 0
      %564 = vmatprep.subr.bf16.mxu0 0
      %565 = vmatpush1.bf16.msra.mxu0 %v562
      %566 = vmatprep.subr.bf16.mxu0 0
      %567 = vmatpush1.bf16.msra.mxu0 0
      %568 = vmatprep.subr.bf16.mxu0 0
      %569 = vmatpush1.bf16.msra.mxu0 0
      %570 = vmatprep.subr.bf16.mxu0 0
      %571 = vmatpush1.bf16.msra.mxu0 0
      %572 = vmatprep.subr.bf16.mxu0 0
      %573 = vmatpush1.bf16.msra.mxu0 0
      %574 = vmatprep.subr.bf16.mxu0 0
      %575 = vmatpush1.bf16.msra.mxu0 0
      %576 = vmatprep.subr.bf16.mxu0 0
      %577 = vmatpush1.bf16.msra.mxu0 0
      %578 = vmatprep.subr.bf16.mxu0 0
      %579 = vmatpush1.bf16.msra.mxu0 0
      %580 = vmatprep.subr.bf16.mxu0 0
      %581 = vmatpush1.bf16.msra.mxu0 0
      %582 = vmatprep.subr.bf16.mxu0 0
      %583 = vmatpush1.bf16.msra.mxu0 0
      %584 = vmatprep.subr.bf16.mxu0 0
      %585 = vmatpush1.bf16.msra.mxu0 0
      %586 = vmatprep.subr.bf16.mxu0 0
      %587 = vmatpush1.bf16.msra.mxu0 0
      %588 = vmatprep.subr.bf16.mxu0 0
      %589 = vmatpush1.bf16.msra.mxu0 0
      %590 = vmatprep.subr.bf16.mxu0 0
      %591 = vmatpush1.bf16.msra.mxu0 0
      %592 = vmatprep.subr.bf16.mxu0 0
      %593 = vmatpush1.bf16.msra.mxu0 0
      %594 = vmatprep.subr.bf16.mxu0 0
      %595 = vmatpush1.bf16.msra.mxu0 0
      %596 = vmatprep.mubr.bf16.mxu0 0
      %597 = vmatmul.mubr.bf16.gmra.mrb[0].mxu0 %v559
      %v598 = vpop.f32.mrb[0].mxu0
      %v599 = vadd.f32 0.0, %v598
      %v600 = vpop.f32.mrb[0].mxu0
      %v601 = vpop.f32.mrb[0].mxu0
      %v602 = vpop.f32.mrb[0].mxu0
      %603 = vdwg.mxu0
      %v604 = vadd.f32 %v549, %v599
      %s605 = scalar_lea.vmem %s203, 28
      %v606 = vld [vmem:[%s605] sm:$0xf]
      %607 = vrot.lane.b32.xlu0 %v275, 115
      %v608 = vpop.permute.xlu0 %607
      %609 = vrot.lane.b32.xlu0 %v276, 115
      %v610 = vpop.permute.xlu0 %609
      %vm611 = vcmask 941056
      %v612 = vsel %vm611, %v608, %v610
      %v614 = vsel %vm221, %v606, 0
      %v617 = vsel %vm225, %v612, 0
      %619 = vmatprep.subr.bf16.mxu0 0
      %620 = vmatpush1.bf16.msra.mxu0 %v617
      %621 = vmatprep.subr.bf16.mxu0 0
      %622 = vmatpush1.bf16.msra.mxu0 0
      %623 = vmatprep.subr.bf16.mxu0 0
      %624 = vmatpush1.bf16.msra.mxu0 0
      %625 = vmatprep.subr.bf16.mxu0 0
      %626 = vmatpush1.bf16.msra.mxu0 0
      %627 = vmatprep.subr.bf16.mxu0 0
      %628 = vmatpush1.bf16.msra.mxu0 0
      %629 = vmatprep.subr.bf16.mxu0 0
      %630 = vmatpush1.bf16.msra.mxu0 0
      %631 = vmatprep.subr.bf16.mxu0 0
      %632 = vmatpush1.bf16.msra.mxu0 0
      %633 = vmatprep.subr.bf16.mxu0 0
      %634 = vmatpush1.bf16.msra.mxu0 0
      %635 = vmatprep.subr.bf16.mxu0 0
      %636 = vmatpush1.bf16.msra.mxu0 0
      %637 = vmatprep.subr.bf16.mxu0 0
      %638 = vmatpush1.bf16.msra.mxu0 0
      %639 = vmatprep.subr.bf16.mxu0 0
      %640 = vmatpush1.bf16.msra.mxu0 0
      %641 = vmatprep.subr.bf16.mxu0 0
      %642 = vmatpush1.bf16.msra.mxu0 0
      %643 = vmatprep.subr.bf16.mxu0 0
      %644 = vmatpush1.bf16.msra.mxu0 0
      %645 = vmatprep.subr.bf16.mxu0 0
      %646 = vmatpush1.bf16.msra.mxu0 0
      %647 = vmatprep.subr.bf16.mxu0 0
      %648 = vmatpush1.bf16.msra.mxu0 0
      %649 = vmatprep.subr.bf16.mxu0 0
      %650 = vmatpush1.bf16.msra.mxu0 0
      %651 = vmatprep.mubr.bf16.mxu0 0
      %652 = vmatmul.mubr.bf16.gmra.mrb[0].mxu0 %v614
      %v653 = vpop.f32.mrb[0].mxu0
      %v654 = vadd.f32 0.0, %v653
      %v655 = vpop.f32.mrb[0].mxu0
      %v656 = vpop.f32.mrb[0].mxu0
      %v657 = vpop.f32.mrb[0].mxu0
      %658 = vdwg.mxu0
      %v659 = vadd.f32 %v604, %v654
      %s660 = scalar_lea.vmem %s203, 32
      %v661 = vld [vmem:[%s660] sm:$0xf]
      %662 = vrot.lane.b32.xlu0 %v275, 114
      %v663 = vpop.permute.xlu0 %662
      %664 = vrot.lane.b32.xlu0 %v276, 114
      %v665 = vpop.permute.xlu0 %664
      %vm666 = vcmask 932864
      %v667 = vsel %vm666, %v663, %v665
      %v669 = vsel %vm221, %v661, 0
      %v672 = vsel %vm225, %v667, 0
      %674 = vmatprep.subr.bf16.mxu0 0
      %675 = vmatpush1.bf16.msra.mxu0 %v672
      %676 = vmatprep.subr.bf16.mxu0 0
      %677 = vmatpush1.bf16.msra.mxu0 0
      %678 = vmatprep.subr.bf16.mxu0 0
      %679 = vmatpush1.bf16.msra.mxu0 0
      %680 = vmatprep.subr.bf16.mxu0 0
      %681 = vmatpush1.bf16.msra.mxu0 0
      %682 = vmatprep.subr.bf16.mxu0 0
      %683 = vmatpush1.bf16.msra.mxu0 0
      %684 = vmatprep.subr.bf16.mxu0 0
      %685 = vmatpush1.bf16.msra.mxu0 0
      %686 = vmatprep.subr.bf16.mxu0 0
      %687 = vmatpush1.bf16.msra.mxu0 0
      %688 = vmatprep.subr.bf16.mxu0 0
      %689 = vmatpush1.bf16.msra.mxu0 0
      %690 = vmatprep.subr.bf16.mxu0 0
      %691 = vmatpush1.bf16.msra.mxu0 0
      %692 = vmatprep.subr.bf16.mxu0 0
      %693 = vmatpush1.bf16.msra.mxu0 0
      %694 = vmatprep.subr.bf16.mxu0 0
      %695 = vmatpush1.bf16.msra.mxu0 0
      %696 = vmatprep.subr.bf16.mxu0 0
      %697 = vmatpush1.bf16.msra.mxu0 0
      %698 = vmatprep.subr.bf16.mxu0 0
      %699 = vmatpush1.bf16.msra.mxu0 0
      %700 = vmatprep.subr.bf16.mxu0 0
      %701 = vmatpush1.bf16.msra.mxu0 0
      %702 = vmatprep.subr.bf16.mxu0 0
      %703 = vmatpush1.bf16.msra.mxu0 0
      %704 = vmatprep.subr.bf16.mxu0 0
      %705 = vmatpush1.bf16.msra.mxu0 0
      %706 = vmatprep.mubr.bf16.mxu0 0
      %707 = vmatmul.mubr.bf16.gmra.mrb[0].mxu0 %v669
      %v708 = vpop.f32.mrb[0].mxu0
      %v709 = vadd.f32 0.0, %v708
      %v710 = vpop.f32.mrb[0].mxu0
      %v711 = vpop.f32.mrb[0].mxu0
      %v712 = vpop.f32.mrb[0].mxu0
      %713 = vdwg.mxu0
      %v714 = vadd.f32 %v659, %v709
      %715 = vst [vmem:[#allocation2] sm:$0xff] %v714
      %p716 = scmp.eq.s32.totalorder %s20, 2
      // Predicated region
      $region33: #{hourglass_forward.18} parent=27 // pred_check
        %p717 = pneg %p716
      $region34: #{hourglass_forward.18} parent=27 // pred_check_branch
        %719 = sbr.rel (%p717) target = $region36
      $region35: #{hourglass_forward.18} parent=27 // pred_region
        %v720 = vld [vmem:[#allocation2] sm:$0xff]
        %v721 = vpack.c.bf16 %v720, %v720
        %722 = vst [vmem:[%s211] sm:$0xf] %v721
      $region36: #{hourglass_forward.18} parent=27 // pred_fallthru
        _
      %p723 = scmp.lt.s32.totalorder %s18, 1
      %s724 = scalar_select %p723, %s18, 1
      %p725 = scmp.lt.s32.totalorder %s19, 1
      %s726 = scalar_select %p725, %s19, 1
      %s727 = smul.addr %s724, 2
      %s728 = sadd.s32 %s726, %s727
      %s729 = smul.addr %s728, 4
      %s730 = scalar_lea.vmem %s2, %s729
      // Predicated region
      $region37: #{hourglass_forward.18} parent=27 // pred_check
        %p731 = pneg %p108
      $region38: #{hourglass_forward.18} parent=27 // pred_check_branch
        %733 = sbr.rel (%p731) target = $region40
      $region39: #{hourglass_forward.18} parent=27 // pred_region
        _
      $region40: #{hourglass_forward.18} parent=27 // pred_fallthru
        _
    $region28: #{hourglass_forward.18} parent=5 // pred_fallthru
      _
    %p734 = scmp.le.s32.totalorder 2, %s8
    // Predicated region
    $region41: #{hourglass_forward.18} parent=5 // pred_check
      %p735 = pneg %p734
    $region42: #{hourglass_forward.18} parent=5 // pred_check_branch
      %737 = sbr.rel (%p735) target = $region44
    $region43: #{hourglass_forward.18} parent=5 // pred_region
      %s738 = ssub.s32 %s8, 2
      // Predicated region
      $region45: #{hourglass_forward.18} parent=43 // pred_check
        %p739 = pneg %p114
      $region46: #{hourglass_forward.18} parent=43 // pred_check_branch
        %741 = sbr.rel (%p739) target = $region48
      $region47: #{hourglass_forward.18} parent=43 // pred_region
        %p742 = scmp.lt.s32.totalorder %s21, 1
        %s743 = scalar_select %p742, %s21, 1
        %p744 = scmp.lt.s32.totalorder %s22, 1
        %s745 = scalar_select %p744, %s22, 1
        %s746 = smul.addr %s743, 2
        %s747 = sadd.s32 %s745, %s746
        %s748 = smul.addr %s747, 4
        %s749 = scalar_lea.vmem %s2, %s748
      $region48: #{hourglass_forward.18} parent=43 // pred_fallthru
        _
    $region44: #{hourglass_forward.18} parent=5 // pred_fallthru
      _
  $region6: #{hourglass_forward.18} parent=0 // loop_footer
    %s12 = sadd.s32 1, %s8
  $region7: #{hourglass_forward.18} parent=0 // loop_footer_branch
    %7 = sbr.rel target = $region3
  $region8: #{hourglass_forward.18} parent=0 // loop_exit
    _

// kernel: hourglass_forward.20
$region0: #{hourglass_forward.20}
  #allocation0 [shape = 'u32[]', space=smem, size = 0x4, offset = 0x4, fixed_abs, tag = 'smem constant byte address 0x4 - core index']
  #allocation1 [shape = 'u32[144,128]{1,0:T(1,128)}', space=vmem, size = 0x12000, scoped, tag = 'internal scratch']
  #allocation2 [shape = 'f32[64,128]{1,0:T(8,128)}', space=vmem, size = 0x8000, scoped, tag = 'scratch operand']
  %s0 = inlined_call_operand.vmem [shape: bf16[2,3,8,256], index: 0, kind: input, shape index: {}]
  %s1 = inlined_call_operand.vmem [shape: bf16[2,4,64,8], index: 1, kind: input, shape index: {}]
  %s2 = inlined_call_operand.vmem [shape: bf16[2,64,256], index: 2, kind: output, shape index: {}]
  %s3 = sld [smem:[#allocation0]]
  $region86: #{hourglass_forward.20} parent=0
    _
  %s5 = ssub.s32 1, %s3
  %s6 = scalar_select 0, %s5, %s3
  $region1: #{hourglass_forward.20} parent=0
    #allocation3 [shape = 'u8[32768]{0}', space=vmem, size = 0x8000, scoped, tag = 'output window, operand 0']
    loop: start=0, step=1, limit=10
    $region2: #{hourglass_forward.20} parent=1 // loop_pre_header
      _
    $region3: #{hourglass_forward.20} parent=1 // loop_header
      %s8 = sphi 0, %s12
      %p9 = scmp.ge.s32.totalorder %s8, 10
      %s15 = sphi 0, %s34
      %s16 = sphi 0, %s30
      %s17 = sphi 0, %s26
      %s18 = sphi 0, %s15
      %s19 = sphi 0, %s16
      %s20 = sphi 0, %s17
      %s21 = sphi 0, %s18
      %s22 = sphi 0, %s19
      %s23 = sphi 0, %s20
      %s41 = sphi 0, %s43
      %s44 = sphi 0, %s41
      %s45 = sphi 0, %s44
      %s61 = sphi 0, %s45
      %s67 = sphi 0, %s69
      %s70 = sphi 0, %s67
      %s71 = sphi 0, %s70
      %s87 = sphi 0, %s71
      %s95 = sphi 0, %s97
      %s98 = sphi 0, %s95
      %s99 = sphi 0, %s98
      %s115 = sphi 0, %s99
    $region4: #{hourglass_forward.20} parent=1 // loop_header_branch
      %11 = sbr.rel (%p9) target = $region8
    $region5: #{hourglass_forward.20} parent=1 // loop_body
      %s13 = ssub.s32 %s8, 1
      %s14 = ssub.s32 %s8, 2
      %s24 = sadd.s32 1, %s17
      %p25 = scmp.ge.s32.totalorder %s24, 2
      %s26 = scalar_select %p25, 0, %s24
      %s27 = sadd.s32 1, %s16
      %s28 = scalar_select %p25, %s27, %s16
      %p29 = scmp.ge.s32.totalorder %s28, 2
      %s30 = scalar_select %p29, 0, %s28
      %s31 = sadd.s32 1, %s15
      %s32 = scalar_select %p29, %s31, %s15
      %p33 = scmp.ge.s32.totalorder %s32, 2
      %s34 = scalar_select %p33, 0, %s32
      %s35 = sadd.s32 %s16, %s17
      %s36 = sadd.s32 %s30, %s26
      %s37 = ssub.s32 %s15, %s34
      %s38 = ssub.s32 %s35, %s36
      %s39 = sor.u32 %s37, %s38
      %p40 = scmp.eq.s32.totalorder %s39, 0
      %s42 = sadd.s32 %s41, 1
      %s43 = scalar_select %p40, %s41, %s42
      %p46 = pneg %p40
      %p47 = scmp.eq.s32.totalorder %s8, 7
      %p48 = por %p46, %p47
      %p49 = scmp.ne.s32.totalorder %s41, %s44
      %p50 = scmp.eq.s32.totalorder %s8, 0
      %p51 = por %p49, %p50
      %p52 = scmp.ne.s32.totalorder %s41, %s44
      %p53 = scmp.eq.s32.totalorder %s13, 7
      %p54 = por %p52, %p53
      %p55 = scmp.ne.s32.totalorder %s44, %s45
      %p56 = scmp.eq.s32.totalorder %s13, 0
      %p57 = por %p55, %p56
      %p58 = scmp.ne.s32.totalorder %s44, %s45
      %p59 = scmp.eq.s32.totalorder %s14, 7
      %p60 = por %p58, %p59
      %p62 = scmp.ne.s32.totalorder %s45, %s61
      %p63 = scmp.eq.s32.totalorder %s14, 0
      %p64 = por %p62, %p63
      %s65 = ssub.s32 %s17, %s26
      %p66 = scmp.eq.s32.totalorder %s65, 0
      %s68 = sadd.s32 %s67, 1
      %s69 = scalar_select %p66, %s67, %s68
      %p72 = pneg %p66
      %p73 = scmp.eq.s32.totalorder %s8, 7
      %p74 = por %p72, %p73
      %p75 = scmp.ne.s32.totalorder %s67, %s70
      %p76 = scmp.eq.s32.totalorder %s8, 0
      %p77 = por %p75, %p76
      %p78 = scmp.ne.s32.totalorder %s67, %s70
      %p79 = scmp.eq.s32.totalorder %s13, 7
      %p80 = por %p78, %p79
      %p81 = scmp.ne.s32.totalorder %s70, %s71
      %p82 = scmp.eq.s32.totalorder %s13, 0
      %p83 = por %p81, %p82
      %p84 = scmp.ne.s32.totalorder %s70, %s71
      %p85 = scmp.eq.s32.totalorder %s14, 7
      %p86 = por %p84, %p85
      %p88 = scmp.ne.s32.totalorder %s71, %s87
      %p89 = scmp.eq.s32.totalorder %s14, 0
      %p90 = por %p88, %p89
      %s91 = ssub.s32 %s15, %s34
      %s92 = ssub.s32 %s16, %s30
      %s93 = sor.u32 %s91, %s92
      %p94 = scmp.eq.s32.totalorder %s93, 0
      %s96 = sadd.s32 %s95, 1
      %s97 = scalar_select %p94, %s95, %s96
      %p100 = pneg %p94
      %p101 = scmp.eq.s32.totalorder %s8, 7
      %p102 = por %p100, %p101
      %p103 = scmp.ne.s32.totalorder %s95, %s98
      %p104 = scmp.eq.s32.totalorder %s8, 0
      %p105 = por %p103, %p104
      %p106 = scmp.ne.s32.totalorder %s95, %s98
      %p107 = scmp.eq.s32.totalorder %s13, 7
      %p108 = por %p106, %p107
      %p109 = scmp.ne.s32.totalorder %s98, %s99
      %p110 = scmp.eq.s32.totalorder %s13, 0
      %p111 = por %p109, %p110
      %p112 = scmp.ne.s32.totalorder %s98, %s99
      %p113 = scmp.eq.s32.totalorder %s14, 7
      %p114 = por %p112, %p113
      %p116 = scmp.ne.s32.totalorder %s99, %s115
      %p117 = scmp.eq.s32.totalorder %s14, 0
      %p118 = por %p116, %p117
      %p119 = scmp.le.s32.totalorder 1, %s8
      %p120 = scmp.lt.s32.totalorder %s8, 9
      %p121 = pnand %p119, %p120
      %p122 = pneg %p121
      // Predicated region
      $region9: #{hourglass_forward.20} parent=5 // pred_check
        _
      $region10: #{hourglass_forward.20} parent=5 // pred_check_branch
        %124 = sbr.rel (%p121) target = $region12
      $region11: #{hourglass_forward.20} parent=5 // pred_region
        %s125 = ssub.s32 %s8, 1
      $region12: #{hourglass_forward.20} parent=5 // pred_fallthru
        _
      %p126 = scmp.lt.s32.totalorder %s8, 8
      // Predicated region
      $region13: #{hourglass_forward.20} parent=5 // pred_check
        %p127 = pneg %p126
      $region14: #{hourglass_forward.20} parent=5 // pred_check_branch
        %129 = sbr.rel (%p127) target = $region16
      $region15: #{hourglass_forward.20} parent=5 // pred_region
        // Predicated region
        $region17: #{hourglass_forward.20} parent=15 // pred_check
          %p130 = pneg %p51
        $region18: #{hourglass_forward.20} parent=15 // pred_check_branch
          %132 = sbr.rel (%p130) target = $region20
        $region19: #{hourglass_forward.20} parent=15 // pred_region
          %s133 = sadd.s32 %s16, %s17
          %p134 = scmp.lt.s32.totalorder %s15, 1
          %s135 = scalar_select %p134, %s15, 1
          %p136 = scmp.lt.s32.totalorder %s133, 2
          %s137 = scalar_select %p136, %s133, 2
          %s138 = smul.addr %s137, 2
          %s139 = smul.addr %s135, 6
          %s140 = sadd.s32 %s138, %s139
          %s141 = smul.addr %s140, 4
          %s142 = scalar_lea.vmem %s0, %s141
          %s143 = sadd.s32 %s16, %s17
        $region20: #{hourglass_forward.20} parent=15 // pred_fallthru
          _
        // Predicated region
        $region21: #{hourglass_forward.20} parent=15 // pred_check
          %p144 = pneg %p77
        $region22: #{hourglass_forward.20} parent=15 // pred_check_branch
          %146 = sbr.rel (%p144) target = $region24
        $region23: #{hourglass_forward.20} parent=15 // pred_region
          %p147 = scmp.lt.s32.totalorder %s17, 1
          %s148 = scalar_select %p147, %s17, 1
          %s149 = smul.addr %s148, 32
          %s150 = smul.addr %s149, 4
          %s151 = scalar_lea.vmem %s1, %s150
        $region24: #{hourglass_forward.20} parent=15 // pred_fallthru
          _
      $region16: #{hourglass_forward.20} parent=5 // pred_fallthru
        _
      %p152 = scmp.le.s32.totalorder 1, %s8
      %p153 = scmp.lt.s32.totalorder %s8, 9
      %p154 = pnand %p152, %p153
      %p155 = pneg %p154
      // Predicated region
      $region25: #{hourglass_forward.20} parent=5 // pred_check
        _
      $region26: #{hourglass_forward.20} parent=5 // pred_check_branch
        %157 = sbr.rel (%p154) target = $region28
      $region27: #{hourglass_forward.20} parent=5 // pred_region
        %s158 = ssub.s32 %s8, 1
        %s159 = sadd.s32 %s19, %s20
        %p160 = scmp.lt.s32.totalorder %s18, 1
        %s161 = scalar_select %p160, %s18, 1
        %p162 = scmp.lt.s32.totalorder %s159, 2
        %s163 = scalar_select %p162, %s159, 2
        %s164 = smul.addr %s163, 2
        %s165 = smul.addr %s161, 6
        %s166 = sadd.s32 %s164, %s165
        %s167 = smul.addr %s166, 4
        %s168 = scalar_lea.vmem %s0, %s167
        %p169 = pneg %p57
        %p170 = pneg %p54
        %p171 = scmp.lt.s32.totalorder %s20, 1
        %s172 = scalar_select %p171, %s20, 1
        %s173 = smul.addr %s172, 32
        %s174 = smul.addr %s173, 4
        %s175 = scalar_lea.vmem %s1, %s174
        %p176 = pneg %p83
        %p177 = pneg %p80
        %p178 = pneg %p111
        %p179 = pneg %p108
        %s180 = sand.u32 %s98, 1
        %s181 = sand.u32 %s98, 1
        %s182 = smul.addr %s181, 32
        %s183 = scalar_lea.vmem [#allocation3], %s182
        %s184 = sadd.s32 %s19, %s20
        %p185 = scmp.lt.s32.totalorder %s18, 1
        %s186 = scalar_select %p185, %s18, 1
        %p187 = scmp.lt.s32.totalorder %s184, 2
        %s188 = scalar_select %p187, %s184, 2
        %s189 = smul.addr %s188, 2
        %s190 = smul.addr %s186, 6
        %s191 = sadd.s32 %s189, %s190
        %s192 = smul.addr %s191, 4
        %s193 = scalar_lea.vmem %s0, %s192
        %s194 = sadd.s32 %s19, %s20
        %p195 = scmp.lt.s32.totalorder %s20, 1
        %s196 = scalar_select %p195, %s20, 1
        %s197 = smul.addr %s196, 32
        %s198 = smul.addr %s197, 4
        %s199 = scalar_lea.vmem %s1, %s198
        %p201 = scmp.eq.s32.totalorder %s20, 0
        // Predicated region
        $region29: #{hourglass_forward.20} parent=27 // pred_check
          %p202 = pneg %p201
        $region30: #{hourglass_forward.20} parent=27 // pred_check_branch
          %204 = sbr.rel (%p202) target = $region32
        $region31: #{hourglass_forward.20} parent=27 // pred_region
          %205 = vst [vmem:[#allocation2] sm:$0xff] 0.0
          %206 = vst [vmem:[#allocation2 + $0x8] sm:$0xff] 0.0
          %207 = vst [vmem:[#allocation2 + $0x10] sm:$0xff] 0.0
          %208 = vst [vmem:[#allocation2 + $0x18] sm:$0xff] 0.0
          %209 = vst [vmem:[#allocation2 + $0x20] sm:$0xff] 0.0
          %210 = vst [vmem:[#allocation2 + $0x28] sm:$0xff] 0.0
          %211 = vst [vmem:[#allocation2 + $0x30] sm:$0xff] 0.0
          %212 = vst [vmem:[#allocation2 + $0x38] sm:$0xff] 0.0
        $region32: #{hourglass_forward.20} parent=27 // pred_fallthru
          _
        %v213 = vld [vmem:[%s193] sm:$0xff]
        %v214 = vld [vmem:[#allocation2] sm:$0xff]
        %v215 = vld [vmem:[#allocation2 + $0x8] sm:$0xff]
        %v216 = vld [vmem:[#allocation2 + $0x10] sm:$0xff]
        %v217 = vld [vmem:[#allocation2 + $0x18] sm:$0xff]
        %v218 = vld [vmem:[#allocation2 + $0x20] sm:$0xff]
        %v219 = vld [vmem:[#allocation2 + $0x28] sm:$0xff]
        %v220 = vld [vmem:[#allocation2 + $0x30] sm:$0xff]
        %v221 = vld [vmem:[#allocation2 + $0x38] sm:$0xff]
        %v222 = vld [vmem:[%s199] sm:$0xf]
        %v223 = vld [vmem:[%s199 + $0x4] sm:$0xf]
        %v224 = vld [vmem:[%s199 + $0x8] sm:$0xf]
        %v225 = vld [vmem:[%s199 + $0xc] sm:$0xf]
        %v226 = vld [vmem:[%s199 + $0x10] sm:$0xf]
        %v227 = vld [vmem:[%s199 + $0x14] sm:$0xf]
        %v228 = vld [vmem:[%s199 + $0x18] sm:$0xf]
        %v229 = vld [vmem:[%s199 + $0x1c] sm:$0xf]
        %v238 = vunpack.c.l.b16 %v222
        %v239 = vunpack.c.l.b16 %v223
        %v240 = vunpack.c.l.b16 %v224
        %v241 = vunpack.c.l.b16 %v225
        %v242 = vunpack.c.l.b16 %v226
        %v243 = vunpack.c.l.b16 %v227
        %v244 = vunpack.c.l.b16 %v228
        %v245 = vunpack.c.l.b16 %v229
        %v246 = vpack.c.b16 %v239, %v238
        %v247 = vpack.c.b16 %v241, %v240
        %v248 = vpack.c.b16 %v243, %v242
        %v249 = vpack.c.b16 %v245, %v244
        %vm250 = vcmask 64512
        %v252 = vsel %vm250, %v246, 0
        %v255 = vsel %vm250, %v247, 0
        %v258 = vsel %vm250, %v248, 0
        %v261 = vsel %vm250, %v249, 0
        %vm263 = vcmask 1043456
        %v265 = vsel %vm263, %v213, 0
        %267 = vmatprep.subr.bf16.mxu0 0
        %268 = vmatpush1.bf16.msra.mxu0 %v265
        %269 = vmatprep.subr.bf16.mxu0 0
        %270 = vmatpush1.bf16.msra.mxu0 0
        %271 = vmatprep.subr.bf16.mxu0 0
        %272 = vmatpush1.bf16.msra.mxu0 0
        %273 = vmatprep.subr.bf16.mxu0 0
        %274 = vmatpush1.bf16.msra.mxu0 0
        %275 = vmatprep.subr.bf16.mxu0 0
        %276 = vmatpush1.bf16.msra.mxu0 0
        %277 = vmatprep.subr.bf16.mxu0 0
        %278 = vmatpush1.bf16.msra.mxu0 0
        %279 = vmatprep.subr.bf16.mxu0 0
        %280 = vmatpush1.bf16.msra.mxu0 0
        %281 = vmatprep.subr.bf16.mxu0 0
        %282 = vmatpush1.bf16.msra.mxu0 0
        %283 = vmatprep.subr.bf16.mxu0 0
        %284 = vmatpush1.bf16.msra.mxu0 0
        %285 = vmatprep.subr.bf16.mxu0 0
        %286 = vmatpush1.bf16.msra.mxu0 0
        %287 = vmatprep.subr.bf16.mxu0 0
        %288 = vmatpush1.bf16.msra.mxu0 0
        %289 = vmatprep.subr.bf16.mxu0 0
        %290 = vmatpush1.bf16.msra.mxu0 0
        %291 = vmatprep.subr.bf16.mxu0 0
        %292 = vmatpush1.bf16.msra.mxu0 0
        %293 = vmatprep.subr.bf16.mxu0 0
        %294 = vmatpush1.bf16.msra.mxu0 0
        %295 = vmatprep.subr.bf16.mxu0 0
        %296 = vmatpush1.bf16.msra.mxu0 0
        %297 = vmatprep.subr.bf16.mxu0 0
        %298 = vmatpush1.bf16.msra.mxu0 0
        %299 = vmatprep.mubr.bf16.mxu0 0
        %300 = vmatmul.mubr.bf16.gmra.mrb[0].mxu0 %v252
        %v301 = vpop.f32.mrb[0].mxu0
        %v302 = vadd.f32 0.0, %v301
        %v303 = vpop.f32.mrb[0].mxu0
        %v304 = vpop.f32.mrb[0].mxu0
        %v305 = vadd.f32 0.0, %v304
        %v306 = vpop.f32.mrb[0].mxu0
        %307 = vmatprep.mubr.bf16.mxu0 0
        %308 = vmatmul.mubr.bf16.gmra.mrb[0].mxu0 %v255
        %v309 = vpop.f32.mrb[0].mxu0
        %v310 = vadd.f32 0.0, %v309
        %v311 = vpop.f32.mrb[0].mxu0
        %v312 = vpop.f32.mrb[0].mxu0
        %v313 = vadd.f32 0.0, %v312
        %v314 = vpop.f32.mrb[0].mxu0
        %315 = vmatprep.mubr.bf16.mxu0 0
        %316 = vmatmul.mubr.bf16.gmra.mrb[0].mxu0 %v258
        %v317 = vpop.f32.mrb[0].mxu0
        %v318 = vadd.f32 0.0, %v317
        %v319 = vpop.f32.mrb[0].mxu0
        %v320 = vpop.f32.mrb[0].mxu0
        %v321 = vadd.f32 0.0, %v320
        %v322 = vpop.f32.mrb[0].mxu0
        %323 = vmatprep.mubr.bf16.mxu0 0
        %324 = vmatmul.mubr.bf16.gmra.mrb[0].mxu0 %v261
        %v325 = vpop.f32.mrb[0].mxu0
        %v326 = vadd.f32 0.0, %v325
        %v327 = vpop.f32.mrb[0].mxu0
        %v328 = vpop.f32.mrb[0].mxu0
        %v329 = vadd.f32 0.0, %v328
        %v330 = vpop.f32.mrb[0].mxu0
        %331 = vdwg.mxu0
        %v332 = vadd.f32 %v214, %v302
        %v333 = vadd.f32 %v215, %v305
        %v334 = vadd.f32 %v216, %v310
        %v335 = vadd.f32 %v217, %v313
        %v336 = vadd.f32 %v218, %v318
        %v337 = vadd.f32 %v219, %v321
        %v338 = vadd.f32 %v220, %v326
        %v339 = vadd.f32 %v221, %v329
        %s340 = scalar_lea.vmem %s199, 32
        %v341 = vld [vmem:[%s340] sm:$0xf]
        %v342 = vld [vmem:[%s340 + $0x4] sm:$0xf]
        %v343 = vld [vmem:[%s340 + $0x8] sm:$0xf]
        %v344 = vld [vmem:[%s340 + $0xc] sm:$0xf]
        %v345 = vld [vmem:[%s340 + $0x10] sm:$0xf]
        %v346 = vld [vmem:[%s340 + $0x14] sm:$0xf]
        %v347 = vld [vmem:[%s340 + $0x18] sm:$0xf]
        %v348 = vld [vmem:[%s340 + $0x1c] sm:$0xf]
        %v357 = vunpack.c.l.b16 %v341
        %v358 = vunpack.c.l.b16 %v342
        %v359 = vunpack.c.l.b16 %v343
        %v360 = vunpack.c.l.b16 %v344
        %v361 = vunpack.c.l.b16 %v345
        %v362 = vunpack.c.l.b16 %v346
        %v363 = vunpack.c.l.b16 %v347
        %v364 = vunpack.c.l.b16 %v348
        %v365 = vpack.c.b16 %v358, %v357
        %v366 = vpack.c.b16 %v360, %v359
        %v367 = vpack.c.b16 %v362, %v361
        %v368 = vpack.c.b16 %v364, %v363
        %v370 = vunpack.c.l.b16 %v213
        %v371 = vunpack.c.h.b16 %v213
        %v372 = vpack.c.b16 %v370, %v370
        %v373 = vpack.c.b16 %v371, %v371
        %374 = vrot.lane.b32.xlu0 %v372, 127
        %v375 = vpop.permute.xlu0 %374
        %376 = vrot.lane.b32.xlu0 %v373, 127
        %v377 = vpop.permute.xlu0 %376
        %vm378 = vcmask 1039360
        %v379 = vsel %vm378, %v375, %v377
        %v381 = vsel %vm250, %v365, 0
        %v384 = vsel %vm250, %v366, 0
        %v387 = vsel %vm250, %v367, 0
        %v390 = vsel %vm250, %v368, 0
        %v393 = vsel %vm263, %v379, 0
        %395 = vmatprep.subr.bf16.mxu0 0
        %396 = vmatpush1.bf16.msra.mxu0 %v393
        %397 = vmatprep.subr.bf16.mxu0 0
        %398 = vmatpush1.bf16.msra.mxu0 0
        %399 = vmatprep.subr.bf16.mxu0 0
        %400 = vmatpush1.bf16.msra.mxu0 0
        %401 = vmatprep.subr.bf16.mxu0 0
        %402 = vmatpush1.bf16.msra.mxu0 0
        %403 = vmatprep.subr.bf16.mxu0 0
        %404 = vmatpush1.bf16.msra.mxu0 0
        %405 = vmatprep.subr.bf16.mxu0 0
        %406 = vmatpush1.bf16.msra.mxu0 0
        %407 = vmatprep.subr.bf16.mxu0 0
        %408 = vmatpush1.bf16.msra.mxu0 0
        %409 = vmatprep.subr.bf16.mxu0 0
        %410 = vmatpush1.bf16.msra.mxu0 0
        %411 = vmatprep.subr.bf16.mxu0 0
        %412 = vmatpush1.bf16.msra.mxu0 0
        %413 = vmatprep.subr.bf16.mxu0 0
        %414 = vmatpush1.bf16.msra.mxu0 0
        %415 = vmatprep.subr.bf16.mxu0 0
        %416 = vmatpush1.bf16.msra.mxu0 0
        %417 = vmatprep.subr.bf16.mxu0 0
        %418 = vmatpush1.bf16.msra.mxu0 0
        %419 = vmatprep.subr.bf16.mxu0 0
        %420 = vmatpush1.bf16.msra.mxu0 0
        %421 = vmatprep.subr.bf16.mxu0 0
        %422 = vmatpush1.bf16.msra.mxu0 0
        %423 = vmatprep.subr.bf16.mxu0 0
        %424 = vmatpush1.bf16.msra.mxu0 0
        %425 = vmatprep.subr.bf16.mxu0 0
        %426 = vmatpush1.bf16.msra.mxu0 0
        %427 = vmatprep.mubr.bf16.mxu0 0
        %428 = vmatmul.mubr.bf16.gmra.mrb[0].mxu0 %v381
        %v429 = vpop.f32.mrb[0].mxu0
        %v430 = vadd.f32 0.0, %v429
        %v431 = vpop.f32.mrb[0].mxu0
        %v432 = vpop.f32.mrb[0].mxu0
        %v433 = vadd.f32 0.0, %v432
        %v434 = vpop.f32.mrb[0].mxu0
        %435 = vmatprep.mubr.bf16.mxu0 0
        %436 = vmatmul.mubr.bf16.gmra.mrb[0].mxu0 %v384
        %v437 = vpop.f32.mrb[0].mxu0
        %v438 = vadd.f32 0.0, %v437
        %v439 = vpop.f32.mrb[0].mxu0
        %v440 = vpop.f32.mrb[0].mxu0
        %v441 = vadd.f32 0.0, %v440
        %v442 = vpop.f32.mrb[0].mxu0
        %443 = vmatprep.mubr.bf16.mxu0 0
        %444 = vmatmul.mubr.bf16.gmra.mrb[0].mxu0 %v387
        %v445 = vpop.f32.mrb[0].mxu0
        %v446 = vadd.f32 0.0, %v445
        %v447 = vpop.f32.mrb[0].mxu0
        %v448 = vpop.f32.mrb[0].mxu0
        %v449 = vadd.f32 0.0, %v448
        %v450 = vpop.f32.mrb[0].mxu0
        %451 = vmatprep.mubr.bf16.mxu0 0
        %452 = vmatmul.mubr.bf16.gmra.mrb[0].mxu0 %v390
        %v453 = vpop.f32.mrb[0].mxu0
        %v454 = vadd.f32 0.0, %v453
        %v455 = vpop.f32.mrb[0].mxu0
        %v456 = vpop.f32.mrb[0].mxu0
        %v457 = vadd.f32 0.0, %v456
        %v458 = vpop.f32.mrb[0].mxu0
        %459 = vdwg.mxu0
        %v460 = vadd.f32 %v332, %v430
        %v461 = vadd.f32 %v333, %v433
        %v462 = vadd.f32 %v334, %v438
        %v463 = vadd.f32 %v335, %v441
        %v464 = vadd.f32 %v336, %v446
        %v465 = vadd.f32 %v337, %v449
        %v466 = vadd.f32 %v338, %v454
        %v467 = vadd.f32 %v339, %v457
        %s468 = scalar_lea.vmem %s199, 64
        %v469 = vld [vmem:[%s468] sm:$0xf]
        %v470 = vld [vmem:[%s468 + $0x4] sm:$0xf]
        %v471 = vld [vmem:[%s468 + $0x8] sm:$0xf]
        %v472 = vld [vmem:[%s468 + $0xc] sm:$0xf]
        %v473 = vld [vmem:[%s468 + $0x10] sm:$0xf]
        %v474 = vld [vmem:[%s468 + $0x14] sm:$0xf]
        %v475 = vld [vmem:[%s468 + $0x18] sm:$0xf]
        %v476 = vld [vmem:[%s468 + $0x1c] sm:$0xf]
        %v485 = vunpack.c.l.b16 %v469
        %v486 = vunpack.c.l.b16 %v470
        %v487 = vunpack.c.l.b16 %v471
        %v488 = vunpack.c.l.b16 %v472
        %v489 = vunpack.c.l.b16 %v473
        %v490 = vunpack.c.l.b16 %v474
        %v491 = vunpack.c.l.b16 %v475
        %v492 = vunpack.c.l.b16 %v476
        %v493 = vpack.c.b16 %v486, %v485
        %v494 = vpack.c.b16 %v488, %v487
        %v495 = vpack.c.b16 %v490, %v489
        %v496 = vpack.c.b16 %v492, %v491
        %497 = vrot.lane.b32.xlu0 %v372, 123
        %v498 = vpop.permute.xlu0 %497
        %499 = vrot.lane.b32.xlu0 %v373, 123
        %v500 = vpop.permute.xlu0 %499
        %vm501 = vcmask 1006592
        %v502 = vsel %vm501, %v498, %v500
        %v504 = vsel %vm250, %v493, 0
        %v507 = vsel %vm250, %v494, 0
        %v510 = vsel %vm250, %v495, 0
        %v513 = vsel %vm250, %v496, 0
        %v516 = vsel %vm263, %v502, 0
        %518 = vmatprep.subr.bf16.mxu0 0
        %519 = vmatpush1.bf16.msra.mxu0 %v516
        %520 = vmatprep.subr.bf16.mxu0 0
        %521 = vmatpush1.bf16.msra.mxu0 0
        %522 = vmatprep.subr.bf16.mxu0 0
        %523 = vmatpush1.bf16.msra.mxu0 0
        %524 = vmatprep.subr.bf16.mxu0 0
        %525 = vmatpush1.bf16.msra.mxu0 0
        %526 = vmatprep.subr.bf16.mxu0 0
        %527 = vmatpush1.bf16.msra.mxu0 0
        %528 = vmatprep.subr.bf16.mxu0 0
        %529 = vmatpush1.bf16.msra.mxu0 0
        %530 = vmatprep.subr.bf16.mxu0 0
        %531 = vmatpush1.bf16.msra.mxu0 0
        %532 = vmatprep.subr.bf16.mxu0 0
        %533 = vmatpush1.bf16.msra.mxu0 0
        %534 = vmatprep.subr.bf16.mxu0 0
        %535 = vmatpush1.bf16.msra.mxu0 0
        %536 = vmatprep.subr.bf16.mxu0 0
        %537 = vmatpush1.bf16.msra.mxu0 0
        %538 = vmatprep.subr.bf16.mxu0 0
        %539 = vmatpush1.bf16.msra.mxu0 0
        %540 = vmatprep.subr.bf16.mxu0 0
        %541 = vmatpush1.bf16.msra.mxu0 0
        %542 = vmatprep.subr.bf16.mxu0 0
        %543 = vmatpush1.bf16.msra.mxu0 0
        %544 = vmatprep.subr.bf16.mxu0 0
        %545 = vmatpush1.bf16.msra.mxu0 0
        %546 = vmatprep.subr.bf16.mxu0 0
        %547 = vmatpush1.bf16.msra.mxu0 0
        %548 = vmatprep.subr.bf16.mxu0 0
        %549 = vmatpush1.bf16.msra.mxu0 0
        %550 = vmatprep.mubr.bf16.mxu0 0
        %551 = vmatmul.mubr.bf16.gmra.mrb[0].mxu0 %v504
        %v552 = vpop.f32.mrb[0].mxu0
        %v553 = vadd.f32 0.0, %v552
        %v554 = vpop.f32.mrb[0].mxu0
        %v555 = vpop.f32.mrb[0].mxu0
        %v556 = vadd.f32 0.0, %v555
        %v557 = vpop.f32.mrb[0].mxu0
        %558 = vmatprep.mubr.bf16.mxu0 0
        %559 = vmatmul.mubr.bf16.gmra.mrb[0].mxu0 %v507
        %v560 = vpop.f32.mrb[0].mxu0
        %v561 = vadd.f32 0.0, %v560
        %v562 = vpop.f32.mrb[0].mxu0
        %v563 = vpop.f32.mrb[0].mxu0
        %v564 = vadd.f32 0.0, %v563
        %v565 = vpop.f32.mrb[0].mxu0
        %566 = vmatprep.mubr.bf16.mxu0 0
        %567 = vmatmul.mubr.bf16.gmra.mrb[0].mxu0 %v510
        %v568 = vpop.f32.mrb[0].mxu0
        %v569 = vadd.f32 0.0, %v568
        %v570 = vpop.f32.mrb[0].mxu0
        %v571 = vpop.f32.mrb[0].mxu0
        %v572 = vadd.f32 0.0, %v571
        %v573 = vpop.f32.mrb[0].mxu0
        %574 = vmatprep.mubr.bf16.mxu0 0
        %575 = vmatmul.mubr.bf16.gmra.mrb[0].mxu0 %v513
        %v576 = vpop.f32.mrb[0].mxu0
        %v577 = vadd.f32 0.0, %v576
        %v578 = vpop.f32.mrb[0].mxu0
        %v579 = vpop.f32.mrb[0].mxu0
        %v580 = vadd.f32 0.0, %v579
        %v581 = vpop.f32.mrb[0].mxu0
        %582 = vdwg.mxu0
        %v583 = vadd.f32 %v460, %v553
        %v584 = vadd.f32 %v461, %v556
        %v585 = vadd.f32 %v462, %v561
        %v586 = vadd.f32 %v463, %v564
        %v587 = vadd.f32 %v464, %v569
        %v588 = vadd.f32 %v465, %v572
        %v589 = vadd.f32 %v466, %v577
        %v590 = vadd.f32 %v467, %v580
        %s591 = scalar_lea.vmem %s199, 96
        %v592 = vld [vmem:[%s591] sm:$0xf]
        %v593 = vld [vmem:[%s591 + $0x4] sm:$0xf]
        %v594 = vld [vmem:[%s591 + $0x8] sm:$0xf]
        %v595 = vld [vmem:[%s591 + $0xc] sm:$0xf]
        %v596 = vld [vmem:[%s591 + $0x10] sm:$0xf]
        %v597 = vld [vmem:[%s591 + $0x14] sm:$0xf]
        %v598 = vld [vmem:[%s591 + $0x18] sm:$0xf]
        %v599 = vld [vmem:[%s591 + $0x1c] sm:$0xf]
        %v608 = vunpack.c.l.b16 %v592
        %v609 = vunpack.c.l.b16 %v593
        %v610 = vunpack.c.l.b16 %v594
        %v611 = vunpack.c.l.b16 %v595
        %v612 = vunpack.c.l.b16 %v596
        %v613 = vunpack.c.l.b16 %v597
        %v614 = vunpack.c.l.b16 %v598
        %v615 = vunpack.c.l.b16 %v599
        %v616 = vpack.c.b16 %v609, %v608
        %v617 = vpack.c.b16 %v611, %v610
        %v618 = vpack.c.b16 %v613, %v612
        %v619 = vpack.c.b16 %v615, %v614
        %620 = vrot.lane.b32.xlu0 %v372, 122
        %v621 = vpop.permute.xlu0 %620
        %622 = vrot.lane.b32.xlu0 %v373, 122
        %v623 = vpop.permute.xlu0 %622
        %vm624 = vcmask 998400
        %v625 = vsel %vm624, %v621, %v623
        %v627 = vsel %vm250, %v616, 0
        %v630 = vsel %vm250, %v617, 0
        %v633 = vsel %vm250, %v618, 0
        %v636 = vsel %vm250, %v619, 0
        %v639 = vsel %vm263, %v625, 0
        %641 = vmatprep.subr.bf16.mxu0 0
        %642 = vmatpush1.bf16.msra.mxu0 %v639
        %643 = vmatprep.subr.bf16.mxu0 0
        %644 = vmatpush1.bf16.msra.mxu0 0
        %645 = vmatprep.subr.bf16.mxu0 0
        %646 = vmatpush1.bf16.msra.mxu0 0
        %647 = vmatprep.subr.bf16.mxu0 0
        %648 = vmatpush1.bf16.msra.mxu0 0
        %649 = vmatprep.subr.bf16.mxu0 0
        %650 = vmatpush1.bf16.msra.mxu0 0
        %651 = vmatprep.subr.bf16.mxu0 0
        %652 = vmatpush1.bf16.msra.mxu0 0
        %653 = vmatprep.subr.bf16.mxu0 0
        %654 = vmatpush1.bf16.msra.mxu0 0
        %655 = vmatprep.subr.bf16.mxu0 0
        %656 = vmatpush1.bf16.msra.mxu0 0
        %657 = vmatprep.subr.bf16.mxu0 0
        %658 = vmatpush1.bf16.msra.mxu0 0
        %659 = vmatprep.subr.bf16.mxu0 0
        %660 = vmatpush1.bf16.msra.mxu0 0
        %661 = vmatprep.subr.bf16.mxu0 0
        %662 = vmatpush1.bf16.msra.mxu0 0
        %663 = vmatprep.subr.bf16.mxu0 0
        %664 = vmatpush1.bf16.msra.mxu0 0
        %665 = vmatprep.subr.bf16.mxu0 0
        %666 = vmatpush1.bf16.msra.mxu0 0
        %667 = vmatprep.subr.bf16.mxu0 0
        %668 = vmatpush1.bf16.msra.mxu0 0
        %669 = vmatprep.subr.bf16.mxu0 0
        %670 = vmatpush1.bf16.msra.mxu0 0
        %671 = vmatprep.subr.bf16.mxu0 0
        %672 = vmatpush1.bf16.msra.mxu0 0
        %673 = vmatprep.mubr.bf16.mxu0 0
        %674 = vmatmul.mubr.bf16.gmra.mrb[0].mxu0 %v627
        %v675 = vpop.f32.mrb[0].mxu0
        %v676 = vadd.f32 0.0, %v675
        %v677 = vpop.f32.mrb[0].mxu0
        %v678 = vpop.f32.mrb[0].mxu0
        %v679 = vadd.f32 0.0, %v678
        %v680 = vpop.f32.mrb[0].mxu0
        %681 = vmatprep.mubr.bf16.mxu0 0
        %682 = vmatmul.mubr.bf16.gmra.mrb[0].mxu0 %v630
        %v683 = vpop.f32.mrb[0].mxu0
        %v684 = vadd.f32 0.0, %v683
        %v685 = vpop.f32.mrb[0].mxu0
        %v686 = vpop.f32.mrb[0].mxu0
        %v687 = vadd.f32 0.0, %v686
        %v688 = vpop.f32.mrb[0].mxu0
        %689 = vmatprep.mubr.bf16.mxu0 0
        %690 = vmatmul.mubr.bf16.gmra.mrb[0].mxu0 %v633
        %v691 = vpop.f32.mrb[0].mxu0
        %v692 = vadd.f32 0.0, %v691
        %v693 = vpop.f32.mrb[0].mxu0
        %v694 = vpop.f32.mrb[0].mxu0
        %v695 = vadd.f32 0.0, %v694
        %v696 = vpop.f32.mrb[0].mxu0
        %697 = vmatprep.mubr.bf16.mxu0 0
        %698 = vmatmul.mubr.bf16.gmra.mrb[0].mxu0 %v636
        %v699 = vpop.f32.mrb[0].mxu0
        %v700 = vadd.f32 0.0, %v699
        %v701 = vpop.f32.mrb[0].mxu0
        %v702 = vpop.f32.mrb[0].mxu0
        %v703 = vadd.f32 0.0, %v702
        %v704 = vpop.f32.mrb[0].mxu0
        %705 = vdwg.mxu0
        %v706 = vadd.f32 %v583, %v676
        %v707 = vadd.f32 %v584, %v679
        %v708 = vadd.f32 %v585, %v684
        %v709 = vadd.f32 %v586, %v687
        %v710 = vadd.f32 %v587, %v692
        %v711 = vadd.f32 %v588, %v695
        %v712 = vadd.f32 %v589, %v700
        %v713 = vadd.f32 %v590, %v703
        %714 = vst [vmem:[#allocation2] sm:$0xff] %v706
        %715 = vst [vmem:[#allocation2 + $0x8] sm:$0xff] %v707
        %716 = vst [vmem:[#allocation2 + $0x10] sm:$0xff] %v708
        %717 = vst [vmem:[#allocation2 + $0x18] sm:$0xff] %v709
        %718 = vst [vmem:[#allocation2 + $0x20] sm:$0xff] %v710
        %719 = vst [vmem:[#allocation2 + $0x28] sm:$0xff] %v711
        %720 = vst [vmem:[#allocation2 + $0x30] sm:$0xff] %v712
        %721 = vst [vmem:[#allocation2 + $0x38] sm:$0xff] %v713
        %p722 = scmp.eq.s32.totalorder %s20, 1
        // Predicated region
        $region33: #{hourglass_forward.20} parent=27 // pred_check
          %p723 = pneg %p722
        $region34: #{hourglass_forward.20} parent=27 // pred_check_branch
          %725 = sbr.rel (%p723) target = $region36
        $region35: #{hourglass_forward.20} parent=27 // pred_region
          %v726 = vld [vmem:[#allocation2] sm:$0xff]
          %v727 = vld [vmem:[#allocation2 + $0x8] sm:$0xff]
          %v728 = vld [vmem:[#allocation2 + $0x10] sm:$0xff]
          %v729 = vld [vmem:[#allocation2 + $0x18] sm:$0xff]
          %v730 = vld [vmem:[#allocation2 + $0x20] sm:$0xff]
          %v731 = vld [vmem:[#allocation2 + $0x28] sm:$0xff]
          %v732 = vld [vmem:[#allocation2 + $0x30] sm:$0xff]
          %v733 = vld [vmem:[#allocation2 + $0x38] sm:$0xff]
          %v734 = vpack.c.bf16 %v727, %v726
          %v735 = vpack.c.bf16 %v729, %v728
          %v736 = vpack.c.bf16 %v731, %v730
          %v737 = vpack.c.bf16 %v733, %v732
          %v742 = vunpack.c.l.b16 %v734
          %v743 = vunpack.c.h.b16 %v734
          %v744 = vunpack.c.l.b16 %v735
          %v745 = vunpack.c.h.b16 %v735
          %v746 = vunpack.c.l.b16 %v736
          %v747 = vunpack.c.h.b16 %v736
          %v748 = vunpack.c.l.b16 %v737
          %v749 = vunpack.c.h.b16 %v737
          %v750 = vpack.c.b16 %v742, %v742
          %v751 = vpack.c.b16 %v743, %v743
          %v752 = vpack.c.b16 %v744, %v744
          %v753 = vpack.c.b16 %v745, %v745
          %v754 = vpack.c.b16 %v746, %v746
          %v755 = vpack.c.b16 %v747, %v747
          %v756 = vpack.c.b16 %v748, %v748
          %v757 = vpack.c.b16 %v749, %v749
          %766 = vst [vmem:[%s183] sm:$0xf] %v750
          %767 = vst [vmem:[%s183 + $0x4] sm:$0xf] %v751
          %768 = vst [vmem:[%s183 + $0x8] sm:$0xf] %v752
          %769 = vst [vmem:[%s183 + $0xc] sm:$0xf] %v753
          %770 = vst [vmem:[%s183 + $0x10] sm:$0xf] %v754
          %771 = vst [vmem:[%s183 + $0x14] sm:$0xf] %v755
          %772 = vst [vmem:[%s183 + $0x18] sm:$0xf] %v756
          %773 = vst [vmem:[%s183 + $0x1c] sm:$0xf] %v757
        $region36: #{hourglass_forward.20} parent=27 // pred_fallthru
          _
        %s774 = sand.u32 %s98, 1
        %s775 = sand.u32 %s98, 1
        %s776 = smul.addr %s775, 32
        %s777 = scalar_lea.vmem [#allocation3], %s776
        // Predicated region
        $region37: #{hourglass_forward.20} parent=27 // pred_check
          %p778 = pneg %p108
        $region38: #{hourglass_forward.20} parent=27 // pred_check_branch
          %780 = sbr.rel (%p778) target = $region40
        $region39: #{hourglass_forward.20} parent=27 // pred_region
          %s781 = smul.addr %s18, 16
          %s782 = sadd.s32 %s19, %s781
          %s783 = smul.addr %s782, 4
          %s784 = scalar_lea.vmem %s2, %s783
          // Predicated region
          $region41: #{hourglass_forward.20} parent=39 // pred_check
            _
          $region42: #{hourglass_forward.20} parent=39 // pred_check_branch
            %786 = sbr.rel (0) target = $region44
          $region43: #{hourglass_forward.20} parent=39 // pred_region
            // Predicated region
            $region45: #{hourglass_forward.20} parent=43 // pred_check
              _
            $region46: #{hourglass_forward.20} parent=43 // pred_check_branch
              %788 = sbr.rel target = $region48
            $region47: #{hourglass_forward.20} parent=43 // pred_region
              // Predicated region
              $region60: #{hourglass_forward.20} parent=47 // pred_check
                _
              $region61: #{hourglass_forward.20} parent=47 // pred_check_branch
                %817 = sbr.rel (0) target = $region63
              $region62: #{hourglass_forward.20} parent=47 // pred_region
                loop: start=0, step=1, limit=1
                $region64: #{hourglass_forward.20} parent=62 // loop_pre_header
                  _
                $region65: #{hourglass_forward.20} parent=62 // loop_header
                  %s819 = sphi 0, %s823
                  %p820 = scmp.ge.s32.totalorder %s819, 1
                  %s824 = sphi %s777, %s777
                  %s825 = sphi %s784, %s784
                $region66: #{hourglass_forward.20} parent=62 // loop_header_branch
                  %822 = sbr.rel (%p820) target = $region70
                $region67: #{hourglass_forward.20} parent=62 // loop_body
                  _
                $region68: #{hourglass_forward.20} parent=62 // loop_footer
                  %s823 = sadd.s32 1, %s819
                $region69: #{hourglass_forward.20} parent=62 // loop_footer_branch
                  %818 = sbr.rel target = $region65
                $region70: #{hourglass_forward.20} parent=62 // loop_exit
                  _
                loop: start=0, step=1, limit=1
                $region71: #{hourglass_forward.20} parent=62 // loop_pre_header
                  _
                $region72: #{hourglass_forward.20} parent=62 // loop_header
                  %s828 = sphi 0, %s832
                  %p829 = scmp.ge.s32.totalorder %s828, 1
                  %s833 = sphi %s777, %s777
                  %s834 = sphi %s784, %s784
                $region73: #{hourglass_forward.20} parent=62 // loop_header_branch
                  %831 = sbr.rel (%p829) target = $region77
                $region74: #{hourglass_forward.20} parent=62 // loop_body
                  %v835 = vld [vmem:[%s833] sm:$0xf]
                  %836 = vst [vmem:[%s834] sm:$0xf] %v835
                  %v837 = vld [vmem:[%s833 + $0x4] sm:$0xf]
                  %838 = vst [vmem:[%s834 + $0x8] sm:$0xf] %v837
                  %v839 = vld [vmem:[%s833 + $0x8] sm:$0xf]
                  %840 = vst [vmem:[%s834 + $0x10] sm:$0xf] %v839
                  %v841 = vld [vmem:[%s833 + $0xc] sm:$0xf]
                  %842 = vst [vmem:[%s834 + $0x18] sm:$0xf] %v841
                  %v843 = vld [vmem:[%s833 + $0x10] sm:$0xf]
                  %844 = vst [vmem:[%s834 + $0x20] sm:$0xf] %v843
                  %v845 = vld [vmem:[%s833 + $0x14] sm:$0xf]
                  %846 = vst [vmem:[%s834 + $0x28] sm:$0xf] %v845
                  %v847 = vld [vmem:[%s833 + $0x18] sm:$0xf]
                  %848 = vst [vmem:[%s834 + $0x30] sm:$0xf] %v847
                  %v849 = vld [vmem:[%s833 + $0x1c] sm:$0xf]
                  %850 = vst [vmem:[%s834 + $0x38] sm:$0xf] %v849
                $region75: #{hourglass_forward.20} parent=62 // loop_footer
                  %s832 = sadd.s32 1, %s828
                $region76: #{hourglass_forward.20} parent=62 // loop_footer_branch
                  %827 = sbr.rel target = $region72
                $region77: #{hourglass_forward.20} parent=62 // loop_exit
                  _
              $region63: #{hourglass_forward.20} parent=47 // pred_fallthru
                _
            $region48: #{hourglass_forward.20} parent=43 // pred_fallthru
              _
            // Predicated region
            $region49: #{hourglass_forward.20} parent=43 // pred_check
              _
            $region50: #{hourglass_forward.20} parent=43 // pred_check_branch
              %790 = sbr.rel (0) target = $region52
            $region51: #{hourglass_forward.20} parent=43 // pred_region
              loop: start=0, step=1, limit=1
              $region53: #{hourglass_forward.20} parent=51 // loop_pre_header
                _
              $region54: #{hourglass_forward.20} parent=51 // loop_header
                %s793 = sphi 0, %s797
                %p794 = scmp.ge.s32.totalorder %s793, 1
                %s798 = sphi %s777, %s777
                %s799 = sphi %s784, %s784
              $region55: #{hourglass_forward.20} parent=51 // loop_header_branch
                %796 = sbr.rel (%p794) target = $region59
              $region56: #{hourglass_forward.20} parent=51 // loop_body
                %v800 = vld [vmem:[%s798] sm:$0xf]
                %801 = vst [vmem:[%s799] sm:$0xf] %v800
                %v802 = vld [vmem:[%s798 + $0x4] sm:$0xf]
                %803 = vst [vmem:[%s799 + $0x8] sm:$0xf] %v802
                %v804 = vld [vmem:[%s798 + $0x8] sm:$0xf]
                %805 = vst [vmem:[%s799 + $0x10] sm:$0xf] %v804
                %v806 = vld [vmem:[%s798 + $0xc] sm:$0xf]
                %807 = vst [vmem:[%s799 + $0x18] sm:$0xf] %v806
                %v808 = vld [vmem:[%s798 + $0x10] sm:$0xf]
                %809 = vst [vmem:[%s799 + $0x20] sm:$0xf] %v808
                %v810 = vld [vmem:[%s798 + $0x14] sm:$0xf]
                %811 = vst [vmem:[%s799 + $0x28] sm:$0xf] %v810
                %v812 = vld [vmem:[%s798 + $0x18] sm:$0xf]
                %813 = vst [vmem:[%s799 + $0x30] sm:$0xf] %v812
                %v814 = vld [vmem:[%s798 + $0x1c] sm:$0xf]
                %815 = vst [vmem:[%s799 + $0x38] sm:$0xf] %v814
              $region57: #{hourglass_forward.20} parent=51 // loop_footer
                %s797 = sadd.s32 1, %s793
              $region58: #{hourglass_forward.20} parent=51 // loop_footer_branch
                %792 = sbr.rel target = $region54
              $region59: #{hourglass_forward.20} parent=51 // loop_exit
                _
            $region52: #{hourglass_forward.20} parent=43 // pred_fallthru
              _
          $region44: #{hourglass_forward.20} parent=39 // pred_fallthru
            _
          %851 = vnop
        $region40: #{hourglass_forward.20} parent=27 // pred_fallthru
          _
      $region28: #{hourglass_forward.20} parent=5 // pred_fallthru
        _
      %p852 = scmp.le.s32.totalorder 2, %s8
      // Predicated region
      $region78: #{hourglass_forward.20} parent=5 // pred_check
        %p853 = pneg %p852
      $region79: #{hourglass_forward.20} parent=5 // pred_check_branch
        %855 = sbr.rel (%p853) target = $region81
      $region80: #{hourglass_forward.20} parent=5 // pred_region
        %s856 = ssub.s32 %s8, 2
        // Predicated region
        $region82: #{hourglass_forward.20} parent=80 // pred_check
          %p857 = pneg %p114
        $region83: #{hourglass_forward.20} parent=80 // pred_check_branch
          %859 = sbr.rel (%p857) target = $region85
        $region84: #{hourglass_forward.20} parent=80 // pred_region
          %s860 = sand.u32 %s99, 1
          %s861 = sand.u32 %s99, 1
          %s862 = smul.addr %s861, 32
          %s863 = scalar_lea.vmem [#allocation3], %s862
        $region85: #{hourglass_forward.20} parent=80 // pred_fallthru
          _
      $region81: #{hourglass_forward.20} parent=5 // pred_fallthru
        _
    $region6: #{hourglass_forward.20} parent=1 // loop_footer
      %s12 = sadd.s32 1, %s8
    $region7: #{hourglass_forward.20} parent=1 // loop_footer_branch
      %7 = sbr.rel target = $region3
    $region8: #{hourglass_forward.20} parent=1 // loop_exit
      _

// kernel: hourglass_forward.21
$region0: #{hourglass_forward.21}
  #allocation0 [shape = 'u32[]', space=smem, size = 0x4, offset = 0x4, fixed_abs, tag = 'smem constant byte address 0x4 - core index']
  #allocation1 [shape = 'u32[144,128]{1,0:T(1,128)}', space=vmem, size = 0x12000, scoped, tag = 'internal scratch']
  %s0 = inlined_call_operand.vmem [shape: bf16[2,2,8,128], index: 0, kind: input, shape index: {}]
  %s1 = inlined_call_operand.vmem [shape: f32[2,8,1], index: 1, kind: input, shape index: {}]
  %s2 = inlined_call_operand.vmem [shape: f32[2,8,1], index: 2, kind: input, shape index: {}]
  %s3 = inlined_call_operand.vmem [shape: f32[2,2,8,128], index: 3, kind: input, shape index: {}]
  %s4 = inlined_call_operand.vmem [shape: f32[2,2,8,128], index: 4, kind: output, shape index: {}]
  %s5 = sld [smem:[#allocation0]]
  $region49: #{hourglass_forward.21} parent=0
    _
  %s7 = ssub.s32 1, %s5
  %s8 = scalar_select 0, %s7, %s5
  loop: start=0, step=1, limit=6
  $region2: #{hourglass_forward.21} parent=0 // loop_pre_header
    _
  $region3: #{hourglass_forward.21} parent=0 // loop_header
    %s10 = sphi 0, %s14
    %p11 = scmp.ge.s32.totalorder %s10, 6
    %s17 = sphi 0, %s29
    %s18 = sphi 0, %s25
    %s19 = sphi 0, %s17
    %s20 = sphi 0, %s18
    %s21 = sphi 0, %s19
    %s22 = sphi 0, %s20
    %s34 = sphi 0, %s36
    %s37 = sphi 0, %s34
    %s38 = sphi 0, %s37
    %s54 = sphi 0, %s38
    %s60 = sphi 0, %s62
    %s63 = sphi 0, %s60
    %s64 = sphi 0, %s63
    %s80 = sphi 0, %s64
    %s86 = sphi 0, %s88
    %s89 = sphi 0, %s86
    %s90 = sphi 0, %s89
    %s106 = sphi 0, %s90
    %s114 = sphi 0, %s116
    %s117 = sphi 0, %s114
    %s118 = sphi 0, %s117
    %s134 = sphi 0, %s118
    %s142 = sphi 0, %s144
    %s145 = sphi 0, %s142
    %s146 = sphi 0, %s145
    %s162 = sphi 0, %s146
  $region4: #{hourglass_forward.21} parent=0 // loop_header_branch
    %13 = sbr.rel (%p11) target = $region8
  $region5: #{hourglass_forward.21} parent=0 // loop_body
    %s15 = ssub.s32 %s10, 1
    %s16 = ssub.s32 %s10, 2
    %s23 = sadd.s32 1, %s18
    %p24 = scmp.ge.s32.totalorder %s23, 2
    %s25 = scalar_select %p24, 0, %s23
    %s26 = sadd.s32 1, %s17
    %s27 = scalar_select %p24, %s26, %s17
    %p28 = scmp.ge.s32.totalorder %s27, 2
    %s29 = scalar_select %p28, 0, %s27
    %s30 = ssub.s32 %s17, %s29
    %s31 = ssub.s32 %s18, %s25
    %s32 = sor.u32 %s30, %s31
    %p33 = scmp.eq.s32.totalorder %s32, 0
    %s35 = sadd.s32 %s34, 1
    %s36 = scalar_select %p33, %s34, %s35
    %p39 = pneg %p33
    %p40 = scmp.eq.s32.totalorder %s10, 3
    %p41 = por %p39, %p40
    %p42 = scmp.ne.s32.totalorder %s34, %s37
    %p43 = scmp.eq.s32.totalorder %s10, 0
    %p44 = por %p42, %p43
    %p45 = scmp.ne.s32.totalorder %s34, %s37
    %p46 = scmp.eq.s32.totalorder %s15, 3
    %p47 = por %p45, %p46
    %p48 = scmp.ne.s32.totalorder %s37, %s38
    %p49 = scmp.eq.s32.totalorder %s15, 0
    %p50 = por %p48, %p49
    %p51 = scmp.ne.s32.totalorder %s37, %s38
    %p52 = scmp.eq.s32.totalorder %s16, 3
    %p53 = por %p51, %p52
    %p55 = scmp.ne.s32.totalorder %s38, %s54
    %p56 = scmp.eq.s32.totalorder %s16, 0
    %p57 = por %p55, %p56
    %s58 = ssub.s32 %s18, %s25
    %p59 = scmp.eq.s32.totalorder %s58, 0
    %s61 = sadd.s32 %s60, 1
    %s62 = scalar_select %p59, %s60, %s61
    %p65 = pneg %p59
    %p66 = scmp.eq.s32.totalorder %s10, 3
    %p67 = por %p65, %p66
    %p68 = scmp.ne.s32.totalorder %s60, %s63
    %p69 = scmp.eq.s32.totalorder %s10, 0
    %p70 = por %p68, %p69
    %p71 = scmp.ne.s32.totalorder %s60, %s63
    %p72 = scmp.eq.s32.totalorder %s15, 3
    %p73 = por %p71, %p72
    %p74 = scmp.ne.s32.totalorder %s63, %s64
    %p75 = scmp.eq.s32.totalorder %s15, 0
    %p76 = por %p74, %p75
    %p77 = scmp.ne.s32.totalorder %s63, %s64
    %p78 = scmp.eq.s32.totalorder %s16, 3
    %p79 = por %p77, %p78
    %p81 = scmp.ne.s32.totalorder %s64, %s80
    %p82 = scmp.eq.s32.totalorder %s16, 0
    %p83 = por %p81, %p82
    %s84 = ssub.s32 %s18, %s25
    %p85 = scmp.eq.s32.totalorder %s84, 0
    %s87 = sadd.s32 %s86, 1
    %s88 = scalar_select %p85, %s86, %s87
    %p91 = pneg %p85
    %p92 = scmp.eq.s32.totalorder %s10, 3
    %p93 = por %p91, %p92
    %p94 = scmp.ne.s32.totalorder %s86, %s89
    %p95 = scmp.eq.s32.totalorder %s10, 0
    %p96 = por %p94, %p95
    %p97 = scmp.ne.s32.totalorder %s86, %s89
    %p98 = scmp.eq.s32.totalorder %s15, 3
    %p99 = por %p97, %p98
    %p100 = scmp.ne.s32.totalorder %s89, %s90
    %p101 = scmp.eq.s32.totalorder %s15, 0
    %p102 = por %p100, %p101
    %p103 = scmp.ne.s32.totalorder %s89, %s90
    %p104 = scmp.eq.s32.totalorder %s16, 3
    %p105 = por %p103, %p104
    %p107 = scmp.ne.s32.totalorder %s90, %s106
    %p108 = scmp.eq.s32.totalorder %s16, 0
    %p109 = por %p107, %p108
    %s110 = ssub.s32 %s17, %s29
    %s111 = ssub.s32 %s18, %s25
    %s112 = sor.u32 %s110, %s111
    %p113 = scmp.eq.s32.totalorder %s112, 0
    %s115 = sadd.s32 %s114, 1
    %s116 = scalar_select %p113, %s114, %s115
    %p119 = pneg %p113
    %p120 = scmp.eq.s32.totalorder %s10, 3
    %p121 = por %p119, %p120
    %p122 = scmp.ne.s32.totalorder %s114, %s117
    %p123 = scmp.eq.s32.totalorder %s10, 0
    %p124 = por %p122, %p123
    %p125 = scmp.ne.s32.totalorder %s114, %s117
    %p126 = scmp.eq.s32.totalorder %s15, 3
    %p127 = por %p125, %p126
    %p128 = scmp.ne.s32.totalorder %s117, %s118
    %p129 = scmp.eq.s32.totalorder %s15, 0
    %p130 = por %p128, %p129
    %p131 = scmp.ne.s32.totalorder %s117, %s118
    %p132 = scmp.eq.s32.totalorder %s16, 3
    %p133 = por %p131, %p132
    %p135 = scmp.ne.s32.totalorder %s118, %s134
    %p136 = scmp.eq.s32.totalorder %s16, 0
    %p137 = por %p135, %p136
    %s138 = ssub.s32 %s17, %s29
    %s139 = ssub.s32 %s18, %s25
    %s140 = sor.u32 %s138, %s139
    %p141 = scmp.eq.s32.totalorder %s140, 0
    %s143 = sadd.s32 %s142, 1
    %s144 = scalar_select %p141, %s142, %s143
    %p147 = pneg %p141
    %p148 = scmp.eq.s32.totalorder %s10, 3
    %p149 = por %p147, %p148
    %p150 = scmp.ne.s32.totalorder %s142, %s145
    %p151 = scmp.eq.s32.totalorder %s10, 0
    %p152 = por %p150, %p151
    %p153 = scmp.ne.s32.totalorder %s142, %s145
    %p154 = scmp.eq.s32.totalorder %s15, 3
    %p155 = por %p153, %p154
    %p156 = scmp.ne.s32.totalorder %s145, %s146
    %p157 = scmp.eq.s32.totalorder %s15, 0
    %p158 = por %p156, %p157
    %p159 = scmp.ne.s32.totalorder %s145, %s146
    %p160 = scmp.eq.s32.totalorder %s16, 3
    %p161 = por %p159, %p160
    %p163 = scmp.ne.s32.totalorder %s146, %s162
    %p164 = scmp.eq.s32.totalorder %s16, 0
    %p165 = por %p163, %p164
    %p166 = scmp.le.s32.totalorder 1, %s10
    %p167 = scmp.lt.s32.totalorder %s10, 5
    %p168 = pnand %p166, %p167
    %p169 = pneg %p168
    // Predicated region
    $region9: #{hourglass_forward.21} parent=5 // pred_check
      _
    $region10: #{hourglass_forward.21} parent=5 // pred_check_branch
      %171 = sbr.rel (%p168) target = $region12
    $region11: #{hourglass_forward.21} parent=5 // pred_region
      %s172 = ssub.s32 %s10, 1
    $region12: #{hourglass_forward.21} parent=5 // pred_fallthru
      _
    %p173 = scmp.lt.s32.totalorder %s10, 4
    // Predicated region
    $region13: #{hourglass_forward.21} parent=5 // pred_check
      %p174 = pneg %p173
    $region14: #{hourglass_forward.21} parent=5 // pred_check_branch
      %176 = sbr.rel (%p174) target = $region16
    $region15: #{hourglass_forward.21} parent=5 // pred_region
      // Predicated region
      $region17: #{hourglass_forward.21} parent=15 // pred_check
        %p177 = pneg %p44
      $region18: #{hourglass_forward.21} parent=15 // pred_check_branch
        %179 = sbr.rel (%p177) target = $region20
      $region19: #{hourglass_forward.21} parent=15 // pred_region
        %p180 = scmp.lt.s32.totalorder %s17, 1
        %s181 = scalar_select %p180, %s17, 1
        %p182 = scmp.lt.s32.totalorder %s18, 1
        %s183 = scalar_select %p182, %s18, 1
        %s184 = smul.addr %s181, 2
        %s185 = sadd.s32 %s183, %s184
        %s186 = smul.addr %s185, 4
        %s187 = scalar_lea.vmem %s0, %s186
      $region20: #{hourglass_forward.21} parent=15 // pred_fallthru
        _
      // Predicated region
      $region21: #{hourglass_forward.21} parent=15 // pred_check
        %p188 = pneg %p70
      $region22: #{hourglass_forward.21} parent=15 // pred_check_branch
        %190 = sbr.rel (%p188) target = $region24
      $region23: #{hourglass_forward.21} parent=15 // pred_region
        %p191 = scmp.lt.s32.totalorder %s18, 1
        %s192 = scalar_select %p191, %s18, 1
        %s193 = smul.addr %s192, 8
        %s194 = scalar_lea.vmem %s1, %s193
      $region24: #{hourglass_forward.21} parent=15 // pred_fallthru
        _
      // Predicated region
      $region25: #{hourglass_forward.21} parent=15 // pred_check
        %p195 = pneg %p96
      $region26: #{hourglass_forward.21} parent=15 // pred_check_branch
        %197 = sbr.rel (%p195) target = $region28
      $region27: #{hourglass_forward.21} parent=15 // pred_region
        %p198 = scmp.lt.s32.totalorder %s18, 1
        %s199 = scalar_select %p198, %s18, 1
        %s200 = smul.addr %s199, 8
        %s201 = scalar_lea.vmem %s2, %s200
      $region28: #{hourglass_forward.21} parent=15 // pred_fallthru
        _
      // Predicated region
      $region29: #{hourglass_forward.21} parent=15 // pred_check
        %p202 = pneg %p124
      $region30: #{hourglass_forward.21} parent=15 // pred_check_branch
        %204 = sbr.rel (%p202) target = $region32
      $region31: #{hourglass_forward.21} parent=15 // pred_region
        %p205 = scmp.lt.s32.totalorder %s17, 1
        %s206 = scalar_select %p205, %s17, 1
        %p207 = scmp.lt.s32.totalorder %s18, 1
        %s208 = scalar_select %p207, %s18, 1
        %s209 = smul.addr %s206, 2
        %s210 = sadd.s32 %s208, %s209
        %s211 = smul.addr %s210, 8
        %s212 = scalar_lea.vmem %s3, %s211
      $region32: #{hourglass_forward.21} parent=15 // pred_fallthru
        _
    $region16: #{hourglass_forward.21} parent=5 // pred_fallthru
      _
    %p213 = scmp.le.s32.totalorder 1, %s10
    %p214 = scmp.lt.s32.totalorder %s10, 5
    %p215 = pnand %p213, %p214
    %p216 = pneg %p215
    // Predicated region
    $region33: #{hourglass_forward.21} parent=5 // pred_check
      _
    $region34: #{hourglass_forward.21} parent=5 // pred_check_branch
      %218 = sbr.rel (%p215) target = $region36
    $region35: #{hourglass_forward.21} parent=5 // pred_region
      %s219 = ssub.s32 %s10, 1
      %p220 = scmp.lt.s32.totalorder %s19, 1
      %s221 = scalar_select %p220, %s19, 1
      %p222 = scmp.lt.s32.totalorder %s20, 1
      %s223 = scalar_select %p222, %s20, 1
      %s224 = smul.addr %s221, 2
      %s225 = sadd.s32 %s223, %s224
      %s226 = smul.addr %s225, 4
      %s227 = scalar_lea.vmem %s0, %s226
      %p228 = pneg %p50
      %p229 = pneg %p47
      %p230 = scmp.lt.s32.totalorder %s20, 1
      %s231 = scalar_select %p230, %s20, 1
      %s232 = smul.addr %s231, 8
      %s233 = scalar_lea.vmem %s1, %s232
      %p234 = pneg %p76
      %p235 = pneg %p73
      %p236 = scmp.lt.s32.totalorder %s20, 1
      %s237 = scalar_select %p236, %s20, 1
      %s238 = smul.addr %s237, 8
      %s239 = scalar_lea.vmem %s2, %s238
      %p240 = pneg %p102
      %p241 = pneg %p99
      %p242 = scmp.lt.s32.totalorder %s19, 1
      %s243 = scalar_select %p242, %s19, 1
      %p244 = scmp.lt.s32.totalorder %s20, 1
      %s245 = scalar_select %p244, %s20, 1
      %s246 = smul.addr %s243, 2
      %s247 = sadd.s32 %s245, %s246
      %s248 = smul.addr %s247, 8
      %s249 = scalar_lea.vmem %s3, %s248
      %p250 = pneg %p130
      %p251 = pneg %p127
      %p252 = pneg %p158
      %p253 = pneg %p155
      %p254 = scmp.lt.s32.totalorder %s19, 1
      %s255 = scalar_select %p254, %s19, 1
      %p256 = scmp.lt.s32.totalorder %s20, 1
      %s257 = scalar_select %p256, %s20, 1
      %s258 = smul.addr %s255, 2
      %s259 = sadd.s32 %s257, %s258
      %s260 = smul.addr %s259, 8
      %s261 = scalar_lea.vmem %s4, %s260
      %p262 = scmp.lt.s32.totalorder %s19, 1
      %s263 = scalar_select %p262, %s19, 1
      %p264 = scmp.lt.s32.totalorder %s20, 1
      %s265 = scalar_select %p264, %s20, 1
      %s266 = smul.addr %s263, 2
      %s267 = sadd.s32 %s265, %s266
      %s268 = smul.addr %s267, 4
      %s269 = scalar_lea.vmem %s0, %s268
      %p270 = scmp.lt.s32.totalorder %s20, 1
      %s271 = scalar_select %p270, %s20, 1
      %s272 = smul.addr %s271, 8
      %s273 = scalar_lea.vmem %s1, %s272
      %p274 = scmp.lt.s32.totalorder %s20, 1
      %s275 = scalar_select %p274, %s20, 1
      %s276 = smul.addr %s275, 8
      %s277 = scalar_lea.vmem %s2, %s276
      %p278 = scmp.lt.s32.totalorder %s19, 1
      %s279 = scalar_select %p278, %s19, 1
      %p280 = scmp.lt.s32.totalorder %s20, 1
      %s281 = scalar_select %p280, %s20, 1
      %s282 = smul.addr %s279, 2
      %s283 = sadd.s32 %s281, %s282
      %s284 = smul.addr %s283, 8
      %s285 = scalar_lea.vmem %s3, %s284
      %p286 = scmp.lt.s32.totalorder %s19, 1
      %s287 = scalar_select %p286, %s19, 1
      %p288 = scmp.lt.s32.totalorder %s20, 1
      %s289 = scalar_select %p288, %s20, 1
      %s290 = smul.addr %s287, 2
      %s291 = sadd.s32 %s289, %s290
      %s292 = smul.addr %s291, 8
      %s293 = scalar_lea.vmem %s4, %s292
      %v294 = vld [vmem:[%s269] sm:$0xf]
      %v295 = vunpack.c.l.bf16 %v294
      %296 = vadd.xlane.f32.xlu0 %v295
      %v297 = vpop.xlane.xlu0 %296
      %v298 = vrot.slane %v297, 4
      %v299 = vadd.f32 %v297, %v298
      %v300 = vrot.slane %v299, 2
      %v301 = vadd.f32 %v299, %v300
      %v302 = vrot.slane %v301, 1
      %v303 = vadd.f32 %v301, %v302
      %s304 = vtos %v303
      %v305 = vstv %s304
      %v306 = vmul.f32 %v295, %v295
      %307 = vadd.xlane.f32.xlu0 %v306
      %v308 = vpop.xlane.xlu0 %307
      %v309 = vrot.slane %v308, 4
      %v310 = vadd.f32 %v308, %v309
      %v311 = vrot.slane %v310, 2
      %v312 = vadd.f32 %v310, %v311
      %v313 = vrot.slane %v312, 1
      %v314 = vadd.f32 %v312, %v313
      %s315 = vtos %v314
      %v316 = vstv %s315
      %v317 = vrcp.pop 1024.0
      %v318 = vmul.f32 %v305, %v317
      %v319 = vmul.f32 %v316, %v317
      %v320 = vmul.f32 %v318, %v318
      %v321 = vsub.f32 %v319, %v320
      %v322 = vmax.f32 %v321, 0.0
      %v323 = vadd.f32 %v322, 1e-05
      %v324 = vrsqrt.pop %v323
      %v325 = vsub.f32 %v295, %v318
      %v326 = vmul.f32 %v325, %v324
      %v327 = vld [vmem:[%s273] sm:$0xff]
      %329 = vset.pattern.permute.xlu0 0
      %330 = vperm.xlu0 %329, %v327
      %v331 = vpop.permute.xlu0 %330
      %v333 = vmul.f32 %v326, %v331
      %v334 = vld [vmem:[%s277] sm:$0xff]
      %336 = vset.pattern.permute.xlu0 0
      %337 = vperm.xlu0 %336, %v334
      %v338 = vpop.permute.xlu0 %337
      %v340 = vadd.f32 %v333, %v338
      %v341 = vld [vmem:[%s285] sm:$0xff]
      %v342 = vadd.f32 %v340, %v341
      %v343 = vmax.f32 %v342, 0.0
      %344 = vst [vmem:[%s293] sm:$0xff] %v343
      %p345 = scmp.lt.s32.totalorder %s19, 1
      %s346 = scalar_select %p345, %s19, 1
      %p347 = scmp.lt.s32.totalorder %s20, 1
      %s348 = scalar_select %p347, %s20, 1
      %s349 = smul.addr %s346, 2
      %s350 = sadd.s32 %s348, %s349
      %s351 = smul.addr %s350, 8
      %s352 = scalar_lea.vmem %s4, %s351
      // Predicated region
      $region37: #{hourglass_forward.21} parent=35 // pred_check
        %p353 = pneg %p155
      $region38: #{hourglass_forward.21} parent=35 // pred_check_branch
        %355 = sbr.rel (%p353) target = $region40
      $region39: #{hourglass_forward.21} parent=35 // pred_region
        _
      $region40: #{hourglass_forward.21} parent=35 // pred_fallthru
        _
    $region36: #{hourglass_forward.21} parent=5 // pred_fallthru
      _
    %p356 = scmp.le.s32.totalorder 2, %s10
    // Predicated region
    $region41: #{hourglass_forward.21} parent=5 // pred_check
      %p357 = pneg %p356
    $region42: #{hourglass_forward.21} parent=5 // pred_check_branch
      %359 = sbr.rel (%p357) target = $region44
    $region43: #{hourglass_forward.21} parent=5 // pred_region
      %s360 = ssub.s32 %s10, 2
      // Predicated region
      $region45: #{hourglass_forward.21} parent=43 // pred_check
        %p361 = pneg %p161
      $region46: #{hourglass_forward.21} parent=43 // pred_check_branch
        %363 = sbr.rel (%p361) target = $region48
      $region47: #{hourglass_forward.21} parent=43 // pred_region
        %p364 = scmp.lt.s32.totalorder %s21, 1
        %s365 = scalar_select %p364, %s21, 1
        %p366 = scmp.lt.s32.totalorder %s22, 1
        %s367 = scalar_select %p366, %s22, 1
        %s368 = smul.addr %s365, 2
        %s369 = sadd.s32 %s367, %s368
        %s370 = smul.addr %s369, 8
        %s371 = scalar_lea.vmem %s4, %s370
      $region48: #{hourglass_forward.21} parent=43 // pred_fallthru
        _
    $region44: #{hourglass_forward.21} parent=5 // pred_fallthru
      _
  $region6: #{hourglass_forward.21} parent=0 // loop_footer
    %s14 = sadd.s32 1, %s10
  $region7: #{hourglass_forward.21} parent=0 // loop_footer_branch
    %9 = sbr.rel target = $region3
  $region8: #{hourglass_forward.21} parent=0 // loop_exit
    _

// kernel: hourglass_forward.22
$region0: #{hourglass_forward.22}
  #allocation0 [shape = 'u32[]', space=smem, size = 0x4, offset = 0x4, fixed_abs, tag = 'smem constant byte address 0x4 - core index']
  #allocation1 [shape = 'u32[144,128]{1,0:T(1,128)}', space=vmem, size = 0x12000, scoped, tag = 'internal scratch']
  #allocation2 [shape = 'f32[32,128]{1,0:T(8,128)}', space=vmem, size = 0x4000, scoped, tag = 'scratch operand']
  %s0 = inlined_call_operand.vmem [shape: bf16[2,5,8,256], index: 0, kind: input, shape index: {}]
  %s1 = inlined_call_operand.vmem [shape: bf16[2,4,32,8], index: 1, kind: input, shape index: {}]
  %s2 = inlined_call_operand.vmem [shape: bf16[2,32,512], index: 2, kind: output, shape index: {}]
  %s3 = sld [smem:[#allocation0]]
  $region86: #{hourglass_forward.22} parent=0
    _
  %s5 = ssub.s32 1, %s3
  %s6 = scalar_select 0, %s5, %s3
  $region1: #{hourglass_forward.22} parent=0
    #allocation3 [shape = 'u8[16384]{0}', space=vmem, size = 0x4000, scoped, tag = 'output window, operand 0']
    loop: start=0, step=1, limit=18
    $region2: #{hourglass_forward.22} parent=1 // loop_pre_header
      _
    $region3: #{hourglass_forward.22} parent=1 // loop_header
      %s8 = sphi 0, %s12
      %p9 = scmp.ge.s32.totalorder %s8, 18
      %s15 = sphi 0, %s34
      %s16 = sphi 0, %s30
      %s17 = sphi 0, %s26
      %s18 = sphi 0, %s15
      %s19 = sphi 0, %s16
      %s20 = sphi 0, %s17
      %s21 = sphi 0, %s18
      %s22 = sphi 0, %s19
      %s23 = sphi 0, %s20
      %s41 = sphi 0, %s43
      %s44 = sphi 0, %s41
      %s45 = sphi 0, %s44
      %s61 = sphi 0, %s45
      %s67 = sphi 0, %s69
      %s70 = sphi 0, %s67
      %s71 = sphi 0, %s70
      %s87 = sphi 0, %s71
      %s95 = sphi 0, %s97
      %s98 = sphi 0, %s95
      %s99 = sphi 0, %s98
      %s115 = sphi 0, %s99
    $region4: #{hourglass_forward.22} parent=1 // loop_header_branch
      %11 = sbr.rel (%p9) target = $region8
    $region5: #{hourglass_forward.22} parent=1 // loop_body
      %s13 = ssub.s32 %s8, 1
      %s14 = ssub.s32 %s8, 2
      %s24 = sadd.s32 1, %s17
      %p25 = scmp.ge.s32.totalorder %s24, 2
      %s26 = scalar_select %p25, 0, %s24
      %s27 = sadd.s32 1, %s16
      %s28 = scalar_select %p25, %s27, %s16
      %p29 = scmp.ge.s32.totalorder %s28, 4
      %s30 = scalar_select %p29, 0, %s28
      %s31 = sadd.s32 1, %s15
      %s32 = scalar_select %p29, %s31, %s15
      %p33 = scmp.ge.s32.totalorder %s32, 2
      %s34 = scalar_select %p33, 0, %s32
      %s35 = sadd.s32 %s16, %s17
      %s36 = sadd.s32 %s30, %s26
      %s37 = ssub.s32 %s15, %s34
      %s38 = ssub.s32 %s35, %s36
      %s39 = sor.u32 %s37, %s38
      %p40 = scmp.eq.s32.totalorder %s39, 0
      %s42 = sadd.s32 %s41, 1
      %s43 = scalar_select %p40, %s41, %s42
      %p46 = pneg %p40
      %p47 = scmp.eq.s32.totalorder %s8, 15
      %p48 = por %p46, %p47
      %p49 = scmp.ne.s32.totalorder %s41, %s44
      %p50 = scmp.eq.s32.totalorder %s8, 0
      %p51 = por %p49, %p50
      %p52 = scmp.ne.s32.totalorder %s41, %s44
      %p53 = scmp.eq.s32.totalorder %s13, 15
      %p54 = por %p52, %p53
      %p55 = scmp.ne.s32.totalorder %s44, %s45
      %p56 = scmp.eq.s32.totalorder %s13, 0
      %p57 = por %p55, %p56
      %p58 = scmp.ne.s32.totalorder %s44, %s45
      %p59 = scmp.eq.s32.totalorder %s14, 15
      %p60 = por %p58, %p59
      %p62 = scmp.ne.s32.totalorder %s45, %s61
      %p63 = scmp.eq.s32.totalorder %s14, 0
      %p64 = por %p62, %p63
      %s65 = ssub.s32 %s17, %s26
      %p66 = scmp.eq.s32.totalorder %s65, 0
      %s68 = sadd.s32 %s67, 1
      %s69 = scalar_select %p66, %s67, %s68
      %p72 = pneg %p66
      %p73 = scmp.eq.s32.totalorder %s8, 15
      %p74 = por %p72, %p73
      %p75 = scmp.ne.s32.totalorder %s67, %s70
      %p76 = scmp.eq.s32.totalorder %s8, 0
      %p77 = por %p75, %p76
      %p78 = scmp.ne.s32.totalorder %s67, %s70
      %p79 = scmp.eq.s32.totalorder %s13, 15
      %p80 = por %p78, %p79
      %p81 = scmp.ne.s32.totalorder %s70, %s71
      %p82 = scmp.eq.s32.totalorder %s13, 0
      %p83 = por %p81, %p82
      %p84 = scmp.ne.s32.totalorder %s70, %s71
      %p85 = scmp.eq.s32.totalorder %s14, 15
      %p86 = por %p84, %p85
      %p88 = scmp.ne.s32.totalorder %s71, %s87
      %p89 = scmp.eq.s32.totalorder %s14, 0
      %p90 = por %p88, %p89
      %s91 = ssub.s32 %s15, %s34
      %s92 = ssub.s32 %s16, %s30
      %s93 = sor.u32 %s91, %s92
      %p94 = scmp.eq.s32.totalorder %s93, 0
      %s96 = sadd.s32 %s95, 1
      %s97 = scalar_select %p94, %s95, %s96
      %p100 = pneg %p94
      %p101 = scmp.eq.s32.totalorder %s8, 15
      %p102 = por %p100, %p101
      %p103 = scmp.ne.s32.totalorder %s95, %s98
      %p104 = scmp.eq.s32.totalorder %s8, 0
      %p105 = por %p103, %p104
      %p106 = scmp.ne.s32.totalorder %s95, %s98
      %p107 = scmp.eq.s32.totalorder %s13, 15
      %p108 = por %p106, %p107
      %p109 = scmp.ne.s32.totalorder %s98, %s99
      %p110 = scmp.eq.s32.totalorder %s13, 0
      %p111 = por %p109, %p110
      %p112 = scmp.ne.s32.totalorder %s98, %s99
      %p113 = scmp.eq.s32.totalorder %s14, 15
      %p114 = por %p112, %p113
      %p116 = scmp.ne.s32.totalorder %s99, %s115
      %p117 = scmp.eq.s32.totalorder %s14, 0
      %p118 = por %p116, %p117
      %p119 = scmp.le.s32.totalorder 1, %s8
      %p120 = scmp.lt.s32.totalorder %s8, 17
      %p121 = pnand %p119, %p120
      %p122 = pneg %p121
      // Predicated region
      $region9: #{hourglass_forward.22} parent=5 // pred_check
        _
      $region10: #{hourglass_forward.22} parent=5 // pred_check_branch
        %124 = sbr.rel (%p121) target = $region12
      $region11: #{hourglass_forward.22} parent=5 // pred_region
        %s125 = ssub.s32 %s8, 1
      $region12: #{hourglass_forward.22} parent=5 // pred_fallthru
        _
      %p126 = scmp.lt.s32.totalorder %s8, 16
      // Predicated region
      $region13: #{hourglass_forward.22} parent=5 // pred_check
        %p127 = pneg %p126
      $region14: #{hourglass_forward.22} parent=5 // pred_check_branch
        %129 = sbr.rel (%p127) target = $region16
      $region15: #{hourglass_forward.22} parent=5 // pred_region
        // Predicated region
        $region17: #{hourglass_forward.22} parent=15 // pred_check
          %p130 = pneg %p51
        $region18: #{hourglass_forward.22} parent=15 // pred_check_branch
          %132 = sbr.rel (%p130) target = $region20
        $region19: #{hourglass_forward.22} parent=15 // pred_region
          %s133 = sadd.s32 %s16, %s17
          %p134 = scmp.lt.s32.totalorder %s15, 1
          %s135 = scalar_select %p134, %s15, 1
          %p136 = scmp.lt.s32.totalorder %s133, 4
          %s137 = scalar_select %p136, %s133, 4
          %s138 = smul.addr %s137, 2
          %s139 = smul.addr %s135, 10
          %s140 = sadd.s32 %s138, %s139
          %s141 = smul.addr %s140, 4
          %s142 = scalar_lea.vmem %s0, %s141
          %s143 = sadd.s32 %s16, %s17
        $region20: #{hourglass_forward.22} parent=15 // pred_fallthru
          _
        // Predicated region
        $region21: #{hourglass_forward.22} parent=15 // pred_check
          %p144 = pneg %p77
        $region22: #{hourglass_forward.22} parent=15 // pred_check_branch
          %146 = sbr.rel (%p144) target = $region24
        $region23: #{hourglass_forward.22} parent=15 // pred_region
          %p147 = scmp.lt.s32.totalorder %s17, 1
          %s148 = scalar_select %p147, %s17, 1
          %s149 = smul.addr %s148, 16
          %s150 = smul.addr %s149, 4
          %s151 = scalar_lea.vmem %s1, %s150
        $region24: #{hourglass_forward.22} parent=15 // pred_fallthru
          _
      $region16: #{hourglass_forward.22} parent=5 // pred_fallthru
        _
      %p152 = scmp.le.s32.totalorder 1, %s8
      %p153 = scmp.lt.s32.totalorder %s8, 17
      %p154 = pnand %p152, %p153
      %p155 = pneg %p154
      // Predicated region
      $region25: #{hourglass_forward.22} parent=5 // pred_check
        _
      $region26: #{hourglass_forward.22} parent=5 // pred_check_branch
        %157 = sbr.rel (%p154) target = $region28
      $region27: #{hourglass_forward.22} parent=5 // pred_region
        %s158 = ssub.s32 %s8, 1
        %s159 = sadd.s32 %s19, %s20
        %p160 = scmp.lt.s32.totalorder %s18, 1
        %s161 = scalar_select %p160, %s18, 1
        %p162 = scmp.lt.s32.totalorder %s159, 4
        %s163 = scalar_select %p162, %s159, 4
        %s164 = smul.addr %s163, 2
        %s165 = smul.addr %s161, 10
        %s166 = sadd.s32 %s164, %s165
        %s167 = smul.addr %s166, 4
        %s168 = scalar_lea.vmem %s0, %s167
        %p169 = pneg %p57
        %p170 = pneg %p54
        %p171 = scmp.lt.s32.totalorder %s20, 1
        %s172 = scalar_select %p171, %s20, 1
        %s173 = smul.addr %s172, 16
        %s174 = smul.addr %s173, 4
        %s175 = scalar_lea.vmem %s1, %s174
        %p176 = pneg %p83
        %p177 = pneg %p80
        %p178 = pneg %p111
        %p179 = pneg %p108
        %s180 = sand.u32 %s98, 1
        %s181 = sand.u32 %s98, 1
        %s182 = smul.addr %s181, 16
        %s183 = scalar_lea.vmem [#allocation3], %s182
        %s184 = sadd.s32 %s19, %s20
        %p185 = scmp.lt.s32.totalorder %s18, 1
        %s186 = scalar_select %p185, %s18, 1
        %p187 = scmp.lt.s32.totalorder %s184, 4
        %s188 = scalar_select %p187, %s184, 4
        %s189 = smul.addr %s188, 2
        %s190 = smul.addr %s186, 10
        %s191 = sadd.s32 %s189, %s190
        %s192 = smul.addr %s191, 4
        %s193 = scalar_lea.vmem %s0, %s192
        %s194 = sadd.s32 %s19, %s20
        %p195 = scmp.lt.s32.totalorder %s20, 1
        %s196 = scalar_select %p195, %s20, 1
        %s197 = smul.addr %s196, 16
        %s198 = smul.addr %s197, 4
        %s199 = scalar_lea.vmem %s1, %s198
        %p201 = scmp.eq.s32.totalorder %s20, 0
        // Predicated region
        $region29: #{hourglass_forward.22} parent=27 // pred_check
          %p202 = pneg %p201
        $region30: #{hourglass_forward.22} parent=27 // pred_check_branch
          %204 = sbr.rel (%p202) target = $region32
        $region31: #{hourglass_forward.22} parent=27 // pred_region
          %205 = vst [vmem:[#allocation2] sm:$0xff] 0.0
          %206 = vst [vmem:[#allocation2 + $0x8] sm:$0xff] 0.0
          %207 = vst [vmem:[#allocation2 + $0x10] sm:$0xff] 0.0
          %208 = vst [vmem:[#allocation2 + $0x18] sm:$0xff] 0.0
        $region32: #{hourglass_forward.22} parent=27 // pred_fallthru
          _
        %v209 = vld [vmem:[%s193] sm:$0xff]
        %v210 = vld [vmem:[#allocation2] sm:$0xff]
        %v211 = vld [vmem:[#allocation2 + $0x8] sm:$0xff]
        %v212 = vld [vmem:[#allocation2 + $0x10] sm:$0xff]
        %v213 = vld [vmem:[#allocation2 + $0x18] sm:$0xff]
        %v214 = vld [vmem:[%s199] sm:$0xf]
        %v215 = vld [vmem:[%s199 + $0x4] sm:$0xf]
        %v216 = vld [vmem:[%s199 + $0x8] sm:$0xf]
        %v217 = vld [vmem:[%s199 + $0xc] sm:$0xf]
        %v222 = vunpack.c.l.b16 %v214
        %v223 = vunpack.c.l.b16 %v215
        %v224 = vunpack.c.l.b16 %v216
        %v225 = vunpack.c.l.b16 %v217
        %v226 = vpack.c.b16 %v223, %v222
        %v227 = vpack.c.b16 %v225, %v224
        %vm228 = vcmask 64512
        %v230 = vsel %vm228, %v226, 0
        %v233 = vsel %vm228, %v227, 0
        %vm235 = vcmask 1043456
        %v237 = vsel %vm235, %v209, 0
        %239 = vmatprep.subr.bf16.mxu0 0
        %240 = vmatpush1.bf16.msra.mxu0 %v237
        %241 = vmatprep.subr.bf16.mxu0 0
        %242 = vmatpush1.bf16.msra.mxu0 0
        %243 = vmatprep.subr.bf16.mxu0 0
        %244 = vmatpush1.bf16.msra.mxu0 0
        %245 = vmatprep.subr.bf16.mxu0 0
        %246 = vmatpush1.bf16.msra.mxu0 0
        %247 = vmatprep.subr.bf16.mxu0 0
        %248 = vmatpush1.bf16.msra.mxu0 0
        %249 = vmatprep.subr.bf16.mxu0 0
        %250 = vmatpush1.bf16.msra.mxu0 0
        %251 = vmatprep.subr.bf16.mxu0 0
        %252 = vmatpush1.bf16.msra.mxu0 0
        %253 = vmatprep.subr.bf16.mxu0 0
        %254 = vmatpush1.bf16.msra.mxu0 0
        %255 = vmatprep.subr.bf16.mxu0 0
        %256 = vmatpush1.bf16.msra.mxu0 0
        %257 = vmatprep.subr.bf16.mxu0 0
        %258 = vmatpush1.bf16.msra.mxu0 0
        %259 = vmatprep.subr.bf16.mxu0 0
        %260 = vmatpush1.bf16.msra.mxu0 0
        %261 = vmatprep.subr.bf16.mxu0 0
        %262 = vmatpush1.bf16.msra.mxu0 0
        %263 = vmatprep.subr.bf16.mxu0 0
        %264 = vmatpush1.bf16.msra.mxu0 0
        %265 = vmatprep.subr.bf16.mxu0 0
        %266 = vmatpush1.bf16.msra.mxu0 0
        %267 = vmatprep.subr.bf16.mxu0 0
        %268 = vmatpush1.bf16.msra.mxu0 0
        %269 = vmatprep.subr.bf16.mxu0 0
        %270 = vmatpush1.bf16.msra.mxu0 0
        %271 = vmatprep.mubr.bf16.mxu0 0
        %272 = vmatmul.mubr.bf16.gmra.mrb[0].mxu0 %v230
        %v273 = vpop.f32.mrb[0].mxu0
        %v274 = vadd.f32 0.0, %v273
        %v275 = vpop.f32.mrb[0].mxu0
        %v276 = vpop.f32.mrb[0].mxu0
        %v277 = vadd.f32 0.0, %v276
        %v278 = vpop.f32.mrb[0].mxu0
        %279 = vmatprep.mubr.bf16.mxu0 0
        %280 = vmatmul.mubr.bf16.gmra.mrb[0].mxu0 %v233
        %v281 = vpop.f32.mrb[0].mxu0
        %v282 = vadd.f32 0.0, %v281
        %v283 = vpop.f32.mrb[0].mxu0
        %v284 = vpop.f32.mrb[0].mxu0
        %v285 = vadd.f32 0.0, %v284
        %v286 = vpop.f32.mrb[0].mxu0
        %287 = vdwg.mxu0
        %v288 = vadd.f32 %v210, %v274
        %v289 = vadd.f32 %v211, %v277
        %v290 = vadd.f32 %v212, %v282
        %v291 = vadd.f32 %v213, %v285
        %s292 = scalar_lea.vmem %s199, 16
        %v293 = vld [vmem:[%s292] sm:$0xf]
        %v294 = vld [vmem:[%s292 + $0x4] sm:$0xf]
        %v295 = vld [vmem:[%s292 + $0x8] sm:$0xf]
        %v296 = vld [vmem:[%s292 + $0xc] sm:$0xf]
        %v301 = vunpack.c.l.b16 %v293
        %v302 = vunpack.c.l.b16 %v294
        %v303 = vunpack.c.l.b16 %v295
        %v304 = vunpack.c.l.b16 %v296
        %v305 = vpack.c.b16 %v302, %v301
        %v306 = vpack.c.b16 %v304, %v303
        %v308 = vunpack.c.l.b16 %v209
        %v309 = vunpack.c.h.b16 %v209
        %v310 = vpack.c.b16 %v308, %v308
        %v311 = vpack.c.b16 %v309, %v309
        %312 = vrot.lane.b32.xlu0 %v310, 127
        %v313 = vpop.permute.xlu0 %312
        %314 = vrot.lane.b32.xlu0 %v311, 127
        %v315 = vpop.permute.xlu0 %314
        %vm316 = vcmask 1039360
        %v317 = vsel %vm316, %v313, %v315
        %v319 = vsel %vm228, %v305, 0
        %v322 = vsel %vm228, %v306, 0
        %v325 = vsel %vm235, %v317, 0
        %327 = vmatprep.subr.bf16.mxu0 0
        %328 = vmatpush1.bf16.msra.mxu0 %v325
        %329 = vmatprep.subr.bf16.mxu0 0
        %330 = vmatpush1.bf16.msra.mxu0 0
        %331 = vmatprep.subr.bf16.mxu0 0
        %332 = vmatpush1.bf16.msra.mxu0 0
        %333 = vmatprep.subr.bf16.mxu0 0
        %334 = vmatpush1.bf16.msra.mxu0 0
        %335 = vmatprep.subr.bf16.mxu0 0
        %336 = vmatpush1.bf16.msra.mxu0 0
        %337 = vmatprep.subr.bf16.mxu0 0
        %338 = vmatpush1.bf16.msra.mxu0 0
        %339 = vmatprep.subr.bf16.mxu0 0
        %340 = vmatpush1.bf16.msra.mxu0 0
        %341 = vmatprep.subr.bf16.mxu0 0
        %342 = vmatpush1.bf16.msra.mxu0 0
        %343 = vmatprep.subr.bf16.mxu0 0
        %344 = vmatpush1.bf16.msra.mxu0 0
        %345 = vmatprep.subr.bf16.mxu0 0
        %346 = vmatpush1.bf16.msra.mxu0 0
        %347 = vmatprep.subr.bf16.mxu0 0
        %348 = vmatpush1.bf16.msra.mxu0 0
        %349 = vmatprep.subr.bf16.mxu0 0
        %350 = vmatpush1.bf16.msra.mxu0 0
        %351 = vmatprep.subr.bf16.mxu0 0
        %352 = vmatpush1.bf16.msra.mxu0 0
        %353 = vmatprep.subr.bf16.mxu0 0
        %354 = vmatpush1.bf16.msra.mxu0 0
        %355 = vmatprep.subr.bf16.mxu0 0
        %356 = vmatpush1.bf16.msra.mxu0 0
        %357 = vmatprep.subr.bf16.mxu0 0
        %358 = vmatpush1.bf16.msra.mxu0 0
        %359 = vmatprep.mubr.bf16.mxu0 0
        %360 = vmatmul.mubr.bf16.gmra.mrb[0].mxu0 %v319
        %v361 = vpop.f32.mrb[0].mxu0
        %v362 = vadd.f32 0.0, %v361
        %v363 = vpop.f32.mrb[0].mxu0
        %v364 = vpop.f32.mrb[0].mxu0
        %v365 = vadd.f32 0.0, %v364
        %v366 = vpop.f32.mrb[0].mxu0
        %367 = vmatprep.mubr.bf16.mxu0 0
        %368 = vmatmul.mubr.bf16.gmra.mrb[0].mxu0 %v322
        %v369 = vpop.f32.mrb[0].mxu0
        %v370 = vadd.f32 0.0, %v369
        %v371 = vpop.f32.mrb[0].mxu0
        %v372 = vpop.f32.mrb[0].mxu0
        %v373 = vadd.f32 0.0, %v372
        %v374 = vpop.f32.mrb[0].mxu0
        %375 = vdwg.mxu0
        %v376 = vadd.f32 %v288, %v362
        %v377 = vadd.f32 %v289, %v365
        %v378 = vadd.f32 %v290, %v370
        %v379 = vadd.f32 %v291, %v373
        %s380 = scalar_lea.vmem %s199, 32
        %v381 = vld [vmem:[%s380] sm:$0xf]
        %v382 = vld [vmem:[%s380 + $0x4] sm:$0xf]
        %v383 = vld [vmem:[%s380 + $0x8] sm:$0xf]
        %v384 = vld [vmem:[%s380 + $0xc] sm:$0xf]
        %v389 = vunpack.c.l.b16 %v381
        %v390 = vunpack.c.l.b16 %v382
        %v391 = vunpack.c.l.b16 %v383
        %v392 = vunpack.c.l.b16 %v384
        %v393 = vpack.c.b16 %v390, %v389
        %v394 = vpack.c.b16 %v392, %v391
        %395 = vrot.lane.b32.xlu0 %v310, 119
        %v396 = vpop.permute.xlu0 %395
        %397 = vrot.lane.b32.xlu0 %v311, 119
        %v398 = vpop.permute.xlu0 %397
        %vm399 = vcmask 973824
        %v400 = vsel %vm399, %v396, %v398
        %v402 = vsel %vm228, %v393, 0
        %v405 = vsel %vm228, %v394, 0
        %v408 = vsel %vm235, %v400, 0
        %410 = vmatprep.subr.bf16.mxu0 0
        %411 = vmatpush1.bf16.msra.mxu0 %v408
        %412 = vmatprep.subr.bf16.mxu0 0
        %413 = vmatpush1.bf16.msra.mxu0 0
        %414 = vmatprep.subr.bf16.mxu0 0
        %415 = vmatpush1.bf16.msra.mxu0 0
        %416 = vmatprep.subr.bf16.mxu0 0
        %417 = vmatpush1.bf16.msra.mxu0 0
        %418 = vmatprep.subr.bf16.mxu0 0
        %419 = vmatpush1.bf16.msra.mxu0 0
        %420 = vmatprep.subr.bf16.mxu0 0
        %421 = vmatpush1.bf16.msra.mxu0 0
        %422 = vmatprep.subr.bf16.mxu0 0
        %423 = vmatpush1.bf16.msra.mxu0 0
        %424 = vmatprep.subr.bf16.mxu0 0
        %425 = vmatpush1.bf16.msra.mxu0 0
        %426 = vmatprep.subr.bf16.mxu0 0
        %427 = vmatpush1.bf16.msra.mxu0 0
        %428 = vmatprep.subr.bf16.mxu0 0
        %429 = vmatpush1.bf16.msra.mxu0 0
        %430 = vmatprep.subr.bf16.mxu0 0
        %431 = vmatpush1.bf16.msra.mxu0 0
        %432 = vmatprep.subr.bf16.mxu0 0
        %433 = vmatpush1.bf16.msra.mxu0 0
        %434 = vmatprep.subr.bf16.mxu0 0
        %435 = vmatpush1.bf16.msra.mxu0 0
        %436 = vmatprep.subr.bf16.mxu0 0
        %437 = vmatpush1.bf16.msra.mxu0 0
        %438 = vmatprep.subr.bf16.mxu0 0
        %439 = vmatpush1.bf16.msra.mxu0 0
        %440 = vmatprep.subr.bf16.mxu0 0
        %441 = vmatpush1.bf16.msra.mxu0 0
        %442 = vmatprep.mubr.bf16.mxu0 0
        %443 = vmatmul.mubr.bf16.gmra.mrb[0].mxu0 %v402
        %v444 = vpop.f32.mrb[0].mxu0
        %v445 = vadd.f32 0.0, %v444
        %v446 = vpop.f32.mrb[0].mxu0
        %v447 = vpop.f32.mrb[0].mxu0
        %v448 = vadd.f32 0.0, %v447
        %v449 = vpop.f32.mrb[0].mxu0
        %450 = vmatprep.mubr.bf16.mxu0 0
        %451 = vmatmul.mubr.bf16.gmra.mrb[0].mxu0 %v405
        %v452 = vpop.f32.mrb[0].mxu0
        %v453 = vadd.f32 0.0, %v452
        %v454 = vpop.f32.mrb[0].mxu0
        %v455 = vpop.f32.mrb[0].mxu0
        %v456 = vadd.f32 0.0, %v455
        %v457 = vpop.f32.mrb[0].mxu0
        %458 = vdwg.mxu0
        %v459 = vadd.f32 %v376, %v445
        %v460 = vadd.f32 %v377, %v448
        %v461 = vadd.f32 %v378, %v453
        %v462 = vadd.f32 %v379, %v456
        %s463 = scalar_lea.vmem %s199, 48
        %v464 = vld [vmem:[%s463] sm:$0xf]
        %v465 = vld [vmem:[%s463 + $0x4] sm:$0xf]
        %v466 = vld [vmem:[%s463 + $0x8] sm:$0xf]
        %v467 = vld [vmem:[%s463 + $0xc] sm:$0xf]
        %v472 = vunpack.c.l.b16 %v464
        %v473 = vunpack.c.l.b16 %v465
        %v474 = vunpack.c.l.b16 %v466
        %v475 = vunpack.c.l.b16 %v467
        %v476 = vpack.c.b16 %v473, %v472
        %v477 = vpack.c.b16 %v475, %v474
        %478 = vrot.lane.b32.xlu0 %v310, 118
        %v479 = vpop.permute.xlu0 %478
        %480 = vrot.lane.b32.xlu0 %v311, 118
        %v481 = vpop.permute.xlu0 %480
        %vm482 = vcmask 965632
        %v483 = vsel %vm482, %v479, %v481
        %v485 = vsel %vm228, %v476, 0
        %v488 = vsel %vm228, %v477, 0
        %v491 = vsel %vm235, %v483, 0
        %493 = vmatprep.subr.bf16.mxu0 0
        %494 = vmatpush1.bf16.msra.mxu0 %v491
        %495 = vmatprep.subr.bf16.mxu0 0
        %496 = vmatpush1.bf16.msra.mxu0 0
        %497 = vmatprep.subr.bf16.mxu0 0
        %498 = vmatpush1.bf16.msra.mxu0 0
        %499 = vmatprep.subr.bf16.mxu0 0
        %500 = vmatpush1.bf16.msra.mxu0 0
        %501 = vmatprep.subr.bf16.mxu0 0
        %502 = vmatpush1.bf16.msra.mxu0 0
        %503 = vmatprep.subr.bf16.mxu0 0
        %504 = vmatpush1.bf16.msra.mxu0 0
        %505 = vmatprep.subr.bf16.mxu0 0
        %506 = vmatpush1.bf16.msra.mxu0 0
        %507 = vmatprep.subr.bf16.mxu0 0
        %508 = vmatpush1.bf16.msra.mxu0 0
        %509 = vmatprep.subr.bf16.mxu0 0
        %510 = vmatpush1.bf16.msra.mxu0 0
        %511 = vmatprep.subr.bf16.mxu0 0
        %512 = vmatpush1.bf16.msra.mxu0 0
        %513 = vmatprep.subr.bf16.mxu0 0
        %514 = vmatpush1.bf16.msra.mxu0 0
        %515 = vmatprep.subr.bf16.mxu0 0
        %516 = vmatpush1.bf16.msra.mxu0 0
        %517 = vmatprep.subr.bf16.mxu0 0
        %518 = vmatpush1.bf16.msra.mxu0 0
        %519 = vmatprep.subr.bf16.mxu0 0
        %520 = vmatpush1.bf16.msra.mxu0 0
        %521 = vmatprep.subr.bf16.mxu0 0
        %522 = vmatpush1.bf16.msra.mxu0 0
        %523 = vmatprep.subr.bf16.mxu0 0
        %524 = vmatpush1.bf16.msra.mxu0 0
        %525 = vmatprep.mubr.bf16.mxu0 0
        %526 = vmatmul.mubr.bf16.gmra.mrb[0].mxu0 %v485
        %v527 = vpop.f32.mrb[0].mxu0
        %v528 = vadd.f32 0.0, %v527
        %v529 = vpop.f32.mrb[0].mxu0
        %v530 = vpop.f32.mrb[0].mxu0
        %v531 = vadd.f32 0.0, %v530
        %v532 = vpop.f32.mrb[0].mxu0
        %533 = vmatprep.mubr.bf16.mxu0 0
        %534 = vmatmul.mubr.bf16.gmra.mrb[0].mxu0 %v488
        %v535 = vpop.f32.mrb[0].mxu0
        %v536 = vadd.f32 0.0, %v535
        %v537 = vpop.f32.mrb[0].mxu0
        %v538 = vpop.f32.mrb[0].mxu0
        %v539 = vadd.f32 0.0, %v538
        %v540 = vpop.f32.mrb[0].mxu0
        %541 = vdwg.mxu0
        %v542 = vadd.f32 %v459, %v528
        %v543 = vadd.f32 %v460, %v531
        %v544 = vadd.f32 %v461, %v536
        %v545 = vadd.f32 %v462, %v539
        %546 = vst [vmem:[#allocation2] sm:$0xff] %v542
        %547 = vst [vmem:[#allocation2 + $0x8] sm:$0xff] %v543
        %548 = vst [vmem:[#allocation2 + $0x10] sm:$0xff] %v544
        %549 = vst [vmem:[#allocation2 + $0x18] sm:$0xff] %v545
        %p550 = scmp.eq.s32.totalorder %s20, 1
        // Predicated region
        $region33: #{hourglass_forward.22} parent=27 // pred_check
          %p551 = pneg %p550
        $region34: #{hourglass_forward.22} parent=27 // pred_check_branch
          %553 = sbr.rel (%p551) target = $region36
        $region35: #{hourglass_forward.22} parent=27 // pred_region
          %v554 = vld [vmem:[#allocation2] sm:$0xff]
          %v555 = vld [vmem:[#allocation2 + $0x8] sm:$0xff]
          %v556 = vld [vmem:[#allocation2 + $0x10] sm:$0xff]
          %v557 = vld [vmem:[#allocation2 + $0x18] sm:$0xff]
          %v558 = vpack.c.bf16 %v555, %v554
          %v559 = vpack.c.bf16 %v557, %v556
          %v562 = vunpack.c.l.b16 %v558
          %v563 = vunpack.c.h.b16 %v558
          %v564 = vunpack.c.l.b16 %v559
          %v565 = vunpack.c.h.b16 %v559
          %v566 = vpack.c.b16 %v562, %v562
          %v567 = vpack.c.b16 %v563, %v563
          %v568 = vpack.c.b16 %v564, %v564
          %v569 = vpack.c.b16 %v565, %v565
          %574 = vst [vmem:[%s183] sm:$0xf] %v566
          %575 = vst [vmem:[%s183 + $0x4] sm:$0xf] %v567
          %576 = vst [vmem:[%s183 + $0x8] sm:$0xf] %v568
          %577 = vst [vmem:[%s183 + $0xc] sm:$0xf] %v569
        $region36: #{hourglass_forward.22} parent=27 // pred_fallthru
          _
        %s578 = sand.u32 %s98, 1
        %s579 = sand.u32 %s98, 1
        %s580 = smul.addr %s579, 16
        %s581 = scalar_lea.vmem [#allocation3], %s580
        // Predicated region
        $region37: #{hourglass_forward.22} parent=27 // pred_check
          %p582 = pneg %p108
        $region38: #{hourglass_forward.22} parent=27 // pred_check_branch
          %584 = sbr.rel (%p582) target = $region40
        $region39: #{hourglass_forward.22} parent=27 // pred_region
          %s585 = smul.addr %s18, 16
          %s586 = sadd.s32 %s19, %s585
          %s587 = smul.addr %s586, 4
          %s588 = scalar_lea.vmem %s2, %s587
          // Predicated region
          $region41: #{hourglass_forward.22} parent=39 // pred_check
            _
          $region42: #{hourglass_forward.22} parent=39 // pred_check_branch
            %590 = sbr.rel (0) target = $region44
          $region43: #{hourglass_forward.22} parent=39 // pred_region
            // Predicated region
            $region45: #{hourglass_forward.22} parent=43 // pred_check
              _
            $region46: #{hourglass_forward.22} parent=43 // pred_check_branch
              %592 = sbr.rel target = $region48
            $region47: #{hourglass_forward.22} parent=43 // pred_region
              // Predicated region
              $region60: #{hourglass_forward.22} parent=47 // pred_check
                _
              $region61: #{hourglass_forward.22} parent=47 // pred_check_branch
                %613 = sbr.rel (0) target = $region63
              $region62: #{hourglass_forward.22} parent=47 // pred_region
                loop: start=0, step=1, limit=1
                $region64: #{hourglass_forward.22} parent=62 // loop_pre_header
                  _
                $region65: #{hourglass_forward.22} parent=62 // loop_header
                  %s615 = sphi 0, %s619
                  %p616 = scmp.ge.s32.totalorder %s615, 1
                  %s620 = sphi %s581, %s581
                  %s621 = sphi %s588, %s588
                $region66: #{hourglass_forward.22} parent=62 // loop_header_branch
                  %618 = sbr.rel (%p616) target = $region70
                $region67: #{hourglass_forward.22} parent=62 // loop_body
                  _
                $region68: #{hourglass_forward.22} parent=62 // loop_footer
                  %s619 = sadd.s32 1, %s615
                $region69: #{hourglass_forward.22} parent=62 // loop_footer_branch
                  %614 = sbr.rel target = $region65
                $region70: #{hourglass_forward.22} parent=62 // loop_exit
                  _
                loop: start=0, step=1, limit=1
                $region71: #{hourglass_forward.22} parent=62 // loop_pre_header
                  _
                $region72: #{hourglass_forward.22} parent=62 // loop_header
                  %s624 = sphi 0, %s628
                  %p625 = scmp.ge.s32.totalorder %s624, 1
                  %s629 = sphi %s581, %s581
                  %s630 = sphi %s588, %s588
                $region73: #{hourglass_forward.22} parent=62 // loop_header_branch
                  %627 = sbr.rel (%p625) target = $region77
                $region74: #{hourglass_forward.22} parent=62 // loop_body
                  %v631 = vld [vmem:[%s629] sm:$0xf]
                  %632 = vst [vmem:[%s630] sm:$0xf] %v631
                  %v633 = vld [vmem:[%s629 + $0x4] sm:$0xf]
                  %634 = vst [vmem:[%s630 + $0x10] sm:$0xf] %v633
                  %v635 = vld [vmem:[%s629 + $0x8] sm:$0xf]
                  %636 = vst [vmem:[%s630 + $0x20] sm:$0xf] %v635
                  %v637 = vld [vmem:[%s629 + $0xc] sm:$0xf]
                  %638 = vst [vmem:[%s630 + $0x30] sm:$0xf] %v637
                $region75: #{hourglass_forward.22} parent=62 // loop_footer
                  %s628 = sadd.s32 1, %s624
                $region76: #{hourglass_forward.22} parent=62 // loop_footer_branch
                  %623 = sbr.rel target = $region72
                $region77: #{hourglass_forward.22} parent=62 // loop_exit
                  _
              $region63: #{hourglass_forward.22} parent=47 // pred_fallthru
                _
            $region48: #{hourglass_forward.22} parent=43 // pred_fallthru
              _
            // Predicated region
            $region49: #{hourglass_forward.22} parent=43 // pred_check
              _
            $region50: #{hourglass_forward.22} parent=43 // pred_check_branch
              %594 = sbr.rel (0) target = $region52
            $region51: #{hourglass_forward.22} parent=43 // pred_region
              loop: start=0, step=1, limit=1
              $region53: #{hourglass_forward.22} parent=51 // loop_pre_header
                _
              $region54: #{hourglass_forward.22} parent=51 // loop_header
                %s597 = sphi 0, %s601
                %p598 = scmp.ge.s32.totalorder %s597, 1
                %s602 = sphi %s581, %s581
                %s603 = sphi %s588, %s588
              $region55: #{hourglass_forward.22} parent=51 // loop_header_branch
                %600 = sbr.rel (%p598) target = $region59
              $region56: #{hourglass_forward.22} parent=51 // loop_body
                %v604 = vld [vmem:[%s602] sm:$0xf]
                %605 = vst [vmem:[%s603] sm:$0xf] %v604
                %v606 = vld [vmem:[%s602 + $0x4] sm:$0xf]
                %607 = vst [vmem:[%s603 + $0x10] sm:$0xf] %v606
                %v608 = vld [vmem:[%s602 + $0x8] sm:$0xf]
                %609 = vst [vmem:[%s603 + $0x20] sm:$0xf] %v608
                %v610 = vld [vmem:[%s602 + $0xc] sm:$0xf]
                %611 = vst [vmem:[%s603 + $0x30] sm:$0xf] %v610
              $region57: #{hourglass_forward.22} parent=51 // loop_footer
                %s601 = sadd.s32 1, %s597
              $region58: #{hourglass_forward.22} parent=51 // loop_footer_branch
                %596 = sbr.rel target = $region54
              $region59: #{hourglass_forward.22} parent=51 // loop_exit
                _
            $region52: #{hourglass_forward.22} parent=43 // pred_fallthru
              _
          $region44: #{hourglass_forward.22} parent=39 // pred_fallthru
            _
          %639 = vnop
        $region40: #{hourglass_forward.22} parent=27 // pred_fallthru
          _
      $region28: #{hourglass_forward.22} parent=5 // pred_fallthru
        _
      %p640 = scmp.le.s32.totalorder 2, %s8
      // Predicated region
      $region78: #{hourglass_forward.22} parent=5 // pred_check
        %p641 = pneg %p640
      $region79: #{hourglass_forward.22} parent=5 // pred_check_branch
        %643 = sbr.rel (%p641) target = $region81
      $region80: #{hourglass_forward.22} parent=5 // pred_region
        %s644 = ssub.s32 %s8, 2
        // Predicated region
        $region82: #{hourglass_forward.22} parent=80 // pred_check
          %p645 = pneg %p114
        $region83: #{hourglass_forward.22} parent=80 // pred_check_branch
          %647 = sbr.rel (%p645) target = $region85
        $region84: #{hourglass_forward.22} parent=80 // pred_region
          %s648 = sand.u32 %s99, 1
          %s649 = sand.u32 %s99, 1
          %s650 = smul.addr %s649, 16
          %s651 = scalar_lea.vmem [#allocation3], %s650
        $region85: #{hourglass_forward.22} parent=80 // pred_fallthru
          _
      $region81: #{hourglass_forward.22} parent=5 // pred_fallthru
        _
    $region6: #{hourglass_forward.22} parent=1 // loop_footer
      %s12 = sadd.s32 1, %s8
    $region7: #{hourglass_forward.22} parent=1 // loop_footer_branch
      %7 = sbr.rel target = $region3
    $region8: #{hourglass_forward.22} parent=1 // loop_exit
      _

// kernel: hourglass_forward.23
$region0: #{hourglass_forward.23}
  #allocation0 [shape = 'u32[]', space=smem, size = 0x4, offset = 0x4, fixed_abs, tag = 'smem constant byte address 0x4 - core index']
  #allocation1 [shape = 'u32[144,128]{1,0:T(1,128)}', space=vmem, size = 0x12000, scoped, tag = 'internal scratch']
  %s0 = inlined_call_operand.vmem [shape: bf16[2,1,56,128], index: 0, kind: input, shape index: {}]
  %s1 = inlined_call_operand.vmem [shape: f32[1,56,1], index: 1, kind: input, shape index: {}]
  %s2 = inlined_call_operand.vmem [shape: f32[1,56,1], index: 2, kind: input, shape index: {}]
  %s3 = inlined_call_operand.vmem [shape: f32[2,1,56,128], index: 3, kind: output, shape index: {}]
  %s4 = sld [smem:[#allocation0]]
  $region45: #{hourglass_forward.23} parent=0
    _
  %s6 = ssub.s32 1, %s4
  %s7 = scalar_select 0, %s6, %s4
  loop: start=0, step=1, limit=4
  $region2: #{hourglass_forward.23} parent=0 // loop_pre_header
    _
  $region3: #{hourglass_forward.23} parent=0 // loop_header
    %s9 = sphi 0, %s13
    %p10 = scmp.ge.s32.totalorder %s9, 4
    %s16 = sphi 0, %s28
    %s17 = sphi 0, %s24
    %s18 = sphi 0, %s16
    %s19 = sphi 0, %s17
    %s20 = sphi 0, %s18
    %s21 = sphi 0, %s19
    %s33 = sphi 0, %s35
    %s36 = sphi 0, %s33
    %s37 = sphi 0, %s36
    %s53 = sphi 0, %s37
    %s59 = sphi 0, %s61
    %s62 = sphi 0, %s59
    %s63 = sphi 0, %s62
    %s79 = sphi 0, %s63
    %s85 = sphi 0, %s87
    %s88 = sphi 0, %s85
    %s89 = sphi 0, %s88
    %s105 = sphi 0, %s89
    %s113 = sphi 0, %s115
    %s116 = sphi 0, %s113
    %s117 = sphi 0, %s116
    %s133 = sphi 0, %s117
  $region4: #{hourglass_forward.23} parent=0 // loop_header_branch
    %12 = sbr.rel (%p10) target = $region8
  $region5: #{hourglass_forward.23} parent=0 // loop_body
    %s14 = ssub.s32 %s9, 1
    %s15 = ssub.s32 %s9, 2
    %s22 = sadd.s32 1, %s17
    %p23 = scmp.ge.s32.totalorder %s22, 1
    %s24 = scalar_select %p23, 0, %s22
    %s25 = sadd.s32 1, %s16
    %s26 = scalar_select %p23, %s25, %s16
    %p27 = scmp.ge.s32.totalorder %s26, 2
    %s28 = scalar_select %p27, 0, %s26
    %s29 = ssub.s32 %s16, %s28
    %s30 = ssub.s32 %s17, %s24
    %s31 = sor.u32 %s29, %s30
    %p32 = scmp.eq.s32.totalorder %s31, 0
    %s34 = sadd.s32 %s33, 1
    %s35 = scalar_select %p32, %s33, %s34
    %p38 = pneg %p32
    %p39 = scmp.eq.s32.totalorder %s9, 1
    %p40 = por %p38, %p39
    %p41 = scmp.ne.s32.totalorder %s33, %s36
    %p42 = scmp.eq.s32.totalorder %s9, 0
    %p43 = por %p41, %p42
    %p44 = scmp.ne.s32.totalorder %s33, %s36
    %p45 = scmp.eq.s32.totalorder %s14, 1
    %p46 = por %p44, %p45
    %p47 = scmp.ne.s32.totalorder %s36, %s37
    %p48 = scmp.eq.s32.totalorder %s14, 0
    %p49 = por %p47, %p48
    %p50 = scmp.ne.s32.totalorder %s36, %s37
    %p51 = scmp.eq.s32.totalorder %s15, 1
    %p52 = por %p50, %p51
    %p54 = scmp.ne.s32.totalorder %s37, %s53
    %p55 = scmp.eq.s32.totalorder %s15, 0
    %p56 = por %p54, %p55
    %s57 = ssub.s32 %s17, %s24
    %p58 = scmp.eq.s32.totalorder %s57, 0
    %s60 = sadd.s32 %s59, 1
    %s61 = scalar_select %p58, %s59, %s60
    %p64 = pneg %p58
    %p65 = scmp.eq.s32.totalorder %s9, 1
    %p66 = por %p64, %p65
    %p67 = scmp.ne.s32.totalorder %s59, %s62
    %p68 = scmp.eq.s32.totalorder %s9, 0
    %p69 = por %p67, %p68
    %p70 = scmp.ne.s32.totalorder %s59, %s62
    %p71 = scmp.eq.s32.totalorder %s14, 1
    %p72 = por %p70, %p71
    %p73 = scmp.ne.s32.totalorder %s62, %s63
    %p74 = scmp.eq.s32.totalorder %s14, 0
    %p75 = por %p73, %p74
    %p76 = scmp.ne.s32.totalorder %s62, %s63
    %p77 = scmp.eq.s32.totalorder %s15, 1
    %p78 = por %p76, %p77
    %p80 = scmp.ne.s32.totalorder %s63, %s79
    %p81 = scmp.eq.s32.totalorder %s15, 0
    %p82 = por %p80, %p81
    %s83 = ssub.s32 %s17, %s24
    %p84 = scmp.eq.s32.totalorder %s83, 0
    %s86 = sadd.s32 %s85, 1
    %s87 = scalar_select %p84, %s85, %s86
    %p90 = pneg %p84
    %p91 = scmp.eq.s32.totalorder %s9, 1
    %p92 = por %p90, %p91
    %p93 = scmp.ne.s32.totalorder %s85, %s88
    %p94 = scmp.eq.s32.totalorder %s9, 0
    %p95 = por %p93, %p94
    %p96 = scmp.ne.s32.totalorder %s85, %s88
    %p97 = scmp.eq.s32.totalorder %s14, 1
    %p98 = por %p96, %p97
    %p99 = scmp.ne.s32.totalorder %s88, %s89
    %p100 = scmp.eq.s32.totalorder %s14, 0
    %p101 = por %p99, %p100
    %p102 = scmp.ne.s32.totalorder %s88, %s89
    %p103 = scmp.eq.s32.totalorder %s15, 1
    %p104 = por %p102, %p103
    %p106 = scmp.ne.s32.totalorder %s89, %s105
    %p107 = scmp.eq.s32.totalorder %s15, 0
    %p108 = por %p106, %p107
    %s109 = ssub.s32 %s16, %s28
    %s110 = ssub.s32 %s17, %s24
    %s111 = sor.u32 %s109, %s110
    %p112 = scmp.eq.s32.totalorder %s111, 0
    %s114 = sadd.s32 %s113, 1
    %s115 = scalar_select %p112, %s113, %s114
    %p118 = pneg %p112
    %p119 = scmp.eq.s32.totalorder %s9, 1
    %p120 = por %p118, %p119
    %p121 = scmp.ne.s32.totalorder %s113, %s116
    %p122 = scmp.eq.s32.totalorder %s9, 0
    %p123 = por %p121, %p122
    %p124 = scmp.ne.s32.totalorder %s113, %s116
    %p125 = scmp.eq.s32.totalorder %s14, 1
    %p126 = por %p124, %p125
    %p127 = scmp.ne.s32.totalorder %s116, %s117
    %p128 = scmp.eq.s32.totalorder %s14, 0
    %p129 = por %p127, %p128
    %p130 = scmp.ne.s32.totalorder %s116, %s117
    %p131 = scmp.eq.s32.totalorder %s15, 1
    %p132 = por %p130, %p131
    %p134 = scmp.ne.s32.totalorder %s117, %s133
    %p135 = scmp.eq.s32.totalorder %s15, 0
    %p136 = por %p134, %p135
    %p137 = scmp.le.s32.totalorder 1, %s9
    %p138 = scmp.lt.s32.totalorder %s9, 3
    %p139 = pnand %p137, %p138
    %p140 = pneg %p139
    // Predicated region
    $region9: #{hourglass_forward.23} parent=5 // pred_check
      _
    $region10: #{hourglass_forward.23} parent=5 // pred_check_branch
      %142 = sbr.rel (%p139) target = $region12
    $region11: #{hourglass_forward.23} parent=5 // pred_region
      %s143 = ssub.s32 %s9, 1
      // Predicated region
      $region13: #{hourglass_forward.23} parent=11 // pred_check
        %p144 = pneg %p75
      $region14: #{hourglass_forward.23} parent=11 // pred_check_branch
        %146 = sbr.rel (%p144) target = $region16
      $region15: #{hourglass_forward.23} parent=11 // pred_region
        %p147 = scmp.lt.s32.totalorder %s19, 0
        %s148 = scalar_select %p147, %s19, 0
        %s149 = smul.addr %s148, 7
        %s150 = smul.addr %s149, 8
        %s151 = scalar_lea.vmem %s1, %s150
      $region16: #{hourglass_forward.23} parent=11 // pred_fallthru
        _
      // Predicated region
      $region17: #{hourglass_forward.23} parent=11 // pred_check
        %p152 = pneg %p101
      $region18: #{hourglass_forward.23} parent=11 // pred_check_branch
        %154 = sbr.rel (%p152) target = $region20
      $region19: #{hourglass_forward.23} parent=11 // pred_region
        %p155 = scmp.lt.s32.totalorder %s19, 0
        %s156 = scalar_select %p155, %s19, 0
        %s157 = smul.addr %s156, 7
        %s158 = smul.addr %s157, 8
        %s159 = scalar_lea.vmem %s2, %s158
      $region20: #{hourglass_forward.23} parent=11 // pred_fallthru
        _
    $region12: #{hourglass_forward.23} parent=5 // pred_fallthru
      _
    %p160 = scmp.lt.s32.totalorder %s9, 2
    // Predicated region
    $region21: #{hourglass_forward.23} parent=5 // pred_check
      %p161 = pneg %p160
    $region22: #{hourglass_forward.23} parent=5 // pred_check_branch
      %163 = sbr.rel (%p161) target = $region24
    $region23: #{hourglass_forward.23} parent=5 // pred_region
      // Predicated region
      $region25: #{hourglass_forward.23} parent=23 // pred_check
        %p164 = pneg %p43
      $region26: #{hourglass_forward.23} parent=23 // pred_check_branch
        %166 = sbr.rel (%p164) target = $region28
      $region27: #{hourglass_forward.23} parent=23 // pred_region
        %p167 = scmp.lt.s32.totalorder %s16, 1
        %s168 = scalar_select %p167, %s16, 1
        %p169 = scmp.lt.s32.totalorder %s17, 0
        %s170 = scalar_select %p169, %s17, 0
        %s171 = smul.addr %s170, 7
        %s172 = smul.addr %s168, 7
        %s173 = sadd.s32 %s171, %s172
        %s174 = smul.addr %s173, 4
        %s175 = scalar_lea.vmem %s0, %s174
      $region28: #{hourglass_forward.23} parent=23 // pred_fallthru
        _
    $region24: #{hourglass_forward.23} parent=5 // pred_fallthru
      _
    %p176 = scmp.le.s32.totalorder 1, %s9
    %p177 = scmp.lt.s32.totalorder %s9, 3
    %p178 = pnand %p176, %p177
    %p179 = pneg %p178
    // Predicated region
    $region29: #{hourglass_forward.23} parent=5 // pred_check
      _
    $region30: #{hourglass_forward.23} parent=5 // pred_check_branch
      %181 = sbr.rel (%p178) target = $region32
    $region31: #{hourglass_forward.23} parent=5 // pred_region
      %s182 = ssub.s32 %s9, 1
      %p183 = scmp.lt.s32.totalorder %s18, 1
      %s184 = scalar_select %p183, %s18, 1
      %p185 = scmp.lt.s32.totalorder %s19, 0
      %s186 = scalar_select %p185, %s19, 0
      %s187 = smul.addr %s186, 7
      %s188 = smul.addr %s184, 7
      %s189 = sadd.s32 %s187, %s188
      %s190 = smul.addr %s189, 4
      %s191 = scalar_lea.vmem %s0, %s190
      %p192 = pneg %p49
      %p193 = pneg %p46
      %p194 = scmp.lt.s32.totalorder %s19, 0
      %s195 = scalar_select %p194, %s19, 0
      %s196 = smul.addr %s195, 7
      %s197 = smul.addr %s196, 8
      %s198 = scalar_lea.vmem %s1, %s197
      %p199 = pneg %p75
      %p200 = pneg %p72
      %p201 = scmp.lt.s32.totalorder %s19, 0
      %s202 = scalar_select %p201, %s19, 0
      %s203 = smul.addr %s202, 7
      %s204 = smul.addr %s203, 8
      %s205 = scalar_lea.vmem %s2, %s204
      %p206 = pneg %p101
      %p207 = pneg %p98
      %p208 = pneg %p129
      %p209 = pneg %p126
      %p210 = scmp.lt.s32.totalorder %s18, 1
      %s211 = scalar_select %p210, %s18, 1
      %p212 = scmp.lt.s32.totalorder %s19, 0
      %s213 = scalar_select %p212, %s19, 0
      %s214 = smul.addr %s213, 7
      %s215 = smul.addr %s211, 7
      %s216 = sadd.s32 %s214, %s215
      %s217 = smul.addr %s216, 8
      %s218 = scalar_lea.vmem %s3, %s217
      %p219 = scmp.lt.s32.totalorder %s18, 1
      %s220 = scalar_select %p219, %s18, 1
      %p221 = scmp.lt.s32.totalorder %s19, 0
      %s222 = scalar_select %p221, %s19, 0
      %s223 = smul.addr %s222, 7
      %s224 = smul.addr %s220, 7
      %s225 = sadd.s32 %s223, %s224
      %s226 = smul.addr %s225, 4
      %s227 = scalar_lea.vmem %s0, %s226
      %p228 = scmp.lt.s32.totalorder %s19, 0
      %s229 = scalar_select %p228, %s19, 0
      %s230 = smul.addr %s229, 7
      %s231 = smul.addr %s230, 8
      %s232 = scalar_lea.vmem %s1, %s231
      %p233 = scmp.lt.s32.totalorder %s19, 0
      %s234 = scalar_select %p233, %s19, 0
      %s235 = smul.addr %s234, 7
      %s236 = smul.addr %s235, 8
      %s237 = scalar_lea.vmem %s2, %s236
      %p238 = scmp.lt.s32.totalorder %s18, 1
      %s239 = scalar_select %p238, %s18, 1
      %p240 = scmp.lt.s32.totalorder %s19, 0
      %s241 = scalar_select %p240, %s19, 0
      %s242 = smul.addr %s241, 7
      %s243 = smul.addr %s239, 7
      %s244 = sadd.s32 %s242, %s243
      %s245 = smul.addr %s244, 8
      %s246 = scalar_lea.vmem %s3, %s245
      %v247 = vld [vmem:[%s227] sm:$0xf]
      %v248 = vld [vmem:[%s227 + $0x4] sm:$0xf]
      %v249 = vld [vmem:[%s227 + $0x8] sm:$0xf]
      %v250 = vld [vmem:[%s227 + $0xc] sm:$0xf]
      %v251 = vld [vmem:[%s227 + $0x10] sm:$0xf]
      %v252 = vld [vmem:[%s227 + $0x14] sm:$0xf]
      %v253 = vld [vmem:[%s227 + $0x18] sm:$0xf]
      %v254 = vunpack.c.l.bf16 %v247
      %v255 = vunpack.c.l.bf16 %v248
      %v256 = vunpack.c.l.bf16 %v249
      %v257 = vunpack.c.l.bf16 %v250
      %v258 = vunpack.c.l.bf16 %v251
      %v259 = vunpack.c.l.bf16 %v252
      %v260 = vunpack.c.l.bf16 %v253
      %v261 = vadd.f32 %v254, %v255
      %v262 = vadd.f32 %v261, %v256
      %v263 = vadd.f32 %v262, %v257
      %v264 = vadd.f32 %v263, %v258
      %v265 = vadd.f32 %v264, %v259
      %v266 = vadd.f32 %v265, %v260
      %267 = vadd.xlane.f32.xlu0 %v266
      %v268 = vpop.xlane.xlu0 %267
      %v269 = vrot.slane %v268, 4
      %v270 = vadd.f32 %v268, %v269
      %v271 = vrot.slane %v270, 2
      %v272 = vadd.f32 %v270, %v271
      %v273 = vrot.slane %v272, 1
      %v274 = vadd.f32 %v272, %v273
      %s275 = vtos %v274
      %v276 = vstv %s275
      %v277 = vmul.f32 %v254, %v254
      %v278 = vmul.f32 %v255, %v255
      %v279 = vmul.f32 %v256, %v256
      %v280 = vmul.f32 %v257, %v257
      %v281 = vmul.f32 %v258, %v258
      %v282 = vmul.f32 %v259, %v259
      %v283 = vmul.f32 %v260, %v260
      %v284 = vadd.f32 %v277, %v278
      %v285 = vadd.f32 %v284, %v279
      %v286 = vadd.f32 %v285, %v280
      %v287 = vadd.f32 %v286, %v281
      %v288 = vadd.f32 %v287, %v282
      %v289 = vadd.f32 %v288, %v283
      %290 = vadd.xlane.f32.xlu0 %v289
      %v291 = vpop.xlane.xlu0 %290
      %v292 = vrot.slane %v291, 4
      %v293 = vadd.f32 %v291, %v292
      %v294 = vrot.slane %v293, 2
      %v295 = vadd.f32 %v293, %v294
      %v296 = vrot.slane %v295, 1
      %v297 = vadd.f32 %v295, %v296
      %s298 = vtos %v297
      %v299 = vstv %s298
      %v300 = vrcp.pop 7168.0
      %v301 = vmul.f32 %v276, %v300
      %v302 = vmul.f32 %v299, %v300
      %v303 = vmul.f32 %v301, %v301
      %v304 = vsub.f32 %v302, %v303
      %v305 = vmax.f32 %v304, 0.0
      %v306 = vadd.f32 %v305, 1e-05
      %v307 = vrsqrt.pop %v306
      %v308 = vsub.f32 %v254, %v301
      %v309 = vsub.f32 %v255, %v301
      %v310 = vsub.f32 %v256, %v301
      %v311 = vsub.f32 %v257, %v301
      %v312 = vsub.f32 %v258, %v301
      %v313 = vsub.f32 %v259, %v301
      %v314 = vsub.f32 %v260, %v301
      %v315 = vmul.f32 %v308, %v307
      %v316 = vmul.f32 %v309, %v307
      %v317 = vmul.f32 %v310, %v307
      %v318 = vmul.f32 %v311, %v307
      %v319 = vmul.f32 %v312, %v307
      %v320 = vmul.f32 %v313, %v307
      %v321 = vmul.f32 %v314, %v307
      %v322 = vld [vmem:[%s232] sm:$0xff]
      %v323 = vld [vmem:[%s232 + $0x8] sm:$0xff]
      %v324 = vld [vmem:[%s232 + $0x10] sm:$0xff]
      %v325 = vld [vmem:[%s232 + $0x18] sm:$0xff]
      %v326 = vld [vmem:[%s232 + $0x20] sm:$0xff]
      %v327 = vld [vmem:[%s232 + $0x28] sm:$0xff]
      %v328 = vld [vmem:[%s232 + $0x30] sm:$0xff]
      %330 = vset.pattern.permute.xlu0 0
      %331 = vperm.xlu0 %330, %v322
      %v332 = vpop.permute.xlu0 %331
      %335 = vset.pattern.permute.xlu0 0
      %336 = vperm.xlu0 %335, %v323
      %v337 = vpop.permute.xlu0 %336
      %340 = vset.pattern.permute.xlu0 0
      %341 = vperm.xlu0 %340, %v324
      %v342 = vpop.permute.xlu0 %341
      %345 = vset.pattern.permute.xlu0 0
      %346 = vperm.xlu0 %345, %v325
      %v347 = vpop.permute.xlu0 %346
      %350 = vset.pattern.permute.xlu0 0
      %351 = vperm.xlu0 %350, %v326
      %v352 = vpop.permute.xlu0 %351
      %355 = vset.pattern.permute.xlu0 0
      %356 = vperm.xlu0 %355, %v327
      %v357 = vpop.permute.xlu0 %356
      %360 = vset.pattern.permute.xlu0 0
      %361 = vperm.xlu0 %360, %v328
      %v362 = vpop.permute.xlu0 %361
      %v364 = vmul.f32 %v315, %v332
      %v365 = vmul.f32 %v316, %v337
      %v366 = vmul.f32 %v317, %v342
      %v367 = vmul.f32 %v318, %v347
      %v368 = vmul.f32 %v319, %v352
      %v369 = vmul.f32 %v320, %v357
      %v370 = vmul.f32 %v321, %v362
      %v371 = vld [vmem:[%s237] sm:$0xff]
      %v372 = vld [vmem:[%s237 + $0x8] sm:$0xff]
      %v373 = vld [vmem:[%s237 + $0x10] sm:$0xff]
      %v374 = vld [vmem:[%s237 + $0x18] sm:$0xff]
      %v375 = vld [vmem:[%s237 + $0x20] sm:$0xff]
      %v376 = vld [vmem:[%s237 + $0x28] sm:$0xff]
      %v377 = vld [vmem:[%s237 + $0x30] sm:$0xff]
      %379 = vset.pattern.permute.xlu0 0
      %380 = vperm.xlu0 %379, %v371
      %v381 = vpop.permute.xlu0 %380
      %384 = vset.pattern.permute.xlu0 0
      %385 = vperm.xlu0 %384, %v372
      %v386 = vpop.permute.xlu0 %385
      %389 = vset.pattern.permute.xlu0 0
      %390 = vperm.xlu0 %389, %v373
      %v391 = vpop.permute.xlu0 %390
      %394 = vset.pattern.permute.xlu0 0
      %395 = vperm.xlu0 %394, %v374
      %v396 = vpop.permute.xlu0 %395
      %399 = vset.pattern.permute.xlu0 0
      %400 = vperm.xlu0 %399, %v375
      %v401 = vpop.permute.xlu0 %400
      %404 = vset.pattern.permute.xlu0 0
      %405 = vperm.xlu0 %404, %v376
      %v406 = vpop.permute.xlu0 %405
      %409 = vset.pattern.permute.xlu0 0
      %410 = vperm.xlu0 %409, %v377
      %v411 = vpop.permute.xlu0 %410
      %v413 = vadd.f32 %v364, %v381
      %v414 = vadd.f32 %v365, %v386
      %v415 = vadd.f32 %v366, %v391
      %v416 = vadd.f32 %v367, %v396
      %v417 = vadd.f32 %v368, %v401
      %v418 = vadd.f32 %v369, %v406
      %v419 = vadd.f32 %v370, %v411
      %420 = vst [vmem:[%s246] sm:$0xff] %v413
      %421 = vst [vmem:[%s246 + $0x8] sm:$0xff] %v414
      %422 = vst [vmem:[%s246 + $0x10] sm:$0xff] %v415
      %423 = vst [vmem:[%s246 + $0x18] sm:$0xff] %v416
      %424 = vst [vmem:[%s246 + $0x20] sm:$0xff] %v417
      %425 = vst [vmem:[%s246 + $0x28] sm:$0xff] %v418
      %426 = vst [vmem:[%s246 + $0x30] sm:$0xff] %v419
      %p427 = scmp.lt.s32.totalorder %s18, 1
      %s428 = scalar_select %p427, %s18, 1
      %p429 = scmp.lt.s32.totalorder %s19, 0
      %s430 = scalar_select %p429, %s19, 0
      %s431 = smul.addr %s430, 7
      %s432 = smul.addr %s428, 7
      %s433 = sadd.s32 %s431, %s432
      %s434 = smul.addr %s433, 8
      %s435 = scalar_lea.vmem %s3, %s434
      // Predicated region
      $region33: #{hourglass_forward.23} parent=31 // pred_check
        %p436 = pneg %p126
      $region34: #{hourglass_forward.23} parent=31 // pred_check_branch
        %438 = sbr.rel (%p436) target = $region36
      $region35: #{hourglass_forward.23} parent=31 // pred_region
        _
      $region36: #{hourglass_forward.23} parent=31 // pred_fallthru
        _
    $region32: #{hourglass_forward.23} parent=5 // pred_fallthru
      _
    %p439 = scmp.le.s32.totalorder 2, %s9
    // Predicated region
    $region37: #{hourglass_forward.23} parent=5 // pred_check
      %p440 = pneg %p439
    $region38: #{hourglass_forward.23} parent=5 // pred_check_branch
      %442 = sbr.rel (%p440) target = $region40
    $region39: #{hourglass_forward.23} parent=5 // pred_region
      %s443 = ssub.s32 %s9, 2
      // Predicated region
      $region41: #{hourglass_forward.23} parent=39 // pred_check
        %p444 = pneg %p132
      $region42: #{hourglass_forward.23} parent=39 // pred_check_branch
        %446 = sbr.rel (%p444) target = $region44
      $region43: #{hourglass_forward.23} parent=39 // pred_region
        %p447 = scmp.lt.s32.totalorder %s20, 1
        %s448 = scalar_select %p447, %s20, 1
        %p449 = scmp.lt.s32.totalorder %s21, 0
        %s450 = scalar_select %p449, %s21, 0
        %s451 = smul.addr %s450, 7
        %s452 = smul.addr %s448, 7
        %s453 = sadd.s32 %s451, %s452
        %s454 = smul.addr %s453, 8
        %s455 = scalar_lea.vmem %s3, %s454
      $region44: #{hourglass_forward.23} parent=39 // pred_fallthru
        _
    $region40: #{hourglass_forward.23} parent=5 // pred_fallthru
      _
  $region6: #{hourglass_forward.23} parent=0 // loop_footer
    %s13 = sadd.s32 1, %s9
  $region7: #{hourglass_forward.23} parent=0 // loop_footer_branch
    %8 = sbr.rel target = $region3
  $region8: #{hourglass_forward.23} parent=0 // loop_exit
    _

</llo_original>
